<compile_context>
chip_gen: v5e
topology: v5e:2x2
jax: 0.10.0
libtpu: 0.0.40
codegen_flags: <defaults>
</compile_context>

<pallas_src>
import functools
import math

import jax
import jax.numpy as jnp
from jax import lax
from jax.experimental import pallas as pl
from jax.experimental.pallas import tpu as pltpu

# ----------------------------------------------------------------------------- config
BATCH = 2
SEQ_NUM = 1          # -> TemporalModelIdentity, cumulative warp is identity
CAM_NUM = 2
NET_H = NET_W = 32   # network_input_height/width
LAYER_ID = 1
LAYER_DIM = 16       # layers_dim[layer_id - 1]
EMBED_DIM = LAYER_DIM * CAM_NUM            # 32   (use_transformer_decoder = False)
FINAL_DIM = 32                              # cfgs['backbone']['channels']
FF_DIM = 64                                 # ffn_feedforward_channels
NUM_HEADS = 4
HEAD_DIM = EMBED_DIM // NUM_HEADS           # 8
BEV_FH = BEV_FW = 8                         # bev_feat_height/width (32 / ratio 4)
L_TOKENS = BEV_FH * BEV_FW                  # 64
CLUSTER_FEAT_DIM = 8
CLASS_NUM = 3
DIRECT_DIM = 8        # TODO(synk): exact VectorHeader 'direct' channel count unknown
NUM_DET_CLASSES = 3
DET_FEAT_CH = 16
LN_EPS = 1e-5

# fused prediction-head layout: (name, mid_channels, out_channels, output_activation)
HEAD_SPECS = (
    ('confidence',   FINAL_DIM,   1,                'sigmoid'),
    # TODO(synk): reference VectorHeader may leave offsets un-activated; sigmoid kept from v1.
    ('offset',       FINAL_DIM,   2,                'sigmoid'),
    ('instance',     FINAL_DIM,   CLUSTER_FEAT_DIM, 'none'),
    ('direct',       FINAL_DIM,   DIRECT_DIM,       'none'),
    ('cls',          FINAL_DIM,   CLASS_NUM,        'none'),
    ('det_heatmap',  DET_FEAT_CH, NUM_DET_CLASSES,  'sigmoid'),
    ('det_wh',       DET_FEAT_CH, 2,                'none'),
    ('det_offset',   DET_FEAT_CH, 2,                'none'),
    ('det_rotation', DET_FEAT_CH, 2,                'none'),
)
TOTAL_MID = sum(m for _, m, _, _ in HEAD_SPECS)   # 224 fused mid channels
TOTAL_OUT = sum(c for _, _, c, _ in HEAD_SPECS)   # 31 real output channels
HEAD_OUT_PAD = 128                                # lane-dense output slab width

CONV_OFFSETS = tuple((dy, dx) for dy in (-1, 0, 1) for dx in (-1, 0, 1))

# packed bias / LayerNorm slab: one row per vector, lane-0 aligned
(ROW_PROJ_B, ROW_BO, ROW_LN1G, ROW_LN1B, ROW_FFN_B1, ROW_FFN_B2,
 ROW_LN2G, ROW_LN2B, ROW_ENC_B, ROW_HB3, ROW_HB1) = range(11)
VEC_ROWS, VEC_COLS = 16, 256


# ----------------------------------------------------------------------------- in-kernel helpers
def _layer_norm(x, g, b):
    mu = jnp.mean(x, axis=-1, keepdims=True)
    var = jnp.mean(x * x, axis=-1, keepdims=True) - mu * mu    # single pass
    return (x - mu) * lax.rsqrt(var + LN_EPS) * g + b


# ----------------------------------------------------------------------------- fused kernel
def _vector_bev_kernel(feat_ref, pos_ref, mask_ref,
                       proj_w_ref, w_qkv_ref, b_q_ref, w_o_ref,
                       ffn_w1_ref, ffn_w2_ref,
                       enc_w_ref, head_w3_ref, head_w1_ref,
                       vec_ref, o_ref, *,
                       num_heads, num_samples, H, W):
    """proj 1x1 -> MHSA -> LN -> FFN -> LN -> encoding 3x3 -> 9 fused heads.

    All BS samples are stacked along the token (sublane) axis (M = BS*L rows); attention
    and the conv boundary masks keep samples strictly separate.
    """
    f32 = jnp.float32
    bf16 = jnp.bfloat16
    L = H * W
    M = num_samples * L
    D = EMBED_DIM
    hd = D // num_heads
    scale = 1.0 / math.sqrt(hd)

    def vrow(row, width):
        # static, lane-0 aligned slice of the packed bias/LN slab -> (1, width) f32
        return vec_ref[row:row + 1, :width]

    # --- spatial-transformer output projection (1x1 conv) ---
    x = jnp.dot(feat_ref[...], proj_w_ref[...],
                preferred_element_type=f32) + vrow(ROW_PROJ_B, D)          # (M, D) f32

    # --- MultiheadAttention (mmcv: query_pos added to q/k input only; residual = pre-pos x)
    xq_b = (x + pos_ref[...]).astype(bf16)
    x_b = x.astype(bf16)

    attn = jnp.zeros((M, D), f32)
    for h in range(num_heads):
        # per-head, lane-aligned projections (no 8-lane slices of a wide qkv slab)
        q_h = (jnp.dot(xq_b, w_qkv_ref[h], preferred_element_type=f32)
               + b_q_ref[h]).astype(bf16)                                   # (M, hd)
        # k-proj bias cancels exactly in softmax; v-proj bias folds into the out-proj bias.
        k_h = jnp.dot(xq_b, w_qkv_ref[num_heads + h],
                      preferred_element_type=f32).astype(bf16)              # (M, hd)
        v_h = jnp.dot(x_b, w_qkv_ref[2 * num_heads + h],
                      preferred_element_type=f32).astype(bf16)              # (M, hd)

        o_parts = []
        for s in range(num_samples):          # attention never mixes samples
            lo, hi = s * L, (s + 1) * L
            qs, ks, vs = q_h[lo:hi], k_h[lo:hi], v_h[lo:hi]
            # q.k^T without materializing k^T (contract last dims of both operands)
            sc = lax.dot_general(qs, ks, (((1,), (1,)), ((), ())),
                                 preferred_element_type=f32) * scale        # (L, L)
            sc = sc - jnp.max(sc, axis=-1, keepdims=True)
            p = jnp.exp(sc)
            p = p * pl.reciprocal(jnp.sum(p, axis=-1, keepdims=True), approx=True)
            o_parts.append(jnp.dot(p.astype(bf16), vs, preferred_element_type=f32))
        o_h = o_parts[0] if num_samples == 1 else jnp.concatenate(o_parts, axis=0)
        # concat(o_h) @ Wo  ==  sum_h o_h @ Wo[h]  (exact) -> accumulate, no lane concat
        attn = attn + jnp.dot(o_h.astype(bf16), w_o_ref[h], preferred_element_type=f32)

    x1 = x + attn + vrow(ROW_BO, D)
    x1n = _layer_norm(x1, vrow(ROW_LN1G, D), vrow(ROW_LN1B, D))

    # --- FFN (ReLU, 2 fcs) + residual + LayerNorm ---
    h1 = jnp.maximum(jnp.dot(x1n.astype(bf16), ffn_w1_ref[...],
                             preferred_element_type=f32) + vrow(ROW_FFN_B1, FF_DIM), 0.0)
    h2 = jnp.dot(h1.astype(bf16), ffn_w2_ref[...],
                 preferred_element_type=f32) + vrow(ROW_FFN_B2, D)
    y = _layer_norm(x1n + h2, vrow(ROW_LN2G, D), vrow(ROW_LN2B, D))         # (M, D)

    # --- 3x3 convs: 9 accumulated masked-shift matmuls (no im2col slab materialized) ---
    def conv3x3(tokens, w9_ref, bias, cout):
        acc = jnp.zeros((M, cout), f32)
        for k, (dy, dx) in enumerate(CONV_OFFSETS):
            delta = dy * W + dx
            if delta == 0:
                tap = tokens                                  # centre tap: always valid
            else:
                # XLU sublane rotate; the precomputed per-sample boundary mask zeroes
                # both image-border and cross-sample wrap-around contributions.
                tap = pltpu.roll(tokens, (-delta) % M, axis=0) * mask_ref[k]
            acc = acc + jnp.dot(tap.astype(bf16), w9_ref[k], preferred_element_type=f32)
        return acc + bias

    # self.encoding: Conv2d(D, FINAL_DIM, 3, padding=1).
    # TODO(synk): reference has no BN/activation after self.encoding; none applied here.
    bev = conv3x3(y, enc_w_ref, vrow(ROW_ENC_B, FINAL_DIM), FINAL_DIM)       # (M, F)

    # all 9 heads fused: shared 3x3+ReLU on concatenated mids, block-diagonal 1x1 slab
    mid = jnp.maximum(conv3x3(bev, head_w3_ref, vrow(ROW_HB3, TOTAL_MID), TOTAL_MID), 0.0)
    out = jnp.dot(mid.astype(bf16), head_w1_ref[...],
                  preferred_element_type=f32) + vrow(ROW_HB1, HEAD_OUT_PAD)
    o_ref[...] = out.astype(o_ref.dtype)          # (M, 128) lane-dense, unmasked stores


def fused_forward(feat_tokens, pos_tiled, masks, params):
    """feat_tokens: (M, CAM_NUM*3) bf16 with M = BS*L -> (M, HEAD_OUT_PAD) f32 head slab."""
    M = feat_tokens.shape[0]
    num_samples = M // L_TOKENS
    kern = functools.partial(_vector_bev_kernel, num_heads=NUM_HEADS,
                             num_samples=num_samples, H=BEV_FH, W=BEV_FW)

    def full(a):
        zero = (0,) * a.ndim
        return pl.BlockSpec(a.shape, lambda n, _z=zero: _z)

    operands = (feat_tokens, pos_tiled, masks,
                params['proj_w'], params['w_qkv'], params['b_q'], params['w_o'],
                params['ffn_w1'], params['ffn_w2'],
                params['enc_w'], params['head_w3'], params['head_w1'],
                params['vecs'])
    return pl.pallas_call(
        kern,
        out_shape=jax.ShapeDtypeStruct((M, HEAD_OUT_PAD), jnp.float32),
        grid=(1,),                       # batch folded into M: single invocation
        in_specs=[full(a) for a in operands],
        out_specs=pl.BlockSpec((M, HEAD_OUT_PAD), lambda n: (0, 0)),
        compiler_params=pltpu.CompilerParams(dimension_semantics=("arbitrary",)),
    )(*operands)


# ----------------------------------------------------------------------------- init / glue
def sine_pos_embed(bh, bw, num_feats, temperature=10000.0):
    """SinePositionalEncoding (mmcv, normalize=False) on an all-valid mask (init-time, pure JAX)."""
    not_mask = jnp.ones((1, bh, bw), jnp.float32)
    y_embed = jnp.cumsum(not_mask, axis=1)
    x_embed = jnp.cumsum(not_mask, axis=2)
    dim_t = temperature ** (2.0 * (jnp.arange(num_feats) // 2) / num_feats)
    pos_x = x_embed[..., None] / dim_t
    pos_y = y_embed[..., None] / dim_t
    pos_x = jnp.stack([jnp.sin(pos_x[..., 0::2]), jnp.cos(pos_x[..., 1::2])],
                      axis=4).reshape(1, bh, bw, -1)
    pos_y = jnp.stack([jnp.sin(pos_y[..., 0::2]), jnp.cos(pos_y[..., 1::2])],
                      axis=4).reshape(1, bh, bw, -1)
    return jnp.concatenate([pos_y, pos_x], axis=3)          # (1, bh, bw, 2*num_feats)


def _conv_masks(num_samples, H, W):
    """(9, num_samples*H*W, 1) f32 validity masks for the 3x3 accumulated conv taps."""
    yy = jnp.arange(H * W, dtype=jnp.int32) // W
    xx = jnp.arange(H * W, dtype=jnp.int32) % W
    rows = []
    for dy, dx in CONV_OFFSETS:
        valid = ((yy + dy >= 0) & (yy + dy < H) & (xx + dx >= 0) & (xx + dx < W))
        rows.append(jnp.tile(valid.astype(jnp.float32), num_samples)[:, None])
    return jnp.stack(rows, axis=0)


def init_params(key):
    ks = iter(jax.random.split(key, 32))

    def w(shape, s=0.05):
        return (s * jax.random.normal(next(ks), shape)).astype(jnp.bfloat16)

    # attention weights per head, head on the leading (sublane-indexed) axis: q | k | v
    w_qkv = jnp.concatenate([w((NUM_HEADS, EMBED_DIM, HEAD_DIM)),
                             w((NUM_HEADS, EMBED_DIM, HEAD_DIM)),
                             w((NUM_HEADS, EMBED_DIM, HEAD_DIM))], axis=0)   # (12, D, hd)
    w_o = w((NUM_HEADS, HEAD_DIM, EMBED_DIM))
    # k-proj bias cancels in softmax, v-proj bias folds into the out-proj bias; torch
    # default-inits all of them to zero, so only the q bias is kept explicitly.
    b_q = jnp.zeros((NUM_HEADS, 1, HEAD_DIM), jnp.float32)

    # 3x3 conv weights stored per spatial tap: (9, Cin, Cout)
    enc_w = w((9, EMBED_DIM, FINAL_DIM))
    head_w3 = jnp.concatenate([w((9, FINAL_DIM, m)) for _, m, _, _ in HEAD_SPECS],
                              axis=-1)                                        # (9, 32, 224)

    # fused head 1x1: per-head weights placed block-diagonally, padded to 128 lanes
    head_w1 = jnp.zeros((TOTAL_MID, HEAD_OUT_PAD), jnp.float32)
    mo, oo = 0, 0
    for _, m, c, _ in HEAD_SPECS:
        head_w1 = head_w1.at[mo:mo + m, oo:oo + c].set(
            0.05 * jax.random.normal(next(ks), (m, c)))
        mo += m
        oo += c
    head_w1 = head_w1.astype(jnp.bfloat16)

    # all small bias / LayerNorm vectors packed in one padded f32 slab (one input DMA)
    vecs = jnp.zeros((VEC_ROWS, VEC_COLS), jnp.float32)
    vecs = vecs.at[ROW_LN1G, :EMBED_DIM].set(1.0)
    vecs = vecs.at[ROW_LN2G, :EMBED_DIM].set(1.0)

    pos = sine_pos_embed(BEV_FH, BEV_FW, EMBED_DIM // 2).reshape(L_TOKENS, EMBED_DIM)

    return dict(
        pos=pos.astype(jnp.float32),
        proj_w=w((CAM_NUM * 3, EMBED_DIM)),
        w_qkv=w_qkv, b_q=b_q, w_o=w_o,
        ffn_w1=w((EMBED_DIM, FF_DIM)), ffn_w2=w((FF_DIM, EMBED_DIM)),
        enc_w=enc_w, head_w3=head_w3, head_w1=head_w1,
        vecs=vecs,
    )


def vector_bev_forward(params, x, pm_matrix, ego_motion_matrix):
    """x: (B, S*C, 3, H, W) NCHW-style, pm_matrix: (B, S*C, 3, 3), ego: (B, S, 6)."""
    B = x.shape[0]
    BS = B * SEQ_NUM
    M = BS * L_TOKENS
    imgs = x.reshape(B * SEQ_NUM * CAM_NUM, 3, NET_H, NET_W)
    del pm_matrix, ego_motion_matrix  # consumed only by the external stubs below

    # TODO(synk): ResNet backbone + SpatialTransformer are external modules; replaced with a
    # deterministic avg-pool camera-feature stand-in that yields the same bev_feat shape.
    pooled = imgs.reshape(B * SEQ_NUM * CAM_NUM, 3,
                          BEV_FH, NET_H // BEV_FH, BEV_FW, NET_W // BEV_FW).mean(axis=(3, 5))
    feat = pooled.reshape(BS, CAM_NUM * 3, BEV_FH, BEV_FW).transpose(0, 2, 3, 1)
    feat = feat.reshape(M, CAM_NUM * 3).astype(jnp.bfloat16)                 # (M, 6)

    pos_tiled = jnp.tile(params['pos'], (BS, 1))                             # (M, D) f32
    masks = _conv_masks(BS, BEV_FH, BEV_FW)                                  # (9, M, 1) const

    # proj 1x1 -> MultiCamFusionEncoderLayer -> encoding 3x3 -> all 9 heads: ONE Pallas call.
    slab = fused_forward(feat, pos_tiled, masks, params)                     # (M, 128) f32

    # TODO(synk): cumulative_warp_features (bilinear ego-motion warp) is external; identity for
    # seq_num == 1.  TemporalModelIdentity + [:, -1] is also identity with seq_num == 1, and the
    # conv heads act per-frame, so it commutes with the fused head computation above.
    slab = slab.reshape(B, SEQ_NUM, BEV_FH, BEV_FW, HEAD_OUT_PAD)[:, -1]     # (B, FH, FW, 128)

    # split the lane-dense slab back into per-head NCHW outputs (+ output activations).
    # TODO(synk): exact VectorHeader / CenterNetHead internals unavailable; approximated as
    # conv3x3+ReLU -> conv1x1 branches (sigmoid on confidence / offset / heatmap).
    outs = {}
    off = 0
    for name, _, c, act in HEAD_SPECS:
        t = slab[..., off:off + c]
        off += c
        if act == 'sigmoid':
            t = jax.nn.sigmoid(t)
        outs[name] = t.transpose(0, 3, 1, 2)

    return {
        'confidence': outs['confidence'],
        'offset': outs['offset'],
        'instance': outs['instance'],
        'direct': outs['direct'],
        'cls': outs['cls'],
        'detection': (outs['det_heatmap'], outs['det_wh'],
                      outs['det_offset'], outs['det_rotation']),
    }


# ----------------------------------------------------------------------------- main
if __name__ == "__main__":
    key = jax.random.PRNGKey(0)
    kp, kx, kpm, keg = jax.random.split(key, 4)
    params = init_params(kp)

    x = jax.random.normal(kx, (BATCH, SEQ_NUM * CAM_NUM, 3, NET_H, NET_W), jnp.float32)
    pm_matrix = jax.random.normal(kpm, (BATCH, SEQ_NUM * CAM_NUM, 3, 3), jnp.float32)
    ego_motion = jax.random.normal(keg, (BATCH, SEQ_NUM, 6), jnp.float32)

    fwd = jax.jit(vector_bev_forward)
    out = fwd(params, x, pm_matrix, ego_motion)
    jax.block_until_ready(out)

    assert out['confidence'].shape == (BATCH, 1, BEV_FH, BEV_FW)
    assert out['offset'].shape == (BATCH, 2, BEV_FH, BEV_FW)
    assert out['instance'].shape == (BATCH, CLUSTER_FEAT_DIM, BEV_FH, BEV_FW)
    assert out['direct'].shape == (BATCH, DIRECT_DIM, BEV_FH, BEV_FW)
    assert out['cls'].shape == (BATCH, CLASS_NUM, BEV_FH, BEV_FW)
    assert out['detection'][0].shape == (BATCH, NUM_DET_CLASSES, BEV_FH, BEV_FW)
    assert out['detection'][1].shape == (BATCH, 2, BEV_FH, BEV_FW)
    assert out['detection'][2].shape == (BATCH, 2, BEV_FH, BEV_FW)
    assert out['detection'][3].shape == (BATCH, 2, BEV_FH, BEV_FW)
    print("KERNEL_OK")
</pallas_src>

<mosaic_0001>
module attributes {stable_mosaic.version = 11 : i64} {
  func.func @_vector_bev_kernel(%arg0: i32, %arg1: memref<128x6xbf16, #tpu.memory_space<vmem>>, %arg2: memref<128x32xf32, #tpu.memory_space<vmem>>, %arg3: memref<9x128x1xf32, #tpu.memory_space<vmem>>, %arg4: memref<6x32xbf16, #tpu.memory_space<vmem>>, %arg5: memref<12x32x8xbf16, #tpu.memory_space<vmem>>, %arg6: memref<4x1x8xf32, #tpu.memory_space<vmem>>, %arg7: memref<4x8x32xbf16, #tpu.memory_space<vmem>>, %arg8: memref<32x64xbf16, #tpu.memory_space<vmem>>, %arg9: memref<64x32xbf16, #tpu.memory_space<vmem>>, %arg10: memref<9x32x32xbf16, #tpu.memory_space<vmem>>, %arg11: memref<9x32x224xbf16, #tpu.memory_space<vmem>>, %arg12: memref<224x128xbf16, #tpu.memory_space<vmem>>, %arg13: memref<16x256xf32, #tpu.memory_space<vmem>>, %arg14: memref<128x128xf32, #tpu.memory_space<vmem>>) attributes {dimension_semantics = [#tpu.dimension_semantics<arbitrary>], iteration_bounds = array<i64: 1>, scalar_prefetch = 0 : i64, scratch_operands = 0 : i64, tpu.core_type = #tpu.core_type<tc>, window_params = [{pipeline_mode = #tpu.pipeline_mode<synchronous>, transform_indices = @transform_0, window_bounds = array<i64: 128, 6>}, {pipeline_mode = #tpu.pipeline_mode<synchronous>, transform_indices = @transform_1, window_bounds = array<i64: 128, 32>}, {pipeline_mode = #tpu.pipeline_mode<synchronous>, transform_indices = @transform_2, window_bounds = array<i64: 9, 128, 1>}, {pipeline_mode = #tpu.pipeline_mode<synchronous>, transform_indices = @transform_3, window_bounds = array<i64: 6, 32>}, {pipeline_mode = #tpu.pipeline_mode<synchronous>, transform_indices = @transform_4, window_bounds = array<i64: 12, 32, 8>}, {pipeline_mode = #tpu.pipeline_mode<synchronous>, transform_indices = @transform_5, window_bounds = array<i64: 4, 1, 8>}, {pipeline_mode = #tpu.pipeline_mode<synchronous>, transform_indices = @transform_6, window_bounds = array<i64: 4, 8, 32>}, {pipeline_mode = #tpu.pipeline_mode<synchronous>, transform_indices = @transform_7, window_bounds = array<i64: 32, 64>}, {pipeline_mode = #tpu.pipeline_mode<synchronous>, transform_indices = @transform_8, window_bounds = array<i64: 64, 32>}, {pipeline_mode = #tpu.pipeline_mode<synchronous>, transform_indices = @transform_9, window_bounds = array<i64: 9, 32, 32>}, {pipeline_mode = #tpu.pipeline_mode<synchronous>, transform_indices = @transform_10, window_bounds = array<i64: 9, 32, 224>}, {pipeline_mode = #tpu.pipeline_mode<synchronous>, transform_indices = @transform_11, window_bounds = array<i64: 224, 128>}, {pipeline_mode = #tpu.pipeline_mode<synchronous>, transform_indices = @transform_12, window_bounds = array<i64: 16, 256>}, {pipeline_mode = #tpu.pipeline_mode<synchronous>, transform_indices = @transform_13, window_bounds = array<i64: 128, 128>}]} {
    %c0 = arith.constant 0 : index
    %c0_0 = arith.constant 0 : index
    %0 = vector.load %arg1[%c0, %c0_0] : memref<128x6xbf16, #tpu.memory_space<vmem>>, vector<128x6xbf16>
    %c0_1 = arith.constant 0 : index
    %c0_2 = arith.constant 0 : index
    %1 = vector.load %arg4[%c0_1, %c0_2] : memref<6x32xbf16, #tpu.memory_space<vmem>>, vector<6x32xbf16>
    %cst = arith.constant dense<0.000000e+00> : vector<128x32xf32>
    %2 = tpu.matmul %0, %1, %cst {dimension_numbers = #tpu.dot_dimension_numbers<[1], [0], [0], [1], [0, 0, 1, 1], [], []>} : vector<128x6xbf16>, vector<6x32xbf16>, vector<128x32xf32> -> vector<128x32xf32>
    %c0_3 = arith.constant 0 : index
    %c0_4 = arith.constant 0 : index
    %3 = vector.load %arg13[%c0_3, %c0_4] : memref<16x256xf32, #tpu.memory_space<vmem>>, vector<1x32xf32>
    %4 = vector.broadcast %3 : vector<1x32xf32> to vector<128x32xf32>
    %5 = arith.addf %2, %4 : vector<128x32xf32>
    %c0_5 = arith.constant 0 : index
    %c0_6 = arith.constant 0 : index
    %6 = vector.load %arg2[%c0_5, %c0_6] : memref<128x32xf32, #tpu.memory_space<vmem>>, vector<128x32xf32>
    %7 = arith.addf %5, %6 : vector<128x32xf32>
    %8 = arith.truncf %7 : vector<128x32xf32> to vector<128x32xbf16>
    %9 = arith.truncf %5 : vector<128x32xf32> to vector<128x32xbf16>
    %cst_7 = arith.constant 0.000000e+00 : f32
    %10 = vector.broadcast %cst_7 : f32 to vector<128x32xf32>
    %c0_8 = arith.constant 0 : index
    %c0_9 = arith.constant 0 : index
    %c0_10 = arith.constant 0 : index
    %11 = vector.load %arg5[%c0_8, %c0_9, %c0_10] : memref<12x32x8xbf16, #tpu.memory_space<vmem>>, vector<1x32x8xbf16>
    %12 = vector.shape_cast %11 : vector<1x32x8xbf16> to vector<32x8xbf16>
    %cst_11 = arith.constant dense<0.000000e+00> : vector<128x8xf32>
    %13 = tpu.matmul %8, %12, %cst_11 {dimension_numbers = #tpu.dot_dimension_numbers<[1], [0], [0], [1], [0, 0, 1, 1], [], []>} : vector<128x32xbf16>, vector<32x8xbf16>, vector<128x8xf32> -> vector<128x8xf32>
    %c0_12 = arith.constant 0 : index
    %c0_13 = arith.constant 0 : index
    %c0_14 = arith.constant 0 : index
    %14 = vector.load %arg6[%c0_12, %c0_13, %c0_14] : memref<4x1x8xf32, #tpu.memory_space<vmem>>, vector<1x1x8xf32>
    %15 = vector.shape_cast %14 : vector<1x1x8xf32> to vector<1x8xf32>
    %16 = vector.broadcast %15 : vector<1x8xf32> to vector<128x8xf32>
    %17 = arith.addf %13, %16 : vector<128x8xf32>
    %18 = arith.truncf %17 : vector<128x8xf32> to vector<128x8xbf16>
    %c4 = arith.constant 4 : index
    %c0_15 = arith.constant 0 : index
    %c0_16 = arith.constant 0 : index
    %19 = vector.load %arg5[%c4, %c0_15, %c0_16] : memref<12x32x8xbf16, #tpu.memory_space<vmem>>, vector<1x32x8xbf16>
    %20 = vector.shape_cast %19 : vector<1x32x8xbf16> to vector<32x8xbf16>
    %cst_17 = arith.constant dense<0.000000e+00> : vector<128x8xf32>
    %21 = tpu.matmul %8, %20, %cst_17 {dimension_numbers = #tpu.dot_dimension_numbers<[1], [0], [0], [1], [0, 0, 1, 1], [], []>} : vector<128x32xbf16>, vector<32x8xbf16>, vector<128x8xf32> -> vector<128x8xf32>
    %22 = arith.truncf %21 : vector<128x8xf32> to vector<128x8xbf16>
    %c8 = arith.constant 8 : index
    %c0_18 = arith.constant 0 : index
    %c0_19 = arith.constant 0 : index
    %23 = vector.load %arg5[%c8, %c0_18, %c0_19] : memref<12x32x8xbf16, #tpu.memory_space<vmem>>, vector<1x32x8xbf16>
    %24 = vector.shape_cast %23 : vector<1x32x8xbf16> to vector<32x8xbf16>
    %cst_20 = arith.constant dense<0.000000e+00> : vector<128x8xf32>
    %25 = tpu.matmul %9, %24, %cst_20 {dimension_numbers = #tpu.dot_dimension_numbers<[1], [0], [0], [1], [0, 0, 1, 1], [], []>} : vector<128x32xbf16>, vector<32x8xbf16>, vector<128x8xf32> -> vector<128x8xf32>
    %26 = arith.truncf %25 : vector<128x8xf32> to vector<128x8xbf16>
    %27 = vector.extract_strided_slice %18 {offsets = [0, 0], sizes = [64, 8], strides = [1, 1]} : vector<128x8xbf16> to vector<64x8xbf16>
    %28 = vector.extract_strided_slice %22 {offsets = [0, 0], sizes = [64, 8], strides = [1, 1]} : vector<128x8xbf16> to vector<64x8xbf16>
    %29 = vector.extract_strided_slice %26 {offsets = [0, 0], sizes = [64, 8], strides = [1, 1]} : vector<128x8xbf16> to vector<64x8xbf16>
    %cst_21 = arith.constant dense<0.000000e+00> : vector<64x64xf32>
    %30 = tpu.matmul %27, %28, %cst_21 {dimension_numbers = #tpu.dot_dimension_numbers<[1], [1], [0], [0], [0, 0, 1, 0], [], []>} : vector<64x8xbf16>, vector<64x8xbf16>, vector<64x64xf32> -> vector<64x64xf32>
    %cst_22 = arith.constant 0.353553385 : f32
    %31 = vector.broadcast %cst_22 : f32 to vector<64x64xf32>
    %32 = arith.mulf %30, %31 : vector<64x64xf32>
    %cst_23 = arith.constant dense<0xFF800000> : vector<64xf32>
    %33 = vector.multi_reduction <maximumf>, %32, %cst_23 [1] : vector<64x64xf32> to vector<64xf32>
    %34 = vector.shape_cast %33 : vector<64xf32> to vector<64x1xf32>
    %35 = vector.broadcast %34 : vector<64x1xf32> to vector<64x64xf32>
    %36 = arith.subf %32, %35 : vector<64x64xf32>
    %37 = math.exp %36 : vector<64x64xf32>
    %cst_24 = arith.constant dense<0.000000e+00> : vector<64xf32>
    %38 = vector.multi_reduction <add>, %37, %cst_24 [1] : vector<64x64xf32> to vector<64xf32>
    %39 = vector.shape_cast %38 : vector<64xf32> to vector<64x1xf32>
    %40 = tpu.reciprocal %39 {approx = true} : vector<64x1xf32> -> vector<64x1xf32>
    %41 = vector.broadcast %40 : vector<64x1xf32> to vector<64x64xf32>
    %42 = arith.mulf %37, %41 : vector<64x64xf32>
    %43 = arith.truncf %42 : vector<64x64xf32> to vector<64x64xbf16>
    %cst_25 = arith.constant dense<0.000000e+00> : vector<64x8xf32>
    %44 = tpu.matmul %43, %29, %cst_25 {dimension_numbers = #tpu.dot_dimension_numbers<[1], [0], [0], [1], [0, 0, 1, 1], [], []>} : vector<64x64xbf16>, vector<64x8xbf16>, vector<64x8xf32> -> vector<64x8xf32>
    %45 = vector.extract_strided_slice %18 {offsets = [64, 0], sizes = [64, 8], strides = [1, 1]} : vector<128x8xbf16> to vector<64x8xbf16>
    %46 = vector.extract_strided_slice %22 {offsets = [64, 0], sizes = [64, 8], strides = [1, 1]} : vector<128x8xbf16> to vector<64x8xbf16>
    %47 = vector.extract_strided_slice %26 {offsets = [64, 0], sizes = [64, 8], strides = [1, 1]} : vector<128x8xbf16> to vector<64x8xbf16>
    %cst_26 = arith.constant dense<0.000000e+00> : vector<64x64xf32>
    %48 = tpu.matmul %45, %46, %cst_26 {dimension_numbers = #tpu.dot_dimension_numbers<[1], [1], [0], [0], [0, 0, 1, 0], [], []>} : vector<64x8xbf16>, vector<64x8xbf16>, vector<64x64xf32> -> vector<64x64xf32>
    %cst_27 = arith.constant 0.353553385 : f32
    %49 = vector.broadcast %cst_27 : f32 to vector<64x64xf32>
    %50 = arith.mulf %48, %49 : vector<64x64xf32>
    %cst_28 = arith.constant dense<0xFF800000> : vector<64xf32>
    %51 = vector.multi_reduction <maximumf>, %50, %cst_28 [1] : vector<64x64xf32> to vector<64xf32>
    %52 = vector.shape_cast %51 : vector<64xf32> to vector<64x1xf32>
    %53 = vector.broadcast %52 : vector<64x1xf32> to vector<64x64xf32>
    %54 = arith.subf %50, %53 : vector<64x64xf32>
    %55 = math.exp %54 : vector<64x64xf32>
    %cst_29 = arith.constant dense<0.000000e+00> : vector<64xf32>
    %56 = vector.multi_reduction <add>, %55, %cst_29 [1] : vector<64x64xf32> to vector<64xf32>
    %57 = vector.shape_cast %56 : vector<64xf32> to vector<64x1xf32>
    %58 = tpu.reciprocal %57 {approx = true} : vector<64x1xf32> -> vector<64x1xf32>
    %59 = vector.broadcast %58 : vector<64x1xf32> to vector<64x64xf32>
    %60 = arith.mulf %55, %59 : vector<64x64xf32>
    %61 = arith.truncf %60 : vector<64x64xf32> to vector<64x64xbf16>
    %cst_30 = arith.constant dense<0.000000e+00> : vector<64x8xf32>
    %62 = tpu.matmul %61, %47, %cst_30 {dimension_numbers = #tpu.dot_dimension_numbers<[1], [0], [0], [1], [0, 0, 1, 1], [], []>} : vector<64x64xbf16>, vector<64x8xbf16>, vector<64x8xf32> -> vector<64x8xf32>
    %63 = tpu.concatenate %44, %62 in 0 : vector<64x8xf32>, vector<64x8xf32> -> vector<128x8xf32>
    %64 = arith.truncf %63 : vector<128x8xf32> to vector<128x8xbf16>
    %c0_31 = arith.constant 0 : index
    %c0_32 = arith.constant 0 : index
    %c0_33 = arith.constant 0 : index
    %65 = vector.load %arg7[%c0_31, %c0_32, %c0_33] : memref<4x8x32xbf16, #tpu.memory_space<vmem>>, vector<1x8x32xbf16>
    %66 = vector.shape_cast %65 : vector<1x8x32xbf16> to vector<8x32xbf16>
    %cst_34 = arith.constant dense<0.000000e+00> : vector<128x32xf32>
    %67 = tpu.matmul %64, %66, %cst_34 {dimension_numbers = #tpu.dot_dimension_numbers<[1], [0], [0], [1], [0, 0, 1, 1], [], []>} : vector<128x8xbf16>, vector<8x32xbf16>, vector<128x32xf32> -> vector<128x32xf32>
    %68 = arith.addf %10, %67 : vector<128x32xf32>
    %c1 = arith.constant 1 : index
    %c0_35 = arith.constant 0 : index
    %c0_36 = arith.constant 0 : index
    %69 = vector.load %arg5[%c1, %c0_35, %c0_36] : memref<12x32x8xbf16, #tpu.memory_space<vmem>>, vector<1x32x8xbf16>
    %70 = vector.shape_cast %69 : vector<1x32x8xbf16> to vector<32x8xbf16>
    %cst_37 = arith.constant dense<0.000000e+00> : vector<128x8xf32>
    %71 = tpu.matmul %8, %70, %cst_37 {dimension_numbers = #tpu.dot_dimension_numbers<[1], [0], [0], [1], [0, 0, 1, 1], [], []>} : vector<128x32xbf16>, vector<32x8xbf16>, vector<128x8xf32> -> vector<128x8xf32>
    %c1_38 = arith.constant 1 : index
    %c0_39 = arith.constant 0 : index
    %c0_40 = arith.constant 0 : index
    %72 = vector.load %arg6[%c1_38, %c0_39, %c0_40] : memref<4x1x8xf32, #tpu.memory_space<vmem>>, vector<1x1x8xf32>
    %73 = vector.shape_cast %72 : vector<1x1x8xf32> to vector<1x8xf32>
    %74 = vector.broadcast %73 : vector<1x8xf32> to vector<128x8xf32>
    %75 = arith.addf %71, %74 : vector<128x8xf32>
    %76 = arith.truncf %75 : vector<128x8xf32> to vector<128x8xbf16>
    %c5 = arith.constant 5 : index
    %c0_41 = arith.constant 0 : index
    %c0_42 = arith.constant 0 : index
    %77 = vector.load %arg5[%c5, %c0_41, %c0_42] : memref<12x32x8xbf16, #tpu.memory_space<vmem>>, vector<1x32x8xbf16>
    %78 = vector.shape_cast %77 : vector<1x32x8xbf16> to vector<32x8xbf16>
    %cst_43 = arith.constant dense<0.000000e+00> : vector<128x8xf32>
    %79 = tpu.matmul %8, %78, %cst_43 {dimension_numbers = #tpu.dot_dimension_numbers<[1], [0], [0], [1], [0, 0, 1, 1], [], []>} : vector<128x32xbf16>, vector<32x8xbf16>, vector<128x8xf32> -> vector<128x8xf32>
    %80 = arith.truncf %79 : vector<128x8xf32> to vector<128x8xbf16>
    %c9 = arith.constant 9 : index
    %c0_44 = arith.constant 0 : index
    %c0_45 = arith.constant 0 : index
    %81 = vector.load %arg5[%c9, %c0_44, %c0_45] : memref<12x32x8xbf16, #tpu.memory_space<vmem>>, vector<1x32x8xbf16>
    %82 = vector.shape_cast %81 : vector<1x32x8xbf16> to vector<32x8xbf16>
    %cst_46 = arith.constant dense<0.000000e+00> : vector<128x8xf32>
    %83 = tpu.matmul %9, %82, %cst_46 {dimension_numbers = #tpu.dot_dimension_numbers<[1], [0], [0], [1], [0, 0, 1, 1], [], []>} : vector<128x32xbf16>, vector<32x8xbf16>, vector<128x8xf32> -> vector<128x8xf32>
    %84 = arith.truncf %83 : vector<128x8xf32> to vector<128x8xbf16>
    %85 = vector.extract_strided_slice %76 {offsets = [0, 0], sizes = [64, 8], strides = [1, 1]} : vector<128x8xbf16> to vector<64x8xbf16>
    %86 = vector.extract_strided_slice %80 {offsets = [0, 0], sizes = [64, 8], strides = [1, 1]} : vector<128x8xbf16> to vector<64x8xbf16>
    %87 = vector.extract_strided_slice %84 {offsets = [0, 0], sizes = [64, 8], strides = [1, 1]} : vector<128x8xbf16> to vector<64x8xbf16>
    %cst_47 = arith.constant dense<0.000000e+00> : vector<64x64xf32>
    %88 = tpu.matmul %85, %86, %cst_47 {dimension_numbers = #tpu.dot_dimension_numbers<[1], [1], [0], [0], [0, 0, 1, 0], [], []>} : vector<64x8xbf16>, vector<64x8xbf16>, vector<64x64xf32> -> vector<64x64xf32>
    %cst_48 = arith.constant 0.353553385 : f32
    %89 = vector.broadcast %cst_48 : f32 to vector<64x64xf32>
    %90 = arith.mulf %88, %89 : vector<64x64xf32>
    %cst_49 = arith.constant dense<0xFF800000> : vector<64xf32>
    %91 = vector.multi_reduction <maximumf>, %90, %cst_49 [1] : vector<64x64xf32> to vector<64xf32>
    %92 = vector.shape_cast %91 : vector<64xf32> to vector<64x1xf32>
    %93 = vector.broadcast %92 : vector<64x1xf32> to vector<64x64xf32>
    %94 = arith.subf %90, %93 : vector<64x64xf32>
    %95 = math.exp %94 : vector<64x64xf32>
    %cst_50 = arith.constant dense<0.000000e+00> : vector<64xf32>
    %96 = vector.multi_reduction <add>, %95, %cst_50 [1] : vector<64x64xf32> to vector<64xf32>
    %97 = vector.shape_cast %96 : vector<64xf32> to vector<64x1xf32>
    %98 = tpu.reciprocal %97 {approx = true} : vector<64x1xf32> -> vector<64x1xf32>
    %99 = vector.broadcast %98 : vector<64x1xf32> to vector<64x64xf32>
    %100 = arith.mulf %95, %99 : vector<64x64xf32>
    %101 = arith.truncf %100 : vector<64x64xf32> to vector<64x64xbf16>
    %cst_51 = arith.constant dense<0.000000e+00> : vector<64x8xf32>
    %102 = tpu.matmul %101, %87, %cst_51 {dimension_numbers = #tpu.dot_dimension_numbers<[1], [0], [0], [1], [0, 0, 1, 1], [], []>} : vector<64x64xbf16>, vector<64x8xbf16>, vector<64x8xf32> -> vector<64x8xf32>
    %103 = vector.extract_strided_slice %76 {offsets = [64, 0], sizes = [64, 8], strides = [1, 1]} : vector<128x8xbf16> to vector<64x8xbf16>
    %104 = vector.extract_strided_slice %80 {offsets = [64, 0], sizes = [64, 8], strides = [1, 1]} : vector<128x8xbf16> to vector<64x8xbf16>
    %105 = vector.extract_strided_slice %84 {offsets = [64, 0], sizes = [64, 8], strides = [1, 1]} : vector<128x8xbf16> to vector<64x8xbf16>
    %cst_52 = arith.constant dense<0.000000e+00> : vector<64x64xf32>
    %106 = tpu.matmul %103, %104, %cst_52 {dimension_numbers = #tpu.dot_dimension_numbers<[1], [1], [0], [0], [0, 0, 1, 0], [], []>} : vector<64x8xbf16>, vector<64x8xbf16>, vector<64x64xf32> -> vector<64x64xf32>
    %cst_53 = arith.constant 0.353553385 : f32
    %107 = vector.broadcast %cst_53 : f32 to vector<64x64xf32>
    %108 = arith.mulf %106, %107 : vector<64x64xf32>
    %cst_54 = arith.constant dense<0xFF800000> : vector<64xf32>
    %109 = vector.multi_reduction <maximumf>, %108, %cst_54 [1] : vector<64x64xf32> to vector<64xf32>
    %110 = vector.shape_cast %109 : vector<64xf32> to vector<64x1xf32>
    %111 = vector.broadcast %110 : vector<64x1xf32> to vector<64x64xf32>
    %112 = arith.subf %108, %111 : vector<64x64xf32>
    %113 = math.exp %112 : vector<64x64xf32>
    %cst_55 = arith.constant dense<0.000000e+00> : vector<64xf32>
    %114 = vector.multi_reduction <add>, %113, %cst_55 [1] : vector<64x64xf32> to vector<64xf32>
    %115 = vector.shape_cast %114 : vector<64xf32> to vector<64x1xf32>
    %116 = tpu.reciprocal %115 {approx = true} : vector<64x1xf32> -> vector<64x1xf32>
    %117 = vector.broadcast %116 : vector<64x1xf32> to vector<64x64xf32>
    %118 = arith.mulf %113, %117 : vector<64x64xf32>
    %119 = arith.truncf %118 : vector<64x64xf32> to vector<64x64xbf16>
    %cst_56 = arith.constant dense<0.000000e+00> : vector<64x8xf32>
    %120 = tpu.matmul %119, %105, %cst_56 {dimension_numbers = #tpu.dot_dimension_numbers<[1], [0], [0], [1], [0, 0, 1, 1], [], []>} : vector<64x64xbf16>, vector<64x8xbf16>, vector<64x8xf32> -> vector<64x8xf32>
    %121 = tpu.concatenate %102, %120 in 0 : vector<64x8xf32>, vector<64x8xf32> -> vector<128x8xf32>
    %122 = arith.truncf %121 : vector<128x8xf32> to vector<128x8xbf16>
    %c1_57 = arith.constant 1 : index
    %c0_58 = arith.constant 0 : index
    %c0_59 = arith.constant 0 : index
    %123 = vector.load %arg7[%c1_57, %c0_58, %c0_59] : memref<4x8x32xbf16, #tpu.memory_space<vmem>>, vector<1x8x32xbf16>
    %124 = vector.shape_cast %123 : vector<1x8x32xbf16> to vector<8x32xbf16>
    %cst_60 = arith.constant dense<0.000000e+00> : vector<128x32xf32>
    %125 = tpu.matmul %122, %124, %cst_60 {dimension_numbers = #tpu.dot_dimension_numbers<[1], [0], [0], [1], [0, 0, 1, 1], [], []>} : vector<128x8xbf16>, vector<8x32xbf16>, vector<128x32xf32> -> vector<128x32xf32>
    %126 = arith.addf %68, %125 : vector<128x32xf32>
    %c2 = arith.constant 2 : index
    %c0_61 = arith.constant 0 : index
    %c0_62 = arith.constant 0 : index
    %127 = vector.load %arg5[%c2, %c0_61, %c0_62] : memref<12x32x8xbf16, #tpu.memory_space<vmem>>, vector<1x32x8xbf16>
    %128 = vector.shape_cast %127 : vector<1x32x8xbf16> to vector<32x8xbf16>
    %cst_63 = arith.constant dense<0.000000e+00> : vector<128x8xf32>
    %129 = tpu.matmul %8, %128, %cst_63 {dimension_numbers = #tpu.dot_dimension_numbers<[1], [0], [0], [1], [0, 0, 1, 1], [], []>} : vector<128x32xbf16>, vector<32x8xbf16>, vector<128x8xf32> -> vector<128x8xf32>
    %c2_64 = arith.constant 2 : index
    %c0_65 = arith.constant 0 : index
    %c0_66 = arith.constant 0 : index
    %130 = vector.load %arg6[%c2_64, %c0_65, %c0_66] : memref<4x1x8xf32, #tpu.memory_space<vmem>>, vector<1x1x8xf32>
    %131 = vector.shape_cast %130 : vector<1x1x8xf32> to vector<1x8xf32>
    %132 = vector.broadcast %131 : vector<1x8xf32> to vector<128x8xf32>
    %133 = arith.addf %129, %132 : vector<128x8xf32>
    %134 = arith.truncf %133 : vector<128x8xf32> to vector<128x8xbf16>
    %c6 = arith.constant 6 : index
    %c0_67 = arith.constant 0 : index
    %c0_68 = arith.constant 0 : index
    %135 = vector.load %arg5[%c6, %c0_67, %c0_68] : memref<12x32x8xbf16, #tpu.memory_space<vmem>>, vector<1x32x8xbf16>
    %136 = vector.shape_cast %135 : vector<1x32x8xbf16> to vector<32x8xbf16>
    %cst_69 = arith.constant dense<0.000000e+00> : vector<128x8xf32>
    %137 = tpu.matmul %8, %136, %cst_69 {dimension_numbers = #tpu.dot_dimension_numbers<[1], [0], [0], [1], [0, 0, 1, 1], [], []>} : vector<128x32xbf16>, vector<32x8xbf16>, vector<128x8xf32> -> vector<128x8xf32>
    %138 = arith.truncf %137 : vector<128x8xf32> to vector<128x8xbf16>
    %c10 = arith.constant 10 : index
    %c0_70 = arith.constant 0 : index
    %c0_71 = arith.constant 0 : index
    %139 = vector.load %arg5[%c10, %c0_70, %c0_71] : memref<12x32x8xbf16, #tpu.memory_space<vmem>>, vector<1x32x8xbf16>
    %140 = vector.shape_cast %139 : vector<1x32x8xbf16> to vector<32x8xbf16>
    %cst_72 = arith.constant dense<0.000000e+00> : vector<128x8xf32>
    %141 = tpu.matmul %9, %140, %cst_72 {dimension_numbers = #tpu.dot_dimension_numbers<[1], [0], [0], [1], [0, 0, 1, 1], [], []>} : vector<128x32xbf16>, vector<32x8xbf16>, vector<128x8xf32> -> vector<128x8xf32>
    %142 = arith.truncf %141 : vector<128x8xf32> to vector<128x8xbf16>
    %143 = vector.extract_strided_slice %134 {offsets = [0, 0], sizes = [64, 8], strides = [1, 1]} : vector<128x8xbf16> to vector<64x8xbf16>
    %144 = vector.extract_strided_slice %138 {offsets = [0, 0], sizes = [64, 8], strides = [1, 1]} : vector<128x8xbf16> to vector<64x8xbf16>
    %145 = vector.extract_strided_slice %142 {offsets = [0, 0], sizes = [64, 8], strides = [1, 1]} : vector<128x8xbf16> to vector<64x8xbf16>
    %cst_73 = arith.constant dense<0.000000e+00> : vector<64x64xf32>
    %146 = tpu.matmul %143, %144, %cst_73 {dimension_numbers = #tpu.dot_dimension_numbers<[1], [1], [0], [0], [0, 0, 1, 0], [], []>} : vector<64x8xbf16>, vector<64x8xbf16>, vector<64x64xf32> -> vector<64x64xf32>
    %cst_74 = arith.constant 0.353553385 : f32
    %147 = vector.broadcast %cst_74 : f32 to vector<64x64xf32>
    %148 = arith.mulf %146, %147 : vector<64x64xf32>
    %cst_75 = arith.constant dense<0xFF800000> : vector<64xf32>
    %149 = vector.multi_reduction <maximumf>, %148, %cst_75 [1] : vector<64x64xf32> to vector<64xf32>
    %150 = vector.shape_cast %149 : vector<64xf32> to vector<64x1xf32>
    %151 = vector.broadcast %150 : vector<64x1xf32> to vector<64x64xf32>
    %152 = arith.subf %148, %151 : vector<64x64xf32>
    %153 = math.exp %152 : vector<64x64xf32>
    %cst_76 = arith.constant dense<0.000000e+00> : vector<64xf32>
    %154 = vector.multi_reduction <add>, %153, %cst_76 [1] : vector<64x64xf32> to vector<64xf32>
    %155 = vector.shape_cast %154 : vector<64xf32> to vector<64x1xf32>
    %156 = tpu.reciprocal %155 {approx = true} : vector<64x1xf32> -> vector<64x1xf32>
    %157 = vector.broadcast %156 : vector<64x1xf32> to vector<64x64xf32>
    %158 = arith.mulf %153, %157 : vector<64x64xf32>
    %159 = arith.truncf %158 : vector<64x64xf32> to vector<64x64xbf16>
    %cst_77 = arith.constant dense<0.000000e+00> : vector<64x8xf32>
    %160 = tpu.matmul %159, %145, %cst_77 {dimension_numbers = #tpu.dot_dimension_numbers<[1], [0], [0], [1], [0, 0, 1, 1], [], []>} : vector<64x64xbf16>, vector<64x8xbf16>, vector<64x8xf32> -> vector<64x8xf32>
    %161 = vector.extract_strided_slice %134 {offsets = [64, 0], sizes = [64, 8], strides = [1, 1]} : vector<128x8xbf16> to vector<64x8xbf16>
    %162 = vector.extract_strided_slice %138 {offsets = [64, 0], sizes = [64, 8], strides = [1, 1]} : vector<128x8xbf16> to vector<64x8xbf16>
    %163 = vector.extract_strided_slice %142 {offsets = [64, 0], sizes = [64, 8], strides = [1, 1]} : vector<128x8xbf16> to vector<64x8xbf16>
    %cst_78 = arith.constant dense<0.000000e+00> : vector<64x64xf32>
    %164 = tpu.matmul %161, %162, %cst_78 {dimension_numbers = #tpu.dot_dimension_numbers<[1], [1], [0], [0], [0, 0, 1, 0], [], []>} : vector<64x8xbf16>, vector<64x8xbf16>, vector<64x64xf32> -> vector<64x64xf32>
    %cst_79 = arith.constant 0.353553385 : f32
    %165 = vector.broadcast %cst_79 : f32 to vector<64x64xf32>
    %166 = arith.mulf %164, %165 : vector<64x64xf32>
    %cst_80 = arith.constant dense<0xFF800000> : vector<64xf32>
    %167 = vector.multi_reduction <maximumf>, %166, %cst_80 [1] : vector<64x64xf32> to vector<64xf32>
    %168 = vector.shape_cast %167 : vector<64xf32> to vector<64x1xf32>
    %169 = vector.broadcast %168 : vector<64x1xf32> to vector<64x64xf32>
    %170 = arith.subf %166, %169 : vector<64x64xf32>
    %171 = math.exp %170 : vector<64x64xf32>
    %cst_81 = arith.constant dense<0.000000e+00> : vector<64xf32>
    %172 = vector.multi_reduction <add>, %171, %cst_81 [1] : vector<64x64xf32> to vector<64xf32>
    %173 = vector.shape_cast %172 : vector<64xf32> to vector<64x1xf32>
    %174 = tpu.reciprocal %173 {approx = true} : vector<64x1xf32> -> vector<64x1xf32>
    %175 = vector.broadcast %174 : vector<64x1xf32> to vector<64x64xf32>
    %176 = arith.mulf %171, %175 : vector<64x64xf32>
    %177 = arith.truncf %176 : vector<64x64xf32> to vector<64x64xbf16>
    %cst_82 = arith.constant dense<0.000000e+00> : vector<64x8xf32>
    %178 = tpu.matmul %177, %163, %cst_82 {dimension_numbers = #tpu.dot_dimension_numbers<[1], [0], [0], [1], [0, 0, 1, 1], [], []>} : vector<64x64xbf16>, vector<64x8xbf16>, vector<64x8xf32> -> vector<64x8xf32>
    %179 = tpu.concatenate %160, %178 in 0 : vector<64x8xf32>, vector<64x8xf32> -> vector<128x8xf32>
    %180 = arith.truncf %179 : vector<128x8xf32> to vector<128x8xbf16>
    %c2_83 = arith.constant 2 : index
    %c0_84 = arith.constant 0 : index
    %c0_85 = arith.constant 0 : index
    %181 = vector.load %arg7[%c2_83, %c0_84, %c0_85] : memref<4x8x32xbf16, #tpu.memory_space<vmem>>, vector<1x8x32xbf16>
    %182 = vector.shape_cast %181 : vector<1x8x32xbf16> to vector<8x32xbf16>
    %cst_86 = arith.constant dense<0.000000e+00> : vector<128x32xf32>
    %183 = tpu.matmul %180, %182, %cst_86 {dimension_numbers = #tpu.dot_dimension_numbers<[1], [0], [0], [1], [0, 0, 1, 1], [], []>} : vector<128x8xbf16>, vector<8x32xbf16>, vector<128x32xf32> -> vector<128x32xf32>
    %184 = arith.addf %126, %183 : vector<128x32xf32>
    %c3 = arith.constant 3 : index
    %c0_87 = arith.constant 0 : index
    %c0_88 = arith.constant 0 : index
    %185 = vector.load %arg5[%c3, %c0_87, %c0_88] : memref<12x32x8xbf16, #tpu.memory_space<vmem>>, vector<1x32x8xbf16>
    %186 = vector.shape_cast %185 : vector<1x32x8xbf16> to vector<32x8xbf16>
    %cst_89 = arith.constant dense<0.000000e+00> : vector<128x8xf32>
    %187 = tpu.matmul %8, %186, %cst_89 {dimension_numbers = #tpu.dot_dimension_numbers<[1], [0], [0], [1], [0, 0, 1, 1], [], []>} : vector<128x32xbf16>, vector<32x8xbf16>, vector<128x8xf32> -> vector<128x8xf32>
    %c3_90 = arith.constant 3 : index
    %c0_91 = arith.constant 0 : index
    %c0_92 = arith.constant 0 : index
    %188 = vector.load %arg6[%c3_90, %c0_91, %c0_92] : memref<4x1x8xf32, #tpu.memory_space<vmem>>, vector<1x1x8xf32>
    %189 = vector.shape_cast %188 : vector<1x1x8xf32> to vector<1x8xf32>
    %190 = vector.broadcast %189 : vector<1x8xf32> to vector<128x8xf32>
    %191 = arith.addf %187, %190 : vector<128x8xf32>
    %192 = arith.truncf %191 : vector<128x8xf32> to vector<128x8xbf16>
    %c7 = arith.constant 7 : index
    %c0_93 = arith.constant 0 : index
    %c0_94 = arith.constant 0 : index
    %193 = vector.load %arg5[%c7, %c0_93, %c0_94] : memref<12x32x8xbf16, #tpu.memory_space<vmem>>, vector<1x32x8xbf16>
    %194 = vector.shape_cast %193 : vector<1x32x8xbf16> to vector<32x8xbf16>
    %cst_95 = arith.constant dense<0.000000e+00> : vector<128x8xf32>
    %195 = tpu.matmul %8, %194, %cst_95 {dimension_numbers = #tpu.dot_dimension_numbers<[1], [0], [0], [1], [0, 0, 1, 1], [], []>} : vector<128x32xbf16>, vector<32x8xbf16>, vector<128x8xf32> -> vector<128x8xf32>
    %196 = arith.truncf %195 : vector<128x8xf32> to vector<128x8xbf16>
    %c11 = arith.constant 11 : index
    %c0_96 = arith.constant 0 : index
    %c0_97 = arith.constant 0 : index
    %197 = vector.load %arg5[%c11, %c0_96, %c0_97] : memref<12x32x8xbf16, #tpu.memory_space<vmem>>, vector<1x32x8xbf16>
    %198 = vector.shape_cast %197 : vector<1x32x8xbf16> to vector<32x8xbf16>
    %cst_98 = arith.constant dense<0.000000e+00> : vector<128x8xf32>
    %199 = tpu.matmul %9, %198, %cst_98 {dimension_numbers = #tpu.dot_dimension_numbers<[1], [0], [0], [1], [0, 0, 1, 1], [], []>} : vector<128x32xbf16>, vector<32x8xbf16>, vector<128x8xf32> -> vector<128x8xf32>
    %200 = arith.truncf %199 : vector<128x8xf32> to vector<128x8xbf16>
    %201 = vector.extract_strided_slice %192 {offsets = [0, 0], sizes = [64, 8], strides = [1, 1]} : vector<128x8xbf16> to vector<64x8xbf16>
    %202 = vector.extract_strided_slice %196 {offsets = [0, 0], sizes = [64, 8], strides = [1, 1]} : vector<128x8xbf16> to vector<64x8xbf16>
    %203 = vector.extract_strided_slice %200 {offsets = [0, 0], sizes = [64, 8], strides = [1, 1]} : vector<128x8xbf16> to vector<64x8xbf16>
    %cst_99 = arith.constant dense<0.000000e+00> : vector<64x64xf32>
    %204 = tpu.matmul %201, %202, %cst_99 {dimension_numbers = #tpu.dot_dimension_numbers<[1], [1], [0], [0], [0, 0, 1, 0], [], []>} : vector<64x8xbf16>, vector<64x8xbf16>, vector<64x64xf32> -> vector<64x64xf32>
    %cst_100 = arith.constant 0.353553385 : f32
    %205 = vector.broadcast %cst_100 : f32 to vector<64x64xf32>
    %206 = arith.mulf %204, %205 : vector<64x64xf32>
    %cst_101 = arith.constant dense<0xFF800000> : vector<64xf32>
    %207 = vector.multi_reduction <maximumf>, %206, %cst_101 [1] : vector<64x64xf32> to vector<64xf32>
    %208 = vector.shape_cast %207 : vector<64xf32> to vector<64x1xf32>
    %209 = vector.broadcast %208 : vector<64x1xf32> to vector<64x64xf32>
    %210 = arith.subf %206, %209 : vector<64x64xf32>
    %211 = math.exp %210 : vector<64x64xf32>
    %cst_102 = arith.constant dense<0.000000e+00> : vector<64xf32>
    %212 = vector.multi_reduction <add>, %211, %cst_102 [1] : vector<64x64xf32> to vector<64xf32>
    %213 = vector.shape_cast %212 : vector<64xf32> to vector<64x1xf32>
    %214 = tpu.reciprocal %213 {approx = true} : vector<64x1xf32> -> vector<64x1xf32>
    %215 = vector.broadcast %214 : vector<64x1xf32> to vector<64x64xf32>
    %216 = arith.mulf %211, %215 : vector<64x64xf32>
    %217 = arith.truncf %216 : vector<64x64xf32> to vector<64x64xbf16>
    %cst_103 = arith.constant dense<0.000000e+00> : vector<64x8xf32>
    %218 = tpu.matmul %217, %203, %cst_103 {dimension_numbers = #tpu.dot_dimension_numbers<[1], [0], [0], [1], [0, 0, 1, 1], [], []>} : vector<64x64xbf16>, vector<64x8xbf16>, vector<64x8xf32> -> vector<64x8xf32>
    %219 = vector.extract_strided_slice %192 {offsets = [64, 0], sizes = [64, 8], strides = [1, 1]} : vector<128x8xbf16> to vector<64x8xbf16>
    %220 = vector.extract_strided_slice %196 {offsets = [64, 0], sizes = [64, 8], strides = [1, 1]} : vector<128x8xbf16> to vector<64x8xbf16>
    %221 = vector.extract_strided_slice %200 {offsets = [64, 0], sizes = [64, 8], strides = [1, 1]} : vector<128x8xbf16> to vector<64x8xbf16>
    %cst_104 = arith.constant dense<0.000000e+00> : vector<64x64xf32>
    %222 = tpu.matmul %219, %220, %cst_104 {dimension_numbers = #tpu.dot_dimension_numbers<[1], [1], [0], [0], [0, 0, 1, 0], [], []>} : vector<64x8xbf16>, vector<64x8xbf16>, vector<64x64xf32> -> vector<64x64xf32>
    %cst_105 = arith.constant 0.353553385 : f32
    %223 = vector.broadcast %cst_105 : f32 to vector<64x64xf32>
    %224 = arith.mulf %222, %223 : vector<64x64xf32>
    %cst_106 = arith.constant dense<0xFF800000> : vector<64xf32>
    %225 = vector.multi_reduction <maximumf>, %224, %cst_106 [1] : vector<64x64xf32> to vector<64xf32>
    %226 = vector.shape_cast %225 : vector<64xf32> to vector<64x1xf32>
    %227 = vector.broadcast %226 : vector<64x1xf32> to vector<64x64xf32>
    %228 = arith.subf %224, %227 : vector<64x64xf32>
    %229 = math.exp %228 : vector<64x64xf32>
    %cst_107 = arith.constant dense<0.000000e+00> : vector<64xf32>
    %230 = vector.multi_reduction <add>, %229, %cst_107 [1] : vector<64x64xf32> to vector<64xf32>
    %231 = vector.shape_cast %230 : vector<64xf32> to vector<64x1xf32>
    %232 = tpu.reciprocal %231 {approx = true} : vector<64x1xf32> -> vector<64x1xf32>
    %233 = vector.broadcast %232 : vector<64x1xf32> to vector<64x64xf32>
    %234 = arith.mulf %229, %233 : vector<64x64xf32>
    %235 = arith.truncf %234 : vector<64x64xf32> to vector<64x64xbf16>
    %cst_108 = arith.constant dense<0.000000e+00> : vector<64x8xf32>
    %236 = tpu.matmul %235, %221, %cst_108 {dimension_numbers = #tpu.dot_dimension_numbers<[1], [0], [0], [1], [0, 0, 1, 1], [], []>} : vector<64x64xbf16>, vector<64x8xbf16>, vector<64x8xf32> -> vector<64x8xf32>
    %237 = tpu.concatenate %218, %236 in 0 : vector<64x8xf32>, vector<64x8xf32> -> vector<128x8xf32>
    %238 = arith.truncf %237 : vector<128x8xf32> to vector<128x8xbf16>
    %c3_109 = arith.constant 3 : index
    %c0_110 = arith.constant 0 : index
    %c0_111 = arith.constant 0 : index
    %239 = vector.load %arg7[%c3_109, %c0_110, %c0_111] : memref<4x8x32xbf16, #tpu.memory_space<vmem>>, vector<1x8x32xbf16>
    %240 = vector.shape_cast %239 : vector<1x8x32xbf16> to vector<8x32xbf16>
    %cst_112 = arith.constant dense<0.000000e+00> : vector<128x32xf32>
    %241 = tpu.matmul %238, %240, %cst_112 {dimension_numbers = #tpu.dot_dimension_numbers<[1], [0], [0], [1], [0, 0, 1, 1], [], []>} : vector<128x8xbf16>, vector<8x32xbf16>, vector<128x32xf32> -> vector<128x32xf32>
    %242 = arith.addf %184, %241 : vector<128x32xf32>
    %243 = arith.addf %5, %242 : vector<128x32xf32>
    %c1_113 = arith.constant 1 : index
    %c0_114 = arith.constant 0 : index
    %244 = vector.load %arg13[%c1_113, %c0_114] : memref<16x256xf32, #tpu.memory_space<vmem>>, vector<1x32xf32>
    %245 = vector.broadcast %244 : vector<1x32xf32> to vector<128x32xf32>
    %246 = arith.addf %243, %245 : vector<128x32xf32>
    %c2_115 = arith.constant 2 : index
    %c0_116 = arith.constant 0 : index
    %247 = vector.load %arg13[%c2_115, %c0_116] : memref<16x256xf32, #tpu.memory_space<vmem>>, vector<1x32xf32>
    %c3_117 = arith.constant 3 : index
    %c0_118 = arith.constant 0 : index
    %248 = vector.load %arg13[%c3_117, %c0_118] : memref<16x256xf32, #tpu.memory_space<vmem>>, vector<1x32xf32>
    %cst_119 = arith.constant dense<0.000000e+00> : vector<128xf32>
    %249 = vector.multi_reduction <add>, %246, %cst_119 [1] : vector<128x32xf32> to vector<128xf32>
    %250 = vector.shape_cast %249 : vector<128xf32> to vector<128x1xf32>
    %cst_120 = arith.constant 3.200000e+01 : f32
    %251 = vector.broadcast %cst_120 : f32 to vector<128x1xf32>
    %252 = arith.divf %250, %251 : vector<128x1xf32>
    %253 = arith.mulf %246, %246 : vector<128x32xf32>
    %cst_121 = arith.constant dense<0.000000e+00> : vector<128xf32>
    %254 = vector.multi_reduction <add>, %253, %cst_121 [1] : vector<128x32xf32> to vector<128xf32>
    %255 = vector.shape_cast %254 : vector<128xf32> to vector<128x1xf32>
    %cst_122 = arith.constant 3.200000e+01 : f32
    %256 = vector.broadcast %cst_122 : f32 to vector<128x1xf32>
    %257 = arith.divf %255, %256 : vector<128x1xf32>
    %258 = arith.mulf %252, %252 : vector<128x1xf32>
    %259 = arith.subf %257, %258 : vector<128x1xf32>
    %260 = vector.broadcast %252 : vector<128x1xf32> to vector<128x32xf32>
    %261 = arith.subf %246, %260 : vector<128x32xf32>
    %cst_123 = arith.constant 9.99999974E-6 : f32
    %262 = vector.broadcast %cst_123 : f32 to vector<128x1xf32>
    %263 = arith.addf %259, %262 : vector<128x1xf32>
    %264 = math.rsqrt %263 : vector<128x1xf32>
    %265 = vector.broadcast %264 : vector<128x1xf32> to vector<128x32xf32>
    %266 = arith.mulf %261, %265 : vector<128x32xf32>
    %267 = vector.broadcast %247 : vector<1x32xf32> to vector<128x32xf32>
    %268 = arith.mulf %266, %267 : vector<128x32xf32>
    %269 = vector.broadcast %248 : vector<1x32xf32> to vector<128x32xf32>
    %270 = arith.addf %268, %269 : vector<128x32xf32>
    %271 = arith.truncf %270 : vector<128x32xf32> to vector<128x32xbf16>
    %c0_124 = arith.constant 0 : index
    %c0_125 = arith.constant 0 : index
    %272 = vector.load %arg8[%c0_124, %c0_125] : memref<32x64xbf16, #tpu.memory_space<vmem>>, vector<32x64xbf16>
    %cst_126 = arith.constant dense<0.000000e+00> : vector<128x64xf32>
    %273 = tpu.matmul %271, %272, %cst_126 {dimension_numbers = #tpu.dot_dimension_numbers<[1], [0], [0], [1], [0, 0, 1, 1], [], []>} : vector<128x32xbf16>, vector<32x64xbf16>, vector<128x64xf32> -> vector<128x64xf32>
    %c4_127 = arith.constant 4 : index
    %c0_128 = arith.constant 0 : index
    %274 = vector.load %arg13[%c4_127, %c0_128] : memref<16x256xf32, #tpu.memory_space<vmem>>, vector<1x64xf32>
    %275 = vector.broadcast %274 : vector<1x64xf32> to vector<128x64xf32>
    %276 = arith.addf %273, %275 : vector<128x64xf32>
    %cst_129 = arith.constant 0.000000e+00 : f32
    %277 = vector.broadcast %cst_129 : f32 to vector<128x64xf32>
    %278 = arith.maximumf %276, %277 : vector<128x64xf32>
    %279 = arith.truncf %278 : vector<128x64xf32> to vector<128x64xbf16>
    %c0_130 = arith.constant 0 : index
    %c0_131 = arith.constant 0 : index
    %280 = vector.load %arg9[%c0_130, %c0_131] : memref<64x32xbf16, #tpu.memory_space<vmem>>, vector<64x32xbf16>
    %cst_132 = arith.constant dense<0.000000e+00> : vector<128x32xf32>
    %281 = tpu.matmul %279, %280, %cst_132 {dimension_numbers = #tpu.dot_dimension_numbers<[1], [0], [0], [1], [0, 0, 1, 1], [], []>} : vector<128x64xbf16>, vector<64x32xbf16>, vector<128x32xf32> -> vector<128x32xf32>
    %c5_133 = arith.constant 5 : index
    %c0_134 = arith.constant 0 : index
    %282 = vector.load %arg13[%c5_133, %c0_134] : memref<16x256xf32, #tpu.memory_space<vmem>>, vector<1x32xf32>
    %283 = vector.broadcast %282 : vector<1x32xf32> to vector<128x32xf32>
    %284 = arith.addf %281, %283 : vector<128x32xf32>
    %285 = arith.addf %270, %284 : vector<128x32xf32>
    %c6_135 = arith.constant 6 : index
    %c0_136 = arith.constant 0 : index
    %286 = vector.load %arg13[%c6_135, %c0_136] : memref<16x256xf32, #tpu.memory_space<vmem>>, vector<1x32xf32>
    %c7_137 = arith.constant 7 : index
    %c0_138 = arith.constant 0 : index
    %287 = vector.load %arg13[%c7_137, %c0_138] : memref<16x256xf32, #tpu.memory_space<vmem>>, vector<1x32xf32>
    %cst_139 = arith.constant dense<0.000000e+00> : vector<128xf32>
    %288 = vector.multi_reduction <add>, %285, %cst_139 [1] : vector<128x32xf32> to vector<128xf32>
    %289 = vector.shape_cast %288 : vector<128xf32> to vector<128x1xf32>
    %cst_140 = arith.constant 3.200000e+01 : f32
    %290 = vector.broadcast %cst_140 : f32 to vector<128x1xf32>
    %291 = arith.divf %289, %290 : vector<128x1xf32>
    %292 = arith.mulf %285, %285 : vector<128x32xf32>
    %cst_141 = arith.constant dense<0.000000e+00> : vector<128xf32>
    %293 = vector.multi_reduction <add>, %292, %cst_141 [1] : vector<128x32xf32> to vector<128xf32>
    %294 = vector.shape_cast %293 : vector<128xf32> to vector<128x1xf32>
    %cst_142 = arith.constant 3.200000e+01 : f32
    %295 = vector.broadcast %cst_142 : f32 to vector<128x1xf32>
    %296 = arith.divf %294, %295 : vector<128x1xf32>
    %297 = arith.mulf %291, %291 : vector<128x1xf32>
    %298 = arith.subf %296, %297 : vector<128x1xf32>
    %299 = vector.broadcast %291 : vector<128x1xf32> to vector<128x32xf32>
    %300 = arith.subf %285, %299 : vector<128x32xf32>
    %cst_143 = arith.constant 9.99999974E-6 : f32
    %301 = vector.broadcast %cst_143 : f32 to vector<128x1xf32>
    %302 = arith.addf %298, %301 : vector<128x1xf32>
    %303 = math.rsqrt %302 : vector<128x1xf32>
    %304 = vector.broadcast %303 : vector<128x1xf32> to vector<128x32xf32>
    %305 = arith.mulf %300, %304 : vector<128x32xf32>
    %306 = vector.broadcast %286 : vector<1x32xf32> to vector<128x32xf32>
    %307 = arith.mulf %305, %306 : vector<128x32xf32>
    %308 = vector.broadcast %287 : vector<1x32xf32> to vector<128x32xf32>
    %309 = arith.addf %307, %308 : vector<128x32xf32>
    %c8_144 = arith.constant 8 : index
    %c0_145 = arith.constant 0 : index
    %310 = vector.load %arg13[%c8_144, %c0_145] : memref<16x256xf32, #tpu.memory_space<vmem>>, vector<1x32xf32>
    %cst_146 = arith.constant 0.000000e+00 : f32
    %311 = vector.broadcast %cst_146 : f32 to vector<128x32xf32>
    %c9_i32 = arith.constant 9 : i32
    %312 = tpu.dynamic_rotate %309 by %c9_i32 dim 0 : vector<128x32xf32>, i32 -> vector<128x32xf32>
    %c0_147 = arith.constant 0 : index
    %c0_148 = arith.constant 0 : index
    %c0_149 = arith.constant 0 : index
    %313 = vector.load %arg3[%c0_147, %c0_148, %c0_149] : memref<9x128x1xf32, #tpu.memory_space<vmem>>, vector<1x128x1xf32>
    %314 = vector.shape_cast %313 : vector<1x128x1xf32> to vector<128x1xf32>
    %315 = vector.broadcast %314 : vector<128x1xf32> to vector<128x32xf32>
    %316 = arith.mulf %312, %315 : vector<128x32xf32>
    %317 = arith.truncf %316 : vector<128x32xf32> to vector<128x32xbf16>
    %c0_150 = arith.constant 0 : index
    %c0_151 = arith.constant 0 : index
    %c0_152 = arith.constant 0 : index
    %318 = vector.load %arg10[%c0_150, %c0_151, %c0_152] : memref<9x32x32xbf16, #tpu.memory_space<vmem>>, vector<1x32x32xbf16>
    %319 = vector.shape_cast %318 : vector<1x32x32xbf16> to vector<32x32xbf16>
    %cst_153 = arith.constant dense<0.000000e+00> : vector<128x32xf32>
    %320 = tpu.matmul %317, %319, %cst_153 {dimension_numbers = #tpu.dot_dimension_numbers<[1], [0], [0], [1], [0, 0, 1, 1], [], []>} : vector<128x32xbf16>, vector<32x32xbf16>, vector<128x32xf32> -> vector<128x32xf32>
    %321 = arith.addf %311, %320 : vector<128x32xf32>
    %c8_i32 = arith.constant 8 : i32
    %322 = tpu.dynamic_rotate %309 by %c8_i32 dim 0 : vector<128x32xf32>, i32 -> vector<128x32xf32>
    %c1_154 = arith.constant 1 : index
    %c0_155 = arith.constant 0 : index
    %c0_156 = arith.constant 0 : index
    %323 = vector.load %arg3[%c1_154, %c0_155, %c0_156] : memref<9x128x1xf32, #tpu.memory_space<vmem>>, vector<1x128x1xf32>
    %324 = vector.shape_cast %323 : vector<1x128x1xf32> to vector<128x1xf32>
    %325 = vector.broadcast %324 : vector<128x1xf32> to vector<128x32xf32>
    %326 = arith.mulf %322, %325 : vector<128x32xf32>
    %327 = arith.truncf %326 : vector<128x32xf32> to vector<128x32xbf16>
    %c1_157 = arith.constant 1 : index
    %c0_158 = arith.constant 0 : index
    %c0_159 = arith.constant 0 : index
    %328 = vector.load %arg10[%c1_157, %c0_158, %c0_159] : memref<9x32x32xbf16, #tpu.memory_space<vmem>>, vector<1x32x32xbf16>
    %329 = vector.shape_cast %328 : vector<1x32x32xbf16> to vector<32x32xbf16>
    %cst_160 = arith.constant dense<0.000000e+00> : vector<128x32xf32>
    %330 = tpu.matmul %327, %329, %cst_160 {dimension_numbers = #tpu.dot_dimension_numbers<[1], [0], [0], [1], [0, 0, 1, 1], [], []>} : vector<128x32xbf16>, vector<32x32xbf16>, vector<128x32xf32> -> vector<128x32xf32>
    %331 = arith.addf %321, %330 : vector<128x32xf32>
    %c7_i32 = arith.constant 7 : i32
    %332 = tpu.dynamic_rotate %309 by %c7_i32 dim 0 : vector<128x32xf32>, i32 -> vector<128x32xf32>
    %c2_161 = arith.constant 2 : index
    %c0_162 = arith.constant 0 : index
    %c0_163 = arith.constant 0 : index
    %333 = vector.load %arg3[%c2_161, %c0_162, %c0_163] : memref<9x128x1xf32, #tpu.memory_space<vmem>>, vector<1x128x1xf32>
    %334 = vector.shape_cast %333 : vector<1x128x1xf32> to vector<128x1xf32>
    %335 = vector.broadcast %334 : vector<128x1xf32> to vector<128x32xf32>
    %336 = arith.mulf %332, %335 : vector<128x32xf32>
    %337 = arith.truncf %336 : vector<128x32xf32> to vector<128x32xbf16>
    %c2_164 = arith.constant 2 : index
    %c0_165 = arith.constant 0 : index
    %c0_166 = arith.constant 0 : index
    %338 = vector.load %arg10[%c2_164, %c0_165, %c0_166] : memref<9x32x32xbf16, #tpu.memory_space<vmem>>, vector<1x32x32xbf16>
    %339 = vector.shape_cast %338 : vector<1x32x32xbf16> to vector<32x32xbf16>
    %cst_167 = arith.constant dense<0.000000e+00> : vector<128x32xf32>
    %340 = tpu.matmul %337, %339, %cst_167 {dimension_numbers = #tpu.dot_dimension_numbers<[1], [0], [0], [1], [0, 0, 1, 1], [], []>} : vector<128x32xbf16>, vector<32x32xbf16>, vector<128x32xf32> -> vector<128x32xf32>
    %341 = arith.addf %331, %340 : vector<128x32xf32>
    %c1_i32 = arith.constant 1 : i32
    %342 = tpu.dynamic_rotate %309 by %c1_i32 dim 0 : vector<128x32xf32>, i32 -> vector<128x32xf32>
    %c3_168 = arith.constant 3 : index
    %c0_169 = arith.constant 0 : index
    %c0_170 = arith.constant 0 : index
    %343 = vector.load %arg3[%c3_168, %c0_169, %c0_170] : memref<9x128x1xf32, #tpu.memory_space<vmem>>, vector<1x128x1xf32>
    %344 = vector.shape_cast %343 : vector<1x128x1xf32> to vector<128x1xf32>
    %345 = vector.broadcast %344 : vector<128x1xf32> to vector<128x32xf32>
    %346 = arith.mulf %342, %345 : vector<128x32xf32>
    %347 = arith.truncf %346 : vector<128x32xf32> to vector<128x32xbf16>
    %c3_171 = arith.constant 3 : index
    %c0_172 = arith.constant 0 : index
    %c0_173 = arith.constant 0 : index
    %348 = vector.load %arg10[%c3_171, %c0_172, %c0_173] : memref<9x32x32xbf16, #tpu.memory_space<vmem>>, vector<1x32x32xbf16>
    %349 = vector.shape_cast %348 : vector<1x32x32xbf16> to vector<32x32xbf16>
    %cst_174 = arith.constant dense<0.000000e+00> : vector<128x32xf32>
    %350 = tpu.matmul %347, %349, %cst_174 {dimension_numbers = #tpu.dot_dimension_numbers<[1], [0], [0], [1], [0, 0, 1, 1], [], []>} : vector<128x32xbf16>, vector<32x32xbf16>, vector<128x32xf32> -> vector<128x32xf32>
    %351 = arith.addf %341, %350 : vector<128x32xf32>
    %352 = arith.truncf %309 : vector<128x32xf32> to vector<128x32xbf16>
    %c4_175 = arith.constant 4 : index
    %c0_176 = arith.constant 0 : index
    %c0_177 = arith.constant 0 : index
    %353 = vector.load %arg10[%c4_175, %c0_176, %c0_177] : memref<9x32x32xbf16, #tpu.memory_space<vmem>>, vector<1x32x32xbf16>
    %354 = vector.shape_cast %353 : vector<1x32x32xbf16> to vector<32x32xbf16>
    %cst_178 = arith.constant dense<0.000000e+00> : vector<128x32xf32>
    %355 = tpu.matmul %352, %354, %cst_178 {dimension_numbers = #tpu.dot_dimension_numbers<[1], [0], [0], [1], [0, 0, 1, 1], [], []>} : vector<128x32xbf16>, vector<32x32xbf16>, vector<128x32xf32> -> vector<128x32xf32>
    %356 = arith.addf %351, %355 : vector<128x32xf32>
    %c127_i32 = arith.constant 127 : i32
    %357 = tpu.dynamic_rotate %309 by %c127_i32 dim 0 : vector<128x32xf32>, i32 -> vector<128x32xf32>
    %c5_179 = arith.constant 5 : index
    %c0_180 = arith.constant 0 : index
    %c0_181 = arith.constant 0 : index
    %358 = vector.load %arg3[%c5_179, %c0_180, %c0_181] : memref<9x128x1xf32, #tpu.memory_space<vmem>>, vector<1x128x1xf32>
    %359 = vector.shape_cast %358 : vector<1x128x1xf32> to vector<128x1xf32>
    %360 = vector.broadcast %359 : vector<128x1xf32> to vector<128x32xf32>
    %361 = arith.mulf %357, %360 : vector<128x32xf32>
    %362 = arith.truncf %361 : vector<128x32xf32> to vector<128x32xbf16>
    %c5_182 = arith.constant 5 : index
    %c0_183 = arith.constant 0 : index
    %c0_184 = arith.constant 0 : index
    %363 = vector.load %arg10[%c5_182, %c0_183, %c0_184] : memref<9x32x32xbf16, #tpu.memory_space<vmem>>, vector<1x32x32xbf16>
    %364 = vector.shape_cast %363 : vector<1x32x32xbf16> to vector<32x32xbf16>
    %cst_185 = arith.constant dense<0.000000e+00> : vector<128x32xf32>
    %365 = tpu.matmul %362, %364, %cst_185 {dimension_numbers = #tpu.dot_dimension_numbers<[1], [0], [0], [1], [0, 0, 1, 1], [], []>} : vector<128x32xbf16>, vector<32x32xbf16>, vector<128x32xf32> -> vector<128x32xf32>
    %366 = arith.addf %356, %365 : vector<128x32xf32>
    %c121_i32 = arith.constant 121 : i32
    %367 = tpu.dynamic_rotate %309 by %c121_i32 dim 0 : vector<128x32xf32>, i32 -> vector<128x32xf32>
    %c6_186 = arith.constant 6 : index
    %c0_187 = arith.constant 0 : index
    %c0_188 = arith.constant 0 : index
    %368 = vector.load %arg3[%c6_186, %c0_187, %c0_188] : memref<9x128x1xf32, #tpu.memory_space<vmem>>, vector<1x128x1xf32>
    %369 = vector.shape_cast %368 : vector<1x128x1xf32> to vector<128x1xf32>
    %370 = vector.broadcast %369 : vector<128x1xf32> to vector<128x32xf32>
    %371 = arith.mulf %367, %370 : vector<128x32xf32>
    %372 = arith.truncf %371 : vector<128x32xf32> to vector<128x32xbf16>
    %c6_189 = arith.constant 6 : index
    %c0_190 = arith.constant 0 : index
    %c0_191 = arith.constant 0 : index
    %373 = vector.load %arg10[%c6_189, %c0_190, %c0_191] : memref<9x32x32xbf16, #tpu.memory_space<vmem>>, vector<1x32x32xbf16>
    %374 = vector.shape_cast %373 : vector<1x32x32xbf16> to vector<32x32xbf16>
    %cst_192 = arith.constant dense<0.000000e+00> : vector<128x32xf32>
    %375 = tpu.matmul %372, %374, %cst_192 {dimension_numbers = #tpu.dot_dimension_numbers<[1], [0], [0], [1], [0, 0, 1, 1], [], []>} : vector<128x32xbf16>, vector<32x32xbf16>, vector<128x32xf32> -> vector<128x32xf32>
    %376 = arith.addf %366, %375 : vector<128x32xf32>
    %c120_i32 = arith.constant 120 : i32
    %377 = tpu.dynamic_rotate %309 by %c120_i32 dim 0 : vector<128x32xf32>, i32 -> vector<128x32xf32>
    %c7_193 = arith.constant 7 : index
    %c0_194 = arith.constant 0 : index
    %c0_195 = arith.constant 0 : index
    %378 = vector.load %arg3[%c7_193, %c0_194, %c0_195] : memref<9x128x1xf32, #tpu.memory_space<vmem>>, vector<1x128x1xf32>
    %379 = vector.shape_cast %378 : vector<1x128x1xf32> to vector<128x1xf32>
    %380 = vector.broadcast %379 : vector<128x1xf32> to vector<128x32xf32>
    %381 = arith.mulf %377, %380 : vector<128x32xf32>
    %382 = arith.truncf %381 : vector<128x32xf32> to vector<128x32xbf16>
    %c7_196 = arith.constant 7 : index
    %c0_197 = arith.constant 0 : index
    %c0_198 = arith.constant 0 : index
    %383 = vector.load %arg10[%c7_196, %c0_197, %c0_198] : memref<9x32x32xbf16, #tpu.memory_space<vmem>>, vector<1x32x32xbf16>
    %384 = vector.shape_cast %383 : vector<1x32x32xbf16> to vector<32x32xbf16>
    %cst_199 = arith.constant dense<0.000000e+00> : vector<128x32xf32>
    %385 = tpu.matmul %382, %384, %cst_199 {dimension_numbers = #tpu.dot_dimension_numbers<[1], [0], [0], [1], [0, 0, 1, 1], [], []>} : vector<128x32xbf16>, vector<32x32xbf16>, vector<128x32xf32> -> vector<128x32xf32>
    %386 = arith.addf %376, %385 : vector<128x32xf32>
    %c119_i32 = arith.constant 119 : i32
    %387 = tpu.dynamic_rotate %309 by %c119_i32 dim 0 : vector<128x32xf32>, i32 -> vector<128x32xf32>
    %c8_200 = arith.constant 8 : index
    %c0_201 = arith.constant 0 : index
    %c0_202 = arith.constant 0 : index
    %388 = vector.load %arg3[%c8_200, %c0_201, %c0_202] : memref<9x128x1xf32, #tpu.memory_space<vmem>>, vector<1x128x1xf32>
    %389 = vector.shape_cast %388 : vector<1x128x1xf32> to vector<128x1xf32>
    %390 = vector.broadcast %389 : vector<128x1xf32> to vector<128x32xf32>
    %391 = arith.mulf %387, %390 : vector<128x32xf32>
    %392 = arith.truncf %391 : vector<128x32xf32> to vector<128x32xbf16>
    %c8_203 = arith.constant 8 : index
    %c0_204 = arith.constant 0 : index
    %c0_205 = arith.constant 0 : index
    %393 = vector.load %arg10[%c8_203, %c0_204, %c0_205] : memref<9x32x32xbf16, #tpu.memory_space<vmem>>, vector<1x32x32xbf16>
    %394 = vector.shape_cast %393 : vector<1x32x32xbf16> to vector<32x32xbf16>
    %cst_206 = arith.constant dense<0.000000e+00> : vector<128x32xf32>
    %395 = tpu.matmul %392, %394, %cst_206 {dimension_numbers = #tpu.dot_dimension_numbers<[1], [0], [0], [1], [0, 0, 1, 1], [], []>} : vector<128x32xbf16>, vector<32x32xbf16>, vector<128x32xf32> -> vector<128x32xf32>
    %396 = arith.addf %386, %395 : vector<128x32xf32>
    %397 = vector.broadcast %310 : vector<1x32xf32> to vector<128x32xf32>
    %398 = arith.addf %396, %397 : vector<128x32xf32>
    %c9_207 = arith.constant 9 : index
    %c0_208 = arith.constant 0 : index
    %399 = vector.load %arg13[%c9_207, %c0_208] : memref<16x256xf32, #tpu.memory_space<vmem>>, vector<1x224xf32>
    %cst_209 = arith.constant 0.000000e+00 : f32
    %400 = vector.broadcast %cst_209 : f32 to vector<128x224xf32>
    %c9_i32_210 = arith.constant 9 : i32
    %401 = tpu.dynamic_rotate %398 by %c9_i32_210 dim 0 : vector<128x32xf32>, i32 -> vector<128x32xf32>
    %c0_211 = arith.constant 0 : index
    %c0_212 = arith.constant 0 : index
    %c0_213 = arith.constant 0 : index
    %402 = vector.load %arg3[%c0_211, %c0_212, %c0_213] : memref<9x128x1xf32, #tpu.memory_space<vmem>>, vector<1x128x1xf32>
    %403 = vector.shape_cast %402 : vector<1x128x1xf32> to vector<128x1xf32>
    %404 = vector.broadcast %403 : vector<128x1xf32> to vector<128x32xf32>
    %405 = arith.mulf %401, %404 : vector<128x32xf32>
    %406 = arith.truncf %405 : vector<128x32xf32> to vector<128x32xbf16>
    %c0_214 = arith.constant 0 : index
    %c0_215 = arith.constant 0 : index
    %c0_216 = arith.constant 0 : index
    %407 = vector.load %arg11[%c0_214, %c0_215, %c0_216] : memref<9x32x224xbf16, #tpu.memory_space<vmem>>, vector<1x32x224xbf16>
    %408 = vector.shape_cast %407 : vector<1x32x224xbf16> to vector<32x224xbf16>
    %cst_217 = arith.constant dense<0.000000e+00> : vector<128x224xf32>
    %409 = tpu.matmul %406, %408, %cst_217 {dimension_numbers = #tpu.dot_dimension_numbers<[1], [0], [0], [1], [0, 0, 1, 1], [], []>} : vector<128x32xbf16>, vector<32x224xbf16>, vector<128x224xf32> -> vector<128x224xf32>
    %410 = arith.addf %400, %409 : vector<128x224xf32>
    %c8_i32_218 = arith.constant 8 : i32
    %411 = tpu.dynamic_rotate %398 by %c8_i32_218 dim 0 : vector<128x32xf32>, i32 -> vector<128x32xf32>
    %c1_219 = arith.constant 1 : index
    %c0_220 = arith.constant 0 : index
    %c0_221 = arith.constant 0 : index
    %412 = vector.load %arg3[%c1_219, %c0_220, %c0_221] : memref<9x128x1xf32, #tpu.memory_space<vmem>>, vector<1x128x1xf32>
    %413 = vector.shape_cast %412 : vector<1x128x1xf32> to vector<128x1xf32>
    %414 = vector.broadcast %413 : vector<128x1xf32> to vector<128x32xf32>
    %415 = arith.mulf %411, %414 : vector<128x32xf32>
    %416 = arith.truncf %415 : vector<128x32xf32> to vector<128x32xbf16>
    %c1_222 = arith.constant 1 : index
    %c0_223 = arith.constant 0 : index
    %c0_224 = arith.constant 0 : index
    %417 = vector.load %arg11[%c1_222, %c0_223, %c0_224] : memref<9x32x224xbf16, #tpu.memory_space<vmem>>, vector<1x32x224xbf16>
    %418 = vector.shape_cast %417 : vector<1x32x224xbf16> to vector<32x224xbf16>
    %cst_225 = arith.constant dense<0.000000e+00> : vector<128x224xf32>
    %419 = tpu.matmul %416, %418, %cst_225 {dimension_numbers = #tpu.dot_dimension_numbers<[1], [0], [0], [1], [0, 0, 1, 1], [], []>} : vector<128x32xbf16>, vector<32x224xbf16>, vector<128x224xf32> -> vector<128x224xf32>
    %420 = arith.addf %410, %419 : vector<128x224xf32>
    %c7_i32_226 = arith.constant 7 : i32
    %421 = tpu.dynamic_rotate %398 by %c7_i32_226 dim 0 : vector<128x32xf32>, i32 -> vector<128x32xf32>
    %c2_227 = arith.constant 2 : index
    %c0_228 = arith.constant 0 : index
    %c0_229 = arith.constant 0 : index
    %422 = vector.load %arg3[%c2_227, %c0_228, %c0_229] : memref<9x128x1xf32, #tpu.memory_space<vmem>>, vector<1x128x1xf32>
    %423 = vector.shape_cast %422 : vector<1x128x1xf32> to vector<128x1xf32>
    %424 = vector.broadcast %423 : vector<128x1xf32> to vector<128x32xf32>
    %425 = arith.mulf %421, %424 : vector<128x32xf32>
    %426 = arith.truncf %425 : vector<128x32xf32> to vector<128x32xbf16>
    %c2_230 = arith.constant 2 : index
    %c0_231 = arith.constant 0 : index
    %c0_232 = arith.constant 0 : index
    %427 = vector.load %arg11[%c2_230, %c0_231, %c0_232] : memref<9x32x224xbf16, #tpu.memory_space<vmem>>, vector<1x32x224xbf16>
    %428 = vector.shape_cast %427 : vector<1x32x224xbf16> to vector<32x224xbf16>
    %cst_233 = arith.constant dense<0.000000e+00> : vector<128x224xf32>
    %429 = tpu.matmul %426, %428, %cst_233 {dimension_numbers = #tpu.dot_dimension_numbers<[1], [0], [0], [1], [0, 0, 1, 1], [], []>} : vector<128x32xbf16>, vector<32x224xbf16>, vector<128x224xf32> -> vector<128x224xf32>
    %430 = arith.addf %420, %429 : vector<128x224xf32>
    %c1_i32_234 = arith.constant 1 : i32
    %431 = tpu.dynamic_rotate %398 by %c1_i32_234 dim 0 : vector<128x32xf32>, i32 -> vector<128x32xf32>
    %c3_235 = arith.constant 3 : index
    %c0_236 = arith.constant 0 : index
    %c0_237 = arith.constant 0 : index
    %432 = vector.load %arg3[%c3_235, %c0_236, %c0_237] : memref<9x128x1xf32, #tpu.memory_space<vmem>>, vector<1x128x1xf32>
    %433 = vector.shape_cast %432 : vector<1x128x1xf32> to vector<128x1xf32>
    %434 = vector.broadcast %433 : vector<128x1xf32> to vector<128x32xf32>
    %435 = arith.mulf %431, %434 : vector<128x32xf32>
    %436 = arith.truncf %435 : vector<128x32xf32> to vector<128x32xbf16>
    %c3_238 = arith.constant 3 : index
    %c0_239 = arith.constant 0 : index
    %c0_240 = arith.constant 0 : index
    %437 = vector.load %arg11[%c3_238, %c0_239, %c0_240] : memref<9x32x224xbf16, #tpu.memory_space<vmem>>, vector<1x32x224xbf16>
    %438 = vector.shape_cast %437 : vector<1x32x224xbf16> to vector<32x224xbf16>
    %cst_241 = arith.constant dense<0.000000e+00> : vector<128x224xf32>
    %439 = tpu.matmul %436, %438, %cst_241 {dimension_numbers = #tpu.dot_dimension_numbers<[1], [0], [0], [1], [0, 0, 1, 1], [], []>} : vector<128x32xbf16>, vector<32x224xbf16>, vector<128x224xf32> -> vector<128x224xf32>
    %440 = arith.addf %430, %439 : vector<128x224xf32>
    %441 = arith.truncf %398 : vector<128x32xf32> to vector<128x32xbf16>
    %c4_242 = arith.constant 4 : index
    %c0_243 = arith.constant 0 : index
    %c0_244 = arith.constant 0 : index
    %442 = vector.load %arg11[%c4_242, %c0_243, %c0_244] : memref<9x32x224xbf16, #tpu.memory_space<vmem>>, vector<1x32x224xbf16>
    %443 = vector.shape_cast %442 : vector<1x32x224xbf16> to vector<32x224xbf16>
    %cst_245 = arith.constant dense<0.000000e+00> : vector<128x224xf32>
    %444 = tpu.matmul %441, %443, %cst_245 {dimension_numbers = #tpu.dot_dimension_numbers<[1], [0], [0], [1], [0, 0, 1, 1], [], []>} : vector<128x32xbf16>, vector<32x224xbf16>, vector<128x224xf32> -> vector<128x224xf32>
    %445 = arith.addf %440, %444 : vector<128x224xf32>
    %c127_i32_246 = arith.constant 127 : i32
    %446 = tpu.dynamic_rotate %398 by %c127_i32_246 dim 0 : vector<128x32xf32>, i32 -> vector<128x32xf32>
    %c5_247 = arith.constant 5 : index
    %c0_248 = arith.constant 0 : index
    %c0_249 = arith.constant 0 : index
    %447 = vector.load %arg3[%c5_247, %c0_248, %c0_249] : memref<9x128x1xf32, #tpu.memory_space<vmem>>, vector<1x128x1xf32>
    %448 = vector.shape_cast %447 : vector<1x128x1xf32> to vector<128x1xf32>
    %449 = vector.broadcast %448 : vector<128x1xf32> to vector<128x32xf32>
    %450 = arith.mulf %446, %449 : vector<128x32xf32>
    %451 = arith.truncf %450 : vector<128x32xf32> to vector<128x32xbf16>
    %c5_250 = arith.constant 5 : index
    %c0_251 = arith.constant 0 : index
    %c0_252 = arith.constant 0 : index
    %452 = vector.load %arg11[%c5_250, %c0_251, %c0_252] : memref<9x32x224xbf16, #tpu.memory_space<vmem>>, vector<1x32x224xbf16>
    %453 = vector.shape_cast %452 : vector<1x32x224xbf16> to vector<32x224xbf16>
    %cst_253 = arith.constant dense<0.000000e+00> : vector<128x224xf32>
    %454 = tpu.matmul %451, %453, %cst_253 {dimension_numbers = #tpu.dot_dimension_numbers<[1], [0], [0], [1], [0, 0, 1, 1], [], []>} : vector<128x32xbf16>, vector<32x224xbf16>, vector<128x224xf32> -> vector<128x224xf32>
    %455 = arith.addf %445, %454 : vector<128x224xf32>
    %c121_i32_254 = arith.constant 121 : i32
    %456 = tpu.dynamic_rotate %398 by %c121_i32_254 dim 0 : vector<128x32xf32>, i32 -> vector<128x32xf32>
    %c6_255 = arith.constant 6 : index
    %c0_256 = arith.constant 0 : index
    %c0_257 = arith.constant 0 : index
    %457 = vector.load %arg3[%c6_255, %c0_256, %c0_257] : memref<9x128x1xf32, #tpu.memory_space<vmem>>, vector<1x128x1xf32>
    %458 = vector.shape_cast %457 : vector<1x128x1xf32> to vector<128x1xf32>
    %459 = vector.broadcast %458 : vector<128x1xf32> to vector<128x32xf32>
    %460 = arith.mulf %456, %459 : vector<128x32xf32>
    %461 = arith.truncf %460 : vector<128x32xf32> to vector<128x32xbf16>
    %c6_258 = arith.constant 6 : index
    %c0_259 = arith.constant 0 : index
    %c0_260 = arith.constant 0 : index
    %462 = vector.load %arg11[%c6_258, %c0_259, %c0_260] : memref<9x32x224xbf16, #tpu.memory_space<vmem>>, vector<1x32x224xbf16>
    %463 = vector.shape_cast %462 : vector<1x32x224xbf16> to vector<32x224xbf16>
    %cst_261 = arith.constant dense<0.000000e+00> : vector<128x224xf32>
    %464 = tpu.matmul %461, %463, %cst_261 {dimension_numbers = #tpu.dot_dimension_numbers<[1], [0], [0], [1], [0, 0, 1, 1], [], []>} : vector<128x32xbf16>, vector<32x224xbf16>, vector<128x224xf32> -> vector<128x224xf32>
    %465 = arith.addf %455, %464 : vector<128x224xf32>
    %c120_i32_262 = arith.constant 120 : i32
    %466 = tpu.dynamic_rotate %398 by %c120_i32_262 dim 0 : vector<128x32xf32>, i32 -> vector<128x32xf32>
    %c7_263 = arith.constant 7 : index
    %c0_264 = arith.constant 0 : index
    %c0_265 = arith.constant 0 : index
    %467 = vector.load %arg3[%c7_263, %c0_264, %c0_265] : memref<9x128x1xf32, #tpu.memory_space<vmem>>, vector<1x128x1xf32>
    %468 = vector.shape_cast %467 : vector<1x128x1xf32> to vector<128x1xf32>
    %469 = vector.broadcast %468 : vector<128x1xf32> to vector<128x32xf32>
    %470 = arith.mulf %466, %469 : vector<128x32xf32>
    %471 = arith.truncf %470 : vector<128x32xf32> to vector<128x32xbf16>
    %c7_266 = arith.constant 7 : index
    %c0_267 = arith.constant 0 : index
    %c0_268 = arith.constant 0 : index
    %472 = vector.load %arg11[%c7_266, %c0_267, %c0_268] : memref<9x32x224xbf16, #tpu.memory_space<vmem>>, vector<1x32x224xbf16>
    %473 = vector.shape_cast %472 : vector<1x32x224xbf16> to vector<32x224xbf16>
    %cst_269 = arith.constant dense<0.000000e+00> : vector<128x224xf32>
    %474 = tpu.matmul %471, %473, %cst_269 {dimension_numbers = #tpu.dot_dimension_numbers<[1], [0], [0], [1], [0, 0, 1, 1], [], []>} : vector<128x32xbf16>, vector<32x224xbf16>, vector<128x224xf32> -> vector<128x224xf32>
    %475 = arith.addf %465, %474 : vector<128x224xf32>
    %c119_i32_270 = arith.constant 119 : i32
    %476 = tpu.dynamic_rotate %398 by %c119_i32_270 dim 0 : vector<128x32xf32>, i32 -> vector<128x32xf32>
    %c8_271 = arith.constant 8 : index
    %c0_272 = arith.constant 0 : index
    %c0_273 = arith.constant 0 : index
    %477 = vector.load %arg3[%c8_271, %c0_272, %c0_273] : memref<9x128x1xf32, #tpu.memory_space<vmem>>, vector<1x128x1xf32>
    %478 = vector.shape_cast %477 : vector<1x128x1xf32> to vector<128x1xf32>
    %479 = vector.broadcast %478 : vector<128x1xf32> to vector<128x32xf32>
    %480 = arith.mulf %476, %479 : vector<128x32xf32>
    %481 = arith.truncf %480 : vector<128x32xf32> to vector<128x32xbf16>
    %c8_274 = arith.constant 8 : index
    %c0_275 = arith.constant 0 : index
    %c0_276 = arith.constant 0 : index
    %482 = vector.load %arg11[%c8_274, %c0_275, %c0_276] : memref<9x32x224xbf16, #tpu.memory_space<vmem>>, vector<1x32x224xbf16>
    %483 = vector.shape_cast %482 : vector<1x32x224xbf16> to vector<32x224xbf16>
    %cst_277 = arith.constant dense<0.000000e+00> : vector<128x224xf32>
    %484 = tpu.matmul %481, %483, %cst_277 {dimension_numbers = #tpu.dot_dimension_numbers<[1], [0], [0], [1], [0, 0, 1, 1], [], []>} : vector<128x32xbf16>, vector<32x224xbf16>, vector<128x224xf32> -> vector<128x224xf32>
    %485 = arith.addf %475, %484 : vector<128x224xf32>
    %486 = vector.broadcast %399 : vector<1x224xf32> to vector<128x224xf32>
    %487 = arith.addf %485, %486 : vector<128x224xf32>
    %cst_278 = arith.constant 0.000000e+00 : f32
    %488 = vector.broadcast %cst_278 : f32 to vector<128x224xf32>
    %489 = arith.maximumf %487, %488 : vector<128x224xf32>
    %490 = arith.truncf %489 : vector<128x224xf32> to vector<128x224xbf16>
    %c0_279 = arith.constant 0 : index
    %c0_280 = arith.constant 0 : index
    %491 = vector.load %arg12[%c0_279, %c0_280] : memref<224x128xbf16, #tpu.memory_space<vmem>>, vector<224x128xbf16>
    %cst_281 = arith.constant dense<0.000000e+00> : vector<128x128xf32>
    %492 = tpu.matmul %490, %491, %cst_281 {dimension_numbers = #tpu.dot_dimension_numbers<[1], [0], [0], [1], [0, 0, 1, 1], [], []>} : vector<128x224xbf16>, vector<224x128xbf16>, vector<128x128xf32> -> vector<128x128xf32>
    %c10_282 = arith.constant 10 : index
    %c0_283 = arith.constant 0 : index
    %493 = vector.load %arg13[%c10_282, %c0_283] : memref<16x256xf32, #tpu.memory_space<vmem>>, vector<1x128xf32>
    %494 = vector.broadcast %493 : vector<1x128xf32> to vector<128x128xf32>
    %495 = arith.addf %492, %494 : vector<128x128xf32>
    %c0_284 = arith.constant 0 : index
    %c0_285 = arith.constant 0 : index
    %496 = vector.load %arg14[%c0_284, %c0_285] : memref<128x128xf32, #tpu.memory_space<vmem>>, vector<128x128xf32>
    tpu.vector_store %arg14[%c0_284, %c0_285], %495 {strides = array<i32>} : memref<128x128xf32, #tpu.memory_space<vmem>>, vector<128x128xf32>,
    return
  }
  func.func @transform_0(%arg0: i32) -> (i32, i32) {
    %c0_i32 = arith.constant 0 : i32
    %c0_i32_0 = arith.constant 0 : i32
    %c0_i32_1 = arith.constant 0 : i32
    return %c0_i32, %c0_i32_0 : i32, i32
  }
  func.func @transform_1(%arg0: i32) -> (i32, i32) {
    %c0_i32 = arith.constant 0 : i32
    %c0_i32_0 = arith.constant 0 : i32
    %c0_i32_1 = arith.constant 0 : i32
    return %c0_i32, %c0_i32_0 : i32, i32
  }
  func.func @transform_2(%arg0: i32) -> (i32, i32, i32) {
    %c0_i32 = arith.constant 0 : i32
    %c0_i32_0 = arith.constant 0 : i32
    %c0_i32_1 = arith.constant 0 : i32
    %c0_i32_2 = arith.constant 0 : i32
    return %c0_i32, %c0_i32_0, %c0_i32_1 : i32, i32, i32
  }
  func.func @transform_3(%arg0: i32) -> (i32, i32) {
    %c0_i32 = arith.constant 0 : i32
    %c0_i32_0 = arith.constant 0 : i32
    %c0_i32_1 = arith.constant 0 : i32
    return %c0_i32, %c0_i32_0 : i32, i32
  }
  func.func @transform_4(%arg0: i32) -> (i32, i32, i32) {
    %c0_i32 = arith.constant 0 : i32
    %c0_i32_0 = arith.constant 0 : i32
    %c0_i32_1 = arith.constant 0 : i32
    %c0_i32_2 = arith.constant 0 : i32
    return %c0_i32, %c0_i32_0, %c0_i32_1 : i32, i32, i32
  }
  func.func @transform_5(%arg0: i32) -> (i32, i32, i32) {
    %c0_i32 = arith.constant 0 : i32
    %c0_i32_0 = arith.constant 0 : i32
    %c0_i32_1 = arith.constant 0 : i32
    %c0_i32_2 = arith.constant 0 : i32
    return %c0_i32, %c0_i32_0, %c0_i32_1 : i32, i32, i32
  }
  func.func @transform_6(%arg0: i32) -> (i32, i32, i32) {
    %c0_i32 = arith.constant 0 : i32
    %c0_i32_0 = arith.constant 0 : i32
    %c0_i32_1 = arith.constant 0 : i32
    %c0_i32_2 = arith.constant 0 : i32
    return %c0_i32, %c0_i32_0, %c0_i32_1 : i32, i32, i32
  }
  func.func @transform_7(%arg0: i32) -> (i32, i32) {
    %c0_i32 = arith.constant 0 : i32
    %c0_i32_0 = arith.constant 0 : i32
    %c0_i32_1 = arith.constant 0 : i32
    return %c0_i32, %c0_i32_0 : i32, i32
  }
  func.func @transform_8(%arg0: i32) -> (i32, i32) {
    %c0_i32 = arith.constant 0 : i32
    %c0_i32_0 = arith.constant 0 : i32
    %c0_i32_1 = arith.constant 0 : i32
    return %c0_i32, %c0_i32_0 : i32, i32
  }
  func.func @transform_9(%arg0: i32) -> (i32, i32, i32) {
    %c0_i32 = arith.constant 0 : i32
    %c0_i32_0 = arith.constant 0 : i32
    %c0_i32_1 = arith.constant 0 : i32
    %c0_i32_2 = arith.constant 0 : i32
    return %c0_i32, %c0_i32_0, %c0_i32_1 : i32, i32, i32
  }
  func.func @transform_10(%arg0: i32) -> (i32, i32, i32) {
    %c0_i32 = arith.constant 0 : i32
    %c0_i32_0 = arith.constant 0 : i32
    %c0_i32_1 = arith.constant 0 : i32
    %c0_i32_2 = arith.constant 0 : i32
    return %c0_i32, %c0_i32_0, %c0_i32_1 : i32, i32, i32
  }
  func.func @transform_11(%arg0: i32) -> (i32, i32) {
    %c0_i32 = arith.constant 0 : i32
    %c0_i32_0 = arith.constant 0 : i32
    %c0_i32_1 = arith.constant 0 : i32
    return %c0_i32, %c0_i32_0 : i32, i32
  }
  func.func @transform_12(%arg0: i32) -> (i32, i32) {
    %c0_i32 = arith.constant 0 : i32
    %c0_i32_0 = arith.constant 0 : i32
    %c0_i32_1 = arith.constant 0 : i32
    return %c0_i32, %c0_i32_0 : i32, i32
  }
  func.func @transform_13(%arg0: i32) -> (i32, i32) {
    %c0_i32 = arith.constant 0 : i32
    %c0_i32_0 = arith.constant 0 : i32
    %c0_i32_1 = arith.constant 0 : i32
    return %c0_i32, %c0_i32_0 : i32, i32
  }
}

</mosaic_0001>

<llo_original>
// kernel: tile.58
$region0: #{tile.58}
  #allocation0 [shape = 's32[1]{0}', space=sflag, size = 0x4, scoped, tag = 'scoped memory for tile.58']
  %s0 = inlined_call_operand.vmem [shape: f32[64], index: 0, kind: input, shape index: {}]
  %s1 = inlined_call_operand.vmem [shape: f32[2,64], index: 1, kind: output, shape index: {}]
  // Predicated region
  $region2: #{tile.58} parent=0 // pred_check
    _
  $region3: #{tile.58} parent=0 // pred_check_branch
    %3 = sbr.rel (0) target = $region5
  $region4: #{tile.58} parent=0 // pred_region
    _
  $region5: #{tile.58} parent=0 // pred_fallthru
    _
  %v4 = vld [vmem:[%s0] ss:$0 sm:$0xff]
  %5 = vst [vmem:[%s1] sm:$0x3] %v4

// kernel: tile.91
$region0: #{tile.91}
  %s0 = inlined_call_operand.vmem [shape: f32[2,64], index: 0, kind: input, shape index: {}]
  %s1 = inlined_call_operand.vmem [shape: f32[1,128,1], index: 1, kind: output, shape index: {}]
  $region1: #{tile.91} parent=0
    #allocation0 [shape = 'u8[4096]{0}', space=vmem, size = 0x1000, scoped, tag = 'scoped mem for output reshape']
    #allocation1 [shape = 'u8[4096]{0}', space=vmem, size = 0x1000, scoped, tag = 'scoped mem for input reshape']
    %s3 = ssub.s32 4, 1
    %v4 = vld [vmem:[%s0] sm:%s3]
    %5 = vst [vmem:[#allocation1] sm:%s3] %v4
    %v6 = vld [vmem:[#allocation1] sm:$0x1]
    %vm7 = vcmask 523264
    %8 = vst.msk [vmem:[#allocation0] sm:$0x1] %vm7, %v6
    %s9 = scalar_lea.vmem [#allocation1], 1
    %v10 = vld [vmem:[%s9] sm:$0x1]
    %11 = vrot.lane.b32.xlu0 %v10, 64
    %v12 = vpop.permute.xlu0 %11
    %vm13 = vcmask 1048064
    %14 = vst.msk [vmem:[#allocation0] sm:$0x1] %vm13, %v12
    %s16 = ssub.s32 2, 1
    %v17 = vld [vmem:[#allocation0] sm:%s16]
    %s19 = ssub.s32 2, 1
    %20 = vst [vmem:[%s1] sm:%s19] %v17

// kernel: vector_bev_forward.1
$region0: #{vector_bev_forward.1}
  #allocation0 [shape = 'u32[]', space=smem, size = 0x4, offset = 0x4, fixed_abs, tag = 'smem constant byte address 0x4 - core index']
  #allocation1 [shape = 'u32[72,128]{1,0:T(1,128)}', space=vmem, size = 0x9000, scoped, tag = 'internal scratch']
  %s0 = inlined_call_operand.vmem [shape: bf16[128,6], index: 0, kind: input, shape index: {}]
  %s1 = inlined_call_operand.vmem [shape: f32[128,32], index: 1, kind: input, shape index: {}]
  %s2 = inlined_call_operand.vmem [shape: f32[9,128,1], index: 2, kind: input, shape index: {}]
  %s3 = inlined_call_operand.vmem [shape: bf16[6,32], index: 3, kind: input, shape index: {}]
  %s4 = inlined_call_operand.vmem [shape: bf16[12,32,8], index: 4, kind: input, shape index: {}]
  %s5 = inlined_call_operand.vmem [shape: f32[4,1,8], index: 5, kind: input, shape index: {}]
  %s6 = inlined_call_operand.vmem [shape: bf16[4,8,32], index: 6, kind: input, shape index: {}]
  %s7 = inlined_call_operand.vmem [shape: bf16[32,64], index: 7, kind: input, shape index: {}]
  %s8 = inlined_call_operand.vmem [shape: bf16[64,32], index: 8, kind: input, shape index: {}]
  %s9 = inlined_call_operand.vmem [shape: bf16[9,32,32], index: 9, kind: input, shape index: {}]
  %s10 = inlined_call_operand.vmem [shape: bf16[9,32,224], index: 10, kind: input, shape index: {}]
  %s11 = inlined_call_operand.vmem [shape: bf16[224,128], index: 11, kind: input, shape index: {}]
  %s12 = inlined_call_operand.vmem [shape: f32[16,256], index: 12, kind: input, shape index: {}]
  %s13 = inlined_call_operand.vmem [shape: f32[128,128], index: 13, kind: output, shape index: {}]
  %s14 = sld [smem:[#allocation0]]
  $region62: #{vector_bev_forward.1} parent=0
    _
  %s16 = ssub.s32 1, %s14
  %s17 = scalar_select 0, %s16, %s14
  // Predicated region
  $region2: #{vector_bev_forward.1} parent=0 // pred_check
    _
  $region3: #{vector_bev_forward.1} parent=0 // pred_check_branch
    %19 = sbr.rel (0) target = $region5
  $region4: #{vector_bev_forward.1} parent=0 // pred_region
    _
  $region5: #{vector_bev_forward.1} parent=0 // pred_fallthru
    _
  // Predicated region
  $region6: #{vector_bev_forward.1} parent=0 // pred_check
    _
  $region7: #{vector_bev_forward.1} parent=0 // pred_check_branch
    %21 = sbr.rel (0) target = $region9
  $region8: #{vector_bev_forward.1} parent=0 // pred_region
    _
  $region9: #{vector_bev_forward.1} parent=0 // pred_fallthru
    _
  // Predicated region
  $region10: #{vector_bev_forward.1} parent=0 // pred_check
    _
  $region11: #{vector_bev_forward.1} parent=0 // pred_check_branch
    %23 = sbr.rel (0) target = $region13
  $region12: #{vector_bev_forward.1} parent=0 // pred_region
    _
  $region13: #{vector_bev_forward.1} parent=0 // pred_fallthru
    _
  // Predicated region
  $region14: #{vector_bev_forward.1} parent=0 // pred_check
    _
  $region15: #{vector_bev_forward.1} parent=0 // pred_check_branch
    %25 = sbr.rel (0) target = $region17
  $region16: #{vector_bev_forward.1} parent=0 // pred_region
    _
  $region17: #{vector_bev_forward.1} parent=0 // pred_fallthru
    _
  // Predicated region
  $region18: #{vector_bev_forward.1} parent=0 // pred_check
    _
  $region19: #{vector_bev_forward.1} parent=0 // pred_check_branch
    %27 = sbr.rel (0) target = $region21
  $region20: #{vector_bev_forward.1} parent=0 // pred_region
    _
  $region21: #{vector_bev_forward.1} parent=0 // pred_fallthru
    _
  // Predicated region
  $region22: #{vector_bev_forward.1} parent=0 // pred_check
    _
  $region23: #{vector_bev_forward.1} parent=0 // pred_check_branch
    %29 = sbr.rel (0) target = $region25
  $region24: #{vector_bev_forward.1} parent=0 // pred_region
    _
  $region25: #{vector_bev_forward.1} parent=0 // pred_fallthru
    _
  // Predicated region
  $region26: #{vector_bev_forward.1} parent=0 // pred_check
    _
  $region27: #{vector_bev_forward.1} parent=0 // pred_check_branch
    %31 = sbr.rel (0) target = $region29
  $region28: #{vector_bev_forward.1} parent=0 // pred_region
    _
  $region29: #{vector_bev_forward.1} parent=0 // pred_fallthru
    _
  // Predicated region
  $region30: #{vector_bev_forward.1} parent=0 // pred_check
    _
  $region31: #{vector_bev_forward.1} parent=0 // pred_check_branch
    %33 = sbr.rel (0) target = $region33
  $region32: #{vector_bev_forward.1} parent=0 // pred_region
    _
  $region33: #{vector_bev_forward.1} parent=0 // pred_fallthru
    _
  // Predicated region
  $region34: #{vector_bev_forward.1} parent=0 // pred_check
    _
  $region35: #{vector_bev_forward.1} parent=0 // pred_check_branch
    %35 = sbr.rel (0) target = $region37
  $region36: #{vector_bev_forward.1} parent=0 // pred_region
    _
  $region37: #{vector_bev_forward.1} parent=0 // pred_fallthru
    _
  // Predicated region
  $region38: #{vector_bev_forward.1} parent=0 // pred_check
    _
  $region39: #{vector_bev_forward.1} parent=0 // pred_check_branch
    %37 = sbr.rel (0) target = $region41
  $region40: #{vector_bev_forward.1} parent=0 // pred_region
    _
  $region41: #{vector_bev_forward.1} parent=0 // pred_fallthru
    _
  // Predicated region
  $region42: #{vector_bev_forward.1} parent=0 // pred_check
    _
  $region43: #{vector_bev_forward.1} parent=0 // pred_check_branch
    %39 = sbr.rel (0) target = $region45
  $region44: #{vector_bev_forward.1} parent=0 // pred_region
    _
  $region45: #{vector_bev_forward.1} parent=0 // pred_fallthru
    _
  // Predicated region
  $region46: #{vector_bev_forward.1} parent=0 // pred_check
    _
  $region47: #{vector_bev_forward.1} parent=0 // pred_check_branch
    %41 = sbr.rel (0) target = $region49
  $region48: #{vector_bev_forward.1} parent=0 // pred_region
    _
  $region49: #{vector_bev_forward.1} parent=0 // pred_fallthru
    _
  // Predicated region
  $region50: #{vector_bev_forward.1} parent=0 // pred_check
    _
  $region51: #{vector_bev_forward.1} parent=0 // pred_check_branch
    %43 = sbr.rel (0) target = $region53
  $region52: #{vector_bev_forward.1} parent=0 // pred_region
    _
  $region53: #{vector_bev_forward.1} parent=0 // pred_fallthru
    _
  %v45 = vld [vmem:[%s0] sm:$0xf]
  %v46 = vld [vmem:[%s0 + $0x4] sm:$0xf]
  %v47 = vld [vmem:[%s0 + $0x8] sm:$0xf]
  %v48 = vld [vmem:[%s0 + $0xc] sm:$0xf]
  %v49 = vld [vmem:[%s0 + $0x10] sm:$0xf]
  %v50 = vld [vmem:[%s0 + $0x14] sm:$0xf]
  %v51 = vld [vmem:[%s0 + $0x18] sm:$0xf]
  %v52 = vld [vmem:[%s0 + $0x1c] sm:$0xf]
  %v53 = vld [vmem:[%s0 + $0x20] sm:$0xf]
  %v54 = vld [vmem:[%s0 + $0x24] sm:$0xf]
  %v55 = vld [vmem:[%s0 + $0x28] sm:$0xf]
  %v56 = vld [vmem:[%s0 + $0x2c] sm:$0xf]
  %v57 = vld [vmem:[%s0 + $0x30] sm:$0xf]
  %v58 = vld [vmem:[%s0 + $0x34] sm:$0xf]
  %v59 = vld [vmem:[%s0 + $0x38] sm:$0xf]
  %v60 = vld [vmem:[%s0 + $0x3c] sm:$0xf]
  %v61 = vld [vmem:[%s3] sm:$0x7]
  %v62 = vld [vmem:[%s12] ss:$0 sm:$0xff]
  %v79 = vunpack.c.l.b16 %v45
  %v80 = vunpack.c.l.b16 %v46
  %v81 = vunpack.c.l.b16 %v47
  %v82 = vunpack.c.l.b16 %v48
  %v83 = vunpack.c.l.b16 %v49
  %v84 = vunpack.c.l.b16 %v50
  %v85 = vunpack.c.l.b16 %v51
  %v86 = vunpack.c.l.b16 %v52
  %v87 = vunpack.c.l.b16 %v53
  %v88 = vunpack.c.l.b16 %v54
  %v89 = vunpack.c.l.b16 %v55
  %v90 = vunpack.c.l.b16 %v56
  %v91 = vunpack.c.l.b16 %v57
  %v92 = vunpack.c.l.b16 %v58
  %v93 = vunpack.c.l.b16 %v59
  %v94 = vunpack.c.l.b16 %v60
  %v95 = vpack.c.b16 %v80, %v79
  %v96 = vpack.c.b16 %v82, %v81
  %v97 = vpack.c.b16 %v84, %v83
  %v98 = vpack.c.b16 %v86, %v85
  %v99 = vpack.c.b16 %v88, %v87
  %v100 = vpack.c.b16 %v90, %v89
  %v101 = vpack.c.b16 %v92, %v91
  %v102 = vpack.c.b16 %v94, %v93
  %vm103 = vcmask 48128
  %v105 = vsel %vm103, %v95, 0
  %v108 = vsel %vm103, %v96, 0
  %v111 = vsel %vm103, %v97, 0
  %v114 = vsel %vm103, %v98, 0
  %v117 = vsel %vm103, %v99, 0
  %v120 = vsel %vm103, %v100, 0
  %v123 = vsel %vm103, %v101, 0
  %v126 = vsel %vm103, %v102, 0
  %vm128 = vcmask 1042432
  %v130 = vsel %vm128, %v61, 0
  %132 = vmatpush.bf16.msra.mxu0 0
  %133 = vmatpush.bf16.msra.mxu0 0
  %134 = vmatpush.bf16.msra.mxu0 0
  %135 = vmatpush.bf16.msra.mxu0 0
  %136 = vmatpush.bf16.msra.mxu0 0
  %137 = vmatpush.bf16.msra.mxu0 0
  %138 = vmatpush.bf16.msra.mxu0 0
  %139 = vmatpush.bf16.msra.mxu0 %v130
  %140 = vmatmul.bf16.gmra.mxu0 %v105
  %v141 = vpop.f32.mrf.mxu0
  %v142 = vadd.f32 %v62, %v141
  %v143 = vpop.f32.mrf.mxu0
  %v144 = vadd.f32 %v62, %v143
  %145 = vmatmul.bf16.gmra.mxu0 %v108
  %v146 = vpop.f32.mrf.mxu0
  %v147 = vadd.f32 %v62, %v146
  %v148 = vpop.f32.mrf.mxu0
  %v149 = vadd.f32 %v62, %v148
  %150 = vmatmul.bf16.gmra.mxu0 %v111
  %v151 = vpop.f32.mrf.mxu0
  %v152 = vadd.f32 %v62, %v151
  %v153 = vpop.f32.mrf.mxu0
  %v154 = vadd.f32 %v62, %v153
  %155 = vmatmul.bf16.gmra.mxu0 %v114
  %v156 = vpop.f32.mrf.mxu0
  %v157 = vadd.f32 %v62, %v156
  %v158 = vpop.f32.mrf.mxu0
  %v159 = vadd.f32 %v62, %v158
  %160 = vmatmul.bf16.gmra.mxu0 %v117
  %v161 = vpop.f32.mrf.mxu0
  %v162 = vadd.f32 %v62, %v161
  %v163 = vpop.f32.mrf.mxu0
  %v164 = vadd.f32 %v62, %v163
  %165 = vmatmul.bf16.gmra.mxu0 %v120
  %v166 = vpop.f32.mrf.mxu0
  %v167 = vadd.f32 %v62, %v166
  %v168 = vpop.f32.mrf.mxu0
  %v169 = vadd.f32 %v62, %v168
  %170 = vmatmul.bf16.gmra.mxu0 %v123
  %v171 = vpop.f32.mrf.mxu0
  %v172 = vadd.f32 %v62, %v171
  %v173 = vpop.f32.mrf.mxu0
  %v174 = vadd.f32 %v62, %v173
  %175 = vmatmul.bf16.gmra.mxu0 %v126
  %v176 = vpop.f32.mrf.mxu0
  %v177 = vadd.f32 %v62, %v176
  %v178 = vpop.f32.mrf.mxu0
  %v179 = vadd.f32 %v62, %v178
  %180 = vdwg.mxu0
  %v181 = vld [vmem:[%s1] sm:$0xff]
  %v182 = vld [vmem:[%s1 + $0x8] sm:$0xff]
  %v183 = vld [vmem:[%s1 + $0x10] sm:$0xff]
  %v184 = vld [vmem:[%s1 + $0x18] sm:$0xff]
  %v185 = vld [vmem:[%s1 + $0x20] sm:$0xff]
  %v186 = vld [vmem:[%s1 + $0x28] sm:$0xff]
  %v187 = vld [vmem:[%s1 + $0x30] sm:$0xff]
  %v188 = vld [vmem:[%s1 + $0x38] sm:$0xff]
  %v189 = vld [vmem:[%s1 + $0x40] sm:$0xff]
  %v190 = vld [vmem:[%s1 + $0x48] sm:$0xff]
  %v191 = vld [vmem:[%s1 + $0x50] sm:$0xff]
  %v192 = vld [vmem:[%s1 + $0x58] sm:$0xff]
  %v193 = vld [vmem:[%s1 + $0x60] sm:$0xff]
  %v194 = vld [vmem:[%s1 + $0x68] sm:$0xff]
  %v195 = vld [vmem:[%s1 + $0x70] sm:$0xff]
  %v196 = vld [vmem:[%s1 + $0x78] sm:$0xff]
  %v197 = vadd.f32 %v142, %v181
  %v198 = vadd.f32 %v144, %v182
  %v199 = vadd.f32 %v147, %v183
  %v200 = vadd.f32 %v149, %v184
  %v201 = vadd.f32 %v152, %v185
  %v202 = vadd.f32 %v154, %v186
  %v203 = vadd.f32 %v157, %v187
  %v204 = vadd.f32 %v159, %v188
  %v205 = vadd.f32 %v162, %v189
  %v206 = vadd.f32 %v164, %v190
  %v207 = vadd.f32 %v167, %v191
  %v208 = vadd.f32 %v169, %v192
  %v209 = vadd.f32 %v172, %v193
  %v210 = vadd.f32 %v174, %v194
  %v211 = vadd.f32 %v177, %v195
  %v212 = vadd.f32 %v179, %v196
  %v213 = vpack.c.bf16 %v198, %v197
  %v214 = vpack.c.bf16 %v200, %v199
  %v215 = vpack.c.bf16 %v202, %v201
  %v216 = vpack.c.bf16 %v204, %v203
  %v217 = vpack.c.bf16 %v206, %v205
  %v218 = vpack.c.bf16 %v208, %v207
  %v219 = vpack.c.bf16 %v210, %v209
  %v220 = vpack.c.bf16 %v212, %v211
  %v221 = vpack.c.bf16 %v144, %v142
  %v222 = vpack.c.bf16 %v149, %v147
  %v223 = vpack.c.bf16 %v154, %v152
  %v224 = vpack.c.bf16 %v159, %v157
  %v225 = vpack.c.bf16 %v164, %v162
  %v226 = vpack.c.bf16 %v169, %v167
  %v227 = vpack.c.bf16 %v174, %v172
  %v228 = vpack.c.bf16 %v179, %v177
  %v229 = vld [vmem:[%s4] sm:$0xf]
  %v230 = vld [vmem:[%s4 + $0x4] sm:$0xf]
  %v231 = vld [vmem:[%s4 + $0x8] sm:$0xf]
  %v232 = vld [vmem:[%s4 + $0xc] sm:$0xf]
  %v233 = vld [vmem:[%s5] sm:$0x1]
  %v235 = vperm.slane %v233, 0
  %v241 = vunpack.c.l.b16 %v229
  %v242 = vunpack.c.l.b16 %v230
  %v243 = vunpack.c.l.b16 %v231
  %v244 = vunpack.c.l.b16 %v232
  %v245 = vpack.c.b16 %v242, %v241
  %v246 = vpack.c.b16 %v244, %v243
  %vm249 = vcmask 261120
  %v251 = vsel %vm249, %v213, 0
  %v254 = vsel %vm249, %v214, 0
  %v257 = vsel %vm249, %v215, 0
  %v260 = vsel %vm249, %v216, 0
  %v263 = vsel %vm249, %v217, 0
  %v266 = vsel %vm249, %v218, 0
  %v269 = vsel %vm249, %v219, 0
  %v272 = vsel %vm249, %v220, 0
  %274 = vmatpush.bf16.msra.mxu0 0
  %275 = vmatpush.bf16.msra.mxu0 0
  %276 = vmatpush.bf16.msra.mxu0 0
  %277 = vmatpush.bf16.msra.mxu0 0
  %278 = vmatpush.bf16.msra.mxu0 0
  %279 = vmatpush.bf16.msra.mxu0 0
  %280 = vmatpush.bf16.msra.mxu0 %v246
  %281 = vmatpush.bf16.msra.mxu0 %v245
  %282 = vmatmul.bf16.gmra.mxu0 %v251
  %v283 = vpop.f32.mrf.mxu0
  %v284 = vadd.f32 %v235, %v283
  %v285 = vpop.f32.mrf.mxu0
  %v286 = vadd.f32 %v235, %v285
  %287 = vmatmul.bf16.gmra.mxu0 %v254
  %v288 = vpop.f32.mrf.mxu0
  %v289 = vadd.f32 %v235, %v288
  %v290 = vpop.f32.mrf.mxu0
  %v291 = vadd.f32 %v235, %v290
  %292 = vmatmul.bf16.gmra.mxu0 %v257
  %v293 = vpop.f32.mrf.mxu0
  %v294 = vadd.f32 %v235, %v293
  %v295 = vpop.f32.mrf.mxu0
  %v296 = vadd.f32 %v235, %v295
  %297 = vmatmul.bf16.gmra.mxu0 %v260
  %v298 = vpop.f32.mrf.mxu0
  %v299 = vadd.f32 %v235, %v298
  %v300 = vpop.f32.mrf.mxu0
  %v301 = vadd.f32 %v235, %v300
  %302 = vmatmul.bf16.gmra.mxu0 %v263
  %v303 = vpop.f32.mrf.mxu0
  %v304 = vadd.f32 %v235, %v303
  %v305 = vpop.f32.mrf.mxu0
  %v306 = vadd.f32 %v235, %v305
  %307 = vmatmul.bf16.gmra.mxu0 %v266
  %v308 = vpop.f32.mrf.mxu0
  %v309 = vadd.f32 %v235, %v308
  %v310 = vpop.f32.mrf.mxu0
  %v311 = vadd.f32 %v235, %v310
  %312 = vmatmul.bf16.gmra.mxu0 %v269
  %v313 = vpop.f32.mrf.mxu0
  %v314 = vadd.f32 %v235, %v313
  %v315 = vpop.f32.mrf.mxu0
  %v316 = vadd.f32 %v235, %v315
  %317 = vmatmul.bf16.gmra.mxu0 %v272
  %v318 = vpop.f32.mrf.mxu0
  %v319 = vadd.f32 %v235, %v318
  %v320 = vpop.f32.mrf.mxu0
  %v321 = vadd.f32 %v235, %v320
  %322 = vdwg.mxu0
  %v323 = vpack.c.bf16 %v284, %v284
  %v324 = vpack.c.bf16 %v286, %v286
  %v325 = vpack.c.bf16 %v289, %v289
  %v326 = vpack.c.bf16 %v291, %v291
  %v327 = vpack.c.bf16 %v294, %v294
  %v328 = vpack.c.bf16 %v296, %v296
  %v329 = vpack.c.bf16 %v299, %v299
  %v330 = vpack.c.bf16 %v301, %v301
  %v331 = vpack.c.bf16 %v304, %v304
  %v332 = vpack.c.bf16 %v306, %v306
  %v333 = vpack.c.bf16 %v309, %v309
  %v334 = vpack.c.bf16 %v311, %v311
  %v335 = vpack.c.bf16 %v314, %v314
  %v336 = vpack.c.bf16 %v316, %v316
  %v337 = vpack.c.bf16 %v319, %v319
  %v338 = vpack.c.bf16 %v321, %v321
  %s339 = scalar_lea.vmem %s4, 64
  %v340 = vld [vmem:[%s339] sm:$0xf]
  %v341 = vld [vmem:[%s339 + $0x4] sm:$0xf]
  %v342 = vld [vmem:[%s339 + $0x8] sm:$0xf]
  %v343 = vld [vmem:[%s339 + $0xc] sm:$0xf]
  %v348 = vunpack.c.l.b16 %v340
  %v349 = vunpack.c.l.b16 %v341
  %v350 = vunpack.c.l.b16 %v342
  %v351 = vunpack.c.l.b16 %v343
  %v352 = vpack.c.b16 %v349, %v348
  %v353 = vpack.c.b16 %v351, %v350
  %356 = vmatpush.bf16.msra.mxu0 0
  %357 = vmatpush.bf16.msra.mxu0 0
  %358 = vmatpush.bf16.msra.mxu0 0
  %359 = vmatpush.bf16.msra.mxu0 0
  %360 = vmatpush.bf16.msra.mxu0 0
  %361 = vmatpush.bf16.msra.mxu0 0
  %362 = vmatpush.bf16.msra.mxu0 %v353
  %363 = vmatpush.bf16.msra.mxu0 %v352
  %364 = vmatmul.bf16.gmra.mxu0 %v251
  %v365 = vpop.f32.mrf.mxu0
  %v366 = vadd.f32 0.0, %v365
  %v367 = vpop.f32.mrf.mxu0
  %v368 = vadd.f32 0.0, %v367
  %369 = vmatmul.bf16.gmra.mxu0 %v254
  %v370 = vpop.f32.mrf.mxu0
  %v371 = vadd.f32 0.0, %v370
  %v372 = vpop.f32.mrf.mxu0
  %v373 = vadd.f32 0.0, %v372
  %374 = vmatmul.bf16.gmra.mxu0 %v257
  %v375 = vpop.f32.mrf.mxu0
  %v376 = vadd.f32 0.0, %v375
  %v377 = vpop.f32.mrf.mxu0
  %v378 = vadd.f32 0.0, %v377
  %379 = vmatmul.bf16.gmra.mxu0 %v260
  %v380 = vpop.f32.mrf.mxu0
  %v381 = vadd.f32 0.0, %v380
  %v382 = vpop.f32.mrf.mxu0
  %v383 = vadd.f32 0.0, %v382
  %384 = vmatmul.bf16.gmra.mxu0 %v263
  %v385 = vpop.f32.mrf.mxu0
  %v386 = vadd.f32 0.0, %v385
  %v387 = vpop.f32.mrf.mxu0
  %v388 = vadd.f32 0.0, %v387
  %389 = vmatmul.bf16.gmra.mxu0 %v266
  %v390 = vpop.f32.mrf.mxu0
  %v391 = vadd.f32 0.0, %v390
  %v392 = vpop.f32.mrf.mxu0
  %v393 = vadd.f32 0.0, %v392
  %394 = vmatmul.bf16.gmra.mxu0 %v269
  %v395 = vpop.f32.mrf.mxu0
  %v396 = vadd.f32 0.0, %v395
  %v397 = vpop.f32.mrf.mxu0
  %v398 = vadd.f32 0.0, %v397
  %399 = vmatmul.bf16.gmra.mxu0 %v272
  %v400 = vpop.f32.mrf.mxu0
  %v401 = vadd.f32 0.0, %v400
  %v402 = vpop.f32.mrf.mxu0
  %v403 = vadd.f32 0.0, %v402
  %404 = vdwg.mxu0
  %v405 = vpack.c.bf16 %v366, %v366
  %v406 = vpack.c.bf16 %v368, %v368
  %v407 = vpack.c.bf16 %v371, %v371
  %v408 = vpack.c.bf16 %v373, %v373
  %v409 = vpack.c.bf16 %v376, %v376
  %v410 = vpack.c.bf16 %v378, %v378
  %v411 = vpack.c.bf16 %v381, %v381
  %v412 = vpack.c.bf16 %v383, %v383
  %v413 = vpack.c.bf16 %v386, %v386
  %v414 = vpack.c.bf16 %v388, %v388
  %v415 = vpack.c.bf16 %v391, %v391
  %v416 = vpack.c.bf16 %v393, %v393
  %v417 = vpack.c.bf16 %v396, %v396
  %v418 = vpack.c.bf16 %v398, %v398
  %v419 = vpack.c.bf16 %v401, %v401
  %v420 = vpack.c.bf16 %v403, %v403
  %s421 = scalar_lea.vmem %s4, 128
  %v422 = vld [vmem:[%s421] sm:$0xf]
  %v423 = vld [vmem:[%s421 + $0x4] sm:$0xf]
  %v424 = vld [vmem:[%s421 + $0x8] sm:$0xf]
  %v425 = vld [vmem:[%s421 + $0xc] sm:$0xf]
  %v430 = vunpack.c.l.b16 %v422
  %v431 = vunpack.c.l.b16 %v423
  %v432 = vunpack.c.l.b16 %v424
  %v433 = vunpack.c.l.b16 %v425
  %v434 = vpack.c.b16 %v431, %v430
  %v435 = vpack.c.b16 %v433, %v432
  %v439 = vsel %vm249, %v221, 0
  %v442 = vsel %vm249, %v222, 0
  %v445 = vsel %vm249, %v223, 0
  %v448 = vsel %vm249, %v224, 0
  %v451 = vsel %vm249, %v225, 0
  %v454 = vsel %vm249, %v226, 0
  %v457 = vsel %vm249, %v227, 0
  %v460 = vsel %vm249, %v228, 0
  %462 = vmatpush.bf16.msra.mxu0 0
  %463 = vmatpush.bf16.msra.mxu0 0
  %464 = vmatpush.bf16.msra.mxu0 0
  %465 = vmatpush.bf16.msra.mxu0 0
  %466 = vmatpush.bf16.msra.mxu0 0
  %467 = vmatpush.bf16.msra.mxu0 0
  %468 = vmatpush.bf16.msra.mxu0 %v435
  %469 = vmatpush.bf16.msra.mxu0 %v434
  %470 = vmatmul.bf16.gmra.mxu0 %v439
  %v471 = vpop.f32.mrf.mxu0
  %v472 = vadd.f32 0.0, %v471
  %v473 = vpop.f32.mrf.mxu0
  %v474 = vadd.f32 0.0, %v473
  %475 = vmatmul.bf16.gmra.mxu0 %v442
  %v476 = vpop.f32.mrf.mxu0
  %v477 = vadd.f32 0.0, %v476
  %v478 = vpop.f32.mrf.mxu0
  %v479 = vadd.f32 0.0, %v478
  %480 = vmatmul.bf16.gmra.mxu0 %v445
  %v481 = vpop.f32.mrf.mxu0
  %v482 = vadd.f32 0.0, %v481
  %v483 = vpop.f32.mrf.mxu0
  %v484 = vadd.f32 0.0, %v483
  %485 = vmatmul.bf16.gmra.mxu0 %v448
  %v486 = vpop.f32.mrf.mxu0
  %v487 = vadd.f32 0.0, %v486
  %v488 = vpop.f32.mrf.mxu0
  %v489 = vadd.f32 0.0, %v488
  %490 = vmatmul.bf16.gmra.mxu0 %v451
  %v491 = vpop.f32.mrf.mxu0
  %v492 = vadd.f32 0.0, %v491
  %v493 = vpop.f32.mrf.mxu0
  %v494 = vadd.f32 0.0, %v493
  %495 = vmatmul.bf16.gmra.mxu0 %v454
  %v496 = vpop.f32.mrf.mxu0
  %v497 = vadd.f32 0.0, %v496
  %v498 = vpop.f32.mrf.mxu0
  %v499 = vadd.f32 0.0, %v498
  %500 = vmatmul.bf16.gmra.mxu0 %v457
  %v501 = vpop.f32.mrf.mxu0
  %v502 = vadd.f32 0.0, %v501
  %v503 = vpop.f32.mrf.mxu0
  %v504 = vadd.f32 0.0, %v503
  %505 = vmatmul.bf16.gmra.mxu0 %v460
  %v506 = vpop.f32.mrf.mxu0
  %v507 = vadd.f32 0.0, %v506
  %v508 = vpop.f32.mrf.mxu0
  %v509 = vadd.f32 0.0, %v508
  %510 = vdwg.mxu0
  %v511 = vpack.c.bf16 %v472, %v472
  %v512 = vpack.c.bf16 %v474, %v474
  %v513 = vpack.c.bf16 %v477, %v477
  %v514 = vpack.c.bf16 %v479, %v479
  %v515 = vpack.c.bf16 %v482, %v482
  %v516 = vpack.c.bf16 %v484, %v484
  %v517 = vpack.c.bf16 %v487, %v487
  %v518 = vpack.c.bf16 %v489, %v489
  %v519 = vpack.c.bf16 %v492, %v492
  %v520 = vpack.c.bf16 %v494, %v494
  %v521 = vpack.c.bf16 %v497, %v497
  %v522 = vpack.c.bf16 %v499, %v499
  %v523 = vpack.c.bf16 %v502, %v502
  %v524 = vpack.c.bf16 %v504, %v504
  %v525 = vpack.c.bf16 %v507, %v507
  %v526 = vpack.c.bf16 %v509, %v509
  %v535 = vunpack.c.l.b16 %v323
  %v536 = vunpack.c.l.b16 %v324
  %v537 = vunpack.c.l.b16 %v325
  %v538 = vunpack.c.l.b16 %v326
  %v539 = vunpack.c.l.b16 %v327
  %v540 = vunpack.c.l.b16 %v328
  %v541 = vunpack.c.l.b16 %v329
  %v542 = vunpack.c.l.b16 %v330
  %v543 = vpack.c.b16 %v536, %v535
  %v544 = vpack.c.b16 %v538, %v537
  %v545 = vpack.c.b16 %v540, %v539
  %v546 = vpack.c.b16 %v542, %v541
  %v555 = vunpack.c.l.b16 %v405
  %v556 = vunpack.c.l.b16 %v406
  %v557 = vunpack.c.l.b16 %v407
  %v558 = vunpack.c.l.b16 %v408
  %v559 = vunpack.c.l.b16 %v409
  %v560 = vunpack.c.l.b16 %v410
  %v561 = vunpack.c.l.b16 %v411
  %v562 = vunpack.c.l.b16 %v412
  %v563 = vpack.c.b16 %v556, %v555
  %v564 = vpack.c.b16 %v558, %v557
  %v565 = vpack.c.b16 %v560, %v559
  %v566 = vpack.c.b16 %v562, %v561
  %vm567 = vcmask 64512
  %v569 = vsel %vm567, %v543, 0
  %v572 = vsel %vm567, %v544, 0
  %v575 = vsel %vm567, %v545, 0
  %v578 = vsel %vm567, %v546, 0
  %v581 = vsel %vm567, %v563, 0
  %v584 = vsel %vm567, %v564, 0
  %v587 = vsel %vm567, %v565, 0
  %v590 = vsel %vm567, %v566, 0
  %592 = vmatpush.bf16.xpose.msra.mxu0 0
  %593 = vmatpush.bf16.xpose.msra.mxu0 0
  %594 = vmatpush.bf16.xpose.msra.mxu0 0
  %595 = vmatpush.bf16.xpose.msra.mxu0 0
  %596 = vmatpush.bf16.xpose.msra.mxu0 %v590
  %597 = vmatpush.bf16.xpose.msra.mxu0 %v587
  %598 = vmatpush.bf16.xpose.msra.mxu0 %v584
  %599 = vmatpush.bf16.xpose.msra.mxu0 %v581
  %600 = vmatmul.bf16.gmra.mxu0 %v569
  %v601 = vpop.f32.mrf.mxu0
  %v602 = vadd.f32 0.0, %v601
  %v603 = vpop.f32.mrf.mxu0
  %v604 = vadd.f32 0.0, %v603
  %605 = vmatmul.bf16.gmra.mxu0 %v572
  %v606 = vpop.f32.mrf.mxu0
  %v607 = vadd.f32 0.0, %v606
  %v608 = vpop.f32.mrf.mxu0
  %v609 = vadd.f32 0.0, %v608
  %610 = vmatmul.bf16.gmra.mxu0 %v575
  %v611 = vpop.f32.mrf.mxu0
  %v612 = vadd.f32 0.0, %v611
  %v613 = vpop.f32.mrf.mxu0
  %v614 = vadd.f32 0.0, %v613
  %615 = vmatmul.bf16.gmra.mxu0 %v578
  %v616 = vpop.f32.mrf.mxu0
  %v617 = vadd.f32 0.0, %v616
  %v618 = vpop.f32.mrf.mxu0
  %v619 = vadd.f32 0.0, %v618
  %620 = vdwg.mxu0
  %v621 = vmul.f32 %v602, 0.35355338
  %v622 = vmul.f32 %v604, 0.35355338
  %v623 = vmul.f32 %v607, 0.35355338
  %v624 = vmul.f32 %v609, 0.35355338
  %v625 = vmul.f32 %v612, 0.35355338
  %v626 = vmul.f32 %v614, 0.35355338
  %v627 = vmul.f32 %v617, 0.35355338
  %v628 = vmul.f32 %v619, 0.35355338
  %vm629 = vcmask 523264
  %v630 = vsel %vm629, %v621, -inf
  %631 = vmax.xlane.f32.xlu0 %v630
  %v632 = vpop.xlane.xlu0 %631
  %v633 = vsel %vm629, %v622, -inf
  %634 = vmax.xlane.f32.xlu0 %v633
  %v635 = vpop.xlane.xlu0 %634
  %v636 = vsel %vm629, %v623, -inf
  %637 = vmax.xlane.f32.xlu0 %v636
  %v638 = vpop.xlane.xlu0 %637
  %v639 = vsel %vm629, %v624, -inf
  %640 = vmax.xlane.f32.xlu0 %v639
  %v641 = vpop.xlane.xlu0 %640
  %v642 = vsel %vm629, %v625, -inf
  %643 = vmax.xlane.f32.xlu0 %v642
  %v644 = vpop.xlane.xlu0 %643
  %v645 = vsel %vm629, %v626, -inf
  %646 = vmax.xlane.f32.xlu0 %v645
  %v647 = vpop.xlane.xlu0 %646
  %v648 = vsel %vm629, %v627, -inf
  %649 = vmax.xlane.f32.xlu0 %v648
  %v650 = vpop.xlane.xlu0 %649
  %v651 = vsel %vm629, %v628, -inf
  %652 = vmax.xlane.f32.xlu0 %v651
  %v653 = vpop.xlane.xlu0 %652
  %v654 = vsub.f32 %v621, %v632
  %v655 = vsub.f32 %v622, %v635
  %v656 = vsub.f32 %v623, %v638
  %v657 = vsub.f32 %v624, %v641
  %v658 = vsub.f32 %v625, %v644
  %v659 = vsub.f32 %v626, %v647
  %v660 = vsub.f32 %v627, %v650
  %v661 = vsub.f32 %v628, %v653
  %v662 = vmul.f32 %v654, 1.442695
  %v663 = vpow.pop %v662
  %v664 = vmul.f32 %v655, 1.442695
  %v665 = vpow.pop %v664
  %v666 = vmul.f32 %v656, 1.442695
  %v667 = vpow.pop %v666
  %v668 = vmul.f32 %v657, 1.442695
  %v669 = vpow.pop %v668
  %v670 = vmul.f32 %v658, 1.442695
  %v671 = vpow.pop %v670
  %v672 = vmul.f32 %v659, 1.442695
  %v673 = vpow.pop %v672
  %v674 = vmul.f32 %v660, 1.442695
  %v675 = vpow.pop %v674
  %v676 = vmul.f32 %v661, 1.442695
  %v677 = vpow.pop %v676
  %v678 = vsel %vm629, %v663, 0.0
  %679 = vadd.xlane.f32.xlu0 %v678
  %v680 = vpop.xlane.xlu0 %679
  %v681 = vsel %vm629, %v665, 0.0
  %682 = vadd.xlane.f32.xlu0 %v681
  %v683 = vpop.xlane.xlu0 %682
  %v684 = vsel %vm629, %v667, 0.0
  %685 = vadd.xlane.f32.xlu0 %v684
  %v686 = vpop.xlane.xlu0 %685
  %v687 = vsel %vm629, %v669, 0.0
  %688 = vadd.xlane.f32.xlu0 %v687
  %v689 = vpop.xlane.xlu0 %688
  %v690 = vsel %vm629, %v671, 0.0
  %691 = vadd.xlane.f32.xlu0 %v690
  %v692 = vpop.xlane.xlu0 %691
  %v693 = vsel %vm629, %v673, 0.0
  %694 = vadd.xlane.f32.xlu0 %v693
  %v695 = vpop.xlane.xlu0 %694
  %v696 = vsel %vm629, %v675, 0.0
  %697 = vadd.xlane.f32.xlu0 %v696
  %v698 = vpop.xlane.xlu0 %697
  %v699 = vsel %vm629, %v677, 0.0
  %700 = vadd.xlane.f32.xlu0 %v699
  %v701 = vpop.xlane.xlu0 %700
  %v702 = vrcp.pop %v680
  %v703 = vrcp.pop %v683
  %v704 = vrcp.pop %v686
  %v705 = vrcp.pop %v689
  %v706 = vrcp.pop %v692
  %v707 = vrcp.pop %v695
  %v708 = vrcp.pop %v698
  %v709 = vrcp.pop %v701
  %v710 = vmul.f32 %v663, %v702
  %v711 = vmul.f32 %v665, %v703
  %v712 = vmul.f32 %v667, %v704
  %v713 = vmul.f32 %v669, %v705
  %v714 = vmul.f32 %v671, %v706
  %v715 = vmul.f32 %v673, %v707
  %v716 = vmul.f32 %v675, %v708
  %v717 = vmul.f32 %v677, %v709
  %v718 = vpack.c.bf16 %v711, %v710
  %v719 = vpack.c.bf16 %v713, %v712
  %v720 = vpack.c.bf16 %v715, %v714
  %v721 = vpack.c.bf16 %v717, %v716
  %v730 = vunpack.c.l.b16 %v511
  %v731 = vunpack.c.l.b16 %v512
  %v732 = vunpack.c.l.b16 %v513
  %v733 = vunpack.c.l.b16 %v514
  %v734 = vunpack.c.l.b16 %v515
  %v735 = vunpack.c.l.b16 %v516
  %v736 = vunpack.c.l.b16 %v517
  %v737 = vunpack.c.l.b16 %v518
  %v738 = vpack.c.b16 %v731, %v730
  %v739 = vpack.c.b16 %v733, %v732
  %v740 = vpack.c.b16 %v735, %v734
  %v741 = vpack.c.b16 %v737, %v736
  %v747 = vsel %vm629, %v718, 0
  %v750 = vsel %vm629, %v719, 0
  %v753 = vsel %vm629, %v720, 0
  %v756 = vsel %vm629, %v721, 0
  %758 = vmatpush.bf16.msra.mxu0 0
  %759 = vmatpush.bf16.msra.mxu0 0
  %760 = vmatpush.bf16.msra.mxu0 0
  %761 = vmatpush.bf16.msra.mxu0 0
  %762 = vmatpush.bf16.msra.mxu0 %v741
  %763 = vmatpush.bf16.msra.mxu0 %v740
  %764 = vmatpush.bf16.msra.mxu0 %v739
  %765 = vmatpush.bf16.msra.mxu0 %v738
  %766 = vmatmul.bf16.gmra.mxu0 %v747
  %v767 = vpop.f32.mrf.mxu0
  %v768 = vadd.f32 0.0, %v767
  %v769 = vpop.f32.mrf.mxu0
  %v770 = vadd.f32 0.0, %v769
  %771 = vmatmul.bf16.gmra.mxu0 %v750
  %v772 = vpop.f32.mrf.mxu0
  %v773 = vadd.f32 0.0, %v772
  %v774 = vpop.f32.mrf.mxu0
  %v775 = vadd.f32 0.0, %v774
  %776 = vmatmul.bf16.gmra.mxu0 %v753
  %v777 = vpop.f32.mrf.mxu0
  %v778 = vadd.f32 0.0, %v777
  %v779 = vpop.f32.mrf.mxu0
  %v780 = vadd.f32 0.0, %v779
  %781 = vmatmul.bf16.gmra.mxu0 %v756
  %v782 = vpop.f32.mrf.mxu0
  %v783 = vadd.f32 0.0, %v782
  %v784 = vpop.f32.mrf.mxu0
  %v785 = vadd.f32 0.0, %v784
  %786 = vdwg.mxu0
  %v795 = vunpack.c.l.b16 %v331
  %v796 = vunpack.c.l.b16 %v332
  %v797 = vunpack.c.l.b16 %v333
  %v798 = vunpack.c.l.b16 %v334
  %v799 = vunpack.c.l.b16 %v335
  %v800 = vunpack.c.l.b16 %v336
  %v801 = vunpack.c.l.b16 %v337
  %v802 = vunpack.c.l.b16 %v338
  %v803 = vpack.c.b16 %v796, %v795
  %v804 = vpack.c.b16 %v798, %v797
  %v805 = vpack.c.b16 %v800, %v799
  %v806 = vpack.c.b16 %v802, %v801
  %v815 = vunpack.c.l.b16 %v413
  %v816 = vunpack.c.l.b16 %v414
  %v817 = vunpack.c.l.b16 %v415
  %v818 = vunpack.c.l.b16 %v416
  %v819 = vunpack.c.l.b16 %v417
  %v820 = vunpack.c.l.b16 %v418
  %v821 = vunpack.c.l.b16 %v419
  %v822 = vunpack.c.l.b16 %v420
  %v823 = vpack.c.b16 %v816, %v815
  %v824 = vpack.c.b16 %v818, %v817
  %v825 = vpack.c.b16 %v820, %v819
  %v826 = vpack.c.b16 %v822, %v821
  %v828 = vsel %vm567, %v803, 0
  %v831 = vsel %vm567, %v804, 0
  %v834 = vsel %vm567, %v805, 0
  %v837 = vsel %vm567, %v806, 0
  %v840 = vsel %vm567, %v823, 0
  %v843 = vsel %vm567, %v824, 0
  %v846 = vsel %vm567, %v825, 0
  %v849 = vsel %vm567, %v826, 0
  %851 = vmatpush.bf16.xpose.msra.mxu0 0
  %852 = vmatpush.bf16.xpose.msra.mxu0 0
  %853 = vmatpush.bf16.xpose.msra.mxu0 0
  %854 = vmatpush.bf16.xpose.msra.mxu0 0
  %855 = vmatpush.bf16.xpose.msra.mxu0 %v849
  %856 = vmatpush.bf16.xpose.msra.mxu0 %v846
  %857 = vmatpush.bf16.xpose.msra.mxu0 %v843
  %858 = vmatpush.bf16.xpose.msra.mxu0 %v840
  %859 = vmatmul.bf16.gmra.mxu0 %v828
  %v860 = vpop.f32.mrf.mxu0
  %v861 = vadd.f32 0.0, %v860
  %v862 = vpop.f32.mrf.mxu0
  %v863 = vadd.f32 0.0, %v862
  %864 = vmatmul.bf16.gmra.mxu0 %v831
  %v865 = vpop.f32.mrf.mxu0
  %v866 = vadd.f32 0.0, %v865
  %v867 = vpop.f32.mrf.mxu0
  %v868 = vadd.f32 0.0, %v867
  %869 = vmatmul.bf16.gmra.mxu0 %v834
  %v870 = vpop.f32.mrf.mxu0
  %v871 = vadd.f32 0.0, %v870
  %v872 = vpop.f32.mrf.mxu0
  %v873 = vadd.f32 0.0, %v872
  %874 = vmatmul.bf16.gmra.mxu0 %v837
  %v875 = vpop.f32.mrf.mxu0
  %v876 = vadd.f32 0.0, %v875
  %v877 = vpop.f32.mrf.mxu0
  %v878 = vadd.f32 0.0, %v877
  %879 = vdwg.mxu0
  %v880 = vmul.f32 %v861, 0.35355338
  %v881 = vmul.f32 %v863, 0.35355338
  %v882 = vmul.f32 %v866, 0.35355338
  %v883 = vmul.f32 %v868, 0.35355338
  %v884 = vmul.f32 %v871, 0.35355338
  %v885 = vmul.f32 %v873, 0.35355338
  %v886 = vmul.f32 %v876, 0.35355338
  %v887 = vmul.f32 %v878, 0.35355338
  %v888 = vsel %vm629, %v880, -inf
  %889 = vmax.xlane.f32.xlu0 %v888
  %v890 = vpop.xlane.xlu0 %889
  %v891 = vsel %vm629, %v881, -inf
  %892 = vmax.xlane.f32.xlu0 %v891
  %v893 = vpop.xlane.xlu0 %892
  %v894 = vsel %vm629, %v882, -inf
  %895 = vmax.xlane.f32.xlu0 %v894
  %v896 = vpop.xlane.xlu0 %895
  %v897 = vsel %vm629, %v883, -inf
  %898 = vmax.xlane.f32.xlu0 %v897
  %v899 = vpop.xlane.xlu0 %898
  %v900 = vsel %vm629, %v884, -inf
  %901 = vmax.xlane.f32.xlu0 %v900
  %v902 = vpop.xlane.xlu0 %901
  %v903 = vsel %vm629, %v885, -inf
  %904 = vmax.xlane.f32.xlu0 %v903
  %v905 = vpop.xlane.xlu0 %904
  %v906 = vsel %vm629, %v886, -inf
  %907 = vmax.xlane.f32.xlu0 %v906
  %v908 = vpop.xlane.xlu0 %907
  %v909 = vsel %vm629, %v887, -inf
  %910 = vmax.xlane.f32.xlu0 %v909
  %v911 = vpop.xlane.xlu0 %910
  %v912 = vsub.f32 %v880, %v890
  %v913 = vsub.f32 %v881, %v893
  %v914 = vsub.f32 %v882, %v896
  %v915 = vsub.f32 %v883, %v899
  %v916 = vsub.f32 %v884, %v902
  %v917 = vsub.f32 %v885, %v905
  %v918 = vsub.f32 %v886, %v908
  %v919 = vsub.f32 %v887, %v911
  %v920 = vmul.f32 %v912, 1.442695
  %v921 = vpow.pop %v920
  %v922 = vmul.f32 %v913, 1.442695
  %v923 = vpow.pop %v922
  %v924 = vmul.f32 %v914, 1.442695
  %v925 = vpow.pop %v924
  %v926 = vmul.f32 %v915, 1.442695
  %v927 = vpow.pop %v926
  %v928 = vmul.f32 %v916, 1.442695
  %v929 = vpow.pop %v928
  %v930 = vmul.f32 %v917, 1.442695
  %v931 = vpow.pop %v930
  %v932 = vmul.f32 %v918, 1.442695
  %v933 = vpow.pop %v932
  %v934 = vmul.f32 %v919, 1.442695
  %v935 = vpow.pop %v934
  %v936 = vsel %vm629, %v921, 0.0
  %937 = vadd.xlane.f32.xlu0 %v936
  %v938 = vpop.xlane.xlu0 %937
  %v939 = vsel %vm629, %v923, 0.0
  %940 = vadd.xlane.f32.xlu0 %v939
  %v941 = vpop.xlane.xlu0 %940
  %v942 = vsel %vm629, %v925, 0.0
  %943 = vadd.xlane.f32.xlu0 %v942
  %v944 = vpop.xlane.xlu0 %943
  %v945 = vsel %vm629, %v927, 0.0
  %946 = vadd.xlane.f32.xlu0 %v945
  %v947 = vpop.xlane.xlu0 %946
  %v948 = vsel %vm629, %v929, 0.0
  %949 = vadd.xlane.f32.xlu0 %v948
  %v950 = vpop.xlane.xlu0 %949
  %v951 = vsel %vm629, %v931, 0.0
  %952 = vadd.xlane.f32.xlu0 %v951
  %v953 = vpop.xlane.xlu0 %952
  %v954 = vsel %vm629, %v933, 0.0
  %955 = vadd.xlane.f32.xlu0 %v954
  %v956 = vpop.xlane.xlu0 %955
  %v957 = vsel %vm629, %v935, 0.0
  %958 = vadd.xlane.f32.xlu0 %v957
  %v959 = vpop.xlane.xlu0 %958
  %v960 = vrcp.pop %v938
  %v961 = vrcp.pop %v941
  %v962 = vrcp.pop %v944
  %v963 = vrcp.pop %v947
  %v964 = vrcp.pop %v950
  %v965 = vrcp.pop %v953
  %v966 = vrcp.pop %v956
  %v967 = vrcp.pop %v959
  %v968 = vmul.f32 %v921, %v960
  %v969 = vmul.f32 %v923, %v961
  %v970 = vmul.f32 %v925, %v962
  %v971 = vmul.f32 %v927, %v963
  %v972 = vmul.f32 %v929, %v964
  %v973 = vmul.f32 %v931, %v965
  %v974 = vmul.f32 %v933, %v966
  %v975 = vmul.f32 %v935, %v967
  %v976 = vpack.c.bf16 %v969, %v968
  %v977 = vpack.c.bf16 %v971, %v970
  %v978 = vpack.c.bf16 %v973, %v972
  %v979 = vpack.c.bf16 %v975, %v974
  %v988 = vunpack.c.l.b16 %v519
  %v989 = vunpack.c.l.b16 %v520
  %v990 = vunpack.c.l.b16 %v521
  %v991 = vunpack.c.l.b16 %v522
  %v992 = vunpack.c.l.b16 %v523
  %v993 = vunpack.c.l.b16 %v524
  %v994 = vunpack.c.l.b16 %v525
  %v995 = vunpack.c.l.b16 %v526
  %v996 = vpack.c.b16 %v989, %v988
  %v997 = vpack.c.b16 %v991, %v990
  %v998 = vpack.c.b16 %v993, %v992
  %v999 = vpack.c.b16 %v995, %v994
  %v1005 = vsel %vm629, %v976, 0
  %v1008 = vsel %vm629, %v977, 0
  %v1011 = vsel %vm629, %v978, 0
  %v1014 = vsel %vm629, %v979, 0
  %1016 = vmatpush.bf16.msra.mxu0 0
  %1017 = vmatpush.bf16.msra.mxu0 0
  %1018 = vmatpush.bf16.msra.mxu0 0
  %1019 = vmatpush.bf16.msra.mxu0 0
  %1020 = vmatpush.bf16.msra.mxu0 %v999
  %1021 = vmatpush.bf16.msra.mxu0 %v998
  %1022 = vmatpush.bf16.msra.mxu0 %v997
  %1023 = vmatpush.bf16.msra.mxu0 %v996
  %1024 = vmatmul.bf16.gmra.mxu0 %v1005
  %v1025 = vpop.f32.mrf.mxu0
  %v1026 = vadd.f32 0.0, %v1025
  %v1027 = vpop.f32.mrf.mxu0
  %v1028 = vadd.f32 0.0, %v1027
  %1029 = vmatmul.bf16.gmra.mxu0 %v1008
  %v1030 = vpop.f32.mrf.mxu0
  %v1031 = vadd.f32 0.0, %v1030
  %v1032 = vpop.f32.mrf.mxu0
  %v1033 = vadd.f32 0.0, %v1032
  %1034 = vmatmul.bf16.gmra.mxu0 %v1011
  %v1035 = vpop.f32.mrf.mxu0
  %v1036 = vadd.f32 0.0, %v1035
  %v1037 = vpop.f32.mrf.mxu0
  %v1038 = vadd.f32 0.0, %v1037
  %1039 = vmatmul.bf16.gmra.mxu0 %v1014
  %v1040 = vpop.f32.mrf.mxu0
  %v1041 = vadd.f32 0.0, %v1040
  %v1042 = vpop.f32.mrf.mxu0
  %v1043 = vadd.f32 0.0, %v1042
  %1044 = vdwg.mxu0
  %v1045 = vpack.c.bf16 %v770, %v768
  %v1046 = vpack.c.bf16 %v775, %v773
  %v1047 = vpack.c.bf16 %v780, %v778
  %v1048 = vpack.c.bf16 %v785, %v783
  %v1049 = vpack.c.bf16 %v1028, %v1026
  %v1050 = vpack.c.bf16 %v1033, %v1031
  %v1051 = vpack.c.bf16 %v1038, %v1036
  %v1052 = vpack.c.bf16 %v1043, %v1041
  %v1053 = vld [vmem:[%s6] sm:$0xf]
  %s1054 = scalar_lea.vmem %s4, 16
  %v1055 = vld [vmem:[%s1054] sm:$0xf]
  %v1056 = vld [vmem:[%s1054 + $0x4] sm:$0xf]
  %v1057 = vld [vmem:[%s1054 + $0x8] sm:$0xf]
  %v1058 = vld [vmem:[%s1054 + $0xc] sm:$0xf]
  %s1059 = scalar_lea.vmem %s5, 1
  %v1060 = vld [vmem:[%s1059] sm:$0x1]
  %v1062 = vperm.slane %v1060, 0
  %v1068 = vunpack.c.l.b16 %v1055
  %v1069 = vunpack.c.l.b16 %v1056
  %v1070 = vunpack.c.l.b16 %v1057
  %v1071 = vunpack.c.l.b16 %v1058
  %v1072 = vpack.c.b16 %v1069, %v1068
  %v1073 = vpack.c.b16 %v1071, %v1070
  %1076 = vmatpush.bf16.msra.mxu0 0
  %1077 = vmatpush.bf16.msra.mxu0 0
  %1078 = vmatpush.bf16.msra.mxu0 0
  %1079 = vmatpush.bf16.msra.mxu0 0
  %1080 = vmatpush.bf16.msra.mxu0 0
  %1081 = vmatpush.bf16.msra.mxu0 0
  %1082 = vmatpush.bf16.msra.mxu0 %v1073
  %1083 = vmatpush.bf16.msra.mxu0 %v1072
  %1084 = vmatmul.bf16.gmra.mxu0 %v251
  %v1085 = vpop.f32.mrf.mxu0
  %v1086 = vadd.f32 %v1062, %v1085
  %v1087 = vpop.f32.mrf.mxu0
  %v1088 = vadd.f32 %v1062, %v1087
  %1089 = vmatmul.bf16.gmra.mxu0 %v254
  %v1090 = vpop.f32.mrf.mxu0
  %v1091 = vadd.f32 %v1062, %v1090
  %v1092 = vpop.f32.mrf.mxu0
  %v1093 = vadd.f32 %v1062, %v1092
  %1094 = vmatmul.bf16.gmra.mxu0 %v257
  %v1095 = vpop.f32.mrf.mxu0
  %v1096 = vadd.f32 %v1062, %v1095
  %v1097 = vpop.f32.mrf.mxu0
  %v1098 = vadd.f32 %v1062, %v1097
  %1099 = vmatmul.bf16.gmra.mxu0 %v260
  %v1100 = vpop.f32.mrf.mxu0
  %v1101 = vadd.f32 %v1062, %v1100
  %v1102 = vpop.f32.mrf.mxu0
  %v1103 = vadd.f32 %v1062, %v1102
  %1104 = vmatmul.bf16.gmra.mxu0 %v263
  %v1105 = vpop.f32.mrf.mxu0
  %v1106 = vadd.f32 %v1062, %v1105
  %v1107 = vpop.f32.mrf.mxu0
  %v1108 = vadd.f32 %v1062, %v1107
  %1109 = vmatmul.bf16.gmra.mxu0 %v266
  %v1110 = vpop.f32.mrf.mxu0
  %v1111 = vadd.f32 %v1062, %v1110
  %v1112 = vpop.f32.mrf.mxu0
  %v1113 = vadd.f32 %v1062, %v1112
  %1114 = vmatmul.bf16.gmra.mxu0 %v269
  %v1115 = vpop.f32.mrf.mxu0
  %v1116 = vadd.f32 %v1062, %v1115
  %v1117 = vpop.f32.mrf.mxu0
  %v1118 = vadd.f32 %v1062, %v1117
  %1119 = vmatmul.bf16.gmra.mxu0 %v272
  %v1120 = vpop.f32.mrf.mxu0
  %v1121 = vadd.f32 %v1062, %v1120
  %v1122 = vpop.f32.mrf.mxu0
  %v1123 = vadd.f32 %v1062, %v1122
  %1124 = vdwg.mxu0
  %v1125 = vpack.c.bf16 %v1086, %v1086
  %v1126 = vpack.c.bf16 %v1088, %v1088
  %v1127 = vpack.c.bf16 %v1091, %v1091
  %v1128 = vpack.c.bf16 %v1093, %v1093
  %v1129 = vpack.c.bf16 %v1096, %v1096
  %v1130 = vpack.c.bf16 %v1098, %v1098
  %v1131 = vpack.c.bf16 %v1101, %v1101
  %v1132 = vpack.c.bf16 %v1103, %v1103
  %v1133 = vpack.c.bf16 %v1106, %v1106
  %v1134 = vpack.c.bf16 %v1108, %v1108
  %v1135 = vpack.c.bf16 %v1111, %v1111
  %v1136 = vpack.c.bf16 %v1113, %v1113
  %v1137 = vpack.c.bf16 %v1116, %v1116
  %v1138 = vpack.c.bf16 %v1118, %v1118
  %v1139 = vpack.c.bf16 %v1121, %v1121
  %v1140 = vpack.c.bf16 %v1123, %v1123
  %s1141 = scalar_lea.vmem %s4, 80
  %v1142 = vld [vmem:[%s1141] sm:$0xf]
  %v1143 = vld [vmem:[%s1141 + $0x4] sm:$0xf]
  %v1144 = vld [vmem:[%s1141 + $0x8] sm:$0xf]
  %v1145 = vld [vmem:[%s1141 + $0xc] sm:$0xf]
  %v1150 = vunpack.c.l.b16 %v1142
  %v1151 = vunpack.c.l.b16 %v1143
  %v1152 = vunpack.c.l.b16 %v1144
  %v1153 = vunpack.c.l.b16 %v1145
  %v1154 = vpack.c.b16 %v1151, %v1150
  %v1155 = vpack.c.b16 %v1153, %v1152
  %1158 = vmatpush.bf16.msra.mxu0 0
  %1159 = vmatpush.bf16.msra.mxu0 0
  %1160 = vmatpush.bf16.msra.mxu0 0
  %1161 = vmatpush.bf16.msra.mxu0 0
  %1162 = vmatpush.bf16.msra.mxu0 0
  %1163 = vmatpush.bf16.msra.mxu0 0
  %1164 = vmatpush.bf16.msra.mxu0 %v1155
  %1165 = vmatpush.bf16.msra.mxu0 %v1154
  %1166 = vmatmul.bf16.gmra.mxu0 %v251
  %v1167 = vpop.f32.mrf.mxu0
  %v1168 = vadd.f32 0.0, %v1167
  %v1169 = vpop.f32.mrf.mxu0
  %v1170 = vadd.f32 0.0, %v1169
  %1171 = vmatmul.bf16.gmra.mxu0 %v254
  %v1172 = vpop.f32.mrf.mxu0
  %v1173 = vadd.f32 0.0, %v1172
  %v1174 = vpop.f32.mrf.mxu0
  %v1175 = vadd.f32 0.0, %v1174
  %1176 = vmatmul.bf16.gmra.mxu0 %v257
  %v1177 = vpop.f32.mrf.mxu0
  %v1178 = vadd.f32 0.0, %v1177
  %v1179 = vpop.f32.mrf.mxu0
  %v1180 = vadd.f32 0.0, %v1179
  %1181 = vmatmul.bf16.gmra.mxu0 %v260
  %v1182 = vpop.f32.mrf.mxu0
  %v1183 = vadd.f32 0.0, %v1182
  %v1184 = vpop.f32.mrf.mxu0
  %v1185 = vadd.f32 0.0, %v1184
  %1186 = vmatmul.bf16.gmra.mxu0 %v263
  %v1187 = vpop.f32.mrf.mxu0
  %v1188 = vadd.f32 0.0, %v1187
  %v1189 = vpop.f32.mrf.mxu0
  %v1190 = vadd.f32 0.0, %v1189
  %1191 = vmatmul.bf16.gmra.mxu0 %v266
  %v1192 = vpop.f32.mrf.mxu0
  %v1193 = vadd.f32 0.0, %v1192
  %v1194 = vpop.f32.mrf.mxu0
  %v1195 = vadd.f32 0.0, %v1194
  %1196 = vmatmul.bf16.gmra.mxu0 %v269
  %v1197 = vpop.f32.mrf.mxu0
  %v1198 = vadd.f32 0.0, %v1197
  %v1199 = vpop.f32.mrf.mxu0
  %v1200 = vadd.f32 0.0, %v1199
  %1201 = vmatmul.bf16.gmra.mxu0 %v272
  %v1202 = vpop.f32.mrf.mxu0
  %v1203 = vadd.f32 0.0, %v1202
  %v1204 = vpop.f32.mrf.mxu0
  %v1205 = vadd.f32 0.0, %v1204
  %1206 = vdwg.mxu0
  %v1207 = vpack.c.bf16 %v1168, %v1168
  %v1208 = vpack.c.bf16 %v1170, %v1170
  %v1209 = vpack.c.bf16 %v1173, %v1173
  %v1210 = vpack.c.bf16 %v1175, %v1175
  %v1211 = vpack.c.bf16 %v1178, %v1178
  %v1212 = vpack.c.bf16 %v1180, %v1180
  %v1213 = vpack.c.bf16 %v1183, %v1183
  %v1214 = vpack.c.bf16 %v1185, %v1185
  %v1215 = vpack.c.bf16 %v1188, %v1188
  %v1216 = vpack.c.bf16 %v1190, %v1190
  %v1217 = vpack.c.bf16 %v1193, %v1193
  %v1218 = vpack.c.bf16 %v1195, %v1195
  %v1219 = vpack.c.bf16 %v1198, %v1198
  %v1220 = vpack.c.bf16 %v1200, %v1200
  %v1221 = vpack.c.bf16 %v1203, %v1203
  %v1222 = vpack.c.bf16 %v1205, %v1205
  %s1223 = scalar_lea.vmem %s4, 144
  %v1224 = vld [vmem:[%s1223] sm:$0xf]
  %v1225 = vld [vmem:[%s1223 + $0x4] sm:$0xf]
  %v1226 = vld [vmem:[%s1223 + $0x8] sm:$0xf]
  %v1227 = vld [vmem:[%s1223 + $0xc] sm:$0xf]
  %v1232 = vunpack.c.l.b16 %v1224
  %v1233 = vunpack.c.l.b16 %v1225
  %v1234 = vunpack.c.l.b16 %v1226
  %v1235 = vunpack.c.l.b16 %v1227
  %v1236 = vpack.c.b16 %v1233, %v1232
  %v1237 = vpack.c.b16 %v1235, %v1234
  %1240 = vmatpush.bf16.msra.mxu0 0
  %1241 = vmatpush.bf16.msra.mxu0 0
  %1242 = vmatpush.bf16.msra.mxu0 0
  %1243 = vmatpush.bf16.msra.mxu0 0
  %1244 = vmatpush.bf16.msra.mxu0 0
  %1245 = vmatpush.bf16.msra.mxu0 0
  %1246 = vmatpush.bf16.msra.mxu0 %v1237
  %1247 = vmatpush.bf16.msra.mxu0 %v1236
  %1248 = vmatmul.bf16.gmra.mxu0 %v439
  %v1249 = vpop.f32.mrf.mxu0
  %v1250 = vadd.f32 0.0, %v1249
  %v1251 = vpop.f32.mrf.mxu0
  %v1252 = vadd.f32 0.0, %v1251
  %1253 = vmatmul.bf16.gmra.mxu0 %v442
  %v1254 = vpop.f32.mrf.mxu0
  %v1255 = vadd.f32 0.0, %v1254
  %v1256 = vpop.f32.mrf.mxu0
  %v1257 = vadd.f32 0.0, %v1256
  %1258 = vmatmul.bf16.gmra.mxu0 %v445
  %v1259 = vpop.f32.mrf.mxu0
  %v1260 = vadd.f32 0.0, %v1259
  %v1261 = vpop.f32.mrf.mxu0
  %v1262 = vadd.f32 0.0, %v1261
  %1263 = vmatmul.bf16.gmra.mxu0 %v448
  %v1264 = vpop.f32.mrf.mxu0
  %v1265 = vadd.f32 0.0, %v1264
  %v1266 = vpop.f32.mrf.mxu0
  %v1267 = vadd.f32 0.0, %v1266
  %1268 = vmatmul.bf16.gmra.mxu0 %v451
  %v1269 = vpop.f32.mrf.mxu0
  %v1270 = vadd.f32 0.0, %v1269
  %v1271 = vpop.f32.mrf.mxu0
  %v1272 = vadd.f32 0.0, %v1271
  %1273 = vmatmul.bf16.gmra.mxu0 %v454
  %v1274 = vpop.f32.mrf.mxu0
  %v1275 = vadd.f32 0.0, %v1274
  %v1276 = vpop.f32.mrf.mxu0
  %v1277 = vadd.f32 0.0, %v1276
  %1278 = vmatmul.bf16.gmra.mxu0 %v457
  %v1279 = vpop.f32.mrf.mxu0
  %v1280 = vadd.f32 0.0, %v1279
  %v1281 = vpop.f32.mrf.mxu0
  %v1282 = vadd.f32 0.0, %v1281
  %1283 = vmatmul.bf16.gmra.mxu0 %v460
  %v1284 = vpop.f32.mrf.mxu0
  %v1285 = vadd.f32 0.0, %v1284
  %v1286 = vpop.f32.mrf.mxu0
  %v1287 = vadd.f32 0.0, %v1286
  %1288 = vdwg.mxu0
  %v1289 = vpack.c.bf16 %v1250, %v1250
  %v1290 = vpack.c.bf16 %v1252, %v1252
  %v1291 = vpack.c.bf16 %v1255, %v1255
  %v1292 = vpack.c.bf16 %v1257, %v1257
  %v1293 = vpack.c.bf16 %v1260, %v1260
  %v1294 = vpack.c.bf16 %v1262, %v1262
  %v1295 = vpack.c.bf16 %v1265, %v1265
  %v1296 = vpack.c.bf16 %v1267, %v1267
  %v1297 = vpack.c.bf16 %v1270, %v1270
  %v1298 = vpack.c.bf16 %v1272, %v1272
  %v1299 = vpack.c.bf16 %v1275, %v1275
  %v1300 = vpack.c.bf16 %v1277, %v1277
  %v1301 = vpack.c.bf16 %v1280, %v1280
  %v1302 = vpack.c.bf16 %v1282, %v1282
  %v1303 = vpack.c.bf16 %v1285, %v1285
  %v1304 = vpack.c.bf16 %v1287, %v1287
  %v1313 = vunpack.c.l.b16 %v1125
  %v1314 = vunpack.c.l.b16 %v1126
  %v1315 = vunpack.c.l.b16 %v1127
  %v1316 = vunpack.c.l.b16 %v1128
  %v1317 = vunpack.c.l.b16 %v1129
  %v1318 = vunpack.c.l.b16 %v1130
  %v1319 = vunpack.c.l.b16 %v1131
  %v1320 = vunpack.c.l.b16 %v1132
  %v1321 = vpack.c.b16 %v1314, %v1313
  %v1322 = vpack.c.b16 %v1316, %v1315
  %v1323 = vpack.c.b16 %v1318, %v1317
  %v1324 = vpack.c.b16 %v1320, %v1319
  %v1333 = vunpack.c.l.b16 %v1207
  %v1334 = vunpack.c.l.b16 %v1208
  %v1335 = vunpack.c.l.b16 %v1209
  %v1336 = vunpack.c.l.b16 %v1210
  %v1337 = vunpack.c.l.b16 %v1211
  %v1338 = vunpack.c.l.b16 %v1212
  %v1339 = vunpack.c.l.b16 %v1213
  %v1340 = vunpack.c.l.b16 %v1214
  %v1341 = vpack.c.b16 %v1334, %v1333
  %v1342 = vpack.c.b16 %v1336, %v1335
  %v1343 = vpack.c.b16 %v1338, %v1337
  %v1344 = vpack.c.b16 %v1340, %v1339
  %v1346 = vsel %vm567, %v1321, 0
  %v1349 = vsel %vm567, %v1322, 0
  %v1352 = vsel %vm567, %v1323, 0
  %v1355 = vsel %vm567, %v1324, 0
  %v1358 = vsel %vm567, %v1341, 0
  %v1361 = vsel %vm567, %v1342, 0
  %v1364 = vsel %vm567, %v1343, 0
  %v1367 = vsel %vm567, %v1344, 0
  %1369 = vmatpush.bf16.xpose.msra.mxu0 0
  %1370 = vmatpush.bf16.xpose.msra.mxu0 0
  %1371 = vmatpush.bf16.xpose.msra.mxu0 0
  %1372 = vmatpush.bf16.xpose.msra.mxu0 0
  %1373 = vmatpush.bf16.xpose.msra.mxu0 %v1367
  %1374 = vmatpush.bf16.xpose.msra.mxu0 %v1364
  %1375 = vmatpush.bf16.xpose.msra.mxu0 %v1361
  %1376 = vmatpush.bf16.xpose.msra.mxu0 %v1358
  %1377 = vmatmul.bf16.gmra.mxu0 %v1346
  %v1378 = vpop.f32.mrf.mxu0
  %v1379 = vadd.f32 0.0, %v1378
  %v1380 = vpop.f32.mrf.mxu0
  %v1381 = vadd.f32 0.0, %v1380
  %1382 = vmatmul.bf16.gmra.mxu0 %v1349
  %v1383 = vpop.f32.mrf.mxu0
  %v1384 = vadd.f32 0.0, %v1383
  %v1385 = vpop.f32.mrf.mxu0
  %v1386 = vadd.f32 0.0, %v1385
  %1387 = vmatmul.bf16.gmra.mxu0 %v1352
  %v1388 = vpop.f32.mrf.mxu0
  %v1389 = vadd.f32 0.0, %v1388
  %v1390 = vpop.f32.mrf.mxu0
  %v1391 = vadd.f32 0.0, %v1390
  %1392 = vmatmul.bf16.gmra.mxu0 %v1355
  %v1393 = vpop.f32.mrf.mxu0
  %v1394 = vadd.f32 0.0, %v1393
  %v1395 = vpop.f32.mrf.mxu0
  %v1396 = vadd.f32 0.0, %v1395
  %1397 = vdwg.mxu0
  %v1398 = vmul.f32 %v1379, 0.35355338
  %v1399 = vmul.f32 %v1381, 0.35355338
  %v1400 = vmul.f32 %v1384, 0.35355338
  %v1401 = vmul.f32 %v1386, 0.35355338
  %v1402 = vmul.f32 %v1389, 0.35355338
  %v1403 = vmul.f32 %v1391, 0.35355338
  %v1404 = vmul.f32 %v1394, 0.35355338
  %v1405 = vmul.f32 %v1396, 0.35355338
  %v1406 = vsel %vm629, %v1398, -inf
  %1407 = vmax.xlane.f32.xlu0 %v1406
  %v1408 = vpop.xlane.xlu0 %1407
  %v1409 = vsel %vm629, %v1399, -inf
  %1410 = vmax.xlane.f32.xlu0 %v1409
  %v1411 = vpop.xlane.xlu0 %1410
  %v1412 = vsel %vm629, %v1400, -inf
  %1413 = vmax.xlane.f32.xlu0 %v1412
  %v1414 = vpop.xlane.xlu0 %1413
  %v1415 = vsel %vm629, %v1401, -inf
  %1416 = vmax.xlane.f32.xlu0 %v1415
  %v1417 = vpop.xlane.xlu0 %1416
  %v1418 = vsel %vm629, %v1402, -inf
  %1419 = vmax.xlane.f32.xlu0 %v1418
  %v1420 = vpop.xlane.xlu0 %1419
  %v1421 = vsel %vm629, %v1403, -inf
  %1422 = vmax.xlane.f32.xlu0 %v1421
  %v1423 = vpop.xlane.xlu0 %1422
  %v1424 = vsel %vm629, %v1404, -inf
  %1425 = vmax.xlane.f32.xlu0 %v1424
  %v1426 = vpop.xlane.xlu0 %1425
  %v1427 = vsel %vm629, %v1405, -inf
  %1428 = vmax.xlane.f32.xlu0 %v1427
  %v1429 = vpop.xlane.xlu0 %1428
  %v1430 = vsub.f32 %v1398, %v1408
  %v1431 = vsub.f32 %v1399, %v1411
  %v1432 = vsub.f32 %v1400, %v1414
  %v1433 = vsub.f32 %v1401, %v1417
  %v1434 = vsub.f32 %v1402, %v1420
  %v1435 = vsub.f32 %v1403, %v1423
  %v1436 = vsub.f32 %v1404, %v1426
  %v1437 = vsub.f32 %v1405, %v1429
  %v1438 = vmul.f32 %v1430, 1.442695
  %v1439 = vpow.pop %v1438
  %v1440 = vmul.f32 %v1431, 1.442695
  %v1441 = vpow.pop %v1440
  %v1442 = vmul.f32 %v1432, 1.442695
  %v1443 = vpow.pop %v1442
  %v1444 = vmul.f32 %v1433, 1.442695
  %v1445 = vpow.pop %v1444
  %v1446 = vmul.f32 %v1434, 1.442695
  %v1447 = vpow.pop %v1446
  %v1448 = vmul.f32 %v1435, 1.442695
  %v1449 = vpow.pop %v1448
  %v1450 = vmul.f32 %v1436, 1.442695
  %v1451 = vpow.pop %v1450
  %v1452 = vmul.f32 %v1437, 1.442695
  %v1453 = vpow.pop %v1452
  %v1454 = vsel %vm629, %v1439, 0.0
  %1455 = vadd.xlane.f32.xlu0 %v1454
  %v1456 = vpop.xlane.xlu0 %1455
  %v1457 = vsel %vm629, %v1441, 0.0
  %1458 = vadd.xlane.f32.xlu0 %v1457
  %v1459 = vpop.xlane.xlu0 %1458
  %v1460 = vsel %vm629, %v1443, 0.0
  %1461 = vadd.xlane.f32.xlu0 %v1460
  %v1462 = vpop.xlane.xlu0 %1461
  %v1463 = vsel %vm629, %v1445, 0.0
  %1464 = vadd.xlane.f32.xlu0 %v1463
  %v1465 = vpop.xlane.xlu0 %1464
  %v1466 = vsel %vm629, %v1447, 0.0
  %1467 = vadd.xlane.f32.xlu0 %v1466
  %v1468 = vpop.xlane.xlu0 %1467
  %v1469 = vsel %vm629, %v1449, 0.0
  %1470 = vadd.xlane.f32.xlu0 %v1469
  %v1471 = vpop.xlane.xlu0 %1470
  %v1472 = vsel %vm629, %v1451, 0.0
  %1473 = vadd.xlane.f32.xlu0 %v1472
  %v1474 = vpop.xlane.xlu0 %1473
  %v1475 = vsel %vm629, %v1453, 0.0
  %1476 = vadd.xlane.f32.xlu0 %v1475
  %v1477 = vpop.xlane.xlu0 %1476
  %v1478 = vrcp.pop %v1456
  %v1479 = vrcp.pop %v1459
  %v1480 = vrcp.pop %v1462
  %v1481 = vrcp.pop %v1465
  %v1482 = vrcp.pop %v1468
  %v1483 = vrcp.pop %v1471
  %v1484 = vrcp.pop %v1474
  %v1485 = vrcp.pop %v1477
  %v1486 = vmul.f32 %v1439, %v1478
  %v1487 = vmul.f32 %v1441, %v1479
  %v1488 = vmul.f32 %v1443, %v1480
  %v1489 = vmul.f32 %v1445, %v1481
  %v1490 = vmul.f32 %v1447, %v1482
  %v1491 = vmul.f32 %v1449, %v1483
  %v1492 = vmul.f32 %v1451, %v1484
  %v1493 = vmul.f32 %v1453, %v1485
  %v1494 = vpack.c.bf16 %v1487, %v1486
  %v1495 = vpack.c.bf16 %v1489, %v1488
  %v1496 = vpack.c.bf16 %v1491, %v1490
  %v1497 = vpack.c.bf16 %v1493, %v1492
  %v1506 = vunpack.c.l.b16 %v1289
  %v1507 = vunpack.c.l.b16 %v1290
  %v1508 = vunpack.c.l.b16 %v1291
  %v1509 = vunpack.c.l.b16 %v1292
  %v1510 = vunpack.c.l.b16 %v1293
  %v1511 = vunpack.c.l.b16 %v1294
  %v1512 = vunpack.c.l.b16 %v1295
  %v1513 = vunpack.c.l.b16 %v1296
  %v1514 = vpack.c.b16 %v1507, %v1506
  %v1515 = vpack.c.b16 %v1509, %v1508
  %v1516 = vpack.c.b16 %v1511, %v1510
  %v1517 = vpack.c.b16 %v1513, %v1512
  %v1523 = vsel %vm629, %v1494, 0
  %v1526 = vsel %vm629, %v1495, 0
  %v1529 = vsel %vm629, %v1496, 0
  %v1532 = vsel %vm629, %v1497, 0
  %1534 = vmatpush.bf16.msra.mxu0 0
  %1535 = vmatpush.bf16.msra.mxu0 0
  %1536 = vmatpush.bf16.msra.mxu0 0
  %1537 = vmatpush.bf16.msra.mxu0 0
  %1538 = vmatpush.bf16.msra.mxu0 %v1517
  %1539 = vmatpush.bf16.msra.mxu0 %v1516
  %1540 = vmatpush.bf16.msra.mxu0 %v1515
  %1541 = vmatpush.bf16.msra.mxu0 %v1514
  %1542 = vmatmul.bf16.gmra.mxu0 %v1523
  %v1543 = vpop.f32.mrf.mxu0
  %v1544 = vadd.f32 0.0, %v1543
  %v1545 = vpop.f32.mrf.mxu0
  %v1546 = vadd.f32 0.0, %v1545
  %1547 = vmatmul.bf16.gmra.mxu0 %v1526
  %v1548 = vpop.f32.mrf.mxu0
  %v1549 = vadd.f32 0.0, %v1548
  %v1550 = vpop.f32.mrf.mxu0
  %v1551 = vadd.f32 0.0, %v1550
  %1552 = vmatmul.bf16.gmra.mxu0 %v1529
  %v1553 = vpop.f32.mrf.mxu0
  %v1554 = vadd.f32 0.0, %v1553
  %v1555 = vpop.f32.mrf.mxu0
  %v1556 = vadd.f32 0.0, %v1555
  %1557 = vmatmul.bf16.gmra.mxu0 %v1532
  %v1558 = vpop.f32.mrf.mxu0
  %v1559 = vadd.f32 0.0, %v1558
  %v1560 = vpop.f32.mrf.mxu0
  %v1561 = vadd.f32 0.0, %v1560
  %1562 = vdwg.mxu0
  %v1571 = vunpack.c.l.b16 %v1133
  %v1572 = vunpack.c.l.b16 %v1134
  %v1573 = vunpack.c.l.b16 %v1135
  %v1574 = vunpack.c.l.b16 %v1136
  %v1575 = vunpack.c.l.b16 %v1137
  %v1576 = vunpack.c.l.b16 %v1138
  %v1577 = vunpack.c.l.b16 %v1139
  %v1578 = vunpack.c.l.b16 %v1140
  %v1579 = vpack.c.b16 %v1572, %v1571
  %v1580 = vpack.c.b16 %v1574, %v1573
  %v1581 = vpack.c.b16 %v1576, %v1575
  %v1582 = vpack.c.b16 %v1578, %v1577
  %v1591 = vunpack.c.l.b16 %v1215
  %v1592 = vunpack.c.l.b16 %v1216
  %v1593 = vunpack.c.l.b16 %v1217
  %v1594 = vunpack.c.l.b16 %v1218
  %v1595 = vunpack.c.l.b16 %v1219
  %v1596 = vunpack.c.l.b16 %v1220
  %v1597 = vunpack.c.l.b16 %v1221
  %v1598 = vunpack.c.l.b16 %v1222
  %v1599 = vpack.c.b16 %v1592, %v1591
  %v1600 = vpack.c.b16 %v1594, %v1593
  %v1601 = vpack.c.b16 %v1596, %v1595
  %v1602 = vpack.c.b16 %v1598, %v1597
  %v1604 = vsel %vm567, %v1579, 0
  %v1607 = vsel %vm567, %v1580, 0
  %v1610 = vsel %vm567, %v1581, 0
  %v1613 = vsel %vm567, %v1582, 0
  %v1616 = vsel %vm567, %v1599, 0
  %v1619 = vsel %vm567, %v1600, 0
  %v1622 = vsel %vm567, %v1601, 0
  %v1625 = vsel %vm567, %v1602, 0
  %1627 = vmatpush.bf16.xpose.msra.mxu0 0
  %1628 = vmatpush.bf16.xpose.msra.mxu0 0
  %1629 = vmatpush.bf16.xpose.msra.mxu0 0
  %1630 = vmatpush.bf16.xpose.msra.mxu0 0
  %1631 = vmatpush.bf16.xpose.msra.mxu0 %v1625
  %1632 = vmatpush.bf16.xpose.msra.mxu0 %v1622
  %1633 = vmatpush.bf16.xpose.msra.mxu0 %v1619
  %1634 = vmatpush.bf16.xpose.msra.mxu0 %v1616
  %1635 = vmatmul.bf16.gmra.mxu0 %v1604
  %v1636 = vpop.f32.mrf.mxu0
  %v1637 = vadd.f32 0.0, %v1636
  %v1638 = vpop.f32.mrf.mxu0
  %v1639 = vadd.f32 0.0, %v1638
  %1640 = vmatmul.bf16.gmra.mxu0 %v1607
  %v1641 = vpop.f32.mrf.mxu0
  %v1642 = vadd.f32 0.0, %v1641
  %v1643 = vpop.f32.mrf.mxu0
  %v1644 = vadd.f32 0.0, %v1643
  %1645 = vmatmul.bf16.gmra.mxu0 %v1610
  %v1646 = vpop.f32.mrf.mxu0
  %v1647 = vadd.f32 0.0, %v1646
  %v1648 = vpop.f32.mrf.mxu0
  %v1649 = vadd.f32 0.0, %v1648
  %1650 = vmatmul.bf16.gmra.mxu0 %v1613
  %v1651 = vpop.f32.mrf.mxu0
  %v1652 = vadd.f32 0.0, %v1651
  %v1653 = vpop.f32.mrf.mxu0
  %v1654 = vadd.f32 0.0, %v1653
  %1655 = vdwg.mxu0
  %v1656 = vmul.f32 %v1637, 0.35355338
  %v1657 = vmul.f32 %v1639, 0.35355338
  %v1658 = vmul.f32 %v1642, 0.35355338
  %v1659 = vmul.f32 %v1644, 0.35355338
  %v1660 = vmul.f32 %v1647, 0.35355338
  %v1661 = vmul.f32 %v1649, 0.35355338
  %v1662 = vmul.f32 %v1652, 0.35355338
  %v1663 = vmul.f32 %v1654, 0.35355338
  %v1664 = vsel %vm629, %v1656, -inf
  %1665 = vmax.xlane.f32.xlu0 %v1664
  %v1666 = vpop.xlane.xlu0 %1665
  %v1667 = vsel %vm629, %v1657, -inf
  %1668 = vmax.xlane.f32.xlu0 %v1667
  %v1669 = vpop.xlane.xlu0 %1668
  %v1670 = vsel %vm629, %v1658, -inf
  %1671 = vmax.xlane.f32.xlu0 %v1670
  %v1672 = vpop.xlane.xlu0 %1671
  %v1673 = vsel %vm629, %v1659, -inf
  %1674 = vmax.xlane.f32.xlu0 %v1673
  %v1675 = vpop.xlane.xlu0 %1674
  %v1676 = vsel %vm629, %v1660, -inf
  %1677 = vmax.xlane.f32.xlu0 %v1676
  %v1678 = vpop.xlane.xlu0 %1677
  %v1679 = vsel %vm629, %v1661, -inf
  %1680 = vmax.xlane.f32.xlu0 %v1679
  %v1681 = vpop.xlane.xlu0 %1680
  %v1682 = vsel %vm629, %v1662, -inf
  %1683 = vmax.xlane.f32.xlu0 %v1682
  %v1684 = vpop.xlane.xlu0 %1683
  %v1685 = vsel %vm629, %v1663, -inf
  %1686 = vmax.xlane.f32.xlu0 %v1685
  %v1687 = vpop.xlane.xlu0 %1686
  %v1688 = vsub.f32 %v1656, %v1666
  %v1689 = vsub.f32 %v1657, %v1669
  %v1690 = vsub.f32 %v1658, %v1672
  %v1691 = vsub.f32 %v1659, %v1675
  %v1692 = vsub.f32 %v1660, %v1678
  %v1693 = vsub.f32 %v1661, %v1681
  %v1694 = vsub.f32 %v1662, %v1684
  %v1695 = vsub.f32 %v1663, %v1687
  %v1696 = vmul.f32 %v1688, 1.442695
  %v1697 = vpow.pop %v1696
  %v1698 = vmul.f32 %v1689, 1.442695
  %v1699 = vpow.pop %v1698
  %v1700 = vmul.f32 %v1690, 1.442695
  %v1701 = vpow.pop %v1700
  %v1702 = vmul.f32 %v1691, 1.442695
  %v1703 = vpow.pop %v1702
  %v1704 = vmul.f32 %v1692, 1.442695
  %v1705 = vpow.pop %v1704
  %v1706 = vmul.f32 %v1693, 1.442695
  %v1707 = vpow.pop %v1706
  %v1708 = vmul.f32 %v1694, 1.442695
  %v1709 = vpow.pop %v1708
  %v1710 = vmul.f32 %v1695, 1.442695
  %v1711 = vpow.pop %v1710
  %v1712 = vsel %vm629, %v1697, 0.0
  %1713 = vadd.xlane.f32.xlu0 %v1712
  %v1714 = vpop.xlane.xlu0 %1713
  %v1715 = vsel %vm629, %v1699, 0.0
  %1716 = vadd.xlane.f32.xlu0 %v1715
  %v1717 = vpop.xlane.xlu0 %1716
  %v1718 = vsel %vm629, %v1701, 0.0
  %1719 = vadd.xlane.f32.xlu0 %v1718
  %v1720 = vpop.xlane.xlu0 %1719
  %v1721 = vsel %vm629, %v1703, 0.0
  %1722 = vadd.xlane.f32.xlu0 %v1721
  %v1723 = vpop.xlane.xlu0 %1722
  %v1724 = vsel %vm629, %v1705, 0.0
  %1725 = vadd.xlane.f32.xlu0 %v1724
  %v1726 = vpop.xlane.xlu0 %1725
  %v1727 = vsel %vm629, %v1707, 0.0
  %1728 = vadd.xlane.f32.xlu0 %v1727
  %v1729 = vpop.xlane.xlu0 %1728
  %v1730 = vsel %vm629, %v1709, 0.0
  %1731 = vadd.xlane.f32.xlu0 %v1730
  %v1732 = vpop.xlane.xlu0 %1731
  %v1733 = vsel %vm629, %v1711, 0.0
  %1734 = vadd.xlane.f32.xlu0 %v1733
  %v1735 = vpop.xlane.xlu0 %1734
  %v1736 = vrcp.pop %v1714
  %v1737 = vrcp.pop %v1717
  %v1738 = vrcp.pop %v1720
  %v1739 = vrcp.pop %v1723
  %v1740 = vrcp.pop %v1726
  %v1741 = vrcp.pop %v1729
  %v1742 = vrcp.pop %v1732
  %v1743 = vrcp.pop %v1735
  %v1744 = vmul.f32 %v1697, %v1736
  %v1745 = vmul.f32 %v1699, %v1737
  %v1746 = vmul.f32 %v1701, %v1738
  %v1747 = vmul.f32 %v1703, %v1739
  %v1748 = vmul.f32 %v1705, %v1740
  %v1749 = vmul.f32 %v1707, %v1741
  %v1750 = vmul.f32 %v1709, %v1742
  %v1751 = vmul.f32 %v1711, %v1743
  %v1752 = vpack.c.bf16 %v1745, %v1744
  %v1753 = vpack.c.bf16 %v1747, %v1746
  %v1754 = vpack.c.bf16 %v1749, %v1748
  %v1755 = vpack.c.bf16 %v1751, %v1750
  %v1764 = vunpack.c.l.b16 %v1297
  %v1765 = vunpack.c.l.b16 %v1298
  %v1766 = vunpack.c.l.b16 %v1299
  %v1767 = vunpack.c.l.b16 %v1300
  %v1768 = vunpack.c.l.b16 %v1301
  %v1769 = vunpack.c.l.b16 %v1302
  %v1770 = vunpack.c.l.b16 %v1303
  %v1771 = vunpack.c.l.b16 %v1304
  %v1772 = vpack.c.b16 %v1765, %v1764
  %v1773 = vpack.c.b16 %v1767, %v1766
  %v1774 = vpack.c.b16 %v1769, %v1768
  %v1775 = vpack.c.b16 %v1771, %v1770
  %v1781 = vsel %vm629, %v1752, 0
  %v1784 = vsel %vm629, %v1753, 0
  %v1787 = vsel %vm629, %v1754, 0
  %v1790 = vsel %vm629, %v1755, 0
  %1792 = vmatpush.bf16.msra.mxu0 0
  %1793 = vmatpush.bf16.msra.mxu0 0
  %1794 = vmatpush.bf16.msra.mxu0 0
  %1795 = vmatpush.bf16.msra.mxu0 0
  %1796 = vmatpush.bf16.msra.mxu0 %v1775
  %1797 = vmatpush.bf16.msra.mxu0 %v1774
  %1798 = vmatpush.bf16.msra.mxu0 %v1773
  %1799 = vmatpush.bf16.msra.mxu0 %v1772
  %1800 = vmatmul.bf16.gmra.mxu0 %v1781
  %v1801 = vpop.f32.mrf.mxu0
  %v1802 = vadd.f32 0.0, %v1801
  %v1803 = vpop.f32.mrf.mxu0
  %v1804 = vadd.f32 0.0, %v1803
  %1805 = vmatmul.bf16.gmra.mxu0 %v1784
  %v1806 = vpop.f32.mrf.mxu0
  %v1807 = vadd.f32 0.0, %v1806
  %v1808 = vpop.f32.mrf.mxu0
  %v1809 = vadd.f32 0.0, %v1808
  %1810 = vmatmul.bf16.gmra.mxu0 %v1787
  %v1811 = vpop.f32.mrf.mxu0
  %v1812 = vadd.f32 0.0, %v1811
  %v1813 = vpop.f32.mrf.mxu0
  %v1814 = vadd.f32 0.0, %v1813
  %1815 = vmatmul.bf16.gmra.mxu0 %v1790
  %v1816 = vpop.f32.mrf.mxu0
  %v1817 = vadd.f32 0.0, %v1816
  %v1818 = vpop.f32.mrf.mxu0
  %v1819 = vadd.f32 0.0, %v1818
  %1820 = vdwg.mxu0
  %v1821 = vpack.c.bf16 %v1546, %v1544
  %v1822 = vpack.c.bf16 %v1551, %v1549
  %v1823 = vpack.c.bf16 %v1556, %v1554
  %v1824 = vpack.c.bf16 %v1561, %v1559
  %v1825 = vpack.c.bf16 %v1804, %v1802
  %v1826 = vpack.c.bf16 %v1809, %v1807
  %v1827 = vpack.c.bf16 %v1814, %v1812
  %v1828 = vpack.c.bf16 %v1819, %v1817
  %s1829 = scalar_lea.vmem %s6, 4
  %v1830 = vld [vmem:[%s1829] sm:$0xf]
  %v1832 = vsel %vm567, %v1821, 0
  %v1835 = vsel %vm567, %v1822, 0
  %v1838 = vsel %vm567, %v1823, 0
  %v1841 = vsel %vm567, %v1824, 0
  %v1844 = vsel %vm567, %v1825, 0
  %v1847 = vsel %vm567, %v1826, 0
  %v1850 = vsel %vm567, %v1827, 0
  %v1853 = vsel %vm567, %v1828, 0
  %vm1855 = vcmask 1043456
  %v1857 = vsel %vm1855, %v1830, 0
  %1859 = vmatpush.bf16.msra.mxu0 0
  %1860 = vmatpush.bf16.msra.mxu0 0
  %1861 = vmatpush.bf16.msra.mxu0 0
  %1862 = vmatpush.bf16.msra.mxu0 0
  %1863 = vmatpush.bf16.msra.mxu0 0
  %1864 = vmatpush.bf16.msra.mxu0 0
  %1865 = vmatpush.bf16.msra.mxu0 0
  %1866 = vmatpush.bf16.msra.mxu0 %v1857
  %1867 = vmatmul.bf16.gmra.mxu0 %v1832
  %v1868 = vpop.f32.mrf.mxu0
  %v1869 = vadd.f32 0.0, %v1868
  %v1870 = vpop.f32.mrf.mxu0
  %v1871 = vadd.f32 0.0, %v1870
  %1872 = vmatmul.bf16.gmra.mxu0 %v1835
  %v1873 = vpop.f32.mrf.mxu0
  %v1874 = vadd.f32 0.0, %v1873
  %v1875 = vpop.f32.mrf.mxu0
  %v1876 = vadd.f32 0.0, %v1875
  %1877 = vmatmul.bf16.gmra.mxu0 %v1838
  %v1878 = vpop.f32.mrf.mxu0
  %v1879 = vadd.f32 0.0, %v1878
  %v1880 = vpop.f32.mrf.mxu0
  %v1881 = vadd.f32 0.0, %v1880
  %1882 = vmatmul.bf16.gmra.mxu0 %v1841
  %v1883 = vpop.f32.mrf.mxu0
  %v1884 = vadd.f32 0.0, %v1883
  %v1885 = vpop.f32.mrf.mxu0
  %v1886 = vadd.f32 0.0, %v1885
  %1887 = vmatmul.bf16.gmra.mxu0 %v1844
  %v1888 = vpop.f32.mrf.mxu0
  %v1889 = vadd.f32 0.0, %v1888
  %v1890 = vpop.f32.mrf.mxu0
  %v1891 = vadd.f32 0.0, %v1890
  %1892 = vmatmul.bf16.gmra.mxu0 %v1847
  %v1893 = vpop.f32.mrf.mxu0
  %v1894 = vadd.f32 0.0, %v1893
  %v1895 = vpop.f32.mrf.mxu0
  %v1896 = vadd.f32 0.0, %v1895
  %1897 = vmatmul.bf16.gmra.mxu0 %v1850
  %v1898 = vpop.f32.mrf.mxu0
  %v1899 = vadd.f32 0.0, %v1898
  %v1900 = vpop.f32.mrf.mxu0
  %v1901 = vadd.f32 0.0, %v1900
  %1902 = vmatmul.bf16.gmra.mxu0 %v1853
  %v1903 = vpop.f32.mrf.mxu0
  %v1904 = vadd.f32 0.0, %v1903
  %v1905 = vpop.f32.mrf.mxu0
  %v1906 = vadd.f32 0.0, %v1905
  %1907 = vdwg.mxu0
  %v1909 = vsel %vm567, %v1045, 0
  %v1912 = vsel %vm567, %v1046, 0
  %v1915 = vsel %vm567, %v1047, 0
  %v1918 = vsel %vm567, %v1048, 0
  %v1921 = vsel %vm567, %v1049, 0
  %v1924 = vsel %vm567, %v1050, 0
  %v1927 = vsel %vm567, %v1051, 0
  %v1930 = vsel %vm567, %v1052, 0
  %v1933 = vsel %vm1855, %v1053, 0
  %1935 = vmatpush.bf16.msra.mxu0 0
  %1936 = vmatpush.bf16.msra.mxu0 0
  %1937 = vmatpush.bf16.msra.mxu0 0
  %1938 = vmatpush.bf16.msra.mxu0 0
  %1939 = vmatpush.bf16.msra.mxu0 0
  %1940 = vmatpush.bf16.msra.mxu0 0
  %1941 = vmatpush.bf16.msra.mxu0 0
  %1942 = vmatpush.bf16.msra.mxu0 %v1933
  %1943 = vmatmul.bf16.gmra.mxu0 %v1909
  %v1944 = vpop.f32.mrf.mxu0
  %v1945 = vadd.f32 %v1869, %v1944
  %v1946 = vpop.f32.mrf.mxu0
  %v1947 = vadd.f32 %v1871, %v1946
  %1948 = vmatmul.bf16.gmra.mxu0 %v1912
  %v1949 = vpop.f32.mrf.mxu0
  %v1950 = vadd.f32 %v1874, %v1949
  %v1951 = vpop.f32.mrf.mxu0
  %v1952 = vadd.f32 %v1876, %v1951
  %1953 = vmatmul.bf16.gmra.mxu0 %v1915
  %v1954 = vpop.f32.mrf.mxu0
  %v1955 = vadd.f32 %v1879, %v1954
  %v1956 = vpop.f32.mrf.mxu0
  %v1957 = vadd.f32 %v1881, %v1956
  %1958 = vmatmul.bf16.gmra.mxu0 %v1918
  %v1959 = vpop.f32.mrf.mxu0
  %v1960 = vadd.f32 %v1884, %v1959
  %v1961 = vpop.f32.mrf.mxu0
  %v1962 = vadd.f32 %v1886, %v1961
  %1963 = vmatmul.bf16.gmra.mxu0 %v1921
  %v1964 = vpop.f32.mrf.mxu0
  %v1965 = vadd.f32 %v1889, %v1964
  %v1966 = vpop.f32.mrf.mxu0
  %v1967 = vadd.f32 %v1891, %v1966
  %1968 = vmatmul.bf16.gmra.mxu0 %v1924
  %v1969 = vpop.f32.mrf.mxu0
  %v1970 = vadd.f32 %v1894, %v1969
  %v1971 = vpop.f32.mrf.mxu0
  %v1972 = vadd.f32 %v1896, %v1971
  %1973 = vmatmul.bf16.gmra.mxu0 %v1927
  %v1974 = vpop.f32.mrf.mxu0
  %v1975 = vadd.f32 %v1899, %v1974
  %v1976 = vpop.f32.mrf.mxu0
  %v1977 = vadd.f32 %v1901, %v1976
  %1978 = vmatmul.bf16.gmra.mxu0 %v1930
  %v1979 = vpop.f32.mrf.mxu0
  %v1980 = vadd.f32 %v1904, %v1979
  %v1981 = vpop.f32.mrf.mxu0
  %v1982 = vadd.f32 %v1906, %v1981
  %1983 = vdwg.mxu0
  %s1984 = scalar_lea.vmem %s4, 32
  %v1985 = vld [vmem:[%s1984] sm:$0xf]
  %v1986 = vld [vmem:[%s1984 + $0x4] sm:$0xf]
  %v1987 = vld [vmem:[%s1984 + $0x8] sm:$0xf]
  %v1988 = vld [vmem:[%s1984 + $0xc] sm:$0xf]
  %s1989 = scalar_lea.vmem %s5, 2
  %v1990 = vld [vmem:[%s1989] sm:$0x1]
  %v1992 = vperm.slane %v1990, 0
  %v1998 = vunpack.c.l.b16 %v1985
  %v1999 = vunpack.c.l.b16 %v1986
  %v2000 = vunpack.c.l.b16 %v1987
  %v2001 = vunpack.c.l.b16 %v1988
  %v2002 = vpack.c.b16 %v1999, %v1998
  %v2003 = vpack.c.b16 %v2001, %v2000
  %2006 = vmatpush.bf16.msra.mxu0 0
  %2007 = vmatpush.bf16.msra.mxu0 0
  %2008 = vmatpush.bf16.msra.mxu0 0
  %2009 = vmatpush.bf16.msra.mxu0 0
  %2010 = vmatpush.bf16.msra.mxu0 0
  %2011 = vmatpush.bf16.msra.mxu0 0
  %2012 = vmatpush.bf16.msra.mxu0 %v2003
  %2013 = vmatpush.bf16.msra.mxu0 %v2002
  %2014 = vmatmul.bf16.gmra.mxu0 %v251
  %v2015 = vpop.f32.mrf.mxu0
  %v2016 = vadd.f32 %v1992, %v2015
  %v2017 = vpop.f32.mrf.mxu0
  %v2018 = vadd.f32 %v1992, %v2017
  %2019 = vmatmul.bf16.gmra.mxu0 %v254
  %v2020 = vpop.f32.mrf.mxu0
  %v2021 = vadd.f32 %v1992, %v2020
  %v2022 = vpop.f32.mrf.mxu0
  %v2023 = vadd.f32 %v1992, %v2022
  %2024 = vmatmul.bf16.gmra.mxu0 %v257
  %v2025 = vpop.f32.mrf.mxu0
  %v2026 = vadd.f32 %v1992, %v2025
  %v2027 = vpop.f32.mrf.mxu0
  %v2028 = vadd.f32 %v1992, %v2027
  %2029 = vmatmul.bf16.gmra.mxu0 %v260
  %v2030 = vpop.f32.mrf.mxu0
  %v2031 = vadd.f32 %v1992, %v2030
  %v2032 = vpop.f32.mrf.mxu0
  %v2033 = vadd.f32 %v1992, %v2032
  %2034 = vmatmul.bf16.gmra.mxu0 %v263
  %v2035 = vpop.f32.mrf.mxu0
  %v2036 = vadd.f32 %v1992, %v2035
  %v2037 = vpop.f32.mrf.mxu0
  %v2038 = vadd.f32 %v1992, %v2037
  %2039 = vmatmul.bf16.gmra.mxu0 %v266
  %v2040 = vpop.f32.mrf.mxu0
  %v2041 = vadd.f32 %v1992, %v2040
  %v2042 = vpop.f32.mrf.mxu0
  %v2043 = vadd.f32 %v1992, %v2042
  %2044 = vmatmul.bf16.gmra.mxu0 %v269
  %v2045 = vpop.f32.mrf.mxu0
  %v2046 = vadd.f32 %v1992, %v2045
  %v2047 = vpop.f32.mrf.mxu0
  %v2048 = vadd.f32 %v1992, %v2047
  %2049 = vmatmul.bf16.gmra.mxu0 %v272
  %v2050 = vpop.f32.mrf.mxu0
  %v2051 = vadd.f32 %v1992, %v2050
  %v2052 = vpop.f32.mrf.mxu0
  %v2053 = vadd.f32 %v1992, %v2052
  %2054 = vdwg.mxu0
  %v2055 = vpack.c.bf16 %v2016, %v2016
  %v2056 = vpack.c.bf16 %v2018, %v2018
  %v2057 = vpack.c.bf16 %v2021, %v2021
  %v2058 = vpack.c.bf16 %v2023, %v2023
  %v2059 = vpack.c.bf16 %v2026, %v2026
  %v2060 = vpack.c.bf16 %v2028, %v2028
  %v2061 = vpack.c.bf16 %v2031, %v2031
  %v2062 = vpack.c.bf16 %v2033, %v2033
  %v2063 = vpack.c.bf16 %v2036, %v2036
  %v2064 = vpack.c.bf16 %v2038, %v2038
  %v2065 = vpack.c.bf16 %v2041, %v2041
  %v2066 = vpack.c.bf16 %v2043, %v2043
  %v2067 = vpack.c.bf16 %v2046, %v2046
  %v2068 = vpack.c.bf16 %v2048, %v2048
  %v2069 = vpack.c.bf16 %v2051, %v2051
  %v2070 = vpack.c.bf16 %v2053, %v2053
  %s2071 = scalar_lea.vmem %s4, 96
  %v2072 = vld [vmem:[%s2071] sm:$0xf]
  %v2073 = vld [vmem:[%s2071 + $0x4] sm:$0xf]
  %v2074 = vld [vmem:[%s2071 + $0x8] sm:$0xf]
  %v2075 = vld [vmem:[%s2071 + $0xc] sm:$0xf]
  %v2080 = vunpack.c.l.b16 %v2072
  %v2081 = vunpack.c.l.b16 %v2073
  %v2082 = vunpack.c.l.b16 %v2074
  %v2083 = vunpack.c.l.b16 %v2075
  %v2084 = vpack.c.b16 %v2081, %v2080
  %v2085 = vpack.c.b16 %v2083, %v2082
  %2088 = vmatpush.bf16.msra.mxu0 0
  %2089 = vmatpush.bf16.msra.mxu0 0
  %2090 = vmatpush.bf16.msra.mxu0 0
  %2091 = vmatpush.bf16.msra.mxu0 0
  %2092 = vmatpush.bf16.msra.mxu0 0
  %2093 = vmatpush.bf16.msra.mxu0 0
  %2094 = vmatpush.bf16.msra.mxu0 %v2085
  %2095 = vmatpush.bf16.msra.mxu0 %v2084
  %2096 = vmatmul.bf16.gmra.mxu0 %v251
  %v2097 = vpop.f32.mrf.mxu0
  %v2098 = vadd.f32 0.0, %v2097
  %v2099 = vpop.f32.mrf.mxu0
  %v2100 = vadd.f32 0.0, %v2099
  %2101 = vmatmul.bf16.gmra.mxu0 %v254
  %v2102 = vpop.f32.mrf.mxu0
  %v2103 = vadd.f32 0.0, %v2102
  %v2104 = vpop.f32.mrf.mxu0
  %v2105 = vadd.f32 0.0, %v2104
  %2106 = vmatmul.bf16.gmra.mxu0 %v257
  %v2107 = vpop.f32.mrf.mxu0
  %v2108 = vadd.f32 0.0, %v2107
  %v2109 = vpop.f32.mrf.mxu0
  %v2110 = vadd.f32 0.0, %v2109
  %2111 = vmatmul.bf16.gmra.mxu0 %v260
  %v2112 = vpop.f32.mrf.mxu0
  %v2113 = vadd.f32 0.0, %v2112
  %v2114 = vpop.f32.mrf.mxu0
  %v2115 = vadd.f32 0.0, %v2114
  %2116 = vmatmul.bf16.gmra.mxu0 %v263
  %v2117 = vpop.f32.mrf.mxu0
  %v2118 = vadd.f32 0.0, %v2117
  %v2119 = vpop.f32.mrf.mxu0
  %v2120 = vadd.f32 0.0, %v2119
  %2121 = vmatmul.bf16.gmra.mxu0 %v266
  %v2122 = vpop.f32.mrf.mxu0
  %v2123 = vadd.f32 0.0, %v2122
  %v2124 = vpop.f32.mrf.mxu0
  %v2125 = vadd.f32 0.0, %v2124
  %2126 = vmatmul.bf16.gmra.mxu0 %v269
  %v2127 = vpop.f32.mrf.mxu0
  %v2128 = vadd.f32 0.0, %v2127
  %v2129 = vpop.f32.mrf.mxu0
  %v2130 = vadd.f32 0.0, %v2129
  %2131 = vmatmul.bf16.gmra.mxu0 %v272
  %v2132 = vpop.f32.mrf.mxu0
  %v2133 = vadd.f32 0.0, %v2132
  %v2134 = vpop.f32.mrf.mxu0
  %v2135 = vadd.f32 0.0, %v2134
  %2136 = vdwg.mxu0
  %v2137 = vpack.c.bf16 %v2098, %v2098
  %v2138 = vpack.c.bf16 %v2100, %v2100
  %v2139 = vpack.c.bf16 %v2103, %v2103
  %v2140 = vpack.c.bf16 %v2105, %v2105
  %v2141 = vpack.c.bf16 %v2108, %v2108
  %v2142 = vpack.c.bf16 %v2110, %v2110
  %v2143 = vpack.c.bf16 %v2113, %v2113
  %v2144 = vpack.c.bf16 %v2115, %v2115
  %v2145 = vpack.c.bf16 %v2118, %v2118
  %v2146 = vpack.c.bf16 %v2120, %v2120
  %v2147 = vpack.c.bf16 %v2123, %v2123
  %v2148 = vpack.c.bf16 %v2125, %v2125
  %v2149 = vpack.c.bf16 %v2128, %v2128
  %v2150 = vpack.c.bf16 %v2130, %v2130
  %v2151 = vpack.c.bf16 %v2133, %v2133
  %v2152 = vpack.c.bf16 %v2135, %v2135
  %s2153 = scalar_lea.vmem %s4, 160
  %v2154 = vld [vmem:[%s2153] sm:$0xf]
  %v2155 = vld [vmem:[%s2153 + $0x4] sm:$0xf]
  %v2156 = vld [vmem:[%s2153 + $0x8] sm:$0xf]
  %v2157 = vld [vmem:[%s2153 + $0xc] sm:$0xf]
  %v2162 = vunpack.c.l.b16 %v2154
  %v2163 = vunpack.c.l.b16 %v2155
  %v2164 = vunpack.c.l.b16 %v2156
  %v2165 = vunpack.c.l.b16 %v2157
  %v2166 = vpack.c.b16 %v2163, %v2162
  %v2167 = vpack.c.b16 %v2165, %v2164
  %2170 = vmatpush.bf16.msra.mxu0 0
  %2171 = vmatpush.bf16.msra.mxu0 0
  %2172 = vmatpush.bf16.msra.mxu0 0
  %2173 = vmatpush.bf16.msra.mxu0 0
  %2174 = vmatpush.bf16.msra.mxu0 0
  %2175 = vmatpush.bf16.msra.mxu0 0
  %2176 = vmatpush.bf16.msra.mxu0 %v2167
  %2177 = vmatpush.bf16.msra.mxu0 %v2166
  %2178 = vmatmul.bf16.gmra.mxu0 %v439
  %v2179 = vpop.f32.mrf.mxu0
  %v2180 = vadd.f32 0.0, %v2179
  %v2181 = vpop.f32.mrf.mxu0
  %v2182 = vadd.f32 0.0, %v2181
  %2183 = vmatmul.bf16.gmra.mxu0 %v442
  %v2184 = vpop.f32.mrf.mxu0
  %v2185 = vadd.f32 0.0, %v2184
  %v2186 = vpop.f32.mrf.mxu0
  %v2187 = vadd.f32 0.0, %v2186
  %2188 = vmatmul.bf16.gmra.mxu0 %v445
  %v2189 = vpop.f32.mrf.mxu0
  %v2190 = vadd.f32 0.0, %v2189
  %v2191 = vpop.f32.mrf.mxu0
  %v2192 = vadd.f32 0.0, %v2191
  %2193 = vmatmul.bf16.gmra.mxu0 %v448
  %v2194 = vpop.f32.mrf.mxu0
  %v2195 = vadd.f32 0.0, %v2194
  %v2196 = vpop.f32.mrf.mxu0
  %v2197 = vadd.f32 0.0, %v2196
  %2198 = vmatmul.bf16.gmra.mxu0 %v451
  %v2199 = vpop.f32.mrf.mxu0
  %v2200 = vadd.f32 0.0, %v2199
  %v2201 = vpop.f32.mrf.mxu0
  %v2202 = vadd.f32 0.0, %v2201
  %2203 = vmatmul.bf16.gmra.mxu0 %v454
  %v2204 = vpop.f32.mrf.mxu0
  %v2205 = vadd.f32 0.0, %v2204
  %v2206 = vpop.f32.mrf.mxu0
  %v2207 = vadd.f32 0.0, %v2206
  %2208 = vmatmul.bf16.gmra.mxu0 %v457
  %v2209 = vpop.f32.mrf.mxu0
  %v2210 = vadd.f32 0.0, %v2209
  %v2211 = vpop.f32.mrf.mxu0
  %v2212 = vadd.f32 0.0, %v2211
  %2213 = vmatmul.bf16.gmra.mxu0 %v460
  %v2214 = vpop.f32.mrf.mxu0
  %v2215 = vadd.f32 0.0, %v2214
  %v2216 = vpop.f32.mrf.mxu0
  %v2217 = vadd.f32 0.0, %v2216
  %2218 = vdwg.mxu0
  %v2219 = vpack.c.bf16 %v2180, %v2180
  %v2220 = vpack.c.bf16 %v2182, %v2182
  %v2221 = vpack.c.bf16 %v2185, %v2185
  %v2222 = vpack.c.bf16 %v2187, %v2187
  %v2223 = vpack.c.bf16 %v2190, %v2190
  %v2224 = vpack.c.bf16 %v2192, %v2192
  %v2225 = vpack.c.bf16 %v2195, %v2195
  %v2226 = vpack.c.bf16 %v2197, %v2197
  %v2227 = vpack.c.bf16 %v2200, %v2200
  %v2228 = vpack.c.bf16 %v2202, %v2202
  %v2229 = vpack.c.bf16 %v2205, %v2205
  %v2230 = vpack.c.bf16 %v2207, %v2207
  %v2231 = vpack.c.bf16 %v2210, %v2210
  %v2232 = vpack.c.bf16 %v2212, %v2212
  %v2233 = vpack.c.bf16 %v2215, %v2215
  %v2234 = vpack.c.bf16 %v2217, %v2217
  %v2243 = vunpack.c.l.b16 %v2055
  %v2244 = vunpack.c.l.b16 %v2056
  %v2245 = vunpack.c.l.b16 %v2057
  %v2246 = vunpack.c.l.b16 %v2058
  %v2247 = vunpack.c.l.b16 %v2059
  %v2248 = vunpack.c.l.b16 %v2060
  %v2249 = vunpack.c.l.b16 %v2061
  %v2250 = vunpack.c.l.b16 %v2062
  %v2251 = vpack.c.b16 %v2244, %v2243
  %v2252 = vpack.c.b16 %v2246, %v2245
  %v2253 = vpack.c.b16 %v2248, %v2247
  %v2254 = vpack.c.b16 %v2250, %v2249
  %v2263 = vunpack.c.l.b16 %v2137
  %v2264 = vunpack.c.l.b16 %v2138
  %v2265 = vunpack.c.l.b16 %v2139
  %v2266 = vunpack.c.l.b16 %v2140
  %v2267 = vunpack.c.l.b16 %v2141
  %v2268 = vunpack.c.l.b16 %v2142
  %v2269 = vunpack.c.l.b16 %v2143
  %v2270 = vunpack.c.l.b16 %v2144
  %v2271 = vpack.c.b16 %v2264, %v2263
  %v2272 = vpack.c.b16 %v2266, %v2265
  %v2273 = vpack.c.b16 %v2268, %v2267
  %v2274 = vpack.c.b16 %v2270, %v2269
  %v2276 = vsel %vm567, %v2251, 0
  %v2279 = vsel %vm567, %v2252, 0
  %v2282 = vsel %vm567, %v2253, 0
  %v2285 = vsel %vm567, %v2254, 0
  %v2288 = vsel %vm567, %v2271, 0
  %v2291 = vsel %vm567, %v2272, 0
  %v2294 = vsel %vm567, %v2273, 0
  %v2297 = vsel %vm567, %v2274, 0
  %2299 = vmatpush.bf16.xpose.msra.mxu0 0
  %2300 = vmatpush.bf16.xpose.msra.mxu0 0
  %2301 = vmatpush.bf16.xpose.msra.mxu0 0
  %2302 = vmatpush.bf16.xpose.msra.mxu0 0
  %2303 = vmatpush.bf16.xpose.msra.mxu0 %v2297
  %2304 = vmatpush.bf16.xpose.msra.mxu0 %v2294
  %2305 = vmatpush.bf16.xpose.msra.mxu0 %v2291
  %2306 = vmatpush.bf16.xpose.msra.mxu0 %v2288
  %2307 = vmatmul.bf16.gmra.mxu0 %v2276
  %v2308 = vpop.f32.mrf.mxu0
  %v2309 = vadd.f32 0.0, %v2308
  %v2310 = vpop.f32.mrf.mxu0
  %v2311 = vadd.f32 0.0, %v2310
  %2312 = vmatmul.bf16.gmra.mxu0 %v2279
  %v2313 = vpop.f32.mrf.mxu0
  %v2314 = vadd.f32 0.0, %v2313
  %v2315 = vpop.f32.mrf.mxu0
  %v2316 = vadd.f32 0.0, %v2315
  %2317 = vmatmul.bf16.gmra.mxu0 %v2282
  %v2318 = vpop.f32.mrf.mxu0
  %v2319 = vadd.f32 0.0, %v2318
  %v2320 = vpop.f32.mrf.mxu0
  %v2321 = vadd.f32 0.0, %v2320
  %2322 = vmatmul.bf16.gmra.mxu0 %v2285
  %v2323 = vpop.f32.mrf.mxu0
  %v2324 = vadd.f32 0.0, %v2323
  %v2325 = vpop.f32.mrf.mxu0
  %v2326 = vadd.f32 0.0, %v2325
  %2327 = vdwg.mxu0
  %v2328 = vmul.f32 %v2309, 0.35355338
  %v2329 = vmul.f32 %v2311, 0.35355338
  %v2330 = vmul.f32 %v2314, 0.35355338
  %v2331 = vmul.f32 %v2316, 0.35355338
  %v2332 = vmul.f32 %v2319, 0.35355338
  %v2333 = vmul.f32 %v2321, 0.35355338
  %v2334 = vmul.f32 %v2324, 0.35355338
  %v2335 = vmul.f32 %v2326, 0.35355338
  %v2336 = vsel %vm629, %v2328, -inf
  %2337 = vmax.xlane.f32.xlu0 %v2336
  %v2338 = vpop.xlane.xlu0 %2337
  %v2339 = vsel %vm629, %v2329, -inf
  %2340 = vmax.xlane.f32.xlu0 %v2339
  %v2341 = vpop.xlane.xlu0 %2340
  %v2342 = vsel %vm629, %v2330, -inf
  %2343 = vmax.xlane.f32.xlu0 %v2342
  %v2344 = vpop.xlane.xlu0 %2343
  %v2345 = vsel %vm629, %v2331, -inf
  %2346 = vmax.xlane.f32.xlu0 %v2345
  %v2347 = vpop.xlane.xlu0 %2346
  %v2348 = vsel %vm629, %v2332, -inf
  %2349 = vmax.xlane.f32.xlu0 %v2348
  %v2350 = vpop.xlane.xlu0 %2349
  %v2351 = vsel %vm629, %v2333, -inf
  %2352 = vmax.xlane.f32.xlu0 %v2351
  %v2353 = vpop.xlane.xlu0 %2352
  %v2354 = vsel %vm629, %v2334, -inf
  %2355 = vmax.xlane.f32.xlu0 %v2354
  %v2356 = vpop.xlane.xlu0 %2355
  %v2357 = vsel %vm629, %v2335, -inf
  %2358 = vmax.xlane.f32.xlu0 %v2357
  %v2359 = vpop.xlane.xlu0 %2358
  %v2360 = vsub.f32 %v2328, %v2338
  %v2361 = vsub.f32 %v2329, %v2341
  %v2362 = vsub.f32 %v2330, %v2344
  %v2363 = vsub.f32 %v2331, %v2347
  %v2364 = vsub.f32 %v2332, %v2350
  %v2365 = vsub.f32 %v2333, %v2353
  %v2366 = vsub.f32 %v2334, %v2356
  %v2367 = vsub.f32 %v2335, %v2359
  %v2368 = vmul.f32 %v2360, 1.442695
  %v2369 = vpow.pop %v2368
  %v2370 = vmul.f32 %v2361, 1.442695
  %v2371 = vpow.pop %v2370
  %v2372 = vmul.f32 %v2362, 1.442695
  %v2373 = vpow.pop %v2372
  %v2374 = vmul.f32 %v2363, 1.442695
  %v2375 = vpow.pop %v2374
  %v2376 = vmul.f32 %v2364, 1.442695
  %v2377 = vpow.pop %v2376
  %v2378 = vmul.f32 %v2365, 1.442695
  %v2379 = vpow.pop %v2378
  %v2380 = vmul.f32 %v2366, 1.442695
  %v2381 = vpow.pop %v2380
  %v2382 = vmul.f32 %v2367, 1.442695
  %v2383 = vpow.pop %v2382
  %v2384 = vsel %vm629, %v2369, 0.0
  %2385 = vadd.xlane.f32.xlu0 %v2384
  %v2386 = vpop.xlane.xlu0 %2385
  %v2387 = vsel %vm629, %v2371, 0.0
  %2388 = vadd.xlane.f32.xlu0 %v2387
  %v2389 = vpop.xlane.xlu0 %2388
  %v2390 = vsel %vm629, %v2373, 0.0
  %2391 = vadd.xlane.f32.xlu0 %v2390
  %v2392 = vpop.xlane.xlu0 %2391
  %v2393 = vsel %vm629, %v2375, 0.0
  %2394 = vadd.xlane.f32.xlu0 %v2393
  %v2395 = vpop.xlane.xlu0 %2394
  %v2396 = vsel %vm629, %v2377, 0.0
  %2397 = vadd.xlane.f32.xlu0 %v2396
  %v2398 = vpop.xlane.xlu0 %2397
  %v2399 = vsel %vm629, %v2379, 0.0
  %2400 = vadd.xlane.f32.xlu0 %v2399
  %v2401 = vpop.xlane.xlu0 %2400
  %v2402 = vsel %vm629, %v2381, 0.0
  %2403 = vadd.xlane.f32.xlu0 %v2402
  %v2404 = vpop.xlane.xlu0 %2403
  %v2405 = vsel %vm629, %v2383, 0.0
  %2406 = vadd.xlane.f32.xlu0 %v2405
  %v2407 = vpop.xlane.xlu0 %2406
  %v2408 = vrcp.pop %v2386
  %v2409 = vrcp.pop %v2389
  %v2410 = vrcp.pop %v2392
  %v2411 = vrcp.pop %v2395
  %v2412 = vrcp.pop %v2398
  %v2413 = vrcp.pop %v2401
  %v2414 = vrcp.pop %v2404
  %v2415 = vrcp.pop %v2407
  %v2416 = vmul.f32 %v2369, %v2408
  %v2417 = vmul.f32 %v2371, %v2409
  %v2418 = vmul.f32 %v2373, %v2410
  %v2419 = vmul.f32 %v2375, %v2411
  %v2420 = vmul.f32 %v2377, %v2412
  %v2421 = vmul.f32 %v2379, %v2413
  %v2422 = vmul.f32 %v2381, %v2414
  %v2423 = vmul.f32 %v2383, %v2415
  %v2424 = vpack.c.bf16 %v2417, %v2416
  %v2425 = vpack.c.bf16 %v2419, %v2418
  %v2426 = vpack.c.bf16 %v2421, %v2420
  %v2427 = vpack.c.bf16 %v2423, %v2422
  %v2436 = vunpack.c.l.b16 %v2219
  %v2437 = vunpack.c.l.b16 %v2220
  %v2438 = vunpack.c.l.b16 %v2221
  %v2439 = vunpack.c.l.b16 %v2222
  %v2440 = vunpack.c.l.b16 %v2223
  %v2441 = vunpack.c.l.b16 %v2224
  %v2442 = vunpack.c.l.b16 %v2225
  %v2443 = vunpack.c.l.b16 %v2226
  %v2444 = vpack.c.b16 %v2437, %v2436
  %v2445 = vpack.c.b16 %v2439, %v2438
  %v2446 = vpack.c.b16 %v2441, %v2440
  %v2447 = vpack.c.b16 %v2443, %v2442
  %v2453 = vsel %vm629, %v2424, 0
  %v2456 = vsel %vm629, %v2425, 0
  %v2459 = vsel %vm629, %v2426, 0
  %v2462 = vsel %vm629, %v2427, 0
  %2464 = vmatpush.bf16.msra.mxu0 0
  %2465 = vmatpush.bf16.msra.mxu0 0
  %2466 = vmatpush.bf16.msra.mxu0 0
  %2467 = vmatpush.bf16.msra.mxu0 0
  %2468 = vmatpush.bf16.msra.mxu0 %v2447
  %2469 = vmatpush.bf16.msra.mxu0 %v2446
  %2470 = vmatpush.bf16.msra.mxu0 %v2445
  %2471 = vmatpush.bf16.msra.mxu0 %v2444
  %2472 = vmatmul.bf16.gmra.mxu0 %v2453
  %v2473 = vpop.f32.mrf.mxu0
  %v2474 = vadd.f32 0.0, %v2473
  %v2475 = vpop.f32.mrf.mxu0
  %v2476 = vadd.f32 0.0, %v2475
  %2477 = vmatmul.bf16.gmra.mxu0 %v2456
  %v2478 = vpop.f32.mrf.mxu0
  %v2479 = vadd.f32 0.0, %v2478
  %v2480 = vpop.f32.mrf.mxu0
  %v2481 = vadd.f32 0.0, %v2480
  %2482 = vmatmul.bf16.gmra.mxu0 %v2459
  %v2483 = vpop.f32.mrf.mxu0
  %v2484 = vadd.f32 0.0, %v2483
  %v2485 = vpop.f32.mrf.mxu0
  %v2486 = vadd.f32 0.0, %v2485
  %2487 = vmatmul.bf16.gmra.mxu0 %v2462
  %v2488 = vpop.f32.mrf.mxu0
  %v2489 = vadd.f32 0.0, %v2488
  %v2490 = vpop.f32.mrf.mxu0
  %v2491 = vadd.f32 0.0, %v2490
  %2492 = vdwg.mxu0
  %v2501 = vunpack.c.l.b16 %v2063
  %v2502 = vunpack.c.l.b16 %v2064
  %v2503 = vunpack.c.l.b16 %v2065
  %v2504 = vunpack.c.l.b16 %v2066
  %v2505 = vunpack.c.l.b16 %v2067
  %v2506 = vunpack.c.l.b16 %v2068
  %v2507 = vunpack.c.l.b16 %v2069
  %v2508 = vunpack.c.l.b16 %v2070
  %v2509 = vpack.c.b16 %v2502, %v2501
  %v2510 = vpack.c.b16 %v2504, %v2503
  %v2511 = vpack.c.b16 %v2506, %v2505
  %v2512 = vpack.c.b16 %v2508, %v2507
  %v2521 = vunpack.c.l.b16 %v2145
  %v2522 = vunpack.c.l.b16 %v2146
  %v2523 = vunpack.c.l.b16 %v2147
  %v2524 = vunpack.c.l.b16 %v2148
  %v2525 = vunpack.c.l.b16 %v2149
  %v2526 = vunpack.c.l.b16 %v2150
  %v2527 = vunpack.c.l.b16 %v2151
  %v2528 = vunpack.c.l.b16 %v2152
  %v2529 = vpack.c.b16 %v2522, %v2521
  %v2530 = vpack.c.b16 %v2524, %v2523
  %v2531 = vpack.c.b16 %v2526, %v2525
  %v2532 = vpack.c.b16 %v2528, %v2527
  %v2534 = vsel %vm567, %v2509, 0
  %v2537 = vsel %vm567, %v2510, 0
  %v2540 = vsel %vm567, %v2511, 0
  %v2543 = vsel %vm567, %v2512, 0
  %v2546 = vsel %vm567, %v2529, 0
  %v2549 = vsel %vm567, %v2530, 0
  %v2552 = vsel %vm567, %v2531, 0
  %v2555 = vsel %vm567, %v2532, 0
  %2557 = vmatpush.bf16.xpose.msra.mxu0 0
  %2558 = vmatpush.bf16.xpose.msra.mxu0 0
  %2559 = vmatpush.bf16.xpose.msra.mxu0 0
  %2560 = vmatpush.bf16.xpose.msra.mxu0 0
  %2561 = vmatpush.bf16.xpose.msra.mxu0 %v2555
  %2562 = vmatpush.bf16.xpose.msra.mxu0 %v2552
  %2563 = vmatpush.bf16.xpose.msra.mxu0 %v2549
  %2564 = vmatpush.bf16.xpose.msra.mxu0 %v2546
  %2565 = vmatmul.bf16.gmra.mxu0 %v2534
  %v2566 = vpop.f32.mrf.mxu0
  %v2567 = vadd.f32 0.0, %v2566
  %v2568 = vpop.f32.mrf.mxu0
  %v2569 = vadd.f32 0.0, %v2568
  %2570 = vmatmul.bf16.gmra.mxu0 %v2537
  %v2571 = vpop.f32.mrf.mxu0
  %v2572 = vadd.f32 0.0, %v2571
  %v2573 = vpop.f32.mrf.mxu0
  %v2574 = vadd.f32 0.0, %v2573
  %2575 = vmatmul.bf16.gmra.mxu0 %v2540
  %v2576 = vpop.f32.mrf.mxu0
  %v2577 = vadd.f32 0.0, %v2576
  %v2578 = vpop.f32.mrf.mxu0
  %v2579 = vadd.f32 0.0, %v2578
  %2580 = vmatmul.bf16.gmra.mxu0 %v2543
  %v2581 = vpop.f32.mrf.mxu0
  %v2582 = vadd.f32 0.0, %v2581
  %v2583 = vpop.f32.mrf.mxu0
  %v2584 = vadd.f32 0.0, %v2583
  %2585 = vdwg.mxu0
  %v2586 = vmul.f32 %v2567, 0.35355338
  %v2587 = vmul.f32 %v2569, 0.35355338
  %v2588 = vmul.f32 %v2572, 0.35355338
  %v2589 = vmul.f32 %v2574, 0.35355338
  %v2590 = vmul.f32 %v2577, 0.35355338
  %v2591 = vmul.f32 %v2579, 0.35355338
  %v2592 = vmul.f32 %v2582, 0.35355338
  %v2593 = vmul.f32 %v2584, 0.35355338
  %v2594 = vsel %vm629, %v2586, -inf
  %2595 = vmax.xlane.f32.xlu0 %v2594
  %v2596 = vpop.xlane.xlu0 %2595
  %v2597 = vsel %vm629, %v2587, -inf
  %2598 = vmax.xlane.f32.xlu0 %v2597
  %v2599 = vpop.xlane.xlu0 %2598
  %v2600 = vsel %vm629, %v2588, -inf
  %2601 = vmax.xlane.f32.xlu0 %v2600
  %v2602 = vpop.xlane.xlu0 %2601
  %v2603 = vsel %vm629, %v2589, -inf
  %2604 = vmax.xlane.f32.xlu0 %v2603
  %v2605 = vpop.xlane.xlu0 %2604
  %v2606 = vsel %vm629, %v2590, -inf
  %2607 = vmax.xlane.f32.xlu0 %v2606
  %v2608 = vpop.xlane.xlu0 %2607
  %v2609 = vsel %vm629, %v2591, -inf
  %2610 = vmax.xlane.f32.xlu0 %v2609
  %v2611 = vpop.xlane.xlu0 %2610
  %v2612 = vsel %vm629, %v2592, -inf
  %2613 = vmax.xlane.f32.xlu0 %v2612
  %v2614 = vpop.xlane.xlu0 %2613
  %v2615 = vsel %vm629, %v2593, -inf
  %2616 = vmax.xlane.f32.xlu0 %v2615
  %v2617 = vpop.xlane.xlu0 %2616
  %v2618 = vsub.f32 %v2586, %v2596
  %v2619 = vsub.f32 %v2587, %v2599
  %v2620 = vsub.f32 %v2588, %v2602
  %v2621 = vsub.f32 %v2589, %v2605
  %v2622 = vsub.f32 %v2590, %v2608
  %v2623 = vsub.f32 %v2591, %v2611
  %v2624 = vsub.f32 %v2592, %v2614
  %v2625 = vsub.f32 %v2593, %v2617
  %v2626 = vmul.f32 %v2618, 1.442695
  %v2627 = vpow.pop %v2626
  %v2628 = vmul.f32 %v2619, 1.442695
  %v2629 = vpow.pop %v2628
  %v2630 = vmul.f32 %v2620, 1.442695
  %v2631 = vpow.pop %v2630
  %v2632 = vmul.f32 %v2621, 1.442695
  %v2633 = vpow.pop %v2632
  %v2634 = vmul.f32 %v2622, 1.442695
  %v2635 = vpow.pop %v2634
  %v2636 = vmul.f32 %v2623, 1.442695
  %v2637 = vpow.pop %v2636
  %v2638 = vmul.f32 %v2624, 1.442695
  %v2639 = vpow.pop %v2638
  %v2640 = vmul.f32 %v2625, 1.442695
  %v2641 = vpow.pop %v2640
  %v2642 = vsel %vm629, %v2627, 0.0
  %2643 = vadd.xlane.f32.xlu0 %v2642
  %v2644 = vpop.xlane.xlu0 %2643
  %v2645 = vsel %vm629, %v2629, 0.0
  %2646 = vadd.xlane.f32.xlu0 %v2645
  %v2647 = vpop.xlane.xlu0 %2646
  %v2648 = vsel %vm629, %v2631, 0.0
  %2649 = vadd.xlane.f32.xlu0 %v2648
  %v2650 = vpop.xlane.xlu0 %2649
  %v2651 = vsel %vm629, %v2633, 0.0
  %2652 = vadd.xlane.f32.xlu0 %v2651
  %v2653 = vpop.xlane.xlu0 %2652
  %v2654 = vsel %vm629, %v2635, 0.0
  %2655 = vadd.xlane.f32.xlu0 %v2654
  %v2656 = vpop.xlane.xlu0 %2655
  %v2657 = vsel %vm629, %v2637, 0.0
  %2658 = vadd.xlane.f32.xlu0 %v2657
  %v2659 = vpop.xlane.xlu0 %2658
  %v2660 = vsel %vm629, %v2639, 0.0
  %2661 = vadd.xlane.f32.xlu0 %v2660
  %v2662 = vpop.xlane.xlu0 %2661
  %v2663 = vsel %vm629, %v2641, 0.0
  %2664 = vadd.xlane.f32.xlu0 %v2663
  %v2665 = vpop.xlane.xlu0 %2664
  %v2666 = vrcp.pop %v2644
  %v2667 = vrcp.pop %v2647
  %v2668 = vrcp.pop %v2650
  %v2669 = vrcp.pop %v2653
  %v2670 = vrcp.pop %v2656
  %v2671 = vrcp.pop %v2659
  %v2672 = vrcp.pop %v2662
  %v2673 = vrcp.pop %v2665
  %v2674 = vmul.f32 %v2627, %v2666
  %v2675 = vmul.f32 %v2629, %v2667
  %v2676 = vmul.f32 %v2631, %v2668
  %v2677 = vmul.f32 %v2633, %v2669
  %v2678 = vmul.f32 %v2635, %v2670
  %v2679 = vmul.f32 %v2637, %v2671
  %v2680 = vmul.f32 %v2639, %v2672
  %v2681 = vmul.f32 %v2641, %v2673
  %v2682 = vpack.c.bf16 %v2675, %v2674
  %v2683 = vpack.c.bf16 %v2677, %v2676
  %v2684 = vpack.c.bf16 %v2679, %v2678
  %v2685 = vpack.c.bf16 %v2681, %v2680
  %v2694 = vunpack.c.l.b16 %v2227
  %v2695 = vunpack.c.l.b16 %v2228
  %v2696 = vunpack.c.l.b16 %v2229
  %v2697 = vunpack.c.l.b16 %v2230
  %v2698 = vunpack.c.l.b16 %v2231
  %v2699 = vunpack.c.l.b16 %v2232
  %v2700 = vunpack.c.l.b16 %v2233
  %v2701 = vunpack.c.l.b16 %v2234
  %v2702 = vpack.c.b16 %v2695, %v2694
  %v2703 = vpack.c.b16 %v2697, %v2696
  %v2704 = vpack.c.b16 %v2699, %v2698
  %v2705 = vpack.c.b16 %v2701, %v2700
  %v2711 = vsel %vm629, %v2682, 0
  %v2714 = vsel %vm629, %v2683, 0
  %v2717 = vsel %vm629, %v2684, 0
  %v2720 = vsel %vm629, %v2685, 0
  %2722 = vmatpush.bf16.msra.mxu0 0
  %2723 = vmatpush.bf16.msra.mxu0 0
  %2724 = vmatpush.bf16.msra.mxu0 0
  %2725 = vmatpush.bf16.msra.mxu0 0
  %2726 = vmatpush.bf16.msra.mxu0 %v2705
  %2727 = vmatpush.bf16.msra.mxu0 %v2704
  %2728 = vmatpush.bf16.msra.mxu0 %v2703
  %2729 = vmatpush.bf16.msra.mxu0 %v2702
  %2730 = vmatmul.bf16.gmra.mxu0 %v2711
  %v2731 = vpop.f32.mrf.mxu0
  %v2732 = vadd.f32 0.0, %v2731
  %v2733 = vpop.f32.mrf.mxu0
  %v2734 = vadd.f32 0.0, %v2733
  %2735 = vmatmul.bf16.gmra.mxu0 %v2714
  %v2736 = vpop.f32.mrf.mxu0
  %v2737 = vadd.f32 0.0, %v2736
  %v2738 = vpop.f32.mrf.mxu0
  %v2739 = vadd.f32 0.0, %v2738
  %2740 = vmatmul.bf16.gmra.mxu0 %v2717
  %v2741 = vpop.f32.mrf.mxu0
  %v2742 = vadd.f32 0.0, %v2741
  %v2743 = vpop.f32.mrf.mxu0
  %v2744 = vadd.f32 0.0, %v2743
  %2745 = vmatmul.bf16.gmra.mxu0 %v2720
  %v2746 = vpop.f32.mrf.mxu0
  %v2747 = vadd.f32 0.0, %v2746
  %v2748 = vpop.f32.mrf.mxu0
  %v2749 = vadd.f32 0.0, %v2748
  %2750 = vdwg.mxu0
  %v2751 = vpack.c.bf16 %v2476, %v2474
  %v2752 = vpack.c.bf16 %v2481, %v2479
  %v2753 = vpack.c.bf16 %v2486, %v2484
  %v2754 = vpack.c.bf16 %v2491, %v2489
  %v2755 = vpack.c.bf16 %v2734, %v2732
  %v2756 = vpack.c.bf16 %v2739, %v2737
  %v2757 = vpack.c.bf16 %v2744, %v2742
  %v2758 = vpack.c.bf16 %v2749, %v2747
  %s2759 = scalar_lea.vmem %s6, 8
  %v2760 = vld [vmem:[%s2759] sm:$0xf]
  %v2762 = vsel %vm567, %v2751, 0
  %v2765 = vsel %vm567, %v2752, 0
  %v2768 = vsel %vm567, %v2753, 0
  %v2771 = vsel %vm567, %v2754, 0
  %v2774 = vsel %vm567, %v2755, 0
  %v2777 = vsel %vm567, %v2756, 0
  %v2780 = vsel %vm567, %v2757, 0
  %v2783 = vsel %vm567, %v2758, 0
  %v2786 = vsel %vm1855, %v2760, 0
  %2788 = vmatpush.bf16.msra.mxu0 0
  %2789 = vmatpush.bf16.msra.mxu0 0
  %2790 = vmatpush.bf16.msra.mxu0 0
  %2791 = vmatpush.bf16.msra.mxu0 0
  %2792 = vmatpush.bf16.msra.mxu0 0
  %2793 = vmatpush.bf16.msra.mxu0 0
  %2794 = vmatpush.bf16.msra.mxu0 0
  %2795 = vmatpush.bf16.msra.mxu0 %v2786
  %2796 = vmatmul.bf16.gmra.mxu0 %v2762
  %v2797 = vpop.f32.mrf.mxu0
  %v2798 = vadd.f32 0.0, %v2797
  %v2799 = vpop.f32.mrf.mxu0
  %v2800 = vadd.f32 0.0, %v2799
  %2801 = vmatmul.bf16.gmra.mxu0 %v2765
  %v2802 = vpop.f32.mrf.mxu0
  %v2803 = vadd.f32 0.0, %v2802
  %v2804 = vpop.f32.mrf.mxu0
  %v2805 = vadd.f32 0.0, %v2804
  %2806 = vmatmul.bf16.gmra.mxu0 %v2768
  %v2807 = vpop.f32.mrf.mxu0
  %v2808 = vadd.f32 0.0, %v2807
  %v2809 = vpop.f32.mrf.mxu0
  %v2810 = vadd.f32 0.0, %v2809
  %2811 = vmatmul.bf16.gmra.mxu0 %v2771
  %v2812 = vpop.f32.mrf.mxu0
  %v2813 = vadd.f32 0.0, %v2812
  %v2814 = vpop.f32.mrf.mxu0
  %v2815 = vadd.f32 0.0, %v2814
  %2816 = vmatmul.bf16.gmra.mxu0 %v2774
  %v2817 = vpop.f32.mrf.mxu0
  %v2818 = vadd.f32 0.0, %v2817
  %v2819 = vpop.f32.mrf.mxu0
  %v2820 = vadd.f32 0.0, %v2819
  %2821 = vmatmul.bf16.gmra.mxu0 %v2777
  %v2822 = vpop.f32.mrf.mxu0
  %v2823 = vadd.f32 0.0, %v2822
  %v2824 = vpop.f32.mrf.mxu0
  %v2825 = vadd.f32 0.0, %v2824
  %2826 = vmatmul.bf16.gmra.mxu0 %v2780
  %v2827 = vpop.f32.mrf.mxu0
  %v2828 = vadd.f32 0.0, %v2827
  %v2829 = vpop.f32.mrf.mxu0
  %v2830 = vadd.f32 0.0, %v2829
  %2831 = vmatmul.bf16.gmra.mxu0 %v2783
  %v2832 = vpop.f32.mrf.mxu0
  %v2833 = vadd.f32 0.0, %v2832
  %v2834 = vpop.f32.mrf.mxu0
  %v2835 = vadd.f32 0.0, %v2834
  %2836 = vdwg.mxu0
  %v2837 = vadd.f32 %v1945, %v2798
  %v2838 = vadd.f32 %v1947, %v2800
  %v2839 = vadd.f32 %v1950, %v2803
  %v2840 = vadd.f32 %v1952, %v2805
  %v2841 = vadd.f32 %v1955, %v2808
  %v2842 = vadd.f32 %v1957, %v2810
  %v2843 = vadd.f32 %v1960, %v2813
  %v2844 = vadd.f32 %v1962, %v2815
  %v2845 = vadd.f32 %v1965, %v2818
  %v2846 = vadd.f32 %v1967, %v2820
  %v2847 = vadd.f32 %v1970, %v2823
  %v2848 = vadd.f32 %v1972, %v2825
  %v2849 = vadd.f32 %v1975, %v2828
  %v2850 = vadd.f32 %v1977, %v2830
  %v2851 = vadd.f32 %v1980, %v2833
  %v2852 = vadd.f32 %v1982, %v2835
  %s2853 = scalar_lea.vmem %s4, 48
  %v2854 = vld [vmem:[%s2853] sm:$0xf]
  %v2855 = vld [vmem:[%s2853 + $0x4] sm:$0xf]
  %v2856 = vld [vmem:[%s2853 + $0x8] sm:$0xf]
  %v2857 = vld [vmem:[%s2853 + $0xc] sm:$0xf]
  %s2858 = scalar_lea.vmem %s5, 3
  %v2859 = vld [vmem:[%s2858] sm:$0x1]
  %v2861 = vperm.slane %v2859, 0
  %v2867 = vunpack.c.l.b16 %v2854
  %v2868 = vunpack.c.l.b16 %v2855
  %v2869 = vunpack.c.l.b16 %v2856
  %v2870 = vunpack.c.l.b16 %v2857
  %v2871 = vpack.c.b16 %v2868, %v2867
  %v2872 = vpack.c.b16 %v2870, %v2869
  %2875 = vmatpush.bf16.msra.mxu0 0
  %2876 = vmatpush.bf16.msra.mxu0 0
  %2877 = vmatpush.bf16.msra.mxu0 0
  %2878 = vmatpush.bf16.msra.mxu0 0
  %2879 = vmatpush.bf16.msra.mxu0 0
  %2880 = vmatpush.bf16.msra.mxu0 0
  %2881 = vmatpush.bf16.msra.mxu0 %v2872
  %2882 = vmatpush.bf16.msra.mxu0 %v2871
  %2883 = vmatmul.bf16.gmra.mxu0 %v251
  %v2884 = vpop.f32.mrf.mxu0
  %v2885 = vadd.f32 %v2861, %v2884
  %v2886 = vpop.f32.mrf.mxu0
  %v2887 = vadd.f32 %v2861, %v2886
  %2888 = vmatmul.bf16.gmra.mxu0 %v254
  %v2889 = vpop.f32.mrf.mxu0
  %v2890 = vadd.f32 %v2861, %v2889
  %v2891 = vpop.f32.mrf.mxu0
  %v2892 = vadd.f32 %v2861, %v2891
  %2893 = vmatmul.bf16.gmra.mxu0 %v257
  %v2894 = vpop.f32.mrf.mxu0
  %v2895 = vadd.f32 %v2861, %v2894
  %v2896 = vpop.f32.mrf.mxu0
  %v2897 = vadd.f32 %v2861, %v2896
  %2898 = vmatmul.bf16.gmra.mxu0 %v260
  %v2899 = vpop.f32.mrf.mxu0
  %v2900 = vadd.f32 %v2861, %v2899
  %v2901 = vpop.f32.mrf.mxu0
  %v2902 = vadd.f32 %v2861, %v2901
  %2903 = vmatmul.bf16.gmra.mxu0 %v263
  %v2904 = vpop.f32.mrf.mxu0
  %v2905 = vadd.f32 %v2861, %v2904
  %v2906 = vpop.f32.mrf.mxu0
  %v2907 = vadd.f32 %v2861, %v2906
  %2908 = vmatmul.bf16.gmra.mxu0 %v266
  %v2909 = vpop.f32.mrf.mxu0
  %v2910 = vadd.f32 %v2861, %v2909
  %v2911 = vpop.f32.mrf.mxu0
  %v2912 = vadd.f32 %v2861, %v2911
  %2913 = vmatmul.bf16.gmra.mxu0 %v269
  %v2914 = vpop.f32.mrf.mxu0
  %v2915 = vadd.f32 %v2861, %v2914
  %v2916 = vpop.f32.mrf.mxu0
  %v2917 = vadd.f32 %v2861, %v2916
  %2918 = vmatmul.bf16.gmra.mxu0 %v272
  %v2919 = vpop.f32.mrf.mxu0
  %v2920 = vadd.f32 %v2861, %v2919
  %v2921 = vpop.f32.mrf.mxu0
  %v2922 = vadd.f32 %v2861, %v2921
  %2923 = vdwg.mxu0
  %v2924 = vpack.c.bf16 %v2885, %v2885
  %v2925 = vpack.c.bf16 %v2887, %v2887
  %v2926 = vpack.c.bf16 %v2890, %v2890
  %v2927 = vpack.c.bf16 %v2892, %v2892
  %v2928 = vpack.c.bf16 %v2895, %v2895
  %v2929 = vpack.c.bf16 %v2897, %v2897
  %v2930 = vpack.c.bf16 %v2900, %v2900
  %v2931 = vpack.c.bf16 %v2902, %v2902
  %v2932 = vpack.c.bf16 %v2905, %v2905
  %v2933 = vpack.c.bf16 %v2907, %v2907
  %v2934 = vpack.c.bf16 %v2910, %v2910
  %v2935 = vpack.c.bf16 %v2912, %v2912
  %v2936 = vpack.c.bf16 %v2915, %v2915
  %v2937 = vpack.c.bf16 %v2917, %v2917
  %v2938 = vpack.c.bf16 %v2920, %v2920
  %v2939 = vpack.c.bf16 %v2922, %v2922
  %s2940 = scalar_lea.vmem %s4, 112
  %v2941 = vld [vmem:[%s2940] sm:$0xf]
  %v2942 = vld [vmem:[%s2940 + $0x4] sm:$0xf]
  %v2943 = vld [vmem:[%s2940 + $0x8] sm:$0xf]
  %v2944 = vld [vmem:[%s2940 + $0xc] sm:$0xf]
  %v2949 = vunpack.c.l.b16 %v2941
  %v2950 = vunpack.c.l.b16 %v2942
  %v2951 = vunpack.c.l.b16 %v2943
  %v2952 = vunpack.c.l.b16 %v2944
  %v2953 = vpack.c.b16 %v2950, %v2949
  %v2954 = vpack.c.b16 %v2952, %v2951
  %2957 = vmatpush.bf16.msra.mxu0 0
  %2958 = vmatpush.bf16.msra.mxu0 0
  %2959 = vmatpush.bf16.msra.mxu0 0
  %2960 = vmatpush.bf16.msra.mxu0 0
  %2961 = vmatpush.bf16.msra.mxu0 0
  %2962 = vmatpush.bf16.msra.mxu0 0
  %2963 = vmatpush.bf16.msra.mxu0 %v2954
  %2964 = vmatpush.bf16.msra.mxu0 %v2953
  %2965 = vmatmul.bf16.gmra.mxu0 %v251
  %v2966 = vpop.f32.mrf.mxu0
  %v2967 = vadd.f32 0.0, %v2966
  %v2968 = vpop.f32.mrf.mxu0
  %v2969 = vadd.f32 0.0, %v2968
  %2970 = vmatmul.bf16.gmra.mxu0 %v254
  %v2971 = vpop.f32.mrf.mxu0
  %v2972 = vadd.f32 0.0, %v2971
  %v2973 = vpop.f32.mrf.mxu0
  %v2974 = vadd.f32 0.0, %v2973
  %2975 = vmatmul.bf16.gmra.mxu0 %v257
  %v2976 = vpop.f32.mrf.mxu0
  %v2977 = vadd.f32 0.0, %v2976
  %v2978 = vpop.f32.mrf.mxu0
  %v2979 = vadd.f32 0.0, %v2978
  %2980 = vmatmul.bf16.gmra.mxu0 %v260
  %v2981 = vpop.f32.mrf.mxu0
  %v2982 = vadd.f32 0.0, %v2981
  %v2983 = vpop.f32.mrf.mxu0
  %v2984 = vadd.f32 0.0, %v2983
  %2985 = vmatmul.bf16.gmra.mxu0 %v263
  %v2986 = vpop.f32.mrf.mxu0
  %v2987 = vadd.f32 0.0, %v2986
  %v2988 = vpop.f32.mrf.mxu0
  %v2989 = vadd.f32 0.0, %v2988
  %2990 = vmatmul.bf16.gmra.mxu0 %v266
  %v2991 = vpop.f32.mrf.mxu0
  %v2992 = vadd.f32 0.0, %v2991
  %v2993 = vpop.f32.mrf.mxu0
  %v2994 = vadd.f32 0.0, %v2993
  %2995 = vmatmul.bf16.gmra.mxu0 %v269
  %v2996 = vpop.f32.mrf.mxu0
  %v2997 = vadd.f32 0.0, %v2996
  %v2998 = vpop.f32.mrf.mxu0
  %v2999 = vadd.f32 0.0, %v2998
  %3000 = vmatmul.bf16.gmra.mxu0 %v272
  %v3001 = vpop.f32.mrf.mxu0
  %v3002 = vadd.f32 0.0, %v3001
  %v3003 = vpop.f32.mrf.mxu0
  %v3004 = vadd.f32 0.0, %v3003
  %3005 = vdwg.mxu0
  %v3006 = vpack.c.bf16 %v2967, %v2967
  %v3007 = vpack.c.bf16 %v2969, %v2969
  %v3008 = vpack.c.bf16 %v2972, %v2972
  %v3009 = vpack.c.bf16 %v2974, %v2974
  %v3010 = vpack.c.bf16 %v2977, %v2977
  %v3011 = vpack.c.bf16 %v2979, %v2979
  %v3012 = vpack.c.bf16 %v2982, %v2982
  %v3013 = vpack.c.bf16 %v2984, %v2984
  %v3014 = vpack.c.bf16 %v2987, %v2987
  %v3015 = vpack.c.bf16 %v2989, %v2989
  %v3016 = vpack.c.bf16 %v2992, %v2992
  %v3017 = vpack.c.bf16 %v2994, %v2994
  %v3018 = vpack.c.bf16 %v2997, %v2997
  %v3019 = vpack.c.bf16 %v2999, %v2999
  %v3020 = vpack.c.bf16 %v3002, %v3002
  %v3021 = vpack.c.bf16 %v3004, %v3004
  %s3022 = scalar_lea.vmem %s4, 176
  %v3023 = vld [vmem:[%s3022] sm:$0xf]
  %v3024 = vld [vmem:[%s3022 + $0x4] sm:$0xf]
  %v3025 = vld [vmem:[%s3022 + $0x8] sm:$0xf]
  %v3026 = vld [vmem:[%s3022 + $0xc] sm:$0xf]
  %v3031 = vunpack.c.l.b16 %v3023
  %v3032 = vunpack.c.l.b16 %v3024
  %v3033 = vunpack.c.l.b16 %v3025
  %v3034 = vunpack.c.l.b16 %v3026
  %v3035 = vpack.c.b16 %v3032, %v3031
  %v3036 = vpack.c.b16 %v3034, %v3033
  %3039 = vmatpush.bf16.msra.mxu0 0
  %3040 = vmatpush.bf16.msra.mxu0 0
  %3041 = vmatpush.bf16.msra.mxu0 0
  %3042 = vmatpush.bf16.msra.mxu0 0
  %3043 = vmatpush.bf16.msra.mxu0 0
  %3044 = vmatpush.bf16.msra.mxu0 0
  %3045 = vmatpush.bf16.msra.mxu0 %v3036
  %3046 = vmatpush.bf16.msra.mxu0 %v3035
  %3047 = vmatmul.bf16.gmra.mxu0 %v439
  %v3048 = vpop.f32.mrf.mxu0
  %v3049 = vadd.f32 0.0, %v3048
  %v3050 = vpop.f32.mrf.mxu0
  %v3051 = vadd.f32 0.0, %v3050
  %3052 = vmatmul.bf16.gmra.mxu0 %v442
  %v3053 = vpop.f32.mrf.mxu0
  %v3054 = vadd.f32 0.0, %v3053
  %v3055 = vpop.f32.mrf.mxu0
  %v3056 = vadd.f32 0.0, %v3055
  %3057 = vmatmul.bf16.gmra.mxu0 %v445
  %v3058 = vpop.f32.mrf.mxu0
  %v3059 = vadd.f32 0.0, %v3058
  %v3060 = vpop.f32.mrf.mxu0
  %v3061 = vadd.f32 0.0, %v3060
  %3062 = vmatmul.bf16.gmra.mxu0 %v448
  %v3063 = vpop.f32.mrf.mxu0
  %v3064 = vadd.f32 0.0, %v3063
  %v3065 = vpop.f32.mrf.mxu0
  %v3066 = vadd.f32 0.0, %v3065
  %3067 = vmatmul.bf16.gmra.mxu0 %v451
  %v3068 = vpop.f32.mrf.mxu0
  %v3069 = vadd.f32 0.0, %v3068
  %v3070 = vpop.f32.mrf.mxu0
  %v3071 = vadd.f32 0.0, %v3070
  %3072 = vmatmul.bf16.gmra.mxu0 %v454
  %v3073 = vpop.f32.mrf.mxu0
  %v3074 = vadd.f32 0.0, %v3073
  %v3075 = vpop.f32.mrf.mxu0
  %v3076 = vadd.f32 0.0, %v3075
  %3077 = vmatmul.bf16.gmra.mxu0 %v457
  %v3078 = vpop.f32.mrf.mxu0
  %v3079 = vadd.f32 0.0, %v3078
  %v3080 = vpop.f32.mrf.mxu0
  %v3081 = vadd.f32 0.0, %v3080
  %3082 = vmatmul.bf16.gmra.mxu0 %v460
  %v3083 = vpop.f32.mrf.mxu0
  %v3084 = vadd.f32 0.0, %v3083
  %v3085 = vpop.f32.mrf.mxu0
  %v3086 = vadd.f32 0.0, %v3085
  %3087 = vdwg.mxu0
  %v3088 = vpack.c.bf16 %v3049, %v3049
  %v3089 = vpack.c.bf16 %v3051, %v3051
  %v3090 = vpack.c.bf16 %v3054, %v3054
  %v3091 = vpack.c.bf16 %v3056, %v3056
  %v3092 = vpack.c.bf16 %v3059, %v3059
  %v3093 = vpack.c.bf16 %v3061, %v3061
  %v3094 = vpack.c.bf16 %v3064, %v3064
  %v3095 = vpack.c.bf16 %v3066, %v3066
  %v3096 = vpack.c.bf16 %v3069, %v3069
  %v3097 = vpack.c.bf16 %v3071, %v3071
  %v3098 = vpack.c.bf16 %v3074, %v3074
  %v3099 = vpack.c.bf16 %v3076, %v3076
  %v3100 = vpack.c.bf16 %v3079, %v3079
  %v3101 = vpack.c.bf16 %v3081, %v3081
  %v3102 = vpack.c.bf16 %v3084, %v3084
  %v3103 = vpack.c.bf16 %v3086, %v3086
  %v3112 = vunpack.c.l.b16 %v2924
  %v3113 = vunpack.c.l.b16 %v2925
  %v3114 = vunpack.c.l.b16 %v2926
  %v3115 = vunpack.c.l.b16 %v2927
  %v3116 = vunpack.c.l.b16 %v2928
  %v3117 = vunpack.c.l.b16 %v2929
  %v3118 = vunpack.c.l.b16 %v2930
  %v3119 = vunpack.c.l.b16 %v2931
  %v3120 = vpack.c.b16 %v3113, %v3112
  %v3121 = vpack.c.b16 %v3115, %v3114
  %v3122 = vpack.c.b16 %v3117, %v3116
  %v3123 = vpack.c.b16 %v3119, %v3118
  %v3132 = vunpack.c.l.b16 %v3006
  %v3133 = vunpack.c.l.b16 %v3007
  %v3134 = vunpack.c.l.b16 %v3008
  %v3135 = vunpack.c.l.b16 %v3009
  %v3136 = vunpack.c.l.b16 %v3010
  %v3137 = vunpack.c.l.b16 %v3011
  %v3138 = vunpack.c.l.b16 %v3012
  %v3139 = vunpack.c.l.b16 %v3013
  %v3140 = vpack.c.b16 %v3133, %v3132
  %v3141 = vpack.c.b16 %v3135, %v3134
  %v3142 = vpack.c.b16 %v3137, %v3136
  %v3143 = vpack.c.b16 %v3139, %v3138
  %v3145 = vsel %vm567, %v3120, 0
  %v3148 = vsel %vm567, %v3121, 0
  %v3151 = vsel %vm567, %v3122, 0
  %v3154 = vsel %vm567, %v3123, 0
  %v3157 = vsel %vm567, %v3140, 0
  %v3160 = vsel %vm567, %v3141, 0
  %v3163 = vsel %vm567, %v3142, 0
  %v3166 = vsel %vm567, %v3143, 0
  %3168 = vmatpush.bf16.xpose.msra.mxu0 0
  %3169 = vmatpush.bf16.xpose.msra.mxu0 0
  %3170 = vmatpush.bf16.xpose.msra.mxu0 0
  %3171 = vmatpush.bf16.xpose.msra.mxu0 0
  %3172 = vmatpush.bf16.xpose.msra.mxu0 %v3166
  %3173 = vmatpush.bf16.xpose.msra.mxu0 %v3163
  %3174 = vmatpush.bf16.xpose.msra.mxu0 %v3160
  %3175 = vmatpush.bf16.xpose.msra.mxu0 %v3157
  %3176 = vmatmul.bf16.gmra.mxu0 %v3145
  %v3177 = vpop.f32.mrf.mxu0
  %v3178 = vadd.f32 0.0, %v3177
  %v3179 = vpop.f32.mrf.mxu0
  %v3180 = vadd.f32 0.0, %v3179
  %3181 = vmatmul.bf16.gmra.mxu0 %v3148
  %v3182 = vpop.f32.mrf.mxu0
  %v3183 = vadd.f32 0.0, %v3182
  %v3184 = vpop.f32.mrf.mxu0
  %v3185 = vadd.f32 0.0, %v3184
  %3186 = vmatmul.bf16.gmra.mxu0 %v3151
  %v3187 = vpop.f32.mrf.mxu0
  %v3188 = vadd.f32 0.0, %v3187
  %v3189 = vpop.f32.mrf.mxu0
  %v3190 = vadd.f32 0.0, %v3189
  %3191 = vmatmul.bf16.gmra.mxu0 %v3154
  %v3192 = vpop.f32.mrf.mxu0
  %v3193 = vadd.f32 0.0, %v3192
  %v3194 = vpop.f32.mrf.mxu0
  %v3195 = vadd.f32 0.0, %v3194
  %3196 = vdwg.mxu0
  %v3197 = vmul.f32 %v3178, 0.35355338
  %v3198 = vmul.f32 %v3180, 0.35355338
  %v3199 = vmul.f32 %v3183, 0.35355338
  %v3200 = vmul.f32 %v3185, 0.35355338
  %v3201 = vmul.f32 %v3188, 0.35355338
  %v3202 = vmul.f32 %v3190, 0.35355338
  %v3203 = vmul.f32 %v3193, 0.35355338
  %v3204 = vmul.f32 %v3195, 0.35355338
  %v3205 = vsel %vm629, %v3197, -inf
  %3206 = vmax.xlane.f32.xlu0 %v3205
  %v3207 = vpop.xlane.xlu0 %3206
  %v3208 = vsel %vm629, %v3198, -inf
  %3209 = vmax.xlane.f32.xlu0 %v3208
  %v3210 = vpop.xlane.xlu0 %3209
  %v3211 = vsel %vm629, %v3199, -inf
  %3212 = vmax.xlane.f32.xlu0 %v3211
  %v3213 = vpop.xlane.xlu0 %3212
  %v3214 = vsel %vm629, %v3200, -inf
  %3215 = vmax.xlane.f32.xlu0 %v3214
  %v3216 = vpop.xlane.xlu0 %3215
  %v3217 = vsel %vm629, %v3201, -inf
  %3218 = vmax.xlane.f32.xlu0 %v3217
  %v3219 = vpop.xlane.xlu0 %3218
  %v3220 = vsel %vm629, %v3202, -inf
  %3221 = vmax.xlane.f32.xlu0 %v3220
  %v3222 = vpop.xlane.xlu0 %3221
  %v3223 = vsel %vm629, %v3203, -inf
  %3224 = vmax.xlane.f32.xlu0 %v3223
  %v3225 = vpop.xlane.xlu0 %3224
  %v3226 = vsel %vm629, %v3204, -inf
  %3227 = vmax.xlane.f32.xlu0 %v3226
  %v3228 = vpop.xlane.xlu0 %3227
  %v3229 = vsub.f32 %v3197, %v3207
  %v3230 = vsub.f32 %v3198, %v3210
  %v3231 = vsub.f32 %v3199, %v3213
  %v3232 = vsub.f32 %v3200, %v3216
  %v3233 = vsub.f32 %v3201, %v3219
  %v3234 = vsub.f32 %v3202, %v3222
  %v3235 = vsub.f32 %v3203, %v3225
  %v3236 = vsub.f32 %v3204, %v3228
  %v3237 = vmul.f32 %v3229, 1.442695
  %v3238 = vpow.pop %v3237
  %v3239 = vmul.f32 %v3230, 1.442695
  %v3240 = vpow.pop %v3239
  %v3241 = vmul.f32 %v3231, 1.442695
  %v3242 = vpow.pop %v3241
  %v3243 = vmul.f32 %v3232, 1.442695
  %v3244 = vpow.pop %v3243
  %v3245 = vmul.f32 %v3233, 1.442695
  %v3246 = vpow.pop %v3245
  %v3247 = vmul.f32 %v3234, 1.442695
  %v3248 = vpow.pop %v3247
  %v3249 = vmul.f32 %v3235, 1.442695
  %v3250 = vpow.pop %v3249
  %v3251 = vmul.f32 %v3236, 1.442695
  %v3252 = vpow.pop %v3251
  %v3253 = vsel %vm629, %v3238, 0.0
  %3254 = vadd.xlane.f32.xlu0 %v3253
  %v3255 = vpop.xlane.xlu0 %3254
  %v3256 = vsel %vm629, %v3240, 0.0
  %3257 = vadd.xlane.f32.xlu0 %v3256
  %v3258 = vpop.xlane.xlu0 %3257
  %v3259 = vsel %vm629, %v3242, 0.0
  %3260 = vadd.xlane.f32.xlu0 %v3259
  %v3261 = vpop.xlane.xlu0 %3260
  %v3262 = vsel %vm629, %v3244, 0.0
  %3263 = vadd.xlane.f32.xlu0 %v3262
  %v3264 = vpop.xlane.xlu0 %3263
  %v3265 = vsel %vm629, %v3246, 0.0
  %3266 = vadd.xlane.f32.xlu0 %v3265
  %v3267 = vpop.xlane.xlu0 %3266
  %v3268 = vsel %vm629, %v3248, 0.0
  %3269 = vadd.xlane.f32.xlu0 %v3268
  %v3270 = vpop.xlane.xlu0 %3269
  %v3271 = vsel %vm629, %v3250, 0.0
  %3272 = vadd.xlane.f32.xlu0 %v3271
  %v3273 = vpop.xlane.xlu0 %3272
  %v3274 = vsel %vm629, %v3252, 0.0
  %3275 = vadd.xlane.f32.xlu0 %v3274
  %v3276 = vpop.xlane.xlu0 %3275
  %v3277 = vrcp.pop %v3255
  %v3278 = vrcp.pop %v3258
  %v3279 = vrcp.pop %v3261
  %v3280 = vrcp.pop %v3264
  %v3281 = vrcp.pop %v3267
  %v3282 = vrcp.pop %v3270
  %v3283 = vrcp.pop %v3273
  %v3284 = vrcp.pop %v3276
  %v3285 = vmul.f32 %v3238, %v3277
  %v3286 = vmul.f32 %v3240, %v3278
  %v3287 = vmul.f32 %v3242, %v3279
  %v3288 = vmul.f32 %v3244, %v3280
  %v3289 = vmul.f32 %v3246, %v3281
  %v3290 = vmul.f32 %v3248, %v3282
  %v3291 = vmul.f32 %v3250, %v3283
  %v3292 = vmul.f32 %v3252, %v3284
  %v3293 = vpack.c.bf16 %v3286, %v3285
  %v3294 = vpack.c.bf16 %v3288, %v3287
  %v3295 = vpack.c.bf16 %v3290, %v3289
  %v3296 = vpack.c.bf16 %v3292, %v3291
  %v3305 = vunpack.c.l.b16 %v3088
  %v3306 = vunpack.c.l.b16 %v3089
  %v3307 = vunpack.c.l.b16 %v3090
  %v3308 = vunpack.c.l.b16 %v3091
  %v3309 = vunpack.c.l.b16 %v3092
  %v3310 = vunpack.c.l.b16 %v3093
  %v3311 = vunpack.c.l.b16 %v3094
  %v3312 = vunpack.c.l.b16 %v3095
  %v3313 = vpack.c.b16 %v3306, %v3305
  %v3314 = vpack.c.b16 %v3308, %v3307
  %v3315 = vpack.c.b16 %v3310, %v3309
  %v3316 = vpack.c.b16 %v3312, %v3311
  %v3322 = vsel %vm629, %v3293, 0
  %v3325 = vsel %vm629, %v3294, 0
  %v3328 = vsel %vm629, %v3295, 0
  %v3331 = vsel %vm629, %v3296, 0
  %3333 = vmatpush.bf16.msra.mxu0 0
  %3334 = vmatpush.bf16.msra.mxu0 0
  %3335 = vmatpush.bf16.msra.mxu0 0
  %3336 = vmatpush.bf16.msra.mxu0 0
  %3337 = vmatpush.bf16.msra.mxu0 %v3316
  %3338 = vmatpush.bf16.msra.mxu0 %v3315
  %3339 = vmatpush.bf16.msra.mxu0 %v3314
  %3340 = vmatpush.bf16.msra.mxu0 %v3313
  %3341 = vmatmul.bf16.gmra.mxu0 %v3322
  %v3342 = vpop.f32.mrf.mxu0
  %v3343 = vadd.f32 0.0, %v3342
  %v3344 = vpop.f32.mrf.mxu0
  %v3345 = vadd.f32 0.0, %v3344
  %3346 = vmatmul.bf16.gmra.mxu0 %v3325
  %v3347 = vpop.f32.mrf.mxu0
  %v3348 = vadd.f32 0.0, %v3347
  %v3349 = vpop.f32.mrf.mxu0
  %v3350 = vadd.f32 0.0, %v3349
  %3351 = vmatmul.bf16.gmra.mxu0 %v3328
  %v3352 = vpop.f32.mrf.mxu0
  %v3353 = vadd.f32 0.0, %v3352
  %v3354 = vpop.f32.mrf.mxu0
  %v3355 = vadd.f32 0.0, %v3354
  %3356 = vmatmul.bf16.gmra.mxu0 %v3331
  %v3357 = vpop.f32.mrf.mxu0
  %v3358 = vadd.f32 0.0, %v3357
  %v3359 = vpop.f32.mrf.mxu0
  %v3360 = vadd.f32 0.0, %v3359
  %3361 = vdwg.mxu0
  %v3370 = vunpack.c.l.b16 %v2932
  %v3371 = vunpack.c.l.b16 %v2933
  %v3372 = vunpack.c.l.b16 %v2934
  %v3373 = vunpack.c.l.b16 %v2935
  %v3374 = vunpack.c.l.b16 %v2936
  %v3375 = vunpack.c.l.b16 %v2937
  %v3376 = vunpack.c.l.b16 %v2938
  %v3377 = vunpack.c.l.b16 %v2939
  %v3378 = vpack.c.b16 %v3371, %v3370
  %v3379 = vpack.c.b16 %v3373, %v3372
  %v3380 = vpack.c.b16 %v3375, %v3374
  %v3381 = vpack.c.b16 %v3377, %v3376
  %v3390 = vunpack.c.l.b16 %v3014
  %v3391 = vunpack.c.l.b16 %v3015
  %v3392 = vunpack.c.l.b16 %v3016
  %v3393 = vunpack.c.l.b16 %v3017
  %v3394 = vunpack.c.l.b16 %v3018
  %v3395 = vunpack.c.l.b16 %v3019
  %v3396 = vunpack.c.l.b16 %v3020
  %v3397 = vunpack.c.l.b16 %v3021
  %v3398 = vpack.c.b16 %v3391, %v3390
  %v3399 = vpack.c.b16 %v3393, %v3392
  %v3400 = vpack.c.b16 %v3395, %v3394
  %v3401 = vpack.c.b16 %v3397, %v3396
  %v3403 = vsel %vm567, %v3378, 0
  %v3406 = vsel %vm567, %v3379, 0
  %v3409 = vsel %vm567, %v3380, 0
  %v3412 = vsel %vm567, %v3381, 0
  %v3415 = vsel %vm567, %v3398, 0
  %v3418 = vsel %vm567, %v3399, 0
  %v3421 = vsel %vm567, %v3400, 0
  %v3424 = vsel %vm567, %v3401, 0
  %3426 = vmatpush.bf16.xpose.msra.mxu0 0
  %3427 = vmatpush.bf16.xpose.msra.mxu0 0
  %3428 = vmatpush.bf16.xpose.msra.mxu0 0
  %3429 = vmatpush.bf16.xpose.msra.mxu0 0
  %3430 = vmatpush.bf16.xpose.msra.mxu0 %v3424
  %3431 = vmatpush.bf16.xpose.msra.mxu0 %v3421
  %3432 = vmatpush.bf16.xpose.msra.mxu0 %v3418
  %3433 = vmatpush.bf16.xpose.msra.mxu0 %v3415
  %3434 = vmatmul.bf16.gmra.mxu0 %v3403
  %v3435 = vpop.f32.mrf.mxu0
  %v3436 = vadd.f32 0.0, %v3435
  %v3437 = vpop.f32.mrf.mxu0
  %v3438 = vadd.f32 0.0, %v3437
  %3439 = vmatmul.bf16.gmra.mxu0 %v3406
  %v3440 = vpop.f32.mrf.mxu0
  %v3441 = vadd.f32 0.0, %v3440
  %v3442 = vpop.f32.mrf.mxu0
  %v3443 = vadd.f32 0.0, %v3442
  %3444 = vmatmul.bf16.gmra.mxu0 %v3409
  %v3445 = vpop.f32.mrf.mxu0
  %v3446 = vadd.f32 0.0, %v3445
  %v3447 = vpop.f32.mrf.mxu0
  %v3448 = vadd.f32 0.0, %v3447
  %3449 = vmatmul.bf16.gmra.mxu0 %v3412
  %v3450 = vpop.f32.mrf.mxu0
  %v3451 = vadd.f32 0.0, %v3450
  %v3452 = vpop.f32.mrf.mxu0
  %v3453 = vadd.f32 0.0, %v3452
  %3454 = vdwg.mxu0
  %v3455 = vmul.f32 %v3436, 0.35355338
  %v3456 = vmul.f32 %v3438, 0.35355338
  %v3457 = vmul.f32 %v3441, 0.35355338
  %v3458 = vmul.f32 %v3443, 0.35355338
  %v3459 = vmul.f32 %v3446, 0.35355338
  %v3460 = vmul.f32 %v3448, 0.35355338
  %v3461 = vmul.f32 %v3451, 0.35355338
  %v3462 = vmul.f32 %v3453, 0.35355338
  %v3463 = vsel %vm629, %v3455, -inf
  %3464 = vmax.xlane.f32.xlu0 %v3463
  %v3465 = vpop.xlane.xlu0 %3464
  %v3466 = vsel %vm629, %v3456, -inf
  %3467 = vmax.xlane.f32.xlu0 %v3466
  %v3468 = vpop.xlane.xlu0 %3467
  %v3469 = vsel %vm629, %v3457, -inf
  %3470 = vmax.xlane.f32.xlu0 %v3469
  %v3471 = vpop.xlane.xlu0 %3470
  %v3472 = vsel %vm629, %v3458, -inf
  %3473 = vmax.xlane.f32.xlu0 %v3472
  %v3474 = vpop.xlane.xlu0 %3473
  %v3475 = vsel %vm629, %v3459, -inf
  %3476 = vmax.xlane.f32.xlu0 %v3475
  %v3477 = vpop.xlane.xlu0 %3476
  %v3478 = vsel %vm629, %v3460, -inf
  %3479 = vmax.xlane.f32.xlu0 %v3478
  %v3480 = vpop.xlane.xlu0 %3479
  %v3481 = vsel %vm629, %v3461, -inf
  %3482 = vmax.xlane.f32.xlu0 %v3481
  %v3483 = vpop.xlane.xlu0 %3482
  %v3484 = vsel %vm629, %v3462, -inf
  %3485 = vmax.xlane.f32.xlu0 %v3484
  %v3486 = vpop.xlane.xlu0 %3485
  %v3487 = vsub.f32 %v3455, %v3465
  %v3488 = vsub.f32 %v3456, %v3468
  %v3489 = vsub.f32 %v3457, %v3471
  %v3490 = vsub.f32 %v3458, %v3474
  %v3491 = vsub.f32 %v3459, %v3477
  %v3492 = vsub.f32 %v3460, %v3480
  %v3493 = vsub.f32 %v3461, %v3483
  %v3494 = vsub.f32 %v3462, %v3486
  %v3495 = vmul.f32 %v3487, 1.442695
  %v3496 = vpow.pop %v3495
  %v3497 = vmul.f32 %v3488, 1.442695
  %v3498 = vpow.pop %v3497
  %v3499 = vmul.f32 %v3489, 1.442695
  %v3500 = vpow.pop %v3499
  %v3501 = vmul.f32 %v3490, 1.442695
  %v3502 = vpow.pop %v3501
  %v3503 = vmul.f32 %v3491, 1.442695
  %v3504 = vpow.pop %v3503
  %v3505 = vmul.f32 %v3492, 1.442695
  %v3506 = vpow.pop %v3505
  %v3507 = vmul.f32 %v3493, 1.442695
  %v3508 = vpow.pop %v3507
  %v3509 = vmul.f32 %v3494, 1.442695
  %v3510 = vpow.pop %v3509
  %v3511 = vsel %vm629, %v3496, 0.0
  %3512 = vadd.xlane.f32.xlu0 %v3511
  %v3513 = vpop.xlane.xlu0 %3512
  %v3514 = vsel %vm629, %v3498, 0.0
  %3515 = vadd.xlane.f32.xlu0 %v3514
  %v3516 = vpop.xlane.xlu0 %3515
  %v3517 = vsel %vm629, %v3500, 0.0
  %3518 = vadd.xlane.f32.xlu0 %v3517
  %v3519 = vpop.xlane.xlu0 %3518
  %v3520 = vsel %vm629, %v3502, 0.0
  %3521 = vadd.xlane.f32.xlu0 %v3520
  %v3522 = vpop.xlane.xlu0 %3521
  %v3523 = vsel %vm629, %v3504, 0.0
  %3524 = vadd.xlane.f32.xlu0 %v3523
  %v3525 = vpop.xlane.xlu0 %3524
  %v3526 = vsel %vm629, %v3506, 0.0
  %3527 = vadd.xlane.f32.xlu0 %v3526
  %v3528 = vpop.xlane.xlu0 %3527
  %v3529 = vsel %vm629, %v3508, 0.0
  %3530 = vadd.xlane.f32.xlu0 %v3529
  %v3531 = vpop.xlane.xlu0 %3530
  %v3532 = vsel %vm629, %v3510, 0.0
  %3533 = vadd.xlane.f32.xlu0 %v3532
  %v3534 = vpop.xlane.xlu0 %3533
  %v3535 = vrcp.pop %v3513
  %v3536 = vrcp.pop %v3516
  %v3537 = vrcp.pop %v3519
  %v3538 = vrcp.pop %v3522
  %v3539 = vrcp.pop %v3525
  %v3540 = vrcp.pop %v3528
  %v3541 = vrcp.pop %v3531
  %v3542 = vrcp.pop %v3534
  %v3543 = vmul.f32 %v3496, %v3535
  %v3544 = vmul.f32 %v3498, %v3536
  %v3545 = vmul.f32 %v3500, %v3537
  %v3546 = vmul.f32 %v3502, %v3538
  %v3547 = vmul.f32 %v3504, %v3539
  %v3548 = vmul.f32 %v3506, %v3540
  %v3549 = vmul.f32 %v3508, %v3541
  %v3550 = vmul.f32 %v3510, %v3542
  %v3551 = vpack.c.bf16 %v3544, %v3543
  %v3552 = vpack.c.bf16 %v3546, %v3545
  %v3553 = vpack.c.bf16 %v3548, %v3547
  %v3554 = vpack.c.bf16 %v3550, %v3549
  %v3563 = vunpack.c.l.b16 %v3096
  %v3564 = vunpack.c.l.b16 %v3097
  %v3565 = vunpack.c.l.b16 %v3098
  %v3566 = vunpack.c.l.b16 %v3099
  %v3567 = vunpack.c.l.b16 %v3100
  %v3568 = vunpack.c.l.b16 %v3101
  %v3569 = vunpack.c.l.b16 %v3102
  %v3570 = vunpack.c.l.b16 %v3103
  %v3571 = vpack.c.b16 %v3564, %v3563
  %v3572 = vpack.c.b16 %v3566, %v3565
  %v3573 = vpack.c.b16 %v3568, %v3567
  %v3574 = vpack.c.b16 %v3570, %v3569
  %v3580 = vsel %vm629, %v3551, 0
  %v3583 = vsel %vm629, %v3552, 0
  %v3586 = vsel %vm629, %v3553, 0
  %v3589 = vsel %vm629, %v3554, 0
  %3591 = vmatpush.bf16.msra.mxu0 0
  %3592 = vmatpush.bf16.msra.mxu0 0
  %3593 = vmatpush.bf16.msra.mxu0 0
  %3594 = vmatpush.bf16.msra.mxu0 0
  %3595 = vmatpush.bf16.msra.mxu0 %v3574
  %3596 = vmatpush.bf16.msra.mxu0 %v3573
  %3597 = vmatpush.bf16.msra.mxu0 %v3572
  %3598 = vmatpush.bf16.msra.mxu0 %v3571
  %3599 = vmatmul.bf16.gmra.mxu0 %v3580
  %v3600 = vpop.f32.mrf.mxu0
  %v3601 = vadd.f32 0.0, %v3600
  %v3602 = vpop.f32.mrf.mxu0
  %v3603 = vadd.f32 0.0, %v3602
  %3604 = vmatmul.bf16.gmra.mxu0 %v3583
  %v3605 = vpop.f32.mrf.mxu0
  %v3606 = vadd.f32 0.0, %v3605
  %v3607 = vpop.f32.mrf.mxu0
  %v3608 = vadd.f32 0.0, %v3607
  %3609 = vmatmul.bf16.gmra.mxu0 %v3586
  %v3610 = vpop.f32.mrf.mxu0
  %v3611 = vadd.f32 0.0, %v3610
  %v3612 = vpop.f32.mrf.mxu0
  %v3613 = vadd.f32 0.0, %v3612
  %3614 = vmatmul.bf16.gmra.mxu0 %v3589
  %v3615 = vpop.f32.mrf.mxu0
  %v3616 = vadd.f32 0.0, %v3615
  %v3617 = vpop.f32.mrf.mxu0
  %v3618 = vadd.f32 0.0, %v3617
  %3619 = vdwg.mxu0
  %v3620 = vpack.c.bf16 %v3345, %v3343
  %v3621 = vpack.c.bf16 %v3350, %v3348
  %v3622 = vpack.c.bf16 %v3355, %v3353
  %v3623 = vpack.c.bf16 %v3360, %v3358
  %v3624 = vpack.c.bf16 %v3603, %v3601
  %v3625 = vpack.c.bf16 %v3608, %v3606
  %v3626 = vpack.c.bf16 %v3613, %v3611
  %v3627 = vpack.c.bf16 %v3618, %v3616
  %s3628 = scalar_lea.vmem %s6, 12
  %v3629 = vld [vmem:[%s3628] sm:$0xf]
  %v3631 = vsel %vm567, %v3620, 0
  %v3634 = vsel %vm567, %v3621, 0
  %v3637 = vsel %vm567, %v3622, 0
  %v3640 = vsel %vm567, %v3623, 0
  %v3643 = vsel %vm567, %v3624, 0
  %v3646 = vsel %vm567, %v3625, 0
  %v3649 = vsel %vm567, %v3626, 0
  %v3652 = vsel %vm567, %v3627, 0
  %v3655 = vsel %vm1855, %v3629, 0
  %3657 = vmatpush.bf16.msra.mxu0 0
  %3658 = vmatpush.bf16.msra.mxu0 0
  %3659 = vmatpush.bf16.msra.mxu0 0
  %3660 = vmatpush.bf16.msra.mxu0 0
  %3661 = vmatpush.bf16.msra.mxu0 0
  %3662 = vmatpush.bf16.msra.mxu0 0
  %3663 = vmatpush.bf16.msra.mxu0 0
  %3664 = vmatpush.bf16.msra.mxu0 %v3655
  %3665 = vmatmul.bf16.gmra.mxu0 %v3631
  %v3666 = vpop.f32.mrf.mxu0
  %v3667 = vadd.f32 0.0, %v3666
  %v3668 = vpop.f32.mrf.mxu0
  %v3669 = vadd.f32 0.0, %v3668
  %3670 = vmatmul.bf16.gmra.mxu0 %v3634
  %v3671 = vpop.f32.mrf.mxu0
  %v3672 = vadd.f32 0.0, %v3671
  %v3673 = vpop.f32.mrf.mxu0
  %v3674 = vadd.f32 0.0, %v3673
  %3675 = vmatmul.bf16.gmra.mxu0 %v3637
  %v3676 = vpop.f32.mrf.mxu0
  %v3677 = vadd.f32 0.0, %v3676
  %v3678 = vpop.f32.mrf.mxu0
  %v3679 = vadd.f32 0.0, %v3678
  %3680 = vmatmul.bf16.gmra.mxu0 %v3640
  %v3681 = vpop.f32.mrf.mxu0
  %v3682 = vadd.f32 0.0, %v3681
  %v3683 = vpop.f32.mrf.mxu0
  %v3684 = vadd.f32 0.0, %v3683
  %3685 = vmatmul.bf16.gmra.mxu0 %v3643
  %v3686 = vpop.f32.mrf.mxu0
  %v3687 = vadd.f32 0.0, %v3686
  %v3688 = vpop.f32.mrf.mxu0
  %v3689 = vadd.f32 0.0, %v3688
  %3690 = vmatmul.bf16.gmra.mxu0 %v3646
  %v3691 = vpop.f32.mrf.mxu0
  %v3692 = vadd.f32 0.0, %v3691
  %v3693 = vpop.f32.mrf.mxu0
  %v3694 = vadd.f32 0.0, %v3693
  %3695 = vmatmul.bf16.gmra.mxu0 %v3649
  %v3696 = vpop.f32.mrf.mxu0
  %v3697 = vadd.f32 0.0, %v3696
  %v3698 = vpop.f32.mrf.mxu0
  %v3699 = vadd.f32 0.0, %v3698
  %3700 = vmatmul.bf16.gmra.mxu0 %v3652
  %v3701 = vpop.f32.mrf.mxu0
  %v3702 = vadd.f32 0.0, %v3701
  %v3703 = vpop.f32.mrf.mxu0
  %v3704 = vadd.f32 0.0, %v3703
  %3705 = vdwg.mxu0
  %v3706 = vadd.f32 %v2837, %v3667
  %v3707 = vadd.f32 %v2838, %v3669
  %v3708 = vadd.f32 %v2839, %v3672
  %v3709 = vadd.f32 %v2840, %v3674
  %v3710 = vadd.f32 %v2841, %v3677
  %v3711 = vadd.f32 %v2842, %v3679
  %v3712 = vadd.f32 %v2843, %v3682
  %v3713 = vadd.f32 %v2844, %v3684
  %v3714 = vadd.f32 %v2845, %v3687
  %v3715 = vadd.f32 %v2846, %v3689
  %v3716 = vadd.f32 %v2847, %v3692
  %v3717 = vadd.f32 %v2848, %v3694
  %v3718 = vadd.f32 %v2849, %v3697
  %v3719 = vadd.f32 %v2850, %v3699
  %v3720 = vadd.f32 %v2851, %v3702
  %v3721 = vadd.f32 %v2852, %v3704
  %v3722 = vadd.f32 %v142, %v3706
  %v3723 = vadd.f32 %v144, %v3707
  %v3724 = vadd.f32 %v147, %v3708
  %v3725 = vadd.f32 %v149, %v3709
  %v3726 = vadd.f32 %v152, %v3710
  %v3727 = vadd.f32 %v154, %v3711
  %v3728 = vadd.f32 %v157, %v3712
  %v3729 = vadd.f32 %v159, %v3713
  %v3730 = vadd.f32 %v162, %v3714
  %v3731 = vadd.f32 %v164, %v3715
  %v3732 = vadd.f32 %v167, %v3716
  %v3733 = vadd.f32 %v169, %v3717
  %v3734 = vadd.f32 %v172, %v3718
  %v3735 = vadd.f32 %v174, %v3719
  %v3736 = vadd.f32 %v177, %v3720
  %v3737 = vadd.f32 %v179, %v3721
  %v3738 = vld [vmem:[%s12 + $0x1] ss:$0 sm:$0xff]
  %v3739 = vadd.f32 %v3722, %v3738
  %v3740 = vadd.f32 %v3723, %v3738
  %v3741 = vadd.f32 %v3724, %v3738
  %v3742 = vadd.f32 %v3725, %v3738
  %v3743 = vadd.f32 %v3726, %v3738
  %v3744 = vadd.f32 %v3727, %v3738
  %v3745 = vadd.f32 %v3728, %v3738
  %v3746 = vadd.f32 %v3729, %v3738
  %v3747 = vadd.f32 %v3730, %v3738
  %v3748 = vadd.f32 %v3731, %v3738
  %v3749 = vadd.f32 %v3732, %v3738
  %v3750 = vadd.f32 %v3733, %v3738
  %v3751 = vadd.f32 %v3734, %v3738
  %v3752 = vadd.f32 %v3735, %v3738
  %v3753 = vadd.f32 %v3736, %v3738
  %v3754 = vadd.f32 %v3737, %v3738
  %v3755 = vld [vmem:[%s12 + $0x2] ss:$0 sm:$0xff]
  %v3756 = vld [vmem:[%s12 + $0x3] ss:$0 sm:$0xff]
  %v3757 = vsel %vm249, %v3739, 0.0
  %3758 = vadd.xlane.f32.xlu0 %v3757
  %v3759 = vpop.xlane.xlu0 %3758
  %v3760 = vsel %vm249, %v3740, 0.0
  %3761 = vadd.xlane.f32.xlu0 %v3760
  %v3762 = vpop.xlane.xlu0 %3761
  %v3763 = vsel %vm249, %v3741, 0.0
  %3764 = vadd.xlane.f32.xlu0 %v3763
  %v3765 = vpop.xlane.xlu0 %3764
  %v3766 = vsel %vm249, %v3742, 0.0
  %3767 = vadd.xlane.f32.xlu0 %v3766
  %v3768 = vpop.xlane.xlu0 %3767
  %v3769 = vsel %vm249, %v3743, 0.0
  %3770 = vadd.xlane.f32.xlu0 %v3769
  %v3771 = vpop.xlane.xlu0 %3770
  %v3772 = vsel %vm249, %v3744, 0.0
  %3773 = vadd.xlane.f32.xlu0 %v3772
  %v3774 = vpop.xlane.xlu0 %3773
  %v3775 = vsel %vm249, %v3745, 0.0
  %3776 = vadd.xlane.f32.xlu0 %v3775
  %v3777 = vpop.xlane.xlu0 %3776
  %v3778 = vsel %vm249, %v3746, 0.0
  %3779 = vadd.xlane.f32.xlu0 %v3778
  %v3780 = vpop.xlane.xlu0 %3779
  %v3781 = vsel %vm249, %v3747, 0.0
  %3782 = vadd.xlane.f32.xlu0 %v3781
  %v3783 = vpop.xlane.xlu0 %3782
  %v3784 = vsel %vm249, %v3748, 0.0
  %3785 = vadd.xlane.f32.xlu0 %v3784
  %v3786 = vpop.xlane.xlu0 %3785
  %v3787 = vsel %vm249, %v3749, 0.0
  %3788 = vadd.xlane.f32.xlu0 %v3787
  %v3789 = vpop.xlane.xlu0 %3788
  %v3790 = vsel %vm249, %v3750, 0.0
  %3791 = vadd.xlane.f32.xlu0 %v3790
  %v3792 = vpop.xlane.xlu0 %3791
  %v3793 = vsel %vm249, %v3751, 0.0
  %3794 = vadd.xlane.f32.xlu0 %v3793
  %v3795 = vpop.xlane.xlu0 %3794
  %v3796 = vsel %vm249, %v3752, 0.0
  %3797 = vadd.xlane.f32.xlu0 %v3796
  %v3798 = vpop.xlane.xlu0 %3797
  %v3799 = vsel %vm249, %v3753, 0.0
  %3800 = vadd.xlane.f32.xlu0 %v3799
  %v3801 = vpop.xlane.xlu0 %3800
  %v3802 = vsel %vm249, %v3754, 0.0
  %3803 = vadd.xlane.f32.xlu0 %v3802
  %v3804 = vpop.xlane.xlu0 %3803
  %v3805 = vrcp.pop 32.0
  %v3806 = vmul.f32 32.0, %v3805
  %v3807 = vsub.f32 1.0, %v3806
  %v3808 = vmul.f32 %v3805, %v3807
  %v3809 = vadd.f32 %v3805, %v3808
  %vm3810 = vweird.f32 %v3805
  %v3811 = vsel %vm3810, %v3805, %v3809
  %v3812 = vmul.f32 %v3759, %v3811
  %v3813 = vmul.f32 %v3762, %v3811
  %v3814 = vmul.f32 %v3765, %v3811
  %v3815 = vmul.f32 %v3768, %v3811
  %v3816 = vmul.f32 %v3771, %v3811
  %v3817 = vmul.f32 %v3774, %v3811
  %v3818 = vmul.f32 %v3777, %v3811
  %v3819 = vmul.f32 %v3780, %v3811
  %v3820 = vmul.f32 %v3783, %v3811
  %v3821 = vmul.f32 %v3786, %v3811
  %v3822 = vmul.f32 %v3789, %v3811
  %v3823 = vmul.f32 %v3792, %v3811
  %v3824 = vmul.f32 %v3795, %v3811
  %v3825 = vmul.f32 %v3798, %v3811
  %v3826 = vmul.f32 %v3801, %v3811
  %v3827 = vmul.f32 %v3804, %v3811
  %v3828 = vmul.f32 %v3739, %v3739
  %v3829 = vmul.f32 %v3740, %v3740
  %v3830 = vmul.f32 %v3741, %v3741
  %v3831 = vmul.f32 %v3742, %v3742
  %v3832 = vmul.f32 %v3743, %v3743
  %v3833 = vmul.f32 %v3744, %v3744
  %v3834 = vmul.f32 %v3745, %v3745
  %v3835 = vmul.f32 %v3746, %v3746
  %v3836 = vmul.f32 %v3747, %v3747
  %v3837 = vmul.f32 %v3748, %v3748
  %v3838 = vmul.f32 %v3749, %v3749
  %v3839 = vmul.f32 %v3750, %v3750
  %v3840 = vmul.f32 %v3751, %v3751
  %v3841 = vmul.f32 %v3752, %v3752
  %v3842 = vmul.f32 %v3753, %v3753
  %v3843 = vmul.f32 %v3754, %v3754
  %v3844 = vsel %vm249, %v3828, 0.0
  %3845 = vadd.xlane.f32.xlu0 %v3844
  %v3846 = vpop.xlane.xlu0 %3845
  %v3847 = vsel %vm249, %v3829, 0.0
  %3848 = vadd.xlane.f32.xlu0 %v3847
  %v3849 = vpop.xlane.xlu0 %3848
  %v3850 = vsel %vm249, %v3830, 0.0
  %3851 = vadd.xlane.f32.xlu0 %v3850
  %v3852 = vpop.xlane.xlu0 %3851
  %v3853 = vsel %vm249, %v3831, 0.0
  %3854 = vadd.xlane.f32.xlu0 %v3853
  %v3855 = vpop.xlane.xlu0 %3854
  %v3856 = vsel %vm249, %v3832, 0.0
  %3857 = vadd.xlane.f32.xlu0 %v3856
  %v3858 = vpop.xlane.xlu0 %3857
  %v3859 = vsel %vm249, %v3833, 0.0
  %3860 = vadd.xlane.f32.xlu0 %v3859
  %v3861 = vpop.xlane.xlu0 %3860
  %v3862 = vsel %vm249, %v3834, 0.0
  %3863 = vadd.xlane.f32.xlu0 %v3862
  %v3864 = vpop.xlane.xlu0 %3863
  %v3865 = vsel %vm249, %v3835, 0.0
  %3866 = vadd.xlane.f32.xlu0 %v3865
  %v3867 = vpop.xlane.xlu0 %3866
  %v3868 = vsel %vm249, %v3836, 0.0
  %3869 = vadd.xlane.f32.xlu0 %v3868
  %v3870 = vpop.xlane.xlu0 %3869
  %v3871 = vsel %vm249, %v3837, 0.0
  %3872 = vadd.xlane.f32.xlu0 %v3871
  %v3873 = vpop.xlane.xlu0 %3872
  %v3874 = vsel %vm249, %v3838, 0.0
  %3875 = vadd.xlane.f32.xlu0 %v3874
  %v3876 = vpop.xlane.xlu0 %3875
  %v3877 = vsel %vm249, %v3839, 0.0
  %3878 = vadd.xlane.f32.xlu0 %v3877
  %v3879 = vpop.xlane.xlu0 %3878
  %v3880 = vsel %vm249, %v3840, 0.0
  %3881 = vadd.xlane.f32.xlu0 %v3880
  %v3882 = vpop.xlane.xlu0 %3881
  %v3883 = vsel %vm249, %v3841, 0.0
  %3884 = vadd.xlane.f32.xlu0 %v3883
  %v3885 = vpop.xlane.xlu0 %3884
  %v3886 = vsel %vm249, %v3842, 0.0
  %3887 = vadd.xlane.f32.xlu0 %v3886
  %v3888 = vpop.xlane.xlu0 %3887
  %v3889 = vsel %vm249, %v3843, 0.0
  %3890 = vadd.xlane.f32.xlu0 %v3889
  %v3891 = vpop.xlane.xlu0 %3890
  %v3892 = vmul.f32 %v3846, %v3811
  %v3893 = vmul.f32 %v3849, %v3811
  %v3894 = vmul.f32 %v3852, %v3811
  %v3895 = vmul.f32 %v3855, %v3811
  %v3896 = vmul.f32 %v3858, %v3811
  %v3897 = vmul.f32 %v3861, %v3811
  %v3898 = vmul.f32 %v3864, %v3811
  %v3899 = vmul.f32 %v3867, %v3811
  %v3900 = vmul.f32 %v3870, %v3811
  %v3901 = vmul.f32 %v3873, %v3811
  %v3902 = vmul.f32 %v3876, %v3811
  %v3903 = vmul.f32 %v3879, %v3811
  %v3904 = vmul.f32 %v3882, %v3811
  %v3905 = vmul.f32 %v3885, %v3811
  %v3906 = vmul.f32 %v3888, %v3811
  %v3907 = vmul.f32 %v3891, %v3811
  %v3908 = vmul.f32 %v3812, %v3812
  %v3909 = vmul.f32 %v3813, %v3813
  %v3910 = vmul.f32 %v3814, %v3814
  %v3911 = vmul.f32 %v3815, %v3815
  %v3912 = vmul.f32 %v3816, %v3816
  %v3913 = vmul.f32 %v3817, %v3817
  %v3914 = vmul.f32 %v3818, %v3818
  %v3915 = vmul.f32 %v3819, %v3819
  %v3916 = vmul.f32 %v3820, %v3820
  %v3917 = vmul.f32 %v3821, %v3821
  %v3918 = vmul.f32 %v3822, %v3822
  %v3919 = vmul.f32 %v3823, %v3823
  %v3920 = vmul.f32 %v3824, %v3824
  %v3921 = vmul.f32 %v3825, %v3825
  %v3922 = vmul.f32 %v3826, %v3826
  %v3923 = vmul.f32 %v3827, %v3827
  %v3924 = vsub.f32 %v3892, %v3908
  %v3925 = vsub.f32 %v3893, %v3909
  %v3926 = vsub.f32 %v3894, %v3910
  %v3927 = vsub.f32 %v3895, %v3911
  %v3928 = vsub.f32 %v3896, %v3912
  %v3929 = vsub.f32 %v3897, %v3913
  %v3930 = vsub.f32 %v3898, %v3914
  %v3931 = vsub.f32 %v3899, %v3915
  %v3932 = vsub.f32 %v3900, %v3916
  %v3933 = vsub.f32 %v3901, %v3917
  %v3934 = vsub.f32 %v3902, %v3918
  %v3935 = vsub.f32 %v3903, %v3919
  %v3936 = vsub.f32 %v3904, %v3920
  %v3937 = vsub.f32 %v3905, %v3921
  %v3938 = vsub.f32 %v3906, %v3922
  %v3939 = vsub.f32 %v3907, %v3923
  %v3940 = vsub.f32 %v3739, %v3812
  %v3941 = vsub.f32 %v3740, %v3813
  %v3942 = vsub.f32 %v3741, %v3814
  %v3943 = vsub.f32 %v3742, %v3815
  %v3944 = vsub.f32 %v3743, %v3816
  %v3945 = vsub.f32 %v3744, %v3817
  %v3946 = vsub.f32 %v3745, %v3818
  %v3947 = vsub.f32 %v3746, %v3819
  %v3948 = vsub.f32 %v3747, %v3820
  %v3949 = vsub.f32 %v3748, %v3821
  %v3950 = vsub.f32 %v3749, %v3822
  %v3951 = vsub.f32 %v3750, %v3823
  %v3952 = vsub.f32 %v3751, %v3824
  %v3953 = vsub.f32 %v3752, %v3825
  %v3954 = vsub.f32 %v3753, %v3826
  %v3955 = vsub.f32 %v3754, %v3827
  %v3956 = vadd.f32 %v3924, 1e-05
  %v3957 = vadd.f32 %v3925, 1e-05
  %v3958 = vadd.f32 %v3926, 1e-05
  %v3959 = vadd.f32 %v3927, 1e-05
  %v3960 = vadd.f32 %v3928, 1e-05
  %v3961 = vadd.f32 %v3929, 1e-05
  %v3962 = vadd.f32 %v3930, 1e-05
  %v3963 = vadd.f32 %v3931, 1e-05
  %v3964 = vadd.f32 %v3932, 1e-05
  %v3965 = vadd.f32 %v3933, 1e-05
  %v3966 = vadd.f32 %v3934, 1e-05
  %v3967 = vadd.f32 %v3935, 1e-05
  %v3968 = vadd.f32 %v3936, 1e-05
  %v3969 = vadd.f32 %v3937, 1e-05
  %v3970 = vadd.f32 %v3938, 1e-05
  %v3971 = vadd.f32 %v3939, 1e-05
  %v3972 = vrsqrt.pop %v3956
  %v3973 = vmul.f32 %v3972, %v3956
  %v3974 = vmul.f32 %v3973, %v3972
  %v3975 = vmul.f32 0.5, %v3974
  %v3976 = vsub.f32 1.5, %v3975
  %v3977 = vmul.f32 %v3972, %v3976
  %vm3978 = vweird.f32 %v3956
  %vm3979 = vweird.f32 %v3972
  %vm3980 = vmor %vm3978, %vm3979
  %v3981 = vsel %vm3980, %v3972, %v3977
  %v3982 = vrsqrt.pop %v3957
  %v3983 = vmul.f32 %v3982, %v3957
  %v3984 = vmul.f32 %v3983, %v3982
  %v3985 = vmul.f32 0.5, %v3984
  %v3986 = vsub.f32 1.5, %v3985
  %v3987 = vmul.f32 %v3982, %v3986
  %vm3988 = vweird.f32 %v3957
  %vm3989 = vweird.f32 %v3982
  %vm3990 = vmor %vm3988, %vm3989
  %v3991 = vsel %vm3990, %v3982, %v3987
  %v3992 = vrsqrt.pop %v3958
  %v3993 = vmul.f32 %v3992, %v3958
  %v3994 = vmul.f32 %v3993, %v3992
  %v3995 = vmul.f32 0.5, %v3994
  %v3996 = vsub.f32 1.5, %v3995
  %v3997 = vmul.f32 %v3992, %v3996
  %vm3998 = vweird.f32 %v3958
  %vm3999 = vweird.f32 %v3992
  %vm4000 = vmor %vm3998, %vm3999
  %v4001 = vsel %vm4000, %v3992, %v3997
  %v4002 = vrsqrt.pop %v3959
  %v4003 = vmul.f32 %v4002, %v3959
  %v4004 = vmul.f32 %v4003, %v4002
  %v4005 = vmul.f32 0.5, %v4004
  %v4006 = vsub.f32 1.5, %v4005
  %v4007 = vmul.f32 %v4002, %v4006
  %vm4008 = vweird.f32 %v3959
  %vm4009 = vweird.f32 %v4002
  %vm4010 = vmor %vm4008, %vm4009
  %v4011 = vsel %vm4010, %v4002, %v4007
  %v4012 = vrsqrt.pop %v3960
  %v4013 = vmul.f32 %v4012, %v3960
  %v4014 = vmul.f32 %v4013, %v4012
  %v4015 = vmul.f32 0.5, %v4014
  %v4016 = vsub.f32 1.5, %v4015
  %v4017 = vmul.f32 %v4012, %v4016
  %vm4018 = vweird.f32 %v3960
  %vm4019 = vweird.f32 %v4012
  %vm4020 = vmor %vm4018, %vm4019
  %v4021 = vsel %vm4020, %v4012, %v4017
  %v4022 = vrsqrt.pop %v3961
  %v4023 = vmul.f32 %v4022, %v3961
  %v4024 = vmul.f32 %v4023, %v4022
  %v4025 = vmul.f32 0.5, %v4024
  %v4026 = vsub.f32 1.5, %v4025
  %v4027 = vmul.f32 %v4022, %v4026
  %vm4028 = vweird.f32 %v3961
  %vm4029 = vweird.f32 %v4022
  %vm4030 = vmor %vm4028, %vm4029
  %v4031 = vsel %vm4030, %v4022, %v4027
  %v4032 = vrsqrt.pop %v3962
  %v4033 = vmul.f32 %v4032, %v3962
  %v4034 = vmul.f32 %v4033, %v4032
  %v4035 = vmul.f32 0.5, %v4034
  %v4036 = vsub.f32 1.5, %v4035
  %v4037 = vmul.f32 %v4032, %v4036
  %vm4038 = vweird.f32 %v3962
  %vm4039 = vweird.f32 %v4032
  %vm4040 = vmor %vm4038, %vm4039
  %v4041 = vsel %vm4040, %v4032, %v4037
  %v4042 = vrsqrt.pop %v3963
  %v4043 = vmul.f32 %v4042, %v3963
  %v4044 = vmul.f32 %v4043, %v4042
  %v4045 = vmul.f32 0.5, %v4044
  %v4046 = vsub.f32 1.5, %v4045
  %v4047 = vmul.f32 %v4042, %v4046
  %vm4048 = vweird.f32 %v3963
  %vm4049 = vweird.f32 %v4042
  %vm4050 = vmor %vm4048, %vm4049
  %v4051 = vsel %vm4050, %v4042, %v4047
  %v4052 = vrsqrt.pop %v3964
  %v4053 = vmul.f32 %v4052, %v3964
  %v4054 = vmul.f32 %v4053, %v4052
  %v4055 = vmul.f32 0.5, %v4054
  %v4056 = vsub.f32 1.5, %v4055
  %v4057 = vmul.f32 %v4052, %v4056
  %vm4058 = vweird.f32 %v3964
  %vm4059 = vweird.f32 %v4052
  %vm4060 = vmor %vm4058, %vm4059
  %v4061 = vsel %vm4060, %v4052, %v4057
  %v4062 = vrsqrt.pop %v3965
  %v4063 = vmul.f32 %v4062, %v3965
  %v4064 = vmul.f32 %v4063, %v4062
  %v4065 = vmul.f32 0.5, %v4064
  %v4066 = vsub.f32 1.5, %v4065
  %v4067 = vmul.f32 %v4062, %v4066
  %vm4068 = vweird.f32 %v3965
  %vm4069 = vweird.f32 %v4062
  %vm4070 = vmor %vm4068, %vm4069
  %v4071 = vsel %vm4070, %v4062, %v4067
  %v4072 = vrsqrt.pop %v3966
  %v4073 = vmul.f32 %v4072, %v3966
  %v4074 = vmul.f32 %v4073, %v4072
  %v4075 = vmul.f32 0.5, %v4074
  %v4076 = vsub.f32 1.5, %v4075
  %v4077 = vmul.f32 %v4072, %v4076
  %vm4078 = vweird.f32 %v3966
  %vm4079 = vweird.f32 %v4072
  %vm4080 = vmor %vm4078, %vm4079
  %v4081 = vsel %vm4080, %v4072, %v4077
  %v4082 = vrsqrt.pop %v3967
  %v4083 = vmul.f32 %v4082, %v3967
  %v4084 = vmul.f32 %v4083, %v4082
  %v4085 = vmul.f32 0.5, %v4084
  %v4086 = vsub.f32 1.5, %v4085
  %v4087 = vmul.f32 %v4082, %v4086
  %vm4088 = vweird.f32 %v3967
  %vm4089 = vweird.f32 %v4082
  %vm4090 = vmor %vm4088, %vm4089
  %v4091 = vsel %vm4090, %v4082, %v4087
  %v4092 = vrsqrt.pop %v3968
  %v4093 = vmul.f32 %v4092, %v3968
  %v4094 = vmul.f32 %v4093, %v4092
  %v4095 = vmul.f32 0.5, %v4094
  %v4096 = vsub.f32 1.5, %v4095
  %v4097 = vmul.f32 %v4092, %v4096
  %vm4098 = vweird.f32 %v3968
  %vm4099 = vweird.f32 %v4092
  %vm4100 = vmor %vm4098, %vm4099
  %v4101 = vsel %vm4100, %v4092, %v4097
  %v4102 = vrsqrt.pop %v3969
  %v4103 = vmul.f32 %v4102, %v3969
  %v4104 = vmul.f32 %v4103, %v4102
  %v4105 = vmul.f32 0.5, %v4104
  %v4106 = vsub.f32 1.5, %v4105
  %v4107 = vmul.f32 %v4102, %v4106
  %vm4108 = vweird.f32 %v3969
  %vm4109 = vweird.f32 %v4102
  %vm4110 = vmor %vm4108, %vm4109
  %v4111 = vsel %vm4110, %v4102, %v4107
  %v4112 = vrsqrt.pop %v3970
  %v4113 = vmul.f32 %v4112, %v3970
  %v4114 = vmul.f32 %v4113, %v4112
  %v4115 = vmul.f32 0.5, %v4114
  %v4116 = vsub.f32 1.5, %v4115
  %v4117 = vmul.f32 %v4112, %v4116
  %vm4118 = vweird.f32 %v3970
  %vm4119 = vweird.f32 %v4112
  %vm4120 = vmor %vm4118, %vm4119
  %v4121 = vsel %vm4120, %v4112, %v4117
  %v4122 = vrsqrt.pop %v3971
  %v4123 = vmul.f32 %v4122, %v3971
  %v4124 = vmul.f32 %v4123, %v4122
  %v4125 = vmul.f32 0.5, %v4124
  %v4126 = vsub.f32 1.5, %v4125
  %v4127 = vmul.f32 %v4122, %v4126
  %vm4128 = vweird.f32 %v3971
  %vm4129 = vweird.f32 %v4122
  %vm4130 = vmor %vm4128, %vm4129
  %v4131 = vsel %vm4130, %v4122, %v4127
  %v4132 = vmul.f32 %v3940, %v3981
  %v4133 = vmul.f32 %v3941, %v3991
  %v4134 = vmul.f32 %v3942, %v4001
  %v4135 = vmul.f32 %v3943, %v4011
  %v4136 = vmul.f32 %v3944, %v4021
  %v4137 = vmul.f32 %v3945, %v4031
  %v4138 = vmul.f32 %v3946, %v4041
  %v4139 = vmul.f32 %v3947, %v4051
  %v4140 = vmul.f32 %v3948, %v4061
  %v4141 = vmul.f32 %v3949, %v4071
  %v4142 = vmul.f32 %v3950, %v4081
  %v4143 = vmul.f32 %v3951, %v4091
  %v4144 = vmul.f32 %v3952, %v4101
  %v4145 = vmul.f32 %v3953, %v4111
  %v4146 = vmul.f32 %v3954, %v4121
  %v4147 = vmul.f32 %v3955, %v4131
  %v4148 = vmul.f32 %v4132, %v3755
  %v4149 = vmul.f32 %v4133, %v3755
  %v4150 = vmul.f32 %v4134, %v3755
  %v4151 = vmul.f32 %v4135, %v3755
  %v4152 = vmul.f32 %v4136, %v3755
  %v4153 = vmul.f32 %v4137, %v3755
  %v4154 = vmul.f32 %v4138, %v3755
  %v4155 = vmul.f32 %v4139, %v3755
  %v4156 = vmul.f32 %v4140, %v3755
  %v4157 = vmul.f32 %v4141, %v3755
  %v4158 = vmul.f32 %v4142, %v3755
  %v4159 = vmul.f32 %v4143, %v3755
  %v4160 = vmul.f32 %v4144, %v3755
  %v4161 = vmul.f32 %v4145, %v3755
  %v4162 = vmul.f32 %v4146, %v3755
  %v4163 = vmul.f32 %v4147, %v3755
  %v4164 = vadd.f32 %v4148, %v3756
  %v4165 = vadd.f32 %v4149, %v3756
  %v4166 = vadd.f32 %v4150, %v3756
  %v4167 = vadd.f32 %v4151, %v3756
  %v4168 = vadd.f32 %v4152, %v3756
  %v4169 = vadd.f32 %v4153, %v3756
  %v4170 = vadd.f32 %v4154, %v3756
  %v4171 = vadd.f32 %v4155, %v3756
  %v4172 = vadd.f32 %v4156, %v3756
  %v4173 = vadd.f32 %v4157, %v3756
  %v4174 = vadd.f32 %v4158, %v3756
  %v4175 = vadd.f32 %v4159, %v3756
  %v4176 = vadd.f32 %v4160, %v3756
  %v4177 = vadd.f32 %v4161, %v3756
  %v4178 = vadd.f32 %v4162, %v3756
  %v4179 = vadd.f32 %v4163, %v3756
  %v4180 = vpack.c.bf16 %v4165, %v4164
  %v4181 = vpack.c.bf16 %v4167, %v4166
  %v4182 = vpack.c.bf16 %v4169, %v4168
  %v4183 = vpack.c.bf16 %v4171, %v4170
  %v4184 = vpack.c.bf16 %v4173, %v4172
  %v4185 = vpack.c.bf16 %v4175, %v4174
  %v4186 = vpack.c.bf16 %v4177, %v4176
  %v4187 = vpack.c.bf16 %v4179, %v4178
  %v4188 = vld [vmem:[%s7] sm:$0xf]
  %v4189 = vld [vmem:[%s7 + $0x4] sm:$0xf]
  %v4190 = vld [vmem:[%s7 + $0x8] sm:$0xf]
  %v4191 = vld [vmem:[%s7 + $0xc] sm:$0xf]
  %v4192 = vld [vmem:[%s12 + $0x4] ss:$0 sm:$0xff]
  %v4197 = vunpack.c.l.b16 %v4188
  %v4198 = vunpack.c.l.b16 %v4189
  %v4199 = vunpack.c.l.b16 %v4190
  %v4200 = vunpack.c.l.b16 %v4191
  %v4201 = vpack.c.b16 %v4198, %v4197
  %v4202 = vpack.c.b16 %v4200, %v4199
  %v4206 = vsel %vm249, %v4180, 0
  %v4209 = vsel %vm249, %v4181, 0
  %v4212 = vsel %vm249, %v4182, 0
  %v4215 = vsel %vm249, %v4183, 0
  %v4218 = vsel %vm249, %v4184, 0
  %v4221 = vsel %vm249, %v4185, 0
  %v4224 = vsel %vm249, %v4186, 0
  %v4227 = vsel %vm249, %v4187, 0
  %4229 = vmatpush.bf16.msra.mxu0 0
  %4230 = vmatpush.bf16.msra.mxu0 0
  %4231 = vmatpush.bf16.msra.mxu0 0
  %4232 = vmatpush.bf16.msra.mxu0 0
  %4233 = vmatpush.bf16.msra.mxu0 0
  %4234 = vmatpush.bf16.msra.mxu0 0
  %4235 = vmatpush.bf16.msra.mxu0 %v4202
  %4236 = vmatpush.bf16.msra.mxu0 %v4201
  %4237 = vmatmul.bf16.gmra.mxu0 %v4206
  %v4238 = vpop.f32.mrf.mxu0
  %v4239 = vadd.f32 %v4192, %v4238
  %v4240 = vpop.f32.mrf.mxu0
  %v4241 = vadd.f32 %v4192, %v4240
  %4242 = vmatmul.bf16.gmra.mxu0 %v4209
  %v4243 = vpop.f32.mrf.mxu0
  %v4244 = vadd.f32 %v4192, %v4243
  %v4245 = vpop.f32.mrf.mxu0
  %v4246 = vadd.f32 %v4192, %v4245
  %4247 = vmatmul.bf16.gmra.mxu0 %v4212
  %v4248 = vpop.f32.mrf.mxu0
  %v4249 = vadd.f32 %v4192, %v4248
  %v4250 = vpop.f32.mrf.mxu0
  %v4251 = vadd.f32 %v4192, %v4250
  %4252 = vmatmul.bf16.gmra.mxu0 %v4215
  %v4253 = vpop.f32.mrf.mxu0
  %v4254 = vadd.f32 %v4192, %v4253
  %v4255 = vpop.f32.mrf.mxu0
  %v4256 = vadd.f32 %v4192, %v4255
  %4257 = vmatmul.bf16.gmra.mxu0 %v4218
  %v4258 = vpop.f32.mrf.mxu0
  %v4259 = vadd.f32 %v4192, %v4258
  %v4260 = vpop.f32.mrf.mxu0
  %v4261 = vadd.f32 %v4192, %v4260
  %4262 = vmatmul.bf16.gmra.mxu0 %v4221
  %v4263 = vpop.f32.mrf.mxu0
  %v4264 = vadd.f32 %v4192, %v4263
  %v4265 = vpop.f32.mrf.mxu0
  %v4266 = vadd.f32 %v4192, %v4265
  %4267 = vmatmul.bf16.gmra.mxu0 %v4224
  %v4268 = vpop.f32.mrf.mxu0
  %v4269 = vadd.f32 %v4192, %v4268
  %v4270 = vpop.f32.mrf.mxu0
  %v4271 = vadd.f32 %v4192, %v4270
  %4272 = vmatmul.bf16.gmra.mxu0 %v4227
  %v4273 = vpop.f32.mrf.mxu0
  %v4274 = vadd.f32 %v4192, %v4273
  %v4275 = vpop.f32.mrf.mxu0
  %v4276 = vadd.f32 %v4192, %v4275
  %4277 = vdwg.mxu0
  %v4278 = vmax.f32 %v4239, 0.0
  %v4279 = vmax.f32 %v4241, 0.0
  %v4280 = vmax.f32 %v4244, 0.0
  %v4281 = vmax.f32 %v4246, 0.0
  %v4282 = vmax.f32 %v4249, 0.0
  %v4283 = vmax.f32 %v4251, 0.0
  %v4284 = vmax.f32 %v4254, 0.0
  %v4285 = vmax.f32 %v4256, 0.0
  %v4286 = vmax.f32 %v4259, 0.0
  %v4287 = vmax.f32 %v4261, 0.0
  %v4288 = vmax.f32 %v4264, 0.0
  %v4289 = vmax.f32 %v4266, 0.0
  %v4290 = vmax.f32 %v4269, 0.0
  %v4291 = vmax.f32 %v4271, 0.0
  %v4292 = vmax.f32 %v4274, 0.0
  %v4293 = vmax.f32 %v4276, 0.0
  %v4294 = vpack.c.bf16 %v4279, %v4278
  %v4295 = vpack.c.bf16 %v4281, %v4280
  %v4296 = vpack.c.bf16 %v4283, %v4282
  %v4297 = vpack.c.bf16 %v4285, %v4284
  %v4298 = vpack.c.bf16 %v4287, %v4286
  %v4299 = vpack.c.bf16 %v4289, %v4288
  %v4300 = vpack.c.bf16 %v4291, %v4290
  %v4301 = vpack.c.bf16 %v4293, %v4292
  %v4302 = vld [vmem:[%s8] sm:$0xf]
  %v4303 = vld [vmem:[%s8 + $0x4] sm:$0xf]
  %v4304 = vld [vmem:[%s8 + $0x8] sm:$0xf]
  %v4305 = vld [vmem:[%s8 + $0xc] sm:$0xf]
  %v4306 = vld [vmem:[%s8 + $0x10] sm:$0xf]
  %v4307 = vld [vmem:[%s8 + $0x14] sm:$0xf]
  %v4308 = vld [vmem:[%s8 + $0x18] sm:$0xf]
  %v4309 = vld [vmem:[%s8 + $0x1c] sm:$0xf]
  %v4310 = vld [vmem:[%s12 + $0x5] ss:$0 sm:$0xff]
  %v4319 = vunpack.c.l.b16 %v4302
  %v4320 = vunpack.c.l.b16 %v4303
  %v4321 = vunpack.c.l.b16 %v4304
  %v4322 = vunpack.c.l.b16 %v4305
  %v4323 = vunpack.c.l.b16 %v4306
  %v4324 = vunpack.c.l.b16 %v4307
  %v4325 = vunpack.c.l.b16 %v4308
  %v4326 = vunpack.c.l.b16 %v4309
  %v4327 = vpack.c.b16 %v4320, %v4319
  %v4328 = vpack.c.b16 %v4322, %v4321
  %v4329 = vpack.c.b16 %v4324, %v4323
  %v4330 = vpack.c.b16 %v4326, %v4325
  %v4336 = vsel %vm629, %v4294, 0
  %v4339 = vsel %vm629, %v4295, 0
  %v4342 = vsel %vm629, %v4296, 0
  %v4345 = vsel %vm629, %v4297, 0
  %v4348 = vsel %vm629, %v4298, 0
  %v4351 = vsel %vm629, %v4299, 0
  %v4354 = vsel %vm629, %v4300, 0
  %v4357 = vsel %vm629, %v4301, 0
  %4359 = vmatpush.bf16.msra.mxu0 0
  %4360 = vmatpush.bf16.msra.mxu0 0
  %4361 = vmatpush.bf16.msra.mxu0 0
  %4362 = vmatpush.bf16.msra.mxu0 0
  %4363 = vmatpush.bf16.msra.mxu0 %v4330
  %4364 = vmatpush.bf16.msra.mxu0 %v4329
  %4365 = vmatpush.bf16.msra.mxu0 %v4328
  %4366 = vmatpush.bf16.msra.mxu0 %v4327
  %4367 = vmatmul.bf16.gmra.mxu0 %v4336
  %v4368 = vpop.f32.mrf.mxu0
  %v4369 = vadd.f32 %v4310, %v4368
  %v4370 = vpop.f32.mrf.mxu0
  %v4371 = vadd.f32 %v4310, %v4370
  %4372 = vmatmul.bf16.gmra.mxu0 %v4339
  %v4373 = vpop.f32.mrf.mxu0
  %v4374 = vadd.f32 %v4310, %v4373
  %v4375 = vpop.f32.mrf.mxu0
  %v4376 = vadd.f32 %v4310, %v4375
  %4377 = vmatmul.bf16.gmra.mxu0 %v4342
  %v4378 = vpop.f32.mrf.mxu0
  %v4379 = vadd.f32 %v4310, %v4378
  %v4380 = vpop.f32.mrf.mxu0
  %v4381 = vadd.f32 %v4310, %v4380
  %4382 = vmatmul.bf16.gmra.mxu0 %v4345
  %v4383 = vpop.f32.mrf.mxu0
  %v4384 = vadd.f32 %v4310, %v4383
  %v4385 = vpop.f32.mrf.mxu0
  %v4386 = vadd.f32 %v4310, %v4385
  %4387 = vmatmul.bf16.gmra.mxu0 %v4348
  %v4388 = vpop.f32.mrf.mxu0
  %v4389 = vadd.f32 %v4310, %v4388
  %v4390 = vpop.f32.mrf.mxu0
  %v4391 = vadd.f32 %v4310, %v4390
  %4392 = vmatmul.bf16.gmra.mxu0 %v4351
  %v4393 = vpop.f32.mrf.mxu0
  %v4394 = vadd.f32 %v4310, %v4393
  %v4395 = vpop.f32.mrf.mxu0
  %v4396 = vadd.f32 %v4310, %v4395
  %4397 = vmatmul.bf16.gmra.mxu0 %v4354
  %v4398 = vpop.f32.mrf.mxu0
  %v4399 = vadd.f32 %v4310, %v4398
  %v4400 = vpop.f32.mrf.mxu0
  %v4401 = vadd.f32 %v4310, %v4400
  %4402 = vmatmul.bf16.gmra.mxu0 %v4357
  %v4403 = vpop.f32.mrf.mxu0
  %v4404 = vadd.f32 %v4310, %v4403
  %v4405 = vpop.f32.mrf.mxu0
  %v4406 = vadd.f32 %v4310, %v4405
  %4407 = vdwg.mxu0
  %v4408 = vadd.f32 %v4164, %v4369
  %v4409 = vadd.f32 %v4165, %v4371
  %v4410 = vadd.f32 %v4166, %v4374
  %v4411 = vadd.f32 %v4167, %v4376
  %v4412 = vadd.f32 %v4168, %v4379
  %v4413 = vadd.f32 %v4169, %v4381
  %v4414 = vadd.f32 %v4170, %v4384
  %v4415 = vadd.f32 %v4171, %v4386
  %v4416 = vadd.f32 %v4172, %v4389
  %v4417 = vadd.f32 %v4173, %v4391
  %v4418 = vadd.f32 %v4174, %v4394
  %v4419 = vadd.f32 %v4175, %v4396
  %v4420 = vadd.f32 %v4176, %v4399
  %v4421 = vadd.f32 %v4177, %v4401
  %v4422 = vadd.f32 %v4178, %v4404
  %v4423 = vadd.f32 %v4179, %v4406
  %v4424 = vld [vmem:[%s12 + $0x6] ss:$0 sm:$0xff]
  %v4425 = vld [vmem:[%s12 + $0x7] ss:$0 sm:$0xff]
  %v4426 = vsel %vm249, %v4408, 0.0
  %4427 = vadd.xlane.f32.xlu0 %v4426
  %v4428 = vpop.xlane.xlu0 %4427
  %v4429 = vsel %vm249, %v4409, 0.0
  %4430 = vadd.xlane.f32.xlu0 %v4429
  %v4431 = vpop.xlane.xlu0 %4430
  %v4432 = vsel %vm249, %v4410, 0.0
  %4433 = vadd.xlane.f32.xlu0 %v4432
  %v4434 = vpop.xlane.xlu0 %4433
  %v4435 = vsel %vm249, %v4411, 0.0
  %4436 = vadd.xlane.f32.xlu0 %v4435
  %v4437 = vpop.xlane.xlu0 %4436
  %v4438 = vsel %vm249, %v4412, 0.0
  %4439 = vadd.xlane.f32.xlu0 %v4438
  %v4440 = vpop.xlane.xlu0 %4439
  %v4441 = vsel %vm249, %v4413, 0.0
  %4442 = vadd.xlane.f32.xlu0 %v4441
  %v4443 = vpop.xlane.xlu0 %4442
  %v4444 = vsel %vm249, %v4414, 0.0
  %4445 = vadd.xlane.f32.xlu0 %v4444
  %v4446 = vpop.xlane.xlu0 %4445
  %v4447 = vsel %vm249, %v4415, 0.0
  %4448 = vadd.xlane.f32.xlu0 %v4447
  %v4449 = vpop.xlane.xlu0 %4448
  %v4450 = vsel %vm249, %v4416, 0.0
  %4451 = vadd.xlane.f32.xlu0 %v4450
  %v4452 = vpop.xlane.xlu0 %4451
  %v4453 = vsel %vm249, %v4417, 0.0
  %4454 = vadd.xlane.f32.xlu0 %v4453
  %v4455 = vpop.xlane.xlu0 %4454
  %v4456 = vsel %vm249, %v4418, 0.0
  %4457 = vadd.xlane.f32.xlu0 %v4456
  %v4458 = vpop.xlane.xlu0 %4457
  %v4459 = vsel %vm249, %v4419, 0.0
  %4460 = vadd.xlane.f32.xlu0 %v4459
  %v4461 = vpop.xlane.xlu0 %4460
  %v4462 = vsel %vm249, %v4420, 0.0
  %4463 = vadd.xlane.f32.xlu0 %v4462
  %v4464 = vpop.xlane.xlu0 %4463
  %v4465 = vsel %vm249, %v4421, 0.0
  %4466 = vadd.xlane.f32.xlu0 %v4465
  %v4467 = vpop.xlane.xlu0 %4466
  %v4468 = vsel %vm249, %v4422, 0.0
  %4469 = vadd.xlane.f32.xlu0 %v4468
  %v4470 = vpop.xlane.xlu0 %4469
  %v4471 = vsel %vm249, %v4423, 0.0
  %4472 = vadd.xlane.f32.xlu0 %v4471
  %v4473 = vpop.xlane.xlu0 %4472
  %v4474 = vmul.f32 %v4428, %v3811
  %v4475 = vmul.f32 %v4431, %v3811
  %v4476 = vmul.f32 %v4434, %v3811
  %v4477 = vmul.f32 %v4437, %v3811
  %v4478 = vmul.f32 %v4440, %v3811
  %v4479 = vmul.f32 %v4443, %v3811
  %v4480 = vmul.f32 %v4446, %v3811
  %v4481 = vmul.f32 %v4449, %v3811
  %v4482 = vmul.f32 %v4452, %v3811
  %v4483 = vmul.f32 %v4455, %v3811
  %v4484 = vmul.f32 %v4458, %v3811
  %v4485 = vmul.f32 %v4461, %v3811
  %v4486 = vmul.f32 %v4464, %v3811
  %v4487 = vmul.f32 %v4467, %v3811
  %v4488 = vmul.f32 %v4470, %v3811
  %v4489 = vmul.f32 %v4473, %v3811
  %v4490 = vmul.f32 %v4408, %v4408
  %v4491 = vmul.f32 %v4409, %v4409
  %v4492 = vmul.f32 %v4410, %v4410
  %v4493 = vmul.f32 %v4411, %v4411
  %v4494 = vmul.f32 %v4412, %v4412
  %v4495 = vmul.f32 %v4413, %v4413
  %v4496 = vmul.f32 %v4414, %v4414
  %v4497 = vmul.f32 %v4415, %v4415
  %v4498 = vmul.f32 %v4416, %v4416
  %v4499 = vmul.f32 %v4417, %v4417
  %v4500 = vmul.f32 %v4418, %v4418
  %v4501 = vmul.f32 %v4419, %v4419
  %v4502 = vmul.f32 %v4420, %v4420
  %v4503 = vmul.f32 %v4421, %v4421
  %v4504 = vmul.f32 %v4422, %v4422
  %v4505 = vmul.f32 %v4423, %v4423
  %v4506 = vsel %vm249, %v4490, 0.0
  %4507 = vadd.xlane.f32.xlu0 %v4506
  %v4508 = vpop.xlane.xlu0 %4507
  %v4509 = vsel %vm249, %v4491, 0.0
  %4510 = vadd.xlane.f32.xlu0 %v4509
  %v4511 = vpop.xlane.xlu0 %4510
  %v4512 = vsel %vm249, %v4492, 0.0
  %4513 = vadd.xlane.f32.xlu0 %v4512
  %v4514 = vpop.xlane.xlu0 %4513
  %v4515 = vsel %vm249, %v4493, 0.0
  %4516 = vadd.xlane.f32.xlu0 %v4515
  %v4517 = vpop.xlane.xlu0 %4516
  %v4518 = vsel %vm249, %v4494, 0.0
  %4519 = vadd.xlane.f32.xlu0 %v4518
  %v4520 = vpop.xlane.xlu0 %4519
  %v4521 = vsel %vm249, %v4495, 0.0
  %4522 = vadd.xlane.f32.xlu0 %v4521
  %v4523 = vpop.xlane.xlu0 %4522
  %v4524 = vsel %vm249, %v4496, 0.0
  %4525 = vadd.xlane.f32.xlu0 %v4524
  %v4526 = vpop.xlane.xlu0 %4525
  %v4527 = vsel %vm249, %v4497, 0.0
  %4528 = vadd.xlane.f32.xlu0 %v4527
  %v4529 = vpop.xlane.xlu0 %4528
  %v4530 = vsel %vm249, %v4498, 0.0
  %4531 = vadd.xlane.f32.xlu0 %v4530
  %v4532 = vpop.xlane.xlu0 %4531
  %v4533 = vsel %vm249, %v4499, 0.0
  %4534 = vadd.xlane.f32.xlu0 %v4533
  %v4535 = vpop.xlane.xlu0 %4534
  %v4536 = vsel %vm249, %v4500, 0.0
  %4537 = vadd.xlane.f32.xlu0 %v4536
  %v4538 = vpop.xlane.xlu0 %4537
  %v4539 = vsel %vm249, %v4501, 0.0
  %4540 = vadd.xlane.f32.xlu0 %v4539
  %v4541 = vpop.xlane.xlu0 %4540
  %v4542 = vsel %vm249, %v4502, 0.0
  %4543 = vadd.xlane.f32.xlu0 %v4542
  %v4544 = vpop.xlane.xlu0 %4543
  %v4545 = vsel %vm249, %v4503, 0.0
  %4546 = vadd.xlane.f32.xlu0 %v4545
  %v4547 = vpop.xlane.xlu0 %4546
  %v4548 = vsel %vm249, %v4504, 0.0
  %4549 = vadd.xlane.f32.xlu0 %v4548
  %v4550 = vpop.xlane.xlu0 %4549
  %v4551 = vsel %vm249, %v4505, 0.0
  %4552 = vadd.xlane.f32.xlu0 %v4551
  %v4553 = vpop.xlane.xlu0 %4552
  %v4554 = vmul.f32 %v4508, %v3811
  %v4555 = vmul.f32 %v4511, %v3811
  %v4556 = vmul.f32 %v4514, %v3811
  %v4557 = vmul.f32 %v4517, %v3811
  %v4558 = vmul.f32 %v4520, %v3811
  %v4559 = vmul.f32 %v4523, %v3811
  %v4560 = vmul.f32 %v4526, %v3811
  %v4561 = vmul.f32 %v4529, %v3811
  %v4562 = vmul.f32 %v4532, %v3811
  %v4563 = vmul.f32 %v4535, %v3811
  %v4564 = vmul.f32 %v4538, %v3811
  %v4565 = vmul.f32 %v4541, %v3811
  %v4566 = vmul.f32 %v4544, %v3811
  %v4567 = vmul.f32 %v4547, %v3811
  %v4568 = vmul.f32 %v4550, %v3811
  %v4569 = vmul.f32 %v4553, %v3811
  %v4570 = vmul.f32 %v4474, %v4474
  %v4571 = vmul.f32 %v4475, %v4475
  %v4572 = vmul.f32 %v4476, %v4476
  %v4573 = vmul.f32 %v4477, %v4477
  %v4574 = vmul.f32 %v4478, %v4478
  %v4575 = vmul.f32 %v4479, %v4479
  %v4576 = vmul.f32 %v4480, %v4480
  %v4577 = vmul.f32 %v4481, %v4481
  %v4578 = vmul.f32 %v4482, %v4482
  %v4579 = vmul.f32 %v4483, %v4483
  %v4580 = vmul.f32 %v4484, %v4484
  %v4581 = vmul.f32 %v4485, %v4485
  %v4582 = vmul.f32 %v4486, %v4486
  %v4583 = vmul.f32 %v4487, %v4487
  %v4584 = vmul.f32 %v4488, %v4488
  %v4585 = vmul.f32 %v4489, %v4489
  %v4586 = vsub.f32 %v4554, %v4570
  %v4587 = vsub.f32 %v4555, %v4571
  %v4588 = vsub.f32 %v4556, %v4572
  %v4589 = vsub.f32 %v4557, %v4573
  %v4590 = vsub.f32 %v4558, %v4574
  %v4591 = vsub.f32 %v4559, %v4575
  %v4592 = vsub.f32 %v4560, %v4576
  %v4593 = vsub.f32 %v4561, %v4577
  %v4594 = vsub.f32 %v4562, %v4578
  %v4595 = vsub.f32 %v4563, %v4579
  %v4596 = vsub.f32 %v4564, %v4580
  %v4597 = vsub.f32 %v4565, %v4581
  %v4598 = vsub.f32 %v4566, %v4582
  %v4599 = vsub.f32 %v4567, %v4583
  %v4600 = vsub.f32 %v4568, %v4584
  %v4601 = vsub.f32 %v4569, %v4585
  %v4602 = vsub.f32 %v4408, %v4474
  %v4603 = vsub.f32 %v4409, %v4475
  %v4604 = vsub.f32 %v4410, %v4476
  %v4605 = vsub.f32 %v4411, %v4477
  %v4606 = vsub.f32 %v4412, %v4478
  %v4607 = vsub.f32 %v4413, %v4479
  %v4608 = vsub.f32 %v4414, %v4480
  %v4609 = vsub.f32 %v4415, %v4481
  %v4610 = vsub.f32 %v4416, %v4482
  %v4611 = vsub.f32 %v4417, %v4483
  %v4612 = vsub.f32 %v4418, %v4484
  %v4613 = vsub.f32 %v4419, %v4485
  %v4614 = vsub.f32 %v4420, %v4486
  %v4615 = vsub.f32 %v4421, %v4487
  %v4616 = vsub.f32 %v4422, %v4488
  %v4617 = vsub.f32 %v4423, %v4489
  %v4618 = vadd.f32 %v4586, 1e-05
  %v4619 = vadd.f32 %v4587, 1e-05
  %v4620 = vadd.f32 %v4588, 1e-05
  %v4621 = vadd.f32 %v4589, 1e-05
  %v4622 = vadd.f32 %v4590, 1e-05
  %v4623 = vadd.f32 %v4591, 1e-05
  %v4624 = vadd.f32 %v4592, 1e-05
  %v4625 = vadd.f32 %v4593, 1e-05
  %v4626 = vadd.f32 %v4594, 1e-05
  %v4627 = vadd.f32 %v4595, 1e-05
  %v4628 = vadd.f32 %v4596, 1e-05
  %v4629 = vadd.f32 %v4597, 1e-05
  %v4630 = vadd.f32 %v4598, 1e-05
  %v4631 = vadd.f32 %v4599, 1e-05
  %v4632 = vadd.f32 %v4600, 1e-05
  %v4633 = vadd.f32 %v4601, 1e-05
  %v4634 = vrsqrt.pop %v4618
  %v4635 = vmul.f32 %v4634, %v4618
  %v4636 = vmul.f32 %v4635, %v4634
  %v4637 = vmul.f32 0.5, %v4636
  %v4638 = vsub.f32 1.5, %v4637
  %v4639 = vmul.f32 %v4634, %v4638
  %vm4640 = vweird.f32 %v4618
  %vm4641 = vweird.f32 %v4634
  %vm4642 = vmor %vm4640, %vm4641
  %v4643 = vsel %vm4642, %v4634, %v4639
  %v4644 = vrsqrt.pop %v4619
  %v4645 = vmul.f32 %v4644, %v4619
  %v4646 = vmul.f32 %v4645, %v4644
  %v4647 = vmul.f32 0.5, %v4646
  %v4648 = vsub.f32 1.5, %v4647
  %v4649 = vmul.f32 %v4644, %v4648
  %vm4650 = vweird.f32 %v4619
  %vm4651 = vweird.f32 %v4644
  %vm4652 = vmor %vm4650, %vm4651
  %v4653 = vsel %vm4652, %v4644, %v4649
  %v4654 = vrsqrt.pop %v4620
  %v4655 = vmul.f32 %v4654, %v4620
  %v4656 = vmul.f32 %v4655, %v4654
  %v4657 = vmul.f32 0.5, %v4656
  %v4658 = vsub.f32 1.5, %v4657
  %v4659 = vmul.f32 %v4654, %v4658
  %vm4660 = vweird.f32 %v4620
  %vm4661 = vweird.f32 %v4654
  %vm4662 = vmor %vm4660, %vm4661
  %v4663 = vsel %vm4662, %v4654, %v4659
  %v4664 = vrsqrt.pop %v4621
  %v4665 = vmul.f32 %v4664, %v4621
  %v4666 = vmul.f32 %v4665, %v4664
  %v4667 = vmul.f32 0.5, %v4666
  %v4668 = vsub.f32 1.5, %v4667
  %v4669 = vmul.f32 %v4664, %v4668
  %vm4670 = vweird.f32 %v4621
  %vm4671 = vweird.f32 %v4664
  %vm4672 = vmor %vm4670, %vm4671
  %v4673 = vsel %vm4672, %v4664, %v4669
  %v4674 = vrsqrt.pop %v4622
  %v4675 = vmul.f32 %v4674, %v4622
  %v4676 = vmul.f32 %v4675, %v4674
  %v4677 = vmul.f32 0.5, %v4676
  %v4678 = vsub.f32 1.5, %v4677
  %v4679 = vmul.f32 %v4674, %v4678
  %vm4680 = vweird.f32 %v4622
  %vm4681 = vweird.f32 %v4674
  %vm4682 = vmor %vm4680, %vm4681
  %v4683 = vsel %vm4682, %v4674, %v4679
  %v4684 = vrsqrt.pop %v4623
  %v4685 = vmul.f32 %v4684, %v4623
  %v4686 = vmul.f32 %v4685, %v4684
  %v4687 = vmul.f32 0.5, %v4686
  %v4688 = vsub.f32 1.5, %v4687
  %v4689 = vmul.f32 %v4684, %v4688
  %vm4690 = vweird.f32 %v4623
  %vm4691 = vweird.f32 %v4684
  %vm4692 = vmor %vm4690, %vm4691
  %v4693 = vsel %vm4692, %v4684, %v4689
  %v4694 = vrsqrt.pop %v4624
  %v4695 = vmul.f32 %v4694, %v4624
  %v4696 = vmul.f32 %v4695, %v4694
  %v4697 = vmul.f32 0.5, %v4696
  %v4698 = vsub.f32 1.5, %v4697
  %v4699 = vmul.f32 %v4694, %v4698
  %vm4700 = vweird.f32 %v4624
  %vm4701 = vweird.f32 %v4694
  %vm4702 = vmor %vm4700, %vm4701
  %v4703 = vsel %vm4702, %v4694, %v4699
  %v4704 = vrsqrt.pop %v4625
  %v4705 = vmul.f32 %v4704, %v4625
  %v4706 = vmul.f32 %v4705, %v4704
  %v4707 = vmul.f32 0.5, %v4706
  %v4708 = vsub.f32 1.5, %v4707
  %v4709 = vmul.f32 %v4704, %v4708
  %vm4710 = vweird.f32 %v4625
  %vm4711 = vweird.f32 %v4704
  %vm4712 = vmor %vm4710, %vm4711
  %v4713 = vsel %vm4712, %v4704, %v4709
  %v4714 = vrsqrt.pop %v4626
  %v4715 = vmul.f32 %v4714, %v4626
  %v4716 = vmul.f32 %v4715, %v4714
  %v4717 = vmul.f32 0.5, %v4716
  %v4718 = vsub.f32 1.5, %v4717
  %v4719 = vmul.f32 %v4714, %v4718
  %vm4720 = vweird.f32 %v4626
  %vm4721 = vweird.f32 %v4714
  %vm4722 = vmor %vm4720, %vm4721
  %v4723 = vsel %vm4722, %v4714, %v4719
  %v4724 = vrsqrt.pop %v4627
  %v4725 = vmul.f32 %v4724, %v4627
  %v4726 = vmul.f32 %v4725, %v4724
  %v4727 = vmul.f32 0.5, %v4726
  %v4728 = vsub.f32 1.5, %v4727
  %v4729 = vmul.f32 %v4724, %v4728
  %vm4730 = vweird.f32 %v4627
  %vm4731 = vweird.f32 %v4724
  %vm4732 = vmor %vm4730, %vm4731
  %v4733 = vsel %vm4732, %v4724, %v4729
  %v4734 = vrsqrt.pop %v4628
  %v4735 = vmul.f32 %v4734, %v4628
  %v4736 = vmul.f32 %v4735, %v4734
  %v4737 = vmul.f32 0.5, %v4736
  %v4738 = vsub.f32 1.5, %v4737
  %v4739 = vmul.f32 %v4734, %v4738
  %vm4740 = vweird.f32 %v4628
  %vm4741 = vweird.f32 %v4734
  %vm4742 = vmor %vm4740, %vm4741
  %v4743 = vsel %vm4742, %v4734, %v4739
  %v4744 = vrsqrt.pop %v4629
  %v4745 = vmul.f32 %v4744, %v4629
  %v4746 = vmul.f32 %v4745, %v4744
  %v4747 = vmul.f32 0.5, %v4746
  %v4748 = vsub.f32 1.5, %v4747
  %v4749 = vmul.f32 %v4744, %v4748
  %vm4750 = vweird.f32 %v4629
  %vm4751 = vweird.f32 %v4744
  %vm4752 = vmor %vm4750, %vm4751
  %v4753 = vsel %vm4752, %v4744, %v4749
  %v4754 = vrsqrt.pop %v4630
  %v4755 = vmul.f32 %v4754, %v4630
  %v4756 = vmul.f32 %v4755, %v4754
  %v4757 = vmul.f32 0.5, %v4756
  %v4758 = vsub.f32 1.5, %v4757
  %v4759 = vmul.f32 %v4754, %v4758
  %vm4760 = vweird.f32 %v4630
  %vm4761 = vweird.f32 %v4754
  %vm4762 = vmor %vm4760, %vm4761
  %v4763 = vsel %vm4762, %v4754, %v4759
  %v4764 = vrsqrt.pop %v4631
  %v4765 = vmul.f32 %v4764, %v4631
  %v4766 = vmul.f32 %v4765, %v4764
  %v4767 = vmul.f32 0.5, %v4766
  %v4768 = vsub.f32 1.5, %v4767
  %v4769 = vmul.f32 %v4764, %v4768
  %vm4770 = vweird.f32 %v4631
  %vm4771 = vweird.f32 %v4764
  %vm4772 = vmor %vm4770, %vm4771
  %v4773 = vsel %vm4772, %v4764, %v4769
  %v4774 = vrsqrt.pop %v4632
  %v4775 = vmul.f32 %v4774, %v4632
  %v4776 = vmul.f32 %v4775, %v4774
  %v4777 = vmul.f32 0.5, %v4776
  %v4778 = vsub.f32 1.5, %v4777
  %v4779 = vmul.f32 %v4774, %v4778
  %vm4780 = vweird.f32 %v4632
  %vm4781 = vweird.f32 %v4774
  %vm4782 = vmor %vm4780, %vm4781
  %v4783 = vsel %vm4782, %v4774, %v4779
  %v4784 = vrsqrt.pop %v4633
  %v4785 = vmul.f32 %v4784, %v4633
  %v4786 = vmul.f32 %v4785, %v4784
  %v4787 = vmul.f32 0.5, %v4786
  %v4788 = vsub.f32 1.5, %v4787
  %v4789 = vmul.f32 %v4784, %v4788
  %vm4790 = vweird.f32 %v4633
  %vm4791 = vweird.f32 %v4784
  %vm4792 = vmor %vm4790, %vm4791
  %v4793 = vsel %vm4792, %v4784, %v4789
  %v4794 = vmul.f32 %v4602, %v4643
  %v4795 = vmul.f32 %v4603, %v4653
  %v4796 = vmul.f32 %v4604, %v4663
  %v4797 = vmul.f32 %v4605, %v4673
  %v4798 = vmul.f32 %v4606, %v4683
  %v4799 = vmul.f32 %v4607, %v4693
  %v4800 = vmul.f32 %v4608, %v4703
  %v4801 = vmul.f32 %v4609, %v4713
  %v4802 = vmul.f32 %v4610, %v4723
  %v4803 = vmul.f32 %v4611, %v4733
  %v4804 = vmul.f32 %v4612, %v4743
  %v4805 = vmul.f32 %v4613, %v4753
  %v4806 = vmul.f32 %v4614, %v4763
  %v4807 = vmul.f32 %v4615, %v4773
  %v4808 = vmul.f32 %v4616, %v4783
  %v4809 = vmul.f32 %v4617, %v4793
  %v4810 = vmul.f32 %v4794, %v4424
  %v4811 = vmul.f32 %v4795, %v4424
  %v4812 = vmul.f32 %v4796, %v4424
  %v4813 = vmul.f32 %v4797, %v4424
  %v4814 = vmul.f32 %v4798, %v4424
  %v4815 = vmul.f32 %v4799, %v4424
  %v4816 = vmul.f32 %v4800, %v4424
  %v4817 = vmul.f32 %v4801, %v4424
  %v4818 = vmul.f32 %v4802, %v4424
  %v4819 = vmul.f32 %v4803, %v4424
  %v4820 = vmul.f32 %v4804, %v4424
  %v4821 = vmul.f32 %v4805, %v4424
  %v4822 = vmul.f32 %v4806, %v4424
  %v4823 = vmul.f32 %v4807, %v4424
  %v4824 = vmul.f32 %v4808, %v4424
  %v4825 = vmul.f32 %v4809, %v4424
  %v4826 = vadd.f32 %v4810, %v4425
  %v4827 = vadd.f32 %v4811, %v4425
  %v4828 = vadd.f32 %v4812, %v4425
  %v4829 = vadd.f32 %v4813, %v4425
  %v4830 = vadd.f32 %v4814, %v4425
  %v4831 = vadd.f32 %v4815, %v4425
  %v4832 = vadd.f32 %v4816, %v4425
  %v4833 = vadd.f32 %v4817, %v4425
  %v4834 = vadd.f32 %v4818, %v4425
  %v4835 = vadd.f32 %v4819, %v4425
  %v4836 = vadd.f32 %v4820, %v4425
  %v4837 = vadd.f32 %v4821, %v4425
  %v4838 = vadd.f32 %v4822, %v4425
  %v4839 = vadd.f32 %v4823, %v4425
  %v4840 = vadd.f32 %v4824, %v4425
  %v4841 = vadd.f32 %v4825, %v4425
  %v4842 = vld [vmem:[%s12 + $0x10] ss:$0 sm:$0xff]
  %v4843 = vrot.slane %v4826, 7
  %v4844 = vrot.slane %v4827, 7
  %v4845 = vrot.slane %v4828, 7
  %v4846 = vrot.slane %v4829, 7
  %v4847 = vrot.slane %v4830, 7
  %v4848 = vrot.slane %v4831, 7
  %v4849 = vrot.slane %v4832, 7
  %v4850 = vrot.slane %v4833, 7
  %v4851 = vrot.slane %v4834, 7
  %v4852 = vrot.slane %v4835, 7
  %v4853 = vrot.slane %v4836, 7
  %v4854 = vrot.slane %v4837, 7
  %v4855 = vrot.slane %v4838, 7
  %v4856 = vrot.slane %v4839, 7
  %v4857 = vrot.slane %v4840, 7
  %v4858 = vrot.slane %v4841, 7
  %v4859 = vlaneseq
  %v4860 = vshrl.u32 %v4859, 7
  %vm4861 = vcmp.lt.s32.totalorder %v4860, 1
  %v4862 = vsel %vm4861, %v4857, %v4858
  %v4863 = vsel %vm4861, %v4856, %v4857
  %v4864 = vsel %vm4861, %v4855, %v4856
  %v4865 = vsel %vm4861, %v4854, %v4855
  %v4866 = vsel %vm4861, %v4853, %v4854
  %v4867 = vsel %vm4861, %v4852, %v4853
  %v4868 = vsel %vm4861, %v4851, %v4852
  %v4869 = vsel %vm4861, %v4850, %v4851
  %v4870 = vsel %vm4861, %v4849, %v4850
  %v4871 = vsel %vm4861, %v4848, %v4849
  %v4872 = vsel %vm4861, %v4847, %v4848
  %v4873 = vsel %vm4861, %v4846, %v4847
  %v4874 = vsel %vm4861, %v4845, %v4846
  %v4875 = vsel %vm4861, %v4844, %v4845
  %v4876 = vsel %vm4861, %v4843, %v4844
  %v4877 = vsel %vm4861, %v4858, %v4843
  %v4878 = vld [vmem:[%s2] sm:$0xff]
  %v4879 = vld [vmem:[%s2 + $0x8] sm:$0xff]
  %v4880 = vld [vmem:[%s2 + $0x10] sm:$0xff]
  %v4881 = vld [vmem:[%s2 + $0x18] sm:$0xff]
  %v4882 = vld [vmem:[%s2 + $0x20] sm:$0xff]
  %v4883 = vld [vmem:[%s2 + $0x28] sm:$0xff]
  %v4884 = vld [vmem:[%s2 + $0x30] sm:$0xff]
  %v4885 = vld [vmem:[%s2 + $0x38] sm:$0xff]
  %v4886 = vld [vmem:[%s2 + $0x40] sm:$0xff]
  %v4887 = vld [vmem:[%s2 + $0x48] sm:$0xff]
  %v4888 = vld [vmem:[%s2 + $0x50] sm:$0xff]
  %v4889 = vld [vmem:[%s2 + $0x58] sm:$0xff]
  %v4890 = vld [vmem:[%s2 + $0x60] sm:$0xff]
  %v4891 = vld [vmem:[%s2 + $0x68] sm:$0xff]
  %v4892 = vld [vmem:[%s2 + $0x70] sm:$0xff]
  %v4893 = vld [vmem:[%s2 + $0x78] sm:$0xff]
  %4895 = vset.pattern.permute.xlu0 0
  %4896 = vperm.xlu0 %4895, %v4878
  %v4897 = vpop.permute.xlu0 %4896
  %4900 = vset.pattern.permute.xlu0 0
  %4901 = vperm.xlu0 %4900, %v4879
  %v4902 = vpop.permute.xlu0 %4901
  %4905 = vset.pattern.permute.xlu0 0
  %4906 = vperm.xlu0 %4905, %v4880
  %v4907 = vpop.permute.xlu0 %4906
  %4910 = vset.pattern.permute.xlu0 0
  %4911 = vperm.xlu0 %4910, %v4881
  %v4912 = vpop.permute.xlu0 %4911
  %4915 = vset.pattern.permute.xlu0 0
  %4916 = vperm.xlu0 %4915, %v4882
  %v4917 = vpop.permute.xlu0 %4916
  %4920 = vset.pattern.permute.xlu0 0
  %4921 = vperm.xlu0 %4920, %v4883
  %v4922 = vpop.permute.xlu0 %4921
  %4925 = vset.pattern.permute.xlu0 0
  %4926 = vperm.xlu0 %4925, %v4884
  %v4927 = vpop.permute.xlu0 %4926
  %4930 = vset.pattern.permute.xlu0 0
  %4931 = vperm.xlu0 %4930, %v4885
  %v4932 = vpop.permute.xlu0 %4931
  %4935 = vset.pattern.permute.xlu0 0
  %4936 = vperm.xlu0 %4935, %v4886
  %v4937 = vpop.permute.xlu0 %4936
  %4940 = vset.pattern.permute.xlu0 0
  %4941 = vperm.xlu0 %4940, %v4887
  %v4942 = vpop.permute.xlu0 %4941
  %4945 = vset.pattern.permute.xlu0 0
  %4946 = vperm.xlu0 %4945, %v4888
  %v4947 = vpop.permute.xlu0 %4946
  %4950 = vset.pattern.permute.xlu0 0
  %4951 = vperm.xlu0 %4950, %v4889
  %v4952 = vpop.permute.xlu0 %4951
  %4955 = vset.pattern.permute.xlu0 0
  %4956 = vperm.xlu0 %4955, %v4890
  %v4957 = vpop.permute.xlu0 %4956
  %4960 = vset.pattern.permute.xlu0 0
  %4961 = vperm.xlu0 %4960, %v4891
  %v4962 = vpop.permute.xlu0 %4961
  %4965 = vset.pattern.permute.xlu0 0
  %4966 = vperm.xlu0 %4965, %v4892
  %v4967 = vpop.permute.xlu0 %4966
  %4970 = vset.pattern.permute.xlu0 0
  %4971 = vperm.xlu0 %4970, %v4893
  %v4972 = vpop.permute.xlu0 %4971
  %v4974 = vmul.f32 %v4862, %v4897
  %v4975 = vmul.f32 %v4877, %v4902
  %v4976 = vmul.f32 %v4876, %v4907
  %v4977 = vmul.f32 %v4875, %v4912
  %v4978 = vmul.f32 %v4874, %v4917
  %v4979 = vmul.f32 %v4873, %v4922
  %v4980 = vmul.f32 %v4872, %v4927
  %v4981 = vmul.f32 %v4871, %v4932
  %v4982 = vmul.f32 %v4870, %v4937
  %v4983 = vmul.f32 %v4869, %v4942
  %v4984 = vmul.f32 %v4868, %v4947
  %v4985 = vmul.f32 %v4867, %v4952
  %v4986 = vmul.f32 %v4866, %v4957
  %v4987 = vmul.f32 %v4865, %v4962
  %v4988 = vmul.f32 %v4864, %v4967
  %v4989 = vmul.f32 %v4863, %v4972
  %v4990 = vpack.c.bf16 %v4975, %v4974
  %v4991 = vpack.c.bf16 %v4977, %v4976
  %v4992 = vpack.c.bf16 %v4979, %v4978
  %v4993 = vpack.c.bf16 %v4981, %v4980
  %v4994 = vpack.c.bf16 %v4983, %v4982
  %v4995 = vpack.c.bf16 %v4985, %v4984
  %v4996 = vpack.c.bf16 %v4987, %v4986
  %v4997 = vpack.c.bf16 %v4989, %v4988
  %v4998 = vld [vmem:[%s9] sm:$0xf]
  %v4999 = vld [vmem:[%s9 + $0x4] sm:$0xf]
  %v5000 = vld [vmem:[%s9 + $0x8] sm:$0xf]
  %v5001 = vld [vmem:[%s9 + $0xc] sm:$0xf]
  %s5002 = scalar_lea.vmem %s2, 128
  %v5003 = vld [vmem:[%s5002] sm:$0xff]
  %v5004 = vld [vmem:[%s5002 + $0x8] sm:$0xff]
  %v5005 = vld [vmem:[%s5002 + $0x10] sm:$0xff]
  %v5006 = vld [vmem:[%s5002 + $0x18] sm:$0xff]
  %v5007 = vld [vmem:[%s5002 + $0x20] sm:$0xff]
  %v5008 = vld [vmem:[%s5002 + $0x28] sm:$0xff]
  %v5009 = vld [vmem:[%s5002 + $0x30] sm:$0xff]
  %v5010 = vld [vmem:[%s5002 + $0x38] sm:$0xff]
  %v5011 = vld [vmem:[%s5002 + $0x40] sm:$0xff]
  %v5012 = vld [vmem:[%s5002 + $0x48] sm:$0xff]
  %v5013 = vld [vmem:[%s5002 + $0x50] sm:$0xff]
  %v5014 = vld [vmem:[%s5002 + $0x58] sm:$0xff]
  %v5015 = vld [vmem:[%s5002 + $0x60] sm:$0xff]
  %v5016 = vld [vmem:[%s5002 + $0x68] sm:$0xff]
  %v5017 = vld [vmem:[%s5002 + $0x70] sm:$0xff]
  %v5018 = vld [vmem:[%s5002 + $0x78] sm:$0xff]
  %5020 = vset.pattern.permute.xlu0 0
  %5021 = vperm.xlu0 %5020, %v5003
  %v5022 = vpop.permute.xlu0 %5021
  %5025 = vset.pattern.permute.xlu0 0
  %5026 = vperm.xlu0 %5025, %v5004
  %v5027 = vpop.permute.xlu0 %5026
  %5030 = vset.pattern.permute.xlu0 0
  %5031 = vperm.xlu0 %5030, %v5005
  %v5032 = vpop.permute.xlu0 %5031
  %5035 = vset.pattern.permute.xlu0 0
  %5036 = vperm.xlu0 %5035, %v5006
  %v5037 = vpop.permute.xlu0 %5036
  %5040 = vset.pattern.permute.xlu0 0
  %5041 = vperm.xlu0 %5040, %v5007
  %v5042 = vpop.permute.xlu0 %5041
  %5045 = vset.pattern.permute.xlu0 0
  %5046 = vperm.xlu0 %5045, %v5008
  %v5047 = vpop.permute.xlu0 %5046
  %5050 = vset.pattern.permute.xlu0 0
  %5051 = vperm.xlu0 %5050, %v5009
  %v5052 = vpop.permute.xlu0 %5051
  %5055 = vset.pattern.permute.xlu0 0
  %5056 = vperm.xlu0 %5055, %v5010
  %v5057 = vpop.permute.xlu0 %5056
  %5060 = vset.pattern.permute.xlu0 0
  %5061 = vperm.xlu0 %5060, %v5011
  %v5062 = vpop.permute.xlu0 %5061
  %5065 = vset.pattern.permute.xlu0 0
  %5066 = vperm.xlu0 %5065, %v5012
  %v5067 = vpop.permute.xlu0 %5066
  %5070 = vset.pattern.permute.xlu0 0
  %5071 = vperm.xlu0 %5070, %v5013
  %v5072 = vpop.permute.xlu0 %5071
  %5075 = vset.pattern.permute.xlu0 0
  %5076 = vperm.xlu0 %5075, %v5014
  %v5077 = vpop.permute.xlu0 %5076
  %5080 = vset.pattern.permute.xlu0 0
  %5081 = vperm.xlu0 %5080, %v5015
  %v5082 = vpop.permute.xlu0 %5081
  %5085 = vset.pattern.permute.xlu0 0
  %5086 = vperm.xlu0 %5085, %v5016
  %v5087 = vpop.permute.xlu0 %5086
  %5090 = vset.pattern.permute.xlu0 0
  %5091 = vperm.xlu0 %5090, %v5017
  %v5092 = vpop.permute.xlu0 %5091
  %5095 = vset.pattern.permute.xlu0 0
  %5096 = vperm.xlu0 %5095, %v5018
  %v5097 = vpop.permute.xlu0 %5096
  %v5099 = vmul.f32 %v4841, %v5022
  %v5100 = vmul.f32 %v4826, %v5027
  %v5101 = vmul.f32 %v4827, %v5032
  %v5102 = vmul.f32 %v4828, %v5037
  %v5103 = vmul.f32 %v4829, %v5042
  %v5104 = vmul.f32 %v4830, %v5047
  %v5105 = vmul.f32 %v4831, %v5052
  %v5106 = vmul.f32 %v4832, %v5057
  %v5107 = vmul.f32 %v4833, %v5062
  %v5108 = vmul.f32 %v4834, %v5067
  %v5109 = vmul.f32 %v4835, %v5072
  %v5110 = vmul.f32 %v4836, %v5077
  %v5111 = vmul.f32 %v4837, %v5082
  %v5112 = vmul.f32 %v4838, %v5087
  %v5113 = vmul.f32 %v4839, %v5092
  %v5114 = vmul.f32 %v4840, %v5097
  %v5115 = vpack.c.bf16 %v5100, %v5099
  %v5116 = vpack.c.bf16 %v5102, %v5101
  %v5117 = vpack.c.bf16 %v5104, %v5103
  %v5118 = vpack.c.bf16 %v5106, %v5105
  %v5119 = vpack.c.bf16 %v5108, %v5107
  %v5120 = vpack.c.bf16 %v5110, %v5109
  %v5121 = vpack.c.bf16 %v5112, %v5111
  %v5122 = vpack.c.bf16 %v5114, %v5113
  %s5123 = scalar_lea.vmem %s9, 16
  %v5124 = vld [vmem:[%s5123] sm:$0xf]
  %v5125 = vld [vmem:[%s5123 + $0x4] sm:$0xf]
  %v5126 = vld [vmem:[%s5123 + $0x8] sm:$0xf]
  %v5127 = vld [vmem:[%s5123 + $0xc] sm:$0xf]
  %v5132 = vunpack.c.l.b16 %v5124
  %v5133 = vunpack.c.l.b16 %v5125
  %v5134 = vunpack.c.l.b16 %v5126
  %v5135 = vunpack.c.l.b16 %v5127
  %v5136 = vpack.c.b16 %v5133, %v5132
  %v5137 = vpack.c.b16 %v5135, %v5134
  %v5141 = vsel %vm249, %v5115, 0
  %v5144 = vsel %vm249, %v5116, 0
  %v5147 = vsel %vm249, %v5117, 0
  %v5150 = vsel %vm249, %v5118, 0
  %v5153 = vsel %vm249, %v5119, 0
  %v5156 = vsel %vm249, %v5120, 0
  %v5159 = vsel %vm249, %v5121, 0
  %v5162 = vsel %vm249, %v5122, 0
  %5164 = vmatpush.bf16.msra.mxu0 0
  %5165 = vmatpush.bf16.msra.mxu0 0
  %5166 = vmatpush.bf16.msra.mxu0 0
  %5167 = vmatpush.bf16.msra.mxu0 0
  %5168 = vmatpush.bf16.msra.mxu0 0
  %5169 = vmatpush.bf16.msra.mxu0 0
  %5170 = vmatpush.bf16.msra.mxu0 %v5137
  %5171 = vmatpush.bf16.msra.mxu0 %v5136
  %5172 = vmatmul.bf16.gmra.mxu0 %v5141
  %v5173 = vpop.f32.mrf.mxu0
  %v5174 = vadd.f32 0.0, %v5173
  %v5175 = vpop.f32.mrf.mxu0
  %v5176 = vadd.f32 0.0, %v5175
  %5177 = vmatmul.bf16.gmra.mxu0 %v5144
  %v5178 = vpop.f32.mrf.mxu0
  %v5179 = vadd.f32 0.0, %v5178
  %v5180 = vpop.f32.mrf.mxu0
  %v5181 = vadd.f32 0.0, %v5180
  %5182 = vmatmul.bf16.gmra.mxu0 %v5147
  %v5183 = vpop.f32.mrf.mxu0
  %v5184 = vadd.f32 0.0, %v5183
  %v5185 = vpop.f32.mrf.mxu0
  %v5186 = vadd.f32 0.0, %v5185
  %5187 = vmatmul.bf16.gmra.mxu0 %v5150
  %v5188 = vpop.f32.mrf.mxu0
  %v5189 = vadd.f32 0.0, %v5188
  %v5190 = vpop.f32.mrf.mxu0
  %v5191 = vadd.f32 0.0, %v5190
  %5192 = vmatmul.bf16.gmra.mxu0 %v5153
  %v5193 = vpop.f32.mrf.mxu0
  %v5194 = vadd.f32 0.0, %v5193
  %v5195 = vpop.f32.mrf.mxu0
  %v5196 = vadd.f32 0.0, %v5195
  %5197 = vmatmul.bf16.gmra.mxu0 %v5156
  %v5198 = vpop.f32.mrf.mxu0
  %v5199 = vadd.f32 0.0, %v5198
  %v5200 = vpop.f32.mrf.mxu0
  %v5201 = vadd.f32 0.0, %v5200
  %5202 = vmatmul.bf16.gmra.mxu0 %v5159
  %v5203 = vpop.f32.mrf.mxu0
  %v5204 = vadd.f32 0.0, %v5203
  %v5205 = vpop.f32.mrf.mxu0
  %v5206 = vadd.f32 0.0, %v5205
  %5207 = vmatmul.bf16.gmra.mxu0 %v5162
  %v5208 = vpop.f32.mrf.mxu0
  %v5209 = vadd.f32 0.0, %v5208
  %v5210 = vpop.f32.mrf.mxu0
  %v5211 = vadd.f32 0.0, %v5210
  %5212 = vdwg.mxu0
  %v5217 = vunpack.c.l.b16 %v4998
  %v5218 = vunpack.c.l.b16 %v4999
  %v5219 = vunpack.c.l.b16 %v5000
  %v5220 = vunpack.c.l.b16 %v5001
  %v5221 = vpack.c.b16 %v5218, %v5217
  %v5222 = vpack.c.b16 %v5220, %v5219
  %v5226 = vsel %vm249, %v4990, 0
  %v5229 = vsel %vm249, %v4991, 0
  %v5232 = vsel %vm249, %v4992, 0
  %v5235 = vsel %vm249, %v4993, 0
  %v5238 = vsel %vm249, %v4994, 0
  %v5241 = vsel %vm249, %v4995, 0
  %v5244 = vsel %vm249, %v4996, 0
  %v5247 = vsel %vm249, %v4997, 0
  %5249 = vmatpush.bf16.msra.mxu0 0
  %5250 = vmatpush.bf16.msra.mxu0 0
  %5251 = vmatpush.bf16.msra.mxu0 0
  %5252 = vmatpush.bf16.msra.mxu0 0
  %5253 = vmatpush.bf16.msra.mxu0 0
  %5254 = vmatpush.bf16.msra.mxu0 0
  %5255 = vmatpush.bf16.msra.mxu0 %v5222
  %5256 = vmatpush.bf16.msra.mxu0 %v5221
  %5257 = vmatmul.bf16.gmra.mxu0 %v5226
  %v5258 = vpop.f32.mrf.mxu0
  %v5259 = vadd.f32 %v5174, %v5258
  %v5260 = vpop.f32.mrf.mxu0
  %v5261 = vadd.f32 %v5176, %v5260
  %5262 = vmatmul.bf16.gmra.mxu0 %v5229
  %v5263 = vpop.f32.mrf.mxu0
  %v5264 = vadd.f32 %v5179, %v5263
  %v5265 = vpop.f32.mrf.mxu0
  %v5266 = vadd.f32 %v5181, %v5265
  %5267 = vmatmul.bf16.gmra.mxu0 %v5232
  %v5268 = vpop.f32.mrf.mxu0
  %v5269 = vadd.f32 %v5184, %v5268
  %v5270 = vpop.f32.mrf.mxu0
  %v5271 = vadd.f32 %v5186, %v5270
  %5272 = vmatmul.bf16.gmra.mxu0 %v5235
  %v5273 = vpop.f32.mrf.mxu0
  %v5274 = vadd.f32 %v5189, %v5273
  %v5275 = vpop.f32.mrf.mxu0
  %v5276 = vadd.f32 %v5191, %v5275
  %5277 = vmatmul.bf16.gmra.mxu0 %v5238
  %v5278 = vpop.f32.mrf.mxu0
  %v5279 = vadd.f32 %v5194, %v5278
  %v5280 = vpop.f32.mrf.mxu0
  %v5281 = vadd.f32 %v5196, %v5280
  %5282 = vmatmul.bf16.gmra.mxu0 %v5241
  %v5283 = vpop.f32.mrf.mxu0
  %v5284 = vadd.f32 %v5199, %v5283
  %v5285 = vpop.f32.mrf.mxu0
  %v5286 = vadd.f32 %v5201, %v5285
  %5287 = vmatmul.bf16.gmra.mxu0 %v5244
  %v5288 = vpop.f32.mrf.mxu0
  %v5289 = vadd.f32 %v5204, %v5288
  %v5290 = vpop.f32.mrf.mxu0
  %v5291 = vadd.f32 %v5206, %v5290
  %5292 = vmatmul.bf16.gmra.mxu0 %v5247
  %v5293 = vpop.f32.mrf.mxu0
  %v5294 = vadd.f32 %v5209, %v5293
  %v5295 = vpop.f32.mrf.mxu0
  %v5296 = vadd.f32 %v5211, %v5295
  %5297 = vdwg.mxu0
  %v5298 = vrot.slane %v4826, 1
  %v5299 = vrot.slane %v4827, 1
  %v5300 = vrot.slane %v4828, 1
  %v5301 = vrot.slane %v4829, 1
  %v5302 = vrot.slane %v4830, 1
  %v5303 = vrot.slane %v4831, 1
  %v5304 = vrot.slane %v4832, 1
  %v5305 = vrot.slane %v4833, 1
  %v5306 = vrot.slane %v4834, 1
  %v5307 = vrot.slane %v4835, 1
  %v5308 = vrot.slane %v4836, 1
  %v5309 = vrot.slane %v4837, 1
  %v5310 = vrot.slane %v4838, 1
  %v5311 = vrot.slane %v4839, 1
  %v5312 = vrot.slane %v4840, 1
  %v5313 = vrot.slane %v4841, 1
  %vm5314 = vcmp.lt.s32.totalorder %v4860, 7
  %v5315 = vsel %vm5314, %v5312, %v5313
  %v5316 = vsel %vm5314, %v5311, %v5312
  %v5317 = vsel %vm5314, %v5310, %v5311
  %v5318 = vsel %vm5314, %v5309, %v5310
  %v5319 = vsel %vm5314, %v5308, %v5309
  %v5320 = vsel %vm5314, %v5307, %v5308
  %v5321 = vsel %vm5314, %v5306, %v5307
  %v5322 = vsel %vm5314, %v5305, %v5306
  %v5323 = vsel %vm5314, %v5304, %v5305
  %v5324 = vsel %vm5314, %v5303, %v5304
  %v5325 = vsel %vm5314, %v5302, %v5303
  %v5326 = vsel %vm5314, %v5301, %v5302
  %v5327 = vsel %vm5314, %v5300, %v5301
  %v5328 = vsel %vm5314, %v5299, %v5300
  %v5329 = vsel %vm5314, %v5298, %v5299
  %v5330 = vsel %vm5314, %v5313, %v5298
  %s5331 = scalar_lea.vmem %s2, 256
  %v5332 = vld [vmem:[%s5331] sm:$0xff]
  %v5333 = vld [vmem:[%s5331 + $0x8] sm:$0xff]
  %v5334 = vld [vmem:[%s5331 + $0x10] sm:$0xff]
  %v5335 = vld [vmem:[%s5331 + $0x18] sm:$0xff]
  %v5336 = vld [vmem:[%s5331 + $0x20] sm:$0xff]
  %v5337 = vld [vmem:[%s5331 + $0x28] sm:$0xff]
  %v5338 = vld [vmem:[%s5331 + $0x30] sm:$0xff]
  %v5339 = vld [vmem:[%s5331 + $0x38] sm:$0xff]
  %v5340 = vld [vmem:[%s5331 + $0x40] sm:$0xff]
  %v5341 = vld [vmem:[%s5331 + $0x48] sm:$0xff]
  %v5342 = vld [vmem:[%s5331 + $0x50] sm:$0xff]
  %v5343 = vld [vmem:[%s5331 + $0x58] sm:$0xff]
  %v5344 = vld [vmem:[%s5331 + $0x60] sm:$0xff]
  %v5345 = vld [vmem:[%s5331 + $0x68] sm:$0xff]
  %v5346 = vld [vmem:[%s5331 + $0x70] sm:$0xff]
  %v5347 = vld [vmem:[%s5331 + $0x78] sm:$0xff]
  %5349 = vset.pattern.permute.xlu0 0
  %5350 = vperm.xlu0 %5349, %v5332
  %v5351 = vpop.permute.xlu0 %5350
  %5354 = vset.pattern.permute.xlu0 0
  %5355 = vperm.xlu0 %5354, %v5333
  %v5356 = vpop.permute.xlu0 %5355
  %5359 = vset.pattern.permute.xlu0 0
  %5360 = vperm.xlu0 %5359, %v5334
  %v5361 = vpop.permute.xlu0 %5360
  %5364 = vset.pattern.permute.xlu0 0
  %5365 = vperm.xlu0 %5364, %v5335
  %v5366 = vpop.permute.xlu0 %5365
  %5369 = vset.pattern.permute.xlu0 0
  %5370 = vperm.xlu0 %5369, %v5336
  %v5371 = vpop.permute.xlu0 %5370
  %5374 = vset.pattern.permute.xlu0 0
  %5375 = vperm.xlu0 %5374, %v5337
  %v5376 = vpop.permute.xlu0 %5375
  %5379 = vset.pattern.permute.xlu0 0
  %5380 = vperm.xlu0 %5379, %v5338
  %v5381 = vpop.permute.xlu0 %5380
  %5384 = vset.pattern.permute.xlu0 0
  %5385 = vperm.xlu0 %5384, %v5339
  %v5386 = vpop.permute.xlu0 %5385
  %5389 = vset.pattern.permute.xlu0 0
  %5390 = vperm.xlu0 %5389, %v5340
  %v5391 = vpop.permute.xlu0 %5390
  %5394 = vset.pattern.permute.xlu0 0
  %5395 = vperm.xlu0 %5394, %v5341
  %v5396 = vpop.permute.xlu0 %5395
  %5399 = vset.pattern.permute.xlu0 0
  %5400 = vperm.xlu0 %5399, %v5342
  %v5401 = vpop.permute.xlu0 %5400
  %5404 = vset.pattern.permute.xlu0 0
  %5405 = vperm.xlu0 %5404, %v5343
  %v5406 = vpop.permute.xlu0 %5405
  %5409 = vset.pattern.permute.xlu0 0
  %5410 = vperm.xlu0 %5409, %v5344
  %v5411 = vpop.permute.xlu0 %5410
  %5414 = vset.pattern.permute.xlu0 0
  %5415 = vperm.xlu0 %5414, %v5345
  %v5416 = vpop.permute.xlu0 %5415
  %5419 = vset.pattern.permute.xlu0 0
  %5420 = vperm.xlu0 %5419, %v5346
  %v5421 = vpop.permute.xlu0 %5420
  %5424 = vset.pattern.permute.xlu0 0
  %5425 = vperm.xlu0 %5424, %v5347
  %v5426 = vpop.permute.xlu0 %5425
  %v5428 = vmul.f32 %v5330, %v5351
  %v5429 = vmul.f32 %v5329, %v5356
  %v5430 = vmul.f32 %v5328, %v5361
  %v5431 = vmul.f32 %v5327, %v5366
  %v5432 = vmul.f32 %v5326, %v5371
  %v5433 = vmul.f32 %v5325, %v5376
  %v5434 = vmul.f32 %v5324, %v5381
  %v5435 = vmul.f32 %v5323, %v5386
  %v5436 = vmul.f32 %v5322, %v5391
  %v5437 = vmul.f32 %v5321, %v5396
  %v5438 = vmul.f32 %v5320, %v5401
  %v5439 = vmul.f32 %v5319, %v5406
  %v5440 = vmul.f32 %v5318, %v5411
  %v5441 = vmul.f32 %v5317, %v5416
  %v5442 = vmul.f32 %v5316, %v5421
  %v5443 = vmul.f32 %v5315, %v5426
  %v5444 = vpack.c.bf16 %v5429, %v5428
  %v5445 = vpack.c.bf16 %v5431, %v5430
  %v5446 = vpack.c.bf16 %v5433, %v5432
  %v5447 = vpack.c.bf16 %v5435, %v5434
  %v5448 = vpack.c.bf16 %v5437, %v5436
  %v5449 = vpack.c.bf16 %v5439, %v5438
  %v5450 = vpack.c.bf16 %v5441, %v5440
  %v5451 = vpack.c.bf16 %v5443, %v5442
  %s5452 = scalar_lea.vmem %s9, 32
  %v5453 = vld [vmem:[%s5452] sm:$0xf]
  %v5454 = vld [vmem:[%s5452 + $0x4] sm:$0xf]
  %v5455 = vld [vmem:[%s5452 + $0x8] sm:$0xf]
  %v5456 = vld [vmem:[%s5452 + $0xc] sm:$0xf]
  %v5461 = vunpack.c.l.b16 %v5453
  %v5462 = vunpack.c.l.b16 %v5454
  %v5463 = vunpack.c.l.b16 %v5455
  %v5464 = vunpack.c.l.b16 %v5456
  %v5465 = vpack.c.b16 %v5462, %v5461
  %v5466 = vpack.c.b16 %v5464, %v5463
  %v5470 = vsel %vm249, %v5444, 0
  %v5473 = vsel %vm249, %v5445, 0
  %v5476 = vsel %vm249, %v5446, 0
  %v5479 = vsel %vm249, %v5447, 0
  %v5482 = vsel %vm249, %v5448, 0
  %v5485 = vsel %vm249, %v5449, 0
  %v5488 = vsel %vm249, %v5450, 0
  %v5491 = vsel %vm249, %v5451, 0
  %5493 = vmatpush.bf16.msra.mxu0 0
  %5494 = vmatpush.bf16.msra.mxu0 0
  %5495 = vmatpush.bf16.msra.mxu0 0
  %5496 = vmatpush.bf16.msra.mxu0 0
  %5497 = vmatpush.bf16.msra.mxu0 0
  %5498 = vmatpush.bf16.msra.mxu0 0
  %5499 = vmatpush.bf16.msra.mxu0 %v5466
  %5500 = vmatpush.bf16.msra.mxu0 %v5465
  %5501 = vmatmul.bf16.gmra.mxu0 %v5470
  %v5502 = vpop.f32.mrf.mxu0
  %v5503 = vadd.f32 0.0, %v5502
  %v5504 = vpop.f32.mrf.mxu0
  %v5505 = vadd.f32 0.0, %v5504
  %5506 = vmatmul.bf16.gmra.mxu0 %v5473
  %v5507 = vpop.f32.mrf.mxu0
  %v5508 = vadd.f32 0.0, %v5507
  %v5509 = vpop.f32.mrf.mxu0
  %v5510 = vadd.f32 0.0, %v5509
  %5511 = vmatmul.bf16.gmra.mxu0 %v5476
  %v5512 = vpop.f32.mrf.mxu0
  %v5513 = vadd.f32 0.0, %v5512
  %v5514 = vpop.f32.mrf.mxu0
  %v5515 = vadd.f32 0.0, %v5514
  %5516 = vmatmul.bf16.gmra.mxu0 %v5479
  %v5517 = vpop.f32.mrf.mxu0
  %v5518 = vadd.f32 0.0, %v5517
  %v5519 = vpop.f32.mrf.mxu0
  %v5520 = vadd.f32 0.0, %v5519
  %5521 = vmatmul.bf16.gmra.mxu0 %v5482
  %v5522 = vpop.f32.mrf.mxu0
  %v5523 = vadd.f32 0.0, %v5522
  %v5524 = vpop.f32.mrf.mxu0
  %v5525 = vadd.f32 0.0, %v5524
  %5526 = vmatmul.bf16.gmra.mxu0 %v5485
  %v5527 = vpop.f32.mrf.mxu0
  %v5528 = vadd.f32 0.0, %v5527
  %v5529 = vpop.f32.mrf.mxu0
  %v5530 = vadd.f32 0.0, %v5529
  %5531 = vmatmul.bf16.gmra.mxu0 %v5488
  %v5532 = vpop.f32.mrf.mxu0
  %v5533 = vadd.f32 0.0, %v5532
  %v5534 = vpop.f32.mrf.mxu0
  %v5535 = vadd.f32 0.0, %v5534
  %5536 = vmatmul.bf16.gmra.mxu0 %v5491
  %v5537 = vpop.f32.mrf.mxu0
  %v5538 = vadd.f32 0.0, %v5537
  %v5539 = vpop.f32.mrf.mxu0
  %v5540 = vadd.f32 0.0, %v5539
  %5541 = vdwg.mxu0
  %v5542 = vadd.f32 %v5259, %v5503
  %v5543 = vadd.f32 %v5261, %v5505
  %v5544 = vadd.f32 %v5264, %v5508
  %v5545 = vadd.f32 %v5266, %v5510
  %v5546 = vadd.f32 %v5269, %v5513
  %v5547 = vadd.f32 %v5271, %v5515
  %v5548 = vadd.f32 %v5274, %v5518
  %v5549 = vadd.f32 %v5276, %v5520
  %v5550 = vadd.f32 %v5279, %v5523
  %v5551 = vadd.f32 %v5281, %v5525
  %v5552 = vadd.f32 %v5284, %v5528
  %v5553 = vadd.f32 %v5286, %v5530
  %v5554 = vadd.f32 %v5289, %v5533
  %v5555 = vadd.f32 %v5291, %v5535
  %v5556 = vadd.f32 %v5294, %v5538
  %v5557 = vadd.f32 %v5296, %v5540
  %s5558 = scalar_lea.vmem %s2, 384
  %v5559 = vld [vmem:[%s5558] sm:$0xff]
  %v5560 = vld [vmem:[%s5558 + $0x8] sm:$0xff]
  %v5561 = vld [vmem:[%s5558 + $0x10] sm:$0xff]
  %v5562 = vld [vmem:[%s5558 + $0x18] sm:$0xff]
  %v5563 = vld [vmem:[%s5558 + $0x20] sm:$0xff]
  %v5564 = vld [vmem:[%s5558 + $0x28] sm:$0xff]
  %v5565 = vld [vmem:[%s5558 + $0x30] sm:$0xff]
  %v5566 = vld [vmem:[%s5558 + $0x38] sm:$0xff]
  %v5567 = vld [vmem:[%s5558 + $0x40] sm:$0xff]
  %v5568 = vld [vmem:[%s5558 + $0x48] sm:$0xff]
  %v5569 = vld [vmem:[%s5558 + $0x50] sm:$0xff]
  %v5570 = vld [vmem:[%s5558 + $0x58] sm:$0xff]
  %v5571 = vld [vmem:[%s5558 + $0x60] sm:$0xff]
  %v5572 = vld [vmem:[%s5558 + $0x68] sm:$0xff]
  %v5573 = vld [vmem:[%s5558 + $0x70] sm:$0xff]
  %v5574 = vld [vmem:[%s5558 + $0x78] sm:$0xff]
  %5576 = vset.pattern.permute.xlu0 0
  %5577 = vperm.xlu0 %5576, %v5559
  %v5578 = vpop.permute.xlu0 %5577
  %5581 = vset.pattern.permute.xlu0 0
  %5582 = vperm.xlu0 %5581, %v5560
  %v5583 = vpop.permute.xlu0 %5582
  %5586 = vset.pattern.permute.xlu0 0
  %5587 = vperm.xlu0 %5586, %v5561
  %v5588 = vpop.permute.xlu0 %5587
  %5591 = vset.pattern.permute.xlu0 0
  %5592 = vperm.xlu0 %5591, %v5562
  %v5593 = vpop.permute.xlu0 %5592
  %5596 = vset.pattern.permute.xlu0 0
  %5597 = vperm.xlu0 %5596, %v5563
  %v5598 = vpop.permute.xlu0 %5597
  %5601 = vset.pattern.permute.xlu0 0
  %5602 = vperm.xlu0 %5601, %v5564
  %v5603 = vpop.permute.xlu0 %5602
  %5606 = vset.pattern.permute.xlu0 0
  %5607 = vperm.xlu0 %5606, %v5565
  %v5608 = vpop.permute.xlu0 %5607
  %5611 = vset.pattern.permute.xlu0 0
  %5612 = vperm.xlu0 %5611, %v5566
  %v5613 = vpop.permute.xlu0 %5612
  %5616 = vset.pattern.permute.xlu0 0
  %5617 = vperm.xlu0 %5616, %v5567
  %v5618 = vpop.permute.xlu0 %5617
  %5621 = vset.pattern.permute.xlu0 0
  %5622 = vperm.xlu0 %5621, %v5568
  %v5623 = vpop.permute.xlu0 %5622
  %5626 = vset.pattern.permute.xlu0 0
  %5627 = vperm.xlu0 %5626, %v5569
  %v5628 = vpop.permute.xlu0 %5627
  %5631 = vset.pattern.permute.xlu0 0
  %5632 = vperm.xlu0 %5631, %v5570
  %v5633 = vpop.permute.xlu0 %5632
  %5636 = vset.pattern.permute.xlu0 0
  %5637 = vperm.xlu0 %5636, %v5571
  %v5638 = vpop.permute.xlu0 %5637
  %5641 = vset.pattern.permute.xlu0 0
  %5642 = vperm.xlu0 %5641, %v5572
  %v5643 = vpop.permute.xlu0 %5642
  %5646 = vset.pattern.permute.xlu0 0
  %5647 = vperm.xlu0 %5646, %v5573
  %v5648 = vpop.permute.xlu0 %5647
  %5651 = vset.pattern.permute.xlu0 0
  %5652 = vperm.xlu0 %5651, %v5574
  %v5653 = vpop.permute.xlu0 %5652
  %v5655 = vmul.f32 %v4877, %v5578
  %v5656 = vmul.f32 %v4876, %v5583
  %v5657 = vmul.f32 %v4875, %v5588
  %v5658 = vmul.f32 %v4874, %v5593
  %v5659 = vmul.f32 %v4873, %v5598
  %v5660 = vmul.f32 %v4872, %v5603
  %v5661 = vmul.f32 %v4871, %v5608
  %v5662 = vmul.f32 %v4870, %v5613
  %v5663 = vmul.f32 %v4869, %v5618
  %v5664 = vmul.f32 %v4868, %v5623
  %v5665 = vmul.f32 %v4867, %v5628
  %v5666 = vmul.f32 %v4866, %v5633
  %v5667 = vmul.f32 %v4865, %v5638
  %v5668 = vmul.f32 %v4864, %v5643
  %v5669 = vmul.f32 %v4863, %v5648
  %v5670 = vmul.f32 %v4862, %v5653
  %v5671 = vpack.c.bf16 %v5656, %v5655
  %v5672 = vpack.c.bf16 %v5658, %v5657
  %v5673 = vpack.c.bf16 %v5660, %v5659
  %v5674 = vpack.c.bf16 %v5662, %v5661
  %v5675 = vpack.c.bf16 %v5664, %v5663
  %v5676 = vpack.c.bf16 %v5666, %v5665
  %v5677 = vpack.c.bf16 %v5668, %v5667
  %v5678 = vpack.c.bf16 %v5670, %v5669
  %s5679 = scalar_lea.vmem %s9, 48
  %v5680 = vld [vmem:[%s5679] sm:$0xf]
  %v5681 = vld [vmem:[%s5679 + $0x4] sm:$0xf]
  %v5682 = vld [vmem:[%s5679 + $0x8] sm:$0xf]
  %v5683 = vld [vmem:[%s5679 + $0xc] sm:$0xf]
  %v5688 = vunpack.c.l.b16 %v5680
  %v5689 = vunpack.c.l.b16 %v5681
  %v5690 = vunpack.c.l.b16 %v5682
  %v5691 = vunpack.c.l.b16 %v5683
  %v5692 = vpack.c.b16 %v5689, %v5688
  %v5693 = vpack.c.b16 %v5691, %v5690
  %v5697 = vsel %vm249, %v5671, 0
  %v5700 = vsel %vm249, %v5672, 0
  %v5703 = vsel %vm249, %v5673, 0
  %v5706 = vsel %vm249, %v5674, 0
  %v5709 = vsel %vm249, %v5675, 0
  %v5712 = vsel %vm249, %v5676, 0
  %v5715 = vsel %vm249, %v5677, 0
  %v5718 = vsel %vm249, %v5678, 0
  %5720 = vmatpush.bf16.msra.mxu0 0
  %5721 = vmatpush.bf16.msra.mxu0 0
  %5722 = vmatpush.bf16.msra.mxu0 0
  %5723 = vmatpush.bf16.msra.mxu0 0
  %5724 = vmatpush.bf16.msra.mxu0 0
  %5725 = vmatpush.bf16.msra.mxu0 0
  %5726 = vmatpush.bf16.msra.mxu0 %v5693
  %5727 = vmatpush.bf16.msra.mxu0 %v5692
  %5728 = vmatmul.bf16.gmra.mxu0 %v5697
  %v5729 = vpop.f32.mrf.mxu0
  %v5730 = vadd.f32 0.0, %v5729
  %v5731 = vpop.f32.mrf.mxu0
  %v5732 = vadd.f32 0.0, %v5731
  %5733 = vmatmul.bf16.gmra.mxu0 %v5700
  %v5734 = vpop.f32.mrf.mxu0
  %v5735 = vadd.f32 0.0, %v5734
  %v5736 = vpop.f32.mrf.mxu0
  %v5737 = vadd.f32 0.0, %v5736
  %5738 = vmatmul.bf16.gmra.mxu0 %v5703
  %v5739 = vpop.f32.mrf.mxu0
  %v5740 = vadd.f32 0.0, %v5739
  %v5741 = vpop.f32.mrf.mxu0
  %v5742 = vadd.f32 0.0, %v5741
  %5743 = vmatmul.bf16.gmra.mxu0 %v5706
  %v5744 = vpop.f32.mrf.mxu0
  %v5745 = vadd.f32 0.0, %v5744
  %v5746 = vpop.f32.mrf.mxu0
  %v5747 = vadd.f32 0.0, %v5746
  %5748 = vmatmul.bf16.gmra.mxu0 %v5709
  %v5749 = vpop.f32.mrf.mxu0
  %v5750 = vadd.f32 0.0, %v5749
  %v5751 = vpop.f32.mrf.mxu0
  %v5752 = vadd.f32 0.0, %v5751
  %5753 = vmatmul.bf16.gmra.mxu0 %v5712
  %v5754 = vpop.f32.mrf.mxu0
  %v5755 = vadd.f32 0.0, %v5754
  %v5756 = vpop.f32.mrf.mxu0
  %v5757 = vadd.f32 0.0, %v5756
  %5758 = vmatmul.bf16.gmra.mxu0 %v5715
  %v5759 = vpop.f32.mrf.mxu0
  %v5760 = vadd.f32 0.0, %v5759
  %v5761 = vpop.f32.mrf.mxu0
  %v5762 = vadd.f32 0.0, %v5761
  %5763 = vmatmul.bf16.gmra.mxu0 %v5718
  %v5764 = vpop.f32.mrf.mxu0
  %v5765 = vadd.f32 0.0, %v5764
  %v5766 = vpop.f32.mrf.mxu0
  %v5767 = vadd.f32 0.0, %v5766
  %5768 = vdwg.mxu0
  %v5769 = vadd.f32 %v5542, %v5730
  %v5770 = vadd.f32 %v5543, %v5732
  %v5771 = vadd.f32 %v5544, %v5735
  %v5772 = vadd.f32 %v5545, %v5737
  %v5773 = vadd.f32 %v5546, %v5740
  %v5774 = vadd.f32 %v5547, %v5742
  %v5775 = vadd.f32 %v5548, %v5745
  %v5776 = vadd.f32 %v5549, %v5747
  %v5777 = vadd.f32 %v5550, %v5750
  %v5778 = vadd.f32 %v5551, %v5752
  %v5779 = vadd.f32 %v5552, %v5755
  %v5780 = vadd.f32 %v5553, %v5757
  %v5781 = vadd.f32 %v5554, %v5760
  %v5782 = vadd.f32 %v5555, %v5762
  %v5783 = vadd.f32 %v5556, %v5765
  %v5784 = vadd.f32 %v5557, %v5767
  %v5785 = vpack.c.bf16 %v4827, %v4826
  %v5786 = vpack.c.bf16 %v4829, %v4828
  %v5787 = vpack.c.bf16 %v4831, %v4830
  %v5788 = vpack.c.bf16 %v4833, %v4832
  %v5789 = vpack.c.bf16 %v4835, %v4834
  %v5790 = vpack.c.bf16 %v4837, %v4836
  %v5791 = vpack.c.bf16 %v4839, %v4838
  %v5792 = vpack.c.bf16 %v4841, %v4840
  %s5793 = scalar_lea.vmem %s9, 64
  %v5794 = vld [vmem:[%s5793] sm:$0xf]
  %v5795 = vld [vmem:[%s5793 + $0x4] sm:$0xf]
  %v5796 = vld [vmem:[%s5793 + $0x8] sm:$0xf]
  %v5797 = vld [vmem:[%s5793 + $0xc] sm:$0xf]
  %v5802 = vunpack.c.l.b16 %v5794
  %v5803 = vunpack.c.l.b16 %v5795
  %v5804 = vunpack.c.l.b16 %v5796
  %v5805 = vunpack.c.l.b16 %v5797
  %v5806 = vpack.c.b16 %v5803, %v5802
  %v5807 = vpack.c.b16 %v5805, %v5804
  %v5811 = vsel %vm249, %v5785, 0
  %v5814 = vsel %vm249, %v5786, 0
  %v5817 = vsel %vm249, %v5787, 0
  %v5820 = vsel %vm249, %v5788, 0
  %v5823 = vsel %vm249, %v5789, 0
  %v5826 = vsel %vm249, %v5790, 0
  %v5829 = vsel %vm249, %v5791, 0
  %v5832 = vsel %vm249, %v5792, 0
  %5834 = vmatpush.bf16.msra.mxu0 0
  %5835 = vmatpush.bf16.msra.mxu0 0
  %5836 = vmatpush.bf16.msra.mxu0 0
  %5837 = vmatpush.bf16.msra.mxu0 0
  %5838 = vmatpush.bf16.msra.mxu0 0
  %5839 = vmatpush.bf16.msra.mxu0 0
  %5840 = vmatpush.bf16.msra.mxu0 %v5807
  %5841 = vmatpush.bf16.msra.mxu0 %v5806
  %5842 = vmatmul.bf16.gmra.mxu0 %v5811
  %v5843 = vpop.f32.mrf.mxu0
  %v5844 = vadd.f32 0.0, %v5843
  %v5845 = vpop.f32.mrf.mxu0
  %v5846 = vadd.f32 0.0, %v5845
  %5847 = vmatmul.bf16.gmra.mxu0 %v5814
  %v5848 = vpop.f32.mrf.mxu0
  %v5849 = vadd.f32 0.0, %v5848
  %v5850 = vpop.f32.mrf.mxu0
  %v5851 = vadd.f32 0.0, %v5850
  %5852 = vmatmul.bf16.gmra.mxu0 %v5817
  %v5853 = vpop.f32.mrf.mxu0
  %v5854 = vadd.f32 0.0, %v5853
  %v5855 = vpop.f32.mrf.mxu0
  %v5856 = vadd.f32 0.0, %v5855
  %5857 = vmatmul.bf16.gmra.mxu0 %v5820
  %v5858 = vpop.f32.mrf.mxu0
  %v5859 = vadd.f32 0.0, %v5858
  %v5860 = vpop.f32.mrf.mxu0
  %v5861 = vadd.f32 0.0, %v5860
  %5862 = vmatmul.bf16.gmra.mxu0 %v5823
  %v5863 = vpop.f32.mrf.mxu0
  %v5864 = vadd.f32 0.0, %v5863
  %v5865 = vpop.f32.mrf.mxu0
  %v5866 = vadd.f32 0.0, %v5865
  %5867 = vmatmul.bf16.gmra.mxu0 %v5826
  %v5868 = vpop.f32.mrf.mxu0
  %v5869 = vadd.f32 0.0, %v5868
  %v5870 = vpop.f32.mrf.mxu0
  %v5871 = vadd.f32 0.0, %v5870
  %5872 = vmatmul.bf16.gmra.mxu0 %v5829
  %v5873 = vpop.f32.mrf.mxu0
  %v5874 = vadd.f32 0.0, %v5873
  %v5875 = vpop.f32.mrf.mxu0
  %v5876 = vadd.f32 0.0, %v5875
  %5877 = vmatmul.bf16.gmra.mxu0 %v5832
  %v5878 = vpop.f32.mrf.mxu0
  %v5879 = vadd.f32 0.0, %v5878
  %v5880 = vpop.f32.mrf.mxu0
  %v5881 = vadd.f32 0.0, %v5880
  %5882 = vdwg.mxu0
  %v5883 = vadd.f32 %v5769, %v5844
  %v5884 = vadd.f32 %v5770, %v5846
  %v5885 = vadd.f32 %v5771, %v5849
  %v5886 = vadd.f32 %v5772, %v5851
  %v5887 = vadd.f32 %v5773, %v5854
  %v5888 = vadd.f32 %v5774, %v5856
  %v5889 = vadd.f32 %v5775, %v5859
  %v5890 = vadd.f32 %v5776, %v5861
  %v5891 = vadd.f32 %v5777, %v5864
  %v5892 = vadd.f32 %v5778, %v5866
  %v5893 = vadd.f32 %v5779, %v5869
  %v5894 = vadd.f32 %v5780, %v5871
  %v5895 = vadd.f32 %v5781, %v5874
  %v5896 = vadd.f32 %v5782, %v5876
  %v5897 = vadd.f32 %v5783, %v5879
  %v5898 = vadd.f32 %v5784, %v5881
  %s5899 = scalar_lea.vmem %s2, 640
  %v5900 = vld [vmem:[%s5899] sm:$0xff]
  %v5901 = vld [vmem:[%s5899 + $0x8] sm:$0xff]
  %v5902 = vld [vmem:[%s5899 + $0x10] sm:$0xff]
  %v5903 = vld [vmem:[%s5899 + $0x18] sm:$0xff]
  %v5904 = vld [vmem:[%s5899 + $0x20] sm:$0xff]
  %v5905 = vld [vmem:[%s5899 + $0x28] sm:$0xff]
  %v5906 = vld [vmem:[%s5899 + $0x30] sm:$0xff]
  %v5907 = vld [vmem:[%s5899 + $0x38] sm:$0xff]
  %v5908 = vld [vmem:[%s5899 + $0x40] sm:$0xff]
  %v5909 = vld [vmem:[%s5899 + $0x48] sm:$0xff]
  %v5910 = vld [vmem:[%s5899 + $0x50] sm:$0xff]
  %v5911 = vld [vmem:[%s5899 + $0x58] sm:$0xff]
  %v5912 = vld [vmem:[%s5899 + $0x60] sm:$0xff]
  %v5913 = vld [vmem:[%s5899 + $0x68] sm:$0xff]
  %v5914 = vld [vmem:[%s5899 + $0x70] sm:$0xff]
  %v5915 = vld [vmem:[%s5899 + $0x78] sm:$0xff]
  %5917 = vset.pattern.permute.xlu0 0
  %5918 = vperm.xlu0 %5917, %v5900
  %v5919 = vpop.permute.xlu0 %5918
  %5922 = vset.pattern.permute.xlu0 0
  %5923 = vperm.xlu0 %5922, %v5901
  %v5924 = vpop.permute.xlu0 %5923
  %5927 = vset.pattern.permute.xlu0 0
  %5928 = vperm.xlu0 %5927, %v5902
  %v5929 = vpop.permute.xlu0 %5928
  %5932 = vset.pattern.permute.xlu0 0
  %5933 = vperm.xlu0 %5932, %v5903
  %v5934 = vpop.permute.xlu0 %5933
  %5937 = vset.pattern.permute.xlu0 0
  %5938 = vperm.xlu0 %5937, %v5904
  %v5939 = vpop.permute.xlu0 %5938
  %5942 = vset.pattern.permute.xlu0 0
  %5943 = vperm.xlu0 %5942, %v5905
  %v5944 = vpop.permute.xlu0 %5943
  %5947 = vset.pattern.permute.xlu0 0
  %5948 = vperm.xlu0 %5947, %v5906
  %v5949 = vpop.permute.xlu0 %5948
  %5952 = vset.pattern.permute.xlu0 0
  %5953 = vperm.xlu0 %5952, %v5907
  %v5954 = vpop.permute.xlu0 %5953
  %5957 = vset.pattern.permute.xlu0 0
  %5958 = vperm.xlu0 %5957, %v5908
  %v5959 = vpop.permute.xlu0 %5958
  %5962 = vset.pattern.permute.xlu0 0
  %5963 = vperm.xlu0 %5962, %v5909
  %v5964 = vpop.permute.xlu0 %5963
  %5967 = vset.pattern.permute.xlu0 0
  %5968 = vperm.xlu0 %5967, %v5910
  %v5969 = vpop.permute.xlu0 %5968
  %5972 = vset.pattern.permute.xlu0 0
  %5973 = vperm.xlu0 %5972, %v5911
  %v5974 = vpop.permute.xlu0 %5973
  %5977 = vset.pattern.permute.xlu0 0
  %5978 = vperm.xlu0 %5977, %v5912
  %v5979 = vpop.permute.xlu0 %5978
  %5982 = vset.pattern.permute.xlu0 0
  %5983 = vperm.xlu0 %5982, %v5913
  %v5984 = vpop.permute.xlu0 %5983
  %5987 = vset.pattern.permute.xlu0 0
  %5988 = vperm.xlu0 %5987, %v5914
  %v5989 = vpop.permute.xlu0 %5988
  %5992 = vset.pattern.permute.xlu0 0
  %5993 = vperm.xlu0 %5992, %v5915
  %v5994 = vpop.permute.xlu0 %5993
  %v5996 = vmul.f32 %v5329, %v5919
  %v5997 = vmul.f32 %v5328, %v5924
  %v5998 = vmul.f32 %v5327, %v5929
  %v5999 = vmul.f32 %v5326, %v5934
  %v6000 = vmul.f32 %v5325, %v5939
  %v6001 = vmul.f32 %v5324, %v5944
  %v6002 = vmul.f32 %v5323, %v5949
  %v6003 = vmul.f32 %v5322, %v5954
  %v6004 = vmul.f32 %v5321, %v5959
  %v6005 = vmul.f32 %v5320, %v5964
  %v6006 = vmul.f32 %v5319, %v5969
  %v6007 = vmul.f32 %v5318, %v5974
  %v6008 = vmul.f32 %v5317, %v5979
  %v6009 = vmul.f32 %v5316, %v5984
  %v6010 = vmul.f32 %v5315, %v5989
  %v6011 = vmul.f32 %v5330, %v5994
  %v6012 = vpack.c.bf16 %v5997, %v5996
  %v6013 = vpack.c.bf16 %v5999, %v5998
  %v6014 = vpack.c.bf16 %v6001, %v6000
  %v6015 = vpack.c.bf16 %v6003, %v6002
  %v6016 = vpack.c.bf16 %v6005, %v6004
  %v6017 = vpack.c.bf16 %v6007, %v6006
  %v6018 = vpack.c.bf16 %v6009, %v6008
  %v6019 = vpack.c.bf16 %v6011, %v6010
  %s6020 = scalar_lea.vmem %s9, 80
  %v6021 = vld [vmem:[%s6020] sm:$0xf]
  %v6022 = vld [vmem:[%s6020 + $0x4] sm:$0xf]
  %v6023 = vld [vmem:[%s6020 + $0x8] sm:$0xf]
  %v6024 = vld [vmem:[%s6020 + $0xc] sm:$0xf]
  %v6029 = vunpack.c.l.b16 %v6021
  %v6030 = vunpack.c.l.b16 %v6022
  %v6031 = vunpack.c.l.b16 %v6023
  %v6032 = vunpack.c.l.b16 %v6024
  %v6033 = vpack.c.b16 %v6030, %v6029
  %v6034 = vpack.c.b16 %v6032, %v6031
  %v6038 = vsel %vm249, %v6012, 0
  %v6041 = vsel %vm249, %v6013, 0
  %v6044 = vsel %vm249, %v6014, 0
  %v6047 = vsel %vm249, %v6015, 0
  %v6050 = vsel %vm249, %v6016, 0
  %v6053 = vsel %vm249, %v6017, 0
  %v6056 = vsel %vm249, %v6018, 0
  %v6059 = vsel %vm249, %v6019, 0
  %6061 = vmatpush.bf16.msra.mxu0 0
  %6062 = vmatpush.bf16.msra.mxu0 0
  %6063 = vmatpush.bf16.msra.mxu0 0
  %6064 = vmatpush.bf16.msra.mxu0 0
  %6065 = vmatpush.bf16.msra.mxu0 0
  %6066 = vmatpush.bf16.msra.mxu0 0
  %6067 = vmatpush.bf16.msra.mxu0 %v6034
  %6068 = vmatpush.bf16.msra.mxu0 %v6033
  %6069 = vmatmul.bf16.gmra.mxu0 %v6038
  %v6070 = vpop.f32.mrf.mxu0
  %v6071 = vadd.f32 0.0, %v6070
  %v6072 = vpop.f32.mrf.mxu0
  %v6073 = vadd.f32 0.0, %v6072
  %6074 = vmatmul.bf16.gmra.mxu0 %v6041
  %v6075 = vpop.f32.mrf.mxu0
  %v6076 = vadd.f32 0.0, %v6075
  %v6077 = vpop.f32.mrf.mxu0
  %v6078 = vadd.f32 0.0, %v6077
  %6079 = vmatmul.bf16.gmra.mxu0 %v6044
  %v6080 = vpop.f32.mrf.mxu0
  %v6081 = vadd.f32 0.0, %v6080
  %v6082 = vpop.f32.mrf.mxu0
  %v6083 = vadd.f32 0.0, %v6082
  %6084 = vmatmul.bf16.gmra.mxu0 %v6047
  %v6085 = vpop.f32.mrf.mxu0
  %v6086 = vadd.f32 0.0, %v6085
  %v6087 = vpop.f32.mrf.mxu0
  %v6088 = vadd.f32 0.0, %v6087
  %6089 = vmatmul.bf16.gmra.mxu0 %v6050
  %v6090 = vpop.f32.mrf.mxu0
  %v6091 = vadd.f32 0.0, %v6090
  %v6092 = vpop.f32.mrf.mxu0
  %v6093 = vadd.f32 0.0, %v6092
  %6094 = vmatmul.bf16.gmra.mxu0 %v6053
  %v6095 = vpop.f32.mrf.mxu0
  %v6096 = vadd.f32 0.0, %v6095
  %v6097 = vpop.f32.mrf.mxu0
  %v6098 = vadd.f32 0.0, %v6097
  %6099 = vmatmul.bf16.gmra.mxu0 %v6056
  %v6100 = vpop.f32.mrf.mxu0
  %v6101 = vadd.f32 0.0, %v6100
  %v6102 = vpop.f32.mrf.mxu0
  %v6103 = vadd.f32 0.0, %v6102
  %6104 = vmatmul.bf16.gmra.mxu0 %v6059
  %v6105 = vpop.f32.mrf.mxu0
  %v6106 = vadd.f32 0.0, %v6105
  %v6107 = vpop.f32.mrf.mxu0
  %v6108 = vadd.f32 0.0, %v6107
  %6109 = vdwg.mxu0
  %v6110 = vadd.f32 %v5883, %v6071
  %v6111 = vadd.f32 %v5884, %v6073
  %v6112 = vadd.f32 %v5885, %v6076
  %v6113 = vadd.f32 %v5886, %v6078
  %v6114 = vadd.f32 %v5887, %v6081
  %v6115 = vadd.f32 %v5888, %v6083
  %v6116 = vadd.f32 %v5889, %v6086
  %v6117 = vadd.f32 %v5890, %v6088
  %v6118 = vadd.f32 %v5891, %v6091
  %v6119 = vadd.f32 %v5892, %v6093
  %v6120 = vadd.f32 %v5893, %v6096
  %v6121 = vadd.f32 %v5894, %v6098
  %v6122 = vadd.f32 %v5895, %v6101
  %v6123 = vadd.f32 %v5896, %v6103
  %v6124 = vadd.f32 %v5897, %v6106
  %v6125 = vadd.f32 %v5898, %v6108
  %s6126 = scalar_lea.vmem %s2, 768
  %v6127 = vld [vmem:[%s6126] sm:$0xff]
  %v6128 = vld [vmem:[%s6126 + $0x8] sm:$0xff]
  %v6129 = vld [vmem:[%s6126 + $0x10] sm:$0xff]
  %v6130 = vld [vmem:[%s6126 + $0x18] sm:$0xff]
  %v6131 = vld [vmem:[%s6126 + $0x20] sm:$0xff]
  %v6132 = vld [vmem:[%s6126 + $0x28] sm:$0xff]
  %v6133 = vld [vmem:[%s6126 + $0x30] sm:$0xff]
  %v6134 = vld [vmem:[%s6126 + $0x38] sm:$0xff]
  %v6135 = vld [vmem:[%s6126 + $0x40] sm:$0xff]
  %v6136 = vld [vmem:[%s6126 + $0x48] sm:$0xff]
  %v6137 = vld [vmem:[%s6126 + $0x50] sm:$0xff]
  %v6138 = vld [vmem:[%s6126 + $0x58] sm:$0xff]
  %v6139 = vld [vmem:[%s6126 + $0x60] sm:$0xff]
  %v6140 = vld [vmem:[%s6126 + $0x68] sm:$0xff]
  %v6141 = vld [vmem:[%s6126 + $0x70] sm:$0xff]
  %v6142 = vld [vmem:[%s6126 + $0x78] sm:$0xff]
  %6144 = vset.pattern.permute.xlu0 0
  %6145 = vperm.xlu0 %6144, %v6127
  %v6146 = vpop.permute.xlu0 %6145
  %6149 = vset.pattern.permute.xlu0 0
  %6150 = vperm.xlu0 %6149, %v6128
  %v6151 = vpop.permute.xlu0 %6150
  %6154 = vset.pattern.permute.xlu0 0
  %6155 = vperm.xlu0 %6154, %v6129
  %v6156 = vpop.permute.xlu0 %6155
  %6159 = vset.pattern.permute.xlu0 0
  %6160 = vperm.xlu0 %6159, %v6130
  %v6161 = vpop.permute.xlu0 %6160
  %6164 = vset.pattern.permute.xlu0 0
  %6165 = vperm.xlu0 %6164, %v6131
  %v6166 = vpop.permute.xlu0 %6165
  %6169 = vset.pattern.permute.xlu0 0
  %6170 = vperm.xlu0 %6169, %v6132
  %v6171 = vpop.permute.xlu0 %6170
  %6174 = vset.pattern.permute.xlu0 0
  %6175 = vperm.xlu0 %6174, %v6133
  %v6176 = vpop.permute.xlu0 %6175
  %6179 = vset.pattern.permute.xlu0 0
  %6180 = vperm.xlu0 %6179, %v6134
  %v6181 = vpop.permute.xlu0 %6180
  %6184 = vset.pattern.permute.xlu0 0
  %6185 = vperm.xlu0 %6184, %v6135
  %v6186 = vpop.permute.xlu0 %6185
  %6189 = vset.pattern.permute.xlu0 0
  %6190 = vperm.xlu0 %6189, %v6136
  %v6191 = vpop.permute.xlu0 %6190
  %6194 = vset.pattern.permute.xlu0 0
  %6195 = vperm.xlu0 %6194, %v6137
  %v6196 = vpop.permute.xlu0 %6195
  %6199 = vset.pattern.permute.xlu0 0
  %6200 = vperm.xlu0 %6199, %v6138
  %v6201 = vpop.permute.xlu0 %6200
  %6204 = vset.pattern.permute.xlu0 0
  %6205 = vperm.xlu0 %6204, %v6139
  %v6206 = vpop.permute.xlu0 %6205
  %6209 = vset.pattern.permute.xlu0 0
  %6210 = vperm.xlu0 %6209, %v6140
  %v6211 = vpop.permute.xlu0 %6210
  %6214 = vset.pattern.permute.xlu0 0
  %6215 = vperm.xlu0 %6214, %v6141
  %v6216 = vpop.permute.xlu0 %6215
  %6219 = vset.pattern.permute.xlu0 0
  %6220 = vperm.xlu0 %6219, %v6142
  %v6221 = vpop.permute.xlu0 %6220
  %v6223 = vmul.f32 %v4876, %v6146
  %v6224 = vmul.f32 %v4875, %v6151
  %v6225 = vmul.f32 %v4874, %v6156
  %v6226 = vmul.f32 %v4873, %v6161
  %v6227 = vmul.f32 %v4872, %v6166
  %v6228 = vmul.f32 %v4871, %v6171
  %v6229 = vmul.f32 %v4870, %v6176
  %v6230 = vmul.f32 %v4869, %v6181
  %v6231 = vmul.f32 %v4868, %v6186
  %v6232 = vmul.f32 %v4867, %v6191
  %v6233 = vmul.f32 %v4866, %v6196
  %v6234 = vmul.f32 %v4865, %v6201
  %v6235 = vmul.f32 %v4864, %v6206
  %v6236 = vmul.f32 %v4863, %v6211
  %v6237 = vmul.f32 %v4862, %v6216
  %v6238 = vmul.f32 %v4877, %v6221
  %v6239 = vpack.c.bf16 %v6224, %v6223
  %v6240 = vpack.c.bf16 %v6226, %v6225
  %v6241 = vpack.c.bf16 %v6228, %v6227
  %v6242 = vpack.c.bf16 %v6230, %v6229
  %v6243 = vpack.c.bf16 %v6232, %v6231
  %v6244 = vpack.c.bf16 %v6234, %v6233
  %v6245 = vpack.c.bf16 %v6236, %v6235
  %v6246 = vpack.c.bf16 %v6238, %v6237
  %s6247 = scalar_lea.vmem %s9, 96
  %v6248 = vld [vmem:[%s6247] sm:$0xf]
  %v6249 = vld [vmem:[%s6247 + $0x4] sm:$0xf]
  %v6250 = vld [vmem:[%s6247 + $0x8] sm:$0xf]
  %v6251 = vld [vmem:[%s6247 + $0xc] sm:$0xf]
  %v6256 = vunpack.c.l.b16 %v6248
  %v6257 = vunpack.c.l.b16 %v6249
  %v6258 = vunpack.c.l.b16 %v6250
  %v6259 = vunpack.c.l.b16 %v6251
  %v6260 = vpack.c.b16 %v6257, %v6256
  %v6261 = vpack.c.b16 %v6259, %v6258
  %v6265 = vsel %vm249, %v6239, 0
  %v6268 = vsel %vm249, %v6240, 0
  %v6271 = vsel %vm249, %v6241, 0
  %v6274 = vsel %vm249, %v6242, 0
  %v6277 = vsel %vm249, %v6243, 0
  %v6280 = vsel %vm249, %v6244, 0
  %v6283 = vsel %vm249, %v6245, 0
  %v6286 = vsel %vm249, %v6246, 0
  %6288 = vmatpush.bf16.msra.mxu0 0
  %6289 = vmatpush.bf16.msra.mxu0 0
  %6290 = vmatpush.bf16.msra.mxu0 0
  %6291 = vmatpush.bf16.msra.mxu0 0
  %6292 = vmatpush.bf16.msra.mxu0 0
  %6293 = vmatpush.bf16.msra.mxu0 0
  %6294 = vmatpush.bf16.msra.mxu0 %v6261
  %6295 = vmatpush.bf16.msra.mxu0 %v6260
  %6296 = vmatmul.bf16.gmra.mxu0 %v6265
  %v6297 = vpop.f32.mrf.mxu0
  %v6298 = vadd.f32 0.0, %v6297
  %v6299 = vpop.f32.mrf.mxu0
  %v6300 = vadd.f32 0.0, %v6299
  %6301 = vmatmul.bf16.gmra.mxu0 %v6268
  %v6302 = vpop.f32.mrf.mxu0
  %v6303 = vadd.f32 0.0, %v6302
  %v6304 = vpop.f32.mrf.mxu0
  %v6305 = vadd.f32 0.0, %v6304
  %6306 = vmatmul.bf16.gmra.mxu0 %v6271
  %v6307 = vpop.f32.mrf.mxu0
  %v6308 = vadd.f32 0.0, %v6307
  %v6309 = vpop.f32.mrf.mxu0
  %v6310 = vadd.f32 0.0, %v6309
  %6311 = vmatmul.bf16.gmra.mxu0 %v6274
  %v6312 = vpop.f32.mrf.mxu0
  %v6313 = vadd.f32 0.0, %v6312
  %v6314 = vpop.f32.mrf.mxu0
  %v6315 = vadd.f32 0.0, %v6314
  %6316 = vmatmul.bf16.gmra.mxu0 %v6277
  %v6317 = vpop.f32.mrf.mxu0
  %v6318 = vadd.f32 0.0, %v6317
  %v6319 = vpop.f32.mrf.mxu0
  %v6320 = vadd.f32 0.0, %v6319
  %6321 = vmatmul.bf16.gmra.mxu0 %v6280
  %v6322 = vpop.f32.mrf.mxu0
  %v6323 = vadd.f32 0.0, %v6322
  %v6324 = vpop.f32.mrf.mxu0
  %v6325 = vadd.f32 0.0, %v6324
  %6326 = vmatmul.bf16.gmra.mxu0 %v6283
  %v6327 = vpop.f32.mrf.mxu0
  %v6328 = vadd.f32 0.0, %v6327
  %v6329 = vpop.f32.mrf.mxu0
  %v6330 = vadd.f32 0.0, %v6329
  %6331 = vmatmul.bf16.gmra.mxu0 %v6286
  %v6332 = vpop.f32.mrf.mxu0
  %v6333 = vadd.f32 0.0, %v6332
  %v6334 = vpop.f32.mrf.mxu0
  %v6335 = vadd.f32 0.0, %v6334
  %6336 = vdwg.mxu0
  %v6337 = vadd.f32 %v6110, %v6298
  %v6338 = vadd.f32 %v6111, %v6300
  %v6339 = vadd.f32 %v6112, %v6303
  %v6340 = vadd.f32 %v6113, %v6305
  %v6341 = vadd.f32 %v6114, %v6308
  %v6342 = vadd.f32 %v6115, %v6310
  %v6343 = vadd.f32 %v6116, %v6313
  %v6344 = vadd.f32 %v6117, %v6315
  %v6345 = vadd.f32 %v6118, %v6318
  %v6346 = vadd.f32 %v6119, %v6320
  %v6347 = vadd.f32 %v6120, %v6323
  %v6348 = vadd.f32 %v6121, %v6325
  %v6349 = vadd.f32 %v6122, %v6328
  %v6350 = vadd.f32 %v6123, %v6330
  %v6351 = vadd.f32 %v6124, %v6333
  %v6352 = vadd.f32 %v6125, %v6335
  %s6353 = scalar_lea.vmem %s2, 896
  %v6354 = vld [vmem:[%s6353] sm:$0xff]
  %v6355 = vld [vmem:[%s6353 + $0x8] sm:$0xff]
  %v6356 = vld [vmem:[%s6353 + $0x10] sm:$0xff]
  %v6357 = vld [vmem:[%s6353 + $0x18] sm:$0xff]
  %v6358 = vld [vmem:[%s6353 + $0x20] sm:$0xff]
  %v6359 = vld [vmem:[%s6353 + $0x28] sm:$0xff]
  %v6360 = vld [vmem:[%s6353 + $0x30] sm:$0xff]
  %v6361 = vld [vmem:[%s6353 + $0x38] sm:$0xff]
  %v6362 = vld [vmem:[%s6353 + $0x40] sm:$0xff]
  %v6363 = vld [vmem:[%s6353 + $0x48] sm:$0xff]
  %v6364 = vld [vmem:[%s6353 + $0x50] sm:$0xff]
  %v6365 = vld [vmem:[%s6353 + $0x58] sm:$0xff]
  %v6366 = vld [vmem:[%s6353 + $0x60] sm:$0xff]
  %v6367 = vld [vmem:[%s6353 + $0x68] sm:$0xff]
  %v6368 = vld [vmem:[%s6353 + $0x70] sm:$0xff]
  %v6369 = vld [vmem:[%s6353 + $0x78] sm:$0xff]
  %6371 = vset.pattern.permute.xlu0 0
  %6372 = vperm.xlu0 %6371, %v6354
  %v6373 = vpop.permute.xlu0 %6372
  %6376 = vset.pattern.permute.xlu0 0
  %6377 = vperm.xlu0 %6376, %v6355
  %v6378 = vpop.permute.xlu0 %6377
  %6381 = vset.pattern.permute.xlu0 0
  %6382 = vperm.xlu0 %6381, %v6356
  %v6383 = vpop.permute.xlu0 %6382
  %6386 = vset.pattern.permute.xlu0 0
  %6387 = vperm.xlu0 %6386, %v6357
  %v6388 = vpop.permute.xlu0 %6387
  %6391 = vset.pattern.permute.xlu0 0
  %6392 = vperm.xlu0 %6391, %v6358
  %v6393 = vpop.permute.xlu0 %6392
  %6396 = vset.pattern.permute.xlu0 0
  %6397 = vperm.xlu0 %6396, %v6359
  %v6398 = vpop.permute.xlu0 %6397
  %6401 = vset.pattern.permute.xlu0 0
  %6402 = vperm.xlu0 %6401, %v6360
  %v6403 = vpop.permute.xlu0 %6402
  %6406 = vset.pattern.permute.xlu0 0
  %6407 = vperm.xlu0 %6406, %v6361
  %v6408 = vpop.permute.xlu0 %6407
  %6411 = vset.pattern.permute.xlu0 0
  %6412 = vperm.xlu0 %6411, %v6362
  %v6413 = vpop.permute.xlu0 %6412
  %6416 = vset.pattern.permute.xlu0 0
  %6417 = vperm.xlu0 %6416, %v6363
  %v6418 = vpop.permute.xlu0 %6417
  %6421 = vset.pattern.permute.xlu0 0
  %6422 = vperm.xlu0 %6421, %v6364
  %v6423 = vpop.permute.xlu0 %6422
  %6426 = vset.pattern.permute.xlu0 0
  %6427 = vperm.xlu0 %6426, %v6365
  %v6428 = vpop.permute.xlu0 %6427
  %6431 = vset.pattern.permute.xlu0 0
  %6432 = vperm.xlu0 %6431, %v6366
  %v6433 = vpop.permute.xlu0 %6432
  %6436 = vset.pattern.permute.xlu0 0
  %6437 = vperm.xlu0 %6436, %v6367
  %v6438 = vpop.permute.xlu0 %6437
  %6441 = vset.pattern.permute.xlu0 0
  %6442 = vperm.xlu0 %6441, %v6368
  %v6443 = vpop.permute.xlu0 %6442
  %6446 = vset.pattern.permute.xlu0 0
  %6447 = vperm.xlu0 %6446, %v6369
  %v6448 = vpop.permute.xlu0 %6447
  %v6450 = vmul.f32 %v4827, %v6373
  %v6451 = vmul.f32 %v4828, %v6378
  %v6452 = vmul.f32 %v4829, %v6383
  %v6453 = vmul.f32 %v4830, %v6388
  %v6454 = vmul.f32 %v4831, %v6393
  %v6455 = vmul.f32 %v4832, %v6398
  %v6456 = vmul.f32 %v4833, %v6403
  %v6457 = vmul.f32 %v4834, %v6408
  %v6458 = vmul.f32 %v4835, %v6413
  %v6459 = vmul.f32 %v4836, %v6418
  %v6460 = vmul.f32 %v4837, %v6423
  %v6461 = vmul.f32 %v4838, %v6428
  %v6462 = vmul.f32 %v4839, %v6433
  %v6463 = vmul.f32 %v4840, %v6438
  %v6464 = vmul.f32 %v4841, %v6443
  %v6465 = vmul.f32 %v4826, %v6448
  %v6466 = vpack.c.bf16 %v6451, %v6450
  %v6467 = vpack.c.bf16 %v6453, %v6452
  %v6468 = vpack.c.bf16 %v6455, %v6454
  %v6469 = vpack.c.bf16 %v6457, %v6456
  %v6470 = vpack.c.bf16 %v6459, %v6458
  %v6471 = vpack.c.bf16 %v6461, %v6460
  %v6472 = vpack.c.bf16 %v6463, %v6462
  %v6473 = vpack.c.bf16 %v6465, %v6464
  %s6474 = scalar_lea.vmem %s9, 112
  %v6475 = vld [vmem:[%s6474] sm:$0xf]
  %v6476 = vld [vmem:[%s6474 + $0x4] sm:$0xf]
  %v6477 = vld [vmem:[%s6474 + $0x8] sm:$0xf]
  %v6478 = vld [vmem:[%s6474 + $0xc] sm:$0xf]
  %v6483 = vunpack.c.l.b16 %v6475
  %v6484 = vunpack.c.l.b16 %v6476
  %v6485 = vunpack.c.l.b16 %v6477
  %v6486 = vunpack.c.l.b16 %v6478
  %v6487 = vpack.c.b16 %v6484, %v6483
  %v6488 = vpack.c.b16 %v6486, %v6485
  %v6492 = vsel %vm249, %v6466, 0
  %v6495 = vsel %vm249, %v6467, 0
  %v6498 = vsel %vm249, %v6468, 0
  %v6501 = vsel %vm249, %v6469, 0
  %v6504 = vsel %vm249, %v6470, 0
  %v6507 = vsel %vm249, %v6471, 0
  %v6510 = vsel %vm249, %v6472, 0
  %v6513 = vsel %vm249, %v6473, 0
  %6515 = vmatpush.bf16.msra.mxu0 0
  %6516 = vmatpush.bf16.msra.mxu0 0
  %6517 = vmatpush.bf16.msra.mxu0 0
  %6518 = vmatpush.bf16.msra.mxu0 0
  %6519 = vmatpush.bf16.msra.mxu0 0
  %6520 = vmatpush.bf16.msra.mxu0 0
  %6521 = vmatpush.bf16.msra.mxu0 %v6488
  %6522 = vmatpush.bf16.msra.mxu0 %v6487
  %6523 = vmatmul.bf16.gmra.mxu0 %v6492
  %v6524 = vpop.f32.mrf.mxu0
  %v6525 = vadd.f32 0.0, %v6524
  %v6526 = vpop.f32.mrf.mxu0
  %v6527 = vadd.f32 0.0, %v6526
  %6528 = vmatmul.bf16.gmra.mxu0 %v6495
  %v6529 = vpop.f32.mrf.mxu0
  %v6530 = vadd.f32 0.0, %v6529
  %v6531 = vpop.f32.mrf.mxu0
  %v6532 = vadd.f32 0.0, %v6531
  %6533 = vmatmul.bf16.gmra.mxu0 %v6498
  %v6534 = vpop.f32.mrf.mxu0
  %v6535 = vadd.f32 0.0, %v6534
  %v6536 = vpop.f32.mrf.mxu0
  %v6537 = vadd.f32 0.0, %v6536
  %6538 = vmatmul.bf16.gmra.mxu0 %v6501
  %v6539 = vpop.f32.mrf.mxu0
  %v6540 = vadd.f32 0.0, %v6539
  %v6541 = vpop.f32.mrf.mxu0
  %v6542 = vadd.f32 0.0, %v6541
  %6543 = vmatmul.bf16.gmra.mxu0 %v6504
  %v6544 = vpop.f32.mrf.mxu0
  %v6545 = vadd.f32 0.0, %v6544
  %v6546 = vpop.f32.mrf.mxu0
  %v6547 = vadd.f32 0.0, %v6546
  %6548 = vmatmul.bf16.gmra.mxu0 %v6507
  %v6549 = vpop.f32.mrf.mxu0
  %v6550 = vadd.f32 0.0, %v6549
  %v6551 = vpop.f32.mrf.mxu0
  %v6552 = vadd.f32 0.0, %v6551
  %6553 = vmatmul.bf16.gmra.mxu0 %v6510
  %v6554 = vpop.f32.mrf.mxu0
  %v6555 = vadd.f32 0.0, %v6554
  %v6556 = vpop.f32.mrf.mxu0
  %v6557 = vadd.f32 0.0, %v6556
  %6558 = vmatmul.bf16.gmra.mxu0 %v6513
  %v6559 = vpop.f32.mrf.mxu0
  %v6560 = vadd.f32 0.0, %v6559
  %v6561 = vpop.f32.mrf.mxu0
  %v6562 = vadd.f32 0.0, %v6561
  %6563 = vdwg.mxu0
  %v6564 = vadd.f32 %v6337, %v6525
  %v6565 = vadd.f32 %v6338, %v6527
  %v6566 = vadd.f32 %v6339, %v6530
  %v6567 = vadd.f32 %v6340, %v6532
  %v6568 = vadd.f32 %v6341, %v6535
  %v6569 = vadd.f32 %v6342, %v6537
  %v6570 = vadd.f32 %v6343, %v6540
  %v6571 = vadd.f32 %v6344, %v6542
  %v6572 = vadd.f32 %v6345, %v6545
  %v6573 = vadd.f32 %v6346, %v6547
  %v6574 = vadd.f32 %v6347, %v6550
  %v6575 = vadd.f32 %v6348, %v6552
  %v6576 = vadd.f32 %v6349, %v6555
  %v6577 = vadd.f32 %v6350, %v6557
  %v6578 = vadd.f32 %v6351, %v6560
  %v6579 = vadd.f32 %v6352, %v6562
  %s6580 = scalar_lea.vmem %s2, 1024
  %v6581 = vld [vmem:[%s6580] sm:$0xff]
  %v6582 = vld [vmem:[%s6580 + $0x8] sm:$0xff]
  %v6583 = vld [vmem:[%s6580 + $0x10] sm:$0xff]
  %v6584 = vld [vmem:[%s6580 + $0x18] sm:$0xff]
  %v6585 = vld [vmem:[%s6580 + $0x20] sm:$0xff]
  %v6586 = vld [vmem:[%s6580 + $0x28] sm:$0xff]
  %v6587 = vld [vmem:[%s6580 + $0x30] sm:$0xff]
  %v6588 = vld [vmem:[%s6580 + $0x38] sm:$0xff]
  %v6589 = vld [vmem:[%s6580 + $0x40] sm:$0xff]
  %v6590 = vld [vmem:[%s6580 + $0x48] sm:$0xff]
  %v6591 = vld [vmem:[%s6580 + $0x50] sm:$0xff]
  %v6592 = vld [vmem:[%s6580 + $0x58] sm:$0xff]
  %v6593 = vld [vmem:[%s6580 + $0x60] sm:$0xff]
  %v6594 = vld [vmem:[%s6580 + $0x68] sm:$0xff]
  %v6595 = vld [vmem:[%s6580 + $0x70] sm:$0xff]
  %v6596 = vld [vmem:[%s6580 + $0x78] sm:$0xff]
  %6598 = vset.pattern.permute.xlu0 0
  %6599 = vperm.xlu0 %6598, %v6581
  %v6600 = vpop.permute.xlu0 %6599
  %6603 = vset.pattern.permute.xlu0 0
  %6604 = vperm.xlu0 %6603, %v6582
  %v6605 = vpop.permute.xlu0 %6604
  %6608 = vset.pattern.permute.xlu0 0
  %6609 = vperm.xlu0 %6608, %v6583
  %v6610 = vpop.permute.xlu0 %6609
  %6613 = vset.pattern.permute.xlu0 0
  %6614 = vperm.xlu0 %6613, %v6584
  %v6615 = vpop.permute.xlu0 %6614
  %6618 = vset.pattern.permute.xlu0 0
  %6619 = vperm.xlu0 %6618, %v6585
  %v6620 = vpop.permute.xlu0 %6619
  %6623 = vset.pattern.permute.xlu0 0
  %6624 = vperm.xlu0 %6623, %v6586
  %v6625 = vpop.permute.xlu0 %6624
  %6628 = vset.pattern.permute.xlu0 0
  %6629 = vperm.xlu0 %6628, %v6587
  %v6630 = vpop.permute.xlu0 %6629
  %6633 = vset.pattern.permute.xlu0 0
  %6634 = vperm.xlu0 %6633, %v6588
  %v6635 = vpop.permute.xlu0 %6634
  %6638 = vset.pattern.permute.xlu0 0
  %6639 = vperm.xlu0 %6638, %v6589
  %v6640 = vpop.permute.xlu0 %6639
  %6643 = vset.pattern.permute.xlu0 0
  %6644 = vperm.xlu0 %6643, %v6590
  %v6645 = vpop.permute.xlu0 %6644
  %6648 = vset.pattern.permute.xlu0 0
  %6649 = vperm.xlu0 %6648, %v6591
  %v6650 = vpop.permute.xlu0 %6649
  %6653 = vset.pattern.permute.xlu0 0
  %6654 = vperm.xlu0 %6653, %v6592
  %v6655 = vpop.permute.xlu0 %6654
  %6658 = vset.pattern.permute.xlu0 0
  %6659 = vperm.xlu0 %6658, %v6593
  %v6660 = vpop.permute.xlu0 %6659
  %6663 = vset.pattern.permute.xlu0 0
  %6664 = vperm.xlu0 %6663, %v6594
  %v6665 = vpop.permute.xlu0 %6664
  %6668 = vset.pattern.permute.xlu0 0
  %6669 = vperm.xlu0 %6668, %v6595
  %v6670 = vpop.permute.xlu0 %6669
  %6673 = vset.pattern.permute.xlu0 0
  %6674 = vperm.xlu0 %6673, %v6596
  %v6675 = vpop.permute.xlu0 %6674
  %v6677 = vmul.f32 %v5328, %v6600
  %v6678 = vmul.f32 %v5327, %v6605
  %v6679 = vmul.f32 %v5326, %v6610
  %v6680 = vmul.f32 %v5325, %v6615
  %v6681 = vmul.f32 %v5324, %v6620
  %v6682 = vmul.f32 %v5323, %v6625
  %v6683 = vmul.f32 %v5322, %v6630
  %v6684 = vmul.f32 %v5321, %v6635
  %v6685 = vmul.f32 %v5320, %v6640
  %v6686 = vmul.f32 %v5319, %v6645
  %v6687 = vmul.f32 %v5318, %v6650
  %v6688 = vmul.f32 %v5317, %v6655
  %v6689 = vmul.f32 %v5316, %v6660
  %v6690 = vmul.f32 %v5315, %v6665
  %v6691 = vmul.f32 %v5330, %v6670
  %v6692 = vmul.f32 %v5329, %v6675
  %v6693 = vpack.c.bf16 %v6678, %v6677
  %v6694 = vpack.c.bf16 %v6680, %v6679
  %v6695 = vpack.c.bf16 %v6682, %v6681
  %v6696 = vpack.c.bf16 %v6684, %v6683
  %v6697 = vpack.c.bf16 %v6686, %v6685
  %v6698 = vpack.c.bf16 %v6688, %v6687
  %v6699 = vpack.c.bf16 %v6690, %v6689
  %v6700 = vpack.c.bf16 %v6692, %v6691
  %s6701 = scalar_lea.vmem %s9, 128
  %v6702 = vld [vmem:[%s6701] sm:$0xf]
  %v6703 = vld [vmem:[%s6701 + $0x4] sm:$0xf]
  %v6704 = vld [vmem:[%s6701 + $0x8] sm:$0xf]
  %v6705 = vld [vmem:[%s6701 + $0xc] sm:$0xf]
  %v6710 = vunpack.c.l.b16 %v6702
  %v6711 = vunpack.c.l.b16 %v6703
  %v6712 = vunpack.c.l.b16 %v6704
  %v6713 = vunpack.c.l.b16 %v6705
  %v6714 = vpack.c.b16 %v6711, %v6710
  %v6715 = vpack.c.b16 %v6713, %v6712
  %v6719 = vsel %vm249, %v6693, 0
  %v6722 = vsel %vm249, %v6694, 0
  %v6725 = vsel %vm249, %v6695, 0
  %v6728 = vsel %vm249, %v6696, 0
  %v6731 = vsel %vm249, %v6697, 0
  %v6734 = vsel %vm249, %v6698, 0
  %v6737 = vsel %vm249, %v6699, 0
  %v6740 = vsel %vm249, %v6700, 0
  %6742 = vmatpush.bf16.msra.mxu0 0
  %6743 = vmatpush.bf16.msra.mxu0 0
  %6744 = vmatpush.bf16.msra.mxu0 0
  %6745 = vmatpush.bf16.msra.mxu0 0
  %6746 = vmatpush.bf16.msra.mxu0 0
  %6747 = vmatpush.bf16.msra.mxu0 0
  %6748 = vmatpush.bf16.msra.mxu0 %v6715
  %6749 = vmatpush.bf16.msra.mxu0 %v6714
  %6750 = vmatmul.bf16.gmra.mxu0 %v6719
  %v6751 = vpop.f32.mrf.mxu0
  %v6752 = vadd.f32 0.0, %v6751
  %v6753 = vpop.f32.mrf.mxu0
  %v6754 = vadd.f32 0.0, %v6753
  %6755 = vmatmul.bf16.gmra.mxu0 %v6722
  %v6756 = vpop.f32.mrf.mxu0
  %v6757 = vadd.f32 0.0, %v6756
  %v6758 = vpop.f32.mrf.mxu0
  %v6759 = vadd.f32 0.0, %v6758
  %6760 = vmatmul.bf16.gmra.mxu0 %v6725
  %v6761 = vpop.f32.mrf.mxu0
  %v6762 = vadd.f32 0.0, %v6761
  %v6763 = vpop.f32.mrf.mxu0
  %v6764 = vadd.f32 0.0, %v6763
  %6765 = vmatmul.bf16.gmra.mxu0 %v6728
  %v6766 = vpop.f32.mrf.mxu0
  %v6767 = vadd.f32 0.0, %v6766
  %v6768 = vpop.f32.mrf.mxu0
  %v6769 = vadd.f32 0.0, %v6768
  %6770 = vmatmul.bf16.gmra.mxu0 %v6731
  %v6771 = vpop.f32.mrf.mxu0
  %v6772 = vadd.f32 0.0, %v6771
  %v6773 = vpop.f32.mrf.mxu0
  %v6774 = vadd.f32 0.0, %v6773
  %6775 = vmatmul.bf16.gmra.mxu0 %v6734
  %v6776 = vpop.f32.mrf.mxu0
  %v6777 = vadd.f32 0.0, %v6776
  %v6778 = vpop.f32.mrf.mxu0
  %v6779 = vadd.f32 0.0, %v6778
  %6780 = vmatmul.bf16.gmra.mxu0 %v6737
  %v6781 = vpop.f32.mrf.mxu0
  %v6782 = vadd.f32 0.0, %v6781
  %v6783 = vpop.f32.mrf.mxu0
  %v6784 = vadd.f32 0.0, %v6783
  %6785 = vmatmul.bf16.gmra.mxu0 %v6740
  %v6786 = vpop.f32.mrf.mxu0
  %v6787 = vadd.f32 0.0, %v6786
  %v6788 = vpop.f32.mrf.mxu0
  %v6789 = vadd.f32 0.0, %v6788
  %6790 = vdwg.mxu0
  %v6791 = vadd.f32 %v6564, %v6752
  %v6792 = vadd.f32 %v6565, %v6754
  %v6793 = vadd.f32 %v6566, %v6757
  %v6794 = vadd.f32 %v6567, %v6759
  %v6795 = vadd.f32 %v6568, %v6762
  %v6796 = vadd.f32 %v6569, %v6764
  %v6797 = vadd.f32 %v6570, %v6767
  %v6798 = vadd.f32 %v6571, %v6769
  %v6799 = vadd.f32 %v6572, %v6772
  %v6800 = vadd.f32 %v6573, %v6774
  %v6801 = vadd.f32 %v6574, %v6777
  %v6802 = vadd.f32 %v6575, %v6779
  %v6803 = vadd.f32 %v6576, %v6782
  %v6804 = vadd.f32 %v6577, %v6784
  %v6805 = vadd.f32 %v6578, %v6787
  %v6806 = vadd.f32 %v6579, %v6789
  %v6807 = vadd.f32 %v6791, %v4842
  %v6808 = vadd.f32 %v6792, %v4842
  %v6809 = vadd.f32 %v6793, %v4842
  %v6810 = vadd.f32 %v6794, %v4842
  %v6811 = vadd.f32 %v6795, %v4842
  %v6812 = vadd.f32 %v6796, %v4842
  %v6813 = vadd.f32 %v6797, %v4842
  %v6814 = vadd.f32 %v6798, %v4842
  %v6815 = vadd.f32 %v6799, %v4842
  %v6816 = vadd.f32 %v6800, %v4842
  %v6817 = vadd.f32 %v6801, %v4842
  %v6818 = vadd.f32 %v6802, %v4842
  %v6819 = vadd.f32 %v6803, %v4842
  %v6820 = vadd.f32 %v6804, %v4842
  %v6821 = vadd.f32 %v6805, %v4842
  %v6822 = vadd.f32 %v6806, %v4842
  %s6823 = scalar_lea.vmem %s12, 17
  %v6824 = vld [vmem:[%s6823] ss:$8 sm:$0x3]
  %v6825 = vrot.slane %v6807, 7
  %v6826 = vrot.slane %v6808, 7
  %v6827 = vrot.slane %v6809, 7
  %v6828 = vrot.slane %v6810, 7
  %v6829 = vrot.slane %v6811, 7
  %v6830 = vrot.slane %v6812, 7
  %v6831 = vrot.slane %v6813, 7
  %v6832 = vrot.slane %v6814, 7
  %v6833 = vrot.slane %v6815, 7
  %v6834 = vrot.slane %v6816, 7
  %v6835 = vrot.slane %v6817, 7
  %v6836 = vrot.slane %v6818, 7
  %v6837 = vrot.slane %v6819, 7
  %v6838 = vrot.slane %v6820, 7
  %v6839 = vrot.slane %v6821, 7
  %v6840 = vrot.slane %v6822, 7
  %v6841 = vsel %vm4861, %v6839, %v6840
  %v6842 = vsel %vm4861, %v6838, %v6839
  %v6843 = vsel %vm4861, %v6837, %v6838
  %v6844 = vsel %vm4861, %v6836, %v6837
  %v6845 = vsel %vm4861, %v6835, %v6836
  %v6846 = vsel %vm4861, %v6834, %v6835
  %v6847 = vsel %vm4861, %v6833, %v6834
  %v6848 = vsel %vm4861, %v6832, %v6833
  %v6849 = vsel %vm4861, %v6831, %v6832
  %v6850 = vsel %vm4861, %v6830, %v6831
  %v6851 = vsel %vm4861, %v6829, %v6830
  %v6852 = vsel %vm4861, %v6828, %v6829
  %v6853 = vsel %vm4861, %v6827, %v6828
  %v6854 = vsel %vm4861, %v6826, %v6827
  %v6855 = vsel %vm4861, %v6825, %v6826
  %v6856 = vsel %vm4861, %v6840, %v6825
  %v6857 = vmul.f32 %v6841, %v4897
  %v6858 = vmul.f32 %v6856, %v4902
  %v6859 = vmul.f32 %v6855, %v4907
  %v6860 = vmul.f32 %v6854, %v4912
  %v6861 = vmul.f32 %v6853, %v4917
  %v6862 = vmul.f32 %v6852, %v4922
  %v6863 = vmul.f32 %v6851, %v4927
  %v6864 = vmul.f32 %v6850, %v4932
  %v6865 = vmul.f32 %v6849, %v4937
  %v6866 = vmul.f32 %v6848, %v4942
  %v6867 = vmul.f32 %v6847, %v4947
  %v6868 = vmul.f32 %v6846, %v4952
  %v6869 = vmul.f32 %v6845, %v4957
  %v6870 = vmul.f32 %v6844, %v4962
  %v6871 = vmul.f32 %v6843, %v4967
  %v6872 = vmul.f32 %v6842, %v4972
  %v6873 = vpack.c.bf16 %v6858, %v6857
  %v6874 = vpack.c.bf16 %v6860, %v6859
  %v6875 = vpack.c.bf16 %v6862, %v6861
  %v6876 = vpack.c.bf16 %v6864, %v6863
  %v6877 = vpack.c.bf16 %v6866, %v6865
  %v6878 = vpack.c.bf16 %v6868, %v6867
  %v6879 = vpack.c.bf16 %v6870, %v6869
  %v6880 = vpack.c.bf16 %v6872, %v6871
  %v6881 = vld [vmem:[%s10] sm:$0xff]
  %v6882 = vld [vmem:[%s10 + $0x8] sm:$0xff]
  %v6883 = vld [vmem:[%s10 + $0x10] sm:$0xff]
  %v6884 = vld [vmem:[%s10 + $0x18] sm:$0xff]
  %v6885 = vmul.f32 %v6822, %v5022
  %v6886 = vmul.f32 %v6807, %v5027
  %v6887 = vmul.f32 %v6808, %v5032
  %v6888 = vmul.f32 %v6809, %v5037
  %v6889 = vmul.f32 %v6810, %v5042
  %v6890 = vmul.f32 %v6811, %v5047
  %v6891 = vmul.f32 %v6812, %v5052
  %v6892 = vmul.f32 %v6813, %v5057
  %v6893 = vmul.f32 %v6814, %v5062
  %v6894 = vmul.f32 %v6815, %v5067
  %v6895 = vmul.f32 %v6816, %v5072
  %v6896 = vmul.f32 %v6817, %v5077
  %v6897 = vmul.f32 %v6818, %v5082
  %v6898 = vmul.f32 %v6819, %v5087
  %v6899 = vmul.f32 %v6820, %v5092
  %v6900 = vmul.f32 %v6821, %v5097
  %v6901 = vpack.c.bf16 %v6886, %v6885
  %v6902 = vpack.c.bf16 %v6888, %v6887
  %v6903 = vpack.c.bf16 %v6890, %v6889
  %v6904 = vpack.c.bf16 %v6892, %v6891
  %v6905 = vpack.c.bf16 %v6894, %v6893
  %v6906 = vpack.c.bf16 %v6896, %v6895
  %v6907 = vpack.c.bf16 %v6898, %v6897
  %v6908 = vpack.c.bf16 %v6900, %v6899
  %s6909 = scalar_lea.vmem %s10, 32
  %v6910 = vld [vmem:[%s6909] sm:$0xff]
  %v6911 = vld [vmem:[%s6909 + $0x8] sm:$0xff]
  %v6912 = vld [vmem:[%s6909 + $0x10] sm:$0xff]
  %v6913 = vld [vmem:[%s6909 + $0x18] sm:$0xff]
  %v6918 = vunpack.c.l.b16 %v6910
  %v6919 = vunpack.c.h.b16 %v6910
  %v6920 = vunpack.c.l.b16 %v6911
  %v6921 = vunpack.c.h.b16 %v6911
  %v6922 = vunpack.c.l.b16 %v6912
  %v6923 = vunpack.c.h.b16 %v6912
  %v6924 = vunpack.c.l.b16 %v6913
  %v6925 = vunpack.c.h.b16 %v6913
  %v6926 = vpack.c.b16 %v6920, %v6918
  %v6927 = vpack.c.b16 %v6921, %v6919
  %v6928 = vpack.c.b16 %v6924, %v6922
  %v6929 = vpack.c.b16 %v6925, %v6923
  %v6935 = vsel %vm249, %v6901, 0
  %v6938 = vsel %vm249, %v6902, 0
  %v6941 = vsel %vm249, %v6903, 0
  %v6944 = vsel %vm249, %v6904, 0
  %v6947 = vsel %vm249, %v6905, 0
  %v6950 = vsel %vm249, %v6906, 0
  %v6953 = vsel %vm249, %v6907, 0
  %v6956 = vsel %vm249, %v6908, 0
  %6958 = vmatpush.bf16.msra.mxu0 0
  %6959 = vmatpush.bf16.msra.mxu0 0
  %6960 = vmatpush.bf16.msra.mxu0 0
  %6961 = vmatpush.bf16.msra.mxu0 0
  %6962 = vmatpush.bf16.msra.mxu0 0
  %6963 = vmatpush.bf16.msra.mxu0 0
  %6964 = vmatpush.bf16.msra.mxu0 %v6928
  %6965 = vmatpush.bf16.msra.mxu0 %v6926
  %6966 = vmatmul.bf16.gmra.mxu0 %v6935
  %v6967 = vpop.f32.mrf.mxu0
  %v6968 = vadd.f32 0.0, %v6967
  %v6969 = vpop.f32.mrf.mxu0
  %v6970 = vadd.f32 0.0, %v6969
  %6971 = vmatmul.bf16.gmra.mxu0 %v6938
  %v6972 = vpop.f32.mrf.mxu0
  %v6973 = vadd.f32 0.0, %v6972
  %v6974 = vpop.f32.mrf.mxu0
  %v6975 = vadd.f32 0.0, %v6974
  %6976 = vmatmul.bf16.gmra.mxu0 %v6941
  %v6977 = vpop.f32.mrf.mxu0
  %v6978 = vadd.f32 0.0, %v6977
  %v6979 = vpop.f32.mrf.mxu0
  %v6980 = vadd.f32 0.0, %v6979
  %6981 = vmatmul.bf16.gmra.mxu0 %v6944
  %v6982 = vpop.f32.mrf.mxu0
  %v6983 = vadd.f32 0.0, %v6982
  %v6984 = vpop.f32.mrf.mxu0
  %v6985 = vadd.f32 0.0, %v6984
  %6986 = vmatmul.bf16.gmra.mxu0 %v6947
  %v6987 = vpop.f32.mrf.mxu0
  %v6988 = vadd.f32 0.0, %v6987
  %v6989 = vpop.f32.mrf.mxu0
  %v6990 = vadd.f32 0.0, %v6989
  %6991 = vmatmul.bf16.gmra.mxu0 %v6950
  %v6992 = vpop.f32.mrf.mxu0
  %v6993 = vadd.f32 0.0, %v6992
  %v6994 = vpop.f32.mrf.mxu0
  %v6995 = vadd.f32 0.0, %v6994
  %6996 = vmatmul.bf16.gmra.mxu0 %v6953
  %v6997 = vpop.f32.mrf.mxu0
  %v6998 = vadd.f32 0.0, %v6997
  %v6999 = vpop.f32.mrf.mxu0
  %v7000 = vadd.f32 0.0, %v6999
  %7001 = vmatmul.bf16.gmra.mxu0 %v6956
  %v7002 = vpop.f32.mrf.mxu0
  %v7003 = vadd.f32 0.0, %v7002
  %v7004 = vpop.f32.mrf.mxu0
  %v7005 = vadd.f32 0.0, %v7004
  %7006 = vdwg.mxu0
  %7007 = vmatpush.bf16.msra.mxu0 0
  %7008 = vmatpush.bf16.msra.mxu0 0
  %7009 = vmatpush.bf16.msra.mxu0 0
  %7010 = vmatpush.bf16.msra.mxu0 0
  %7011 = vmatpush.bf16.msra.mxu0 0
  %7012 = vmatpush.bf16.msra.mxu0 0
  %7013 = vmatpush.bf16.msra.mxu0 %v6929
  %7014 = vmatpush.bf16.msra.mxu0 %v6927
  %7015 = vmatmul.bf16.gmra.mxu0 %v6935
  %v7016 = vpop.f32.mrf.mxu0
  %v7017 = vadd.f32 0.0, %v7016
  %v7018 = vpop.f32.mrf.mxu0
  %v7019 = vadd.f32 0.0, %v7018
  %7020 = vmatmul.bf16.gmra.mxu0 %v6938
  %v7021 = vpop.f32.mrf.mxu0
  %v7022 = vadd.f32 0.0, %v7021
  %v7023 = vpop.f32.mrf.mxu0
  %v7024 = vadd.f32 0.0, %v7023
  %7025 = vmatmul.bf16.gmra.mxu0 %v6941
  %v7026 = vpop.f32.mrf.mxu0
  %v7027 = vadd.f32 0.0, %v7026
  %v7028 = vpop.f32.mrf.mxu0
  %v7029 = vadd.f32 0.0, %v7028
  %7030 = vmatmul.bf16.gmra.mxu0 %v6944
  %v7031 = vpop.f32.mrf.mxu0
  %v7032 = vadd.f32 0.0, %v7031
  %v7033 = vpop.f32.mrf.mxu0
  %v7034 = vadd.f32 0.0, %v7033
  %7035 = vmatmul.bf16.gmra.mxu0 %v6947
  %v7036 = vpop.f32.mrf.mxu0
  %v7037 = vadd.f32 0.0, %v7036
  %v7038 = vpop.f32.mrf.mxu0
  %v7039 = vadd.f32 0.0, %v7038
  %7040 = vmatmul.bf16.gmra.mxu0 %v6950
  %v7041 = vpop.f32.mrf.mxu0
  %v7042 = vadd.f32 0.0, %v7041
  %v7043 = vpop.f32.mrf.mxu0
  %v7044 = vadd.f32 0.0, %v7043
  %7045 = vmatmul.bf16.gmra.mxu0 %v6953
  %v7046 = vpop.f32.mrf.mxu0
  %v7047 = vadd.f32 0.0, %v7046
  %v7048 = vpop.f32.mrf.mxu0
  %v7049 = vadd.f32 0.0, %v7048
  %7050 = vmatmul.bf16.gmra.mxu0 %v6956
  %v7051 = vpop.f32.mrf.mxu0
  %v7052 = vadd.f32 0.0, %v7051
  %v7053 = vpop.f32.mrf.mxu0
  %v7054 = vadd.f32 0.0, %v7053
  %7055 = vdwg.mxu0
  %v7060 = vunpack.c.l.b16 %v6881
  %v7061 = vunpack.c.h.b16 %v6881
  %v7062 = vunpack.c.l.b16 %v6882
  %v7063 = vunpack.c.h.b16 %v6882
  %v7064 = vunpack.c.l.b16 %v6883
  %v7065 = vunpack.c.h.b16 %v6883
  %v7066 = vunpack.c.l.b16 %v6884
  %v7067 = vunpack.c.h.b16 %v6884
  %v7068 = vpack.c.b16 %v7062, %v7060
  %v7069 = vpack.c.b16 %v7063, %v7061
  %v7070 = vpack.c.b16 %v7066, %v7064
  %v7071 = vpack.c.b16 %v7067, %v7065
  %v7077 = vsel %vm249, %v6873, 0
  %v7080 = vsel %vm249, %v6874, 0
  %v7083 = vsel %vm249, %v6875, 0
  %v7086 = vsel %vm249, %v6876, 0
  %v7089 = vsel %vm249, %v6877, 0
  %v7092 = vsel %vm249, %v6878, 0
  %v7095 = vsel %vm249, %v6879, 0
  %v7098 = vsel %vm249, %v6880, 0
  %7100 = vmatpush.bf16.msra.mxu0 0
  %7101 = vmatpush.bf16.msra.mxu0 0
  %7102 = vmatpush.bf16.msra.mxu0 0
  %7103 = vmatpush.bf16.msra.mxu0 0
  %7104 = vmatpush.bf16.msra.mxu0 0
  %7105 = vmatpush.bf16.msra.mxu0 0
  %7106 = vmatpush.bf16.msra.mxu0 %v7070
  %7107 = vmatpush.bf16.msra.mxu0 %v7068
  %7108 = vmatmul.bf16.gmra.mxu0 %v7077
  %v7109 = vpop.f32.mrf.mxu0
  %v7110 = vadd.f32 %v6968, %v7109
  %v7111 = vpop.f32.mrf.mxu0
  %v7112 = vadd.f32 %v6970, %v7111
  %7113 = vmatmul.bf16.gmra.mxu0 %v7080
  %v7114 = vpop.f32.mrf.mxu0
  %v7115 = vadd.f32 %v6973, %v7114
  %v7116 = vpop.f32.mrf.mxu0
  %v7117 = vadd.f32 %v6975, %v7116
  %7118 = vmatmul.bf16.gmra.mxu0 %v7083
  %v7119 = vpop.f32.mrf.mxu0
  %v7120 = vadd.f32 %v6978, %v7119
  %v7121 = vpop.f32.mrf.mxu0
  %v7122 = vadd.f32 %v6980, %v7121
  %7123 = vmatmul.bf16.gmra.mxu0 %v7086
  %v7124 = vpop.f32.mrf.mxu0
  %v7125 = vadd.f32 %v6983, %v7124
  %v7126 = vpop.f32.mrf.mxu0
  %v7127 = vadd.f32 %v6985, %v7126
  %7128 = vmatmul.bf16.gmra.mxu0 %v7089
  %v7129 = vpop.f32.mrf.mxu0
  %v7130 = vadd.f32 %v6988, %v7129
  %v7131 = vpop.f32.mrf.mxu0
  %v7132 = vadd.f32 %v6990, %v7131
  %7133 = vmatmul.bf16.gmra.mxu0 %v7092
  %v7134 = vpop.f32.mrf.mxu0
  %v7135 = vadd.f32 %v6993, %v7134
  %v7136 = vpop.f32.mrf.mxu0
  %v7137 = vadd.f32 %v6995, %v7136
  %7138 = vmatmul.bf16.gmra.mxu0 %v7095
  %v7139 = vpop.f32.mrf.mxu0
  %v7140 = vadd.f32 %v6998, %v7139
  %v7141 = vpop.f32.mrf.mxu0
  %v7142 = vadd.f32 %v7000, %v7141
  %7143 = vmatmul.bf16.gmra.mxu0 %v7098
  %v7144 = vpop.f32.mrf.mxu0
  %v7145 = vadd.f32 %v7003, %v7144
  %v7146 = vpop.f32.mrf.mxu0
  %v7147 = vadd.f32 %v7005, %v7146
  %7148 = vdwg.mxu0
  %7149 = vmatpush.bf16.msra.mxu0 0
  %7150 = vmatpush.bf16.msra.mxu0 0
  %7151 = vmatpush.bf16.msra.mxu0 0
  %7152 = vmatpush.bf16.msra.mxu0 0
  %7153 = vmatpush.bf16.msra.mxu0 0
  %7154 = vmatpush.bf16.msra.mxu0 0
  %7155 = vmatpush.bf16.msra.mxu0 %v7071
  %7156 = vmatpush.bf16.msra.mxu0 %v7069
  %7157 = vmatmul.bf16.gmra.mxu0 %v7077
  %v7158 = vpop.f32.mrf.mxu0
  %v7159 = vadd.f32 %v7017, %v7158
  %v7160 = vpop.f32.mrf.mxu0
  %v7161 = vadd.f32 %v7019, %v7160
  %7162 = vmatmul.bf16.gmra.mxu0 %v7080
  %v7163 = vpop.f32.mrf.mxu0
  %v7164 = vadd.f32 %v7022, %v7163
  %v7165 = vpop.f32.mrf.mxu0
  %v7166 = vadd.f32 %v7024, %v7165
  %7167 = vmatmul.bf16.gmra.mxu0 %v7083
  %v7168 = vpop.f32.mrf.mxu0
  %v7169 = vadd.f32 %v7027, %v7168
  %v7170 = vpop.f32.mrf.mxu0
  %v7171 = vadd.f32 %v7029, %v7170
  %7172 = vmatmul.bf16.gmra.mxu0 %v7086
  %v7173 = vpop.f32.mrf.mxu0
  %v7174 = vadd.f32 %v7032, %v7173
  %v7175 = vpop.f32.mrf.mxu0
  %v7176 = vadd.f32 %v7034, %v7175
  %7177 = vmatmul.bf16.gmra.mxu0 %v7089
  %v7178 = vpop.f32.mrf.mxu0
  %v7179 = vadd.f32 %v7037, %v7178
  %v7180 = vpop.f32.mrf.mxu0
  %v7181 = vadd.f32 %v7039, %v7180
  %7182 = vmatmul.bf16.gmra.mxu0 %v7092
  %v7183 = vpop.f32.mrf.mxu0
  %v7184 = vadd.f32 %v7042, %v7183
  %v7185 = vpop.f32.mrf.mxu0
  %v7186 = vadd.f32 %v7044, %v7185
  %7187 = vmatmul.bf16.gmra.mxu0 %v7095
  %v7188 = vpop.f32.mrf.mxu0
  %v7189 = vadd.f32 %v7047, %v7188
  %v7190 = vpop.f32.mrf.mxu0
  %v7191 = vadd.f32 %v7049, %v7190
  %7192 = vmatmul.bf16.gmra.mxu0 %v7098
  %v7193 = vpop.f32.mrf.mxu0
  %v7194 = vadd.f32 %v7052, %v7193
  %v7195 = vpop.f32.mrf.mxu0
  %v7196 = vadd.f32 %v7054, %v7195
  %7197 = vdwg.mxu0
  %v7198 = vrot.slane %v6807, 1
  %v7199 = vrot.slane %v6808, 1
  %v7200 = vrot.slane %v6809, 1
  %v7201 = vrot.slane %v6810, 1
  %v7202 = vrot.slane %v6811, 1
  %v7203 = vrot.slane %v6812, 1
  %v7204 = vrot.slane %v6813, 1
  %v7205 = vrot.slane %v6814, 1
  %v7206 = vrot.slane %v6815, 1
  %v7207 = vrot.slane %v6816, 1
  %v7208 = vrot.slane %v6817, 1
  %v7209 = vrot.slane %v6818, 1
  %v7210 = vrot.slane %v6819, 1
  %v7211 = vrot.slane %v6820, 1
  %v7212 = vrot.slane %v6821, 1
  %v7213 = vrot.slane %v6822, 1
  %v7214 = vsel %vm5314, %v7212, %v7213
  %v7215 = vsel %vm5314, %v7211, %v7212
  %v7216 = vsel %vm5314, %v7210, %v7211
  %v7217 = vsel %vm5314, %v7209, %v7210
  %v7218 = vsel %vm5314, %v7208, %v7209
  %v7219 = vsel %vm5314, %v7207, %v7208
  %v7220 = vsel %vm5314, %v7206, %v7207
  %v7221 = vsel %vm5314, %v7205, %v7206
  %v7222 = vsel %vm5314, %v7204, %v7205
  %v7223 = vsel %vm5314, %v7203, %v7204
  %v7224 = vsel %vm5314, %v7202, %v7203
  %v7225 = vsel %vm5314, %v7201, %v7202
  %v7226 = vsel %vm5314, %v7200, %v7201
  %v7227 = vsel %vm5314, %v7199, %v7200
  %v7228 = vsel %vm5314, %v7198, %v7199
  %v7229 = vsel %vm5314, %v7213, %v7198
  %v7230 = vmul.f32 %v7229, %v5351
  %v7231 = vmul.f32 %v7228, %v5356
  %v7232 = vmul.f32 %v7227, %v5361
  %v7233 = vmul.f32 %v7226, %v5366
  %v7234 = vmul.f32 %v7225, %v5371
  %v7235 = vmul.f32 %v7224, %v5376
  %v7236 = vmul.f32 %v7223, %v5381
  %v7237 = vmul.f32 %v7222, %v5386
  %v7238 = vmul.f32 %v7221, %v5391
  %v7239 = vmul.f32 %v7220, %v5396
  %v7240 = vmul.f32 %v7219, %v5401
  %v7241 = vmul.f32 %v7218, %v5406
  %v7242 = vmul.f32 %v7217, %v5411
  %v7243 = vmul.f32 %v7216, %v5416
  %v7244 = vmul.f32 %v7215, %v5421
  %v7245 = vmul.f32 %v7214, %v5426
  %v7246 = vpack.c.bf16 %v7231, %v7230
  %v7247 = vpack.c.bf16 %v7233, %v7232
  %v7248 = vpack.c.bf16 %v7235, %v7234
  %v7249 = vpack.c.bf16 %v7237, %v7236
  %v7250 = vpack.c.bf16 %v7239, %v7238
  %v7251 = vpack.c.bf16 %v7241, %v7240
  %v7252 = vpack.c.bf16 %v7243, %v7242
  %v7253 = vpack.c.bf16 %v7245, %v7244
  %s7254 = scalar_lea.vmem %s10, 64
  %v7255 = vld [vmem:[%s7254] sm:$0xff]
  %v7256 = vld [vmem:[%s7254 + $0x8] sm:$0xff]
  %v7257 = vld [vmem:[%s7254 + $0x10] sm:$0xff]
  %v7258 = vld [vmem:[%s7254 + $0x18] sm:$0xff]
  %v7263 = vunpack.c.l.b16 %v7255
  %v7264 = vunpack.c.h.b16 %v7255
  %v7265 = vunpack.c.l.b16 %v7256
  %v7266 = vunpack.c.h.b16 %v7256
  %v7267 = vunpack.c.l.b16 %v7257
  %v7268 = vunpack.c.h.b16 %v7257
  %v7269 = vunpack.c.l.b16 %v7258
  %v7270 = vunpack.c.h.b16 %v7258
  %v7271 = vpack.c.b16 %v7265, %v7263
  %v7272 = vpack.c.b16 %v7266, %v7264
  %v7273 = vpack.c.b16 %v7269, %v7267
  %v7274 = vpack.c.b16 %v7270, %v7268
  %v7280 = vsel %vm249, %v7246, 0
  %v7283 = vsel %vm249, %v7247, 0
  %v7286 = vsel %vm249, %v7248, 0
  %v7289 = vsel %vm249, %v7249, 0
  %v7292 = vsel %vm249, %v7250, 0
  %v7295 = vsel %vm249, %v7251, 0
  %v7298 = vsel %vm249, %v7252, 0
  %v7301 = vsel %vm249, %v7253, 0
  %7303 = vmatpush.bf16.msra.mxu0 0
  %7304 = vmatpush.bf16.msra.mxu0 0
  %7305 = vmatpush.bf16.msra.mxu0 0
  %7306 = vmatpush.bf16.msra.mxu0 0
  %7307 = vmatpush.bf16.msra.mxu0 0
  %7308 = vmatpush.bf16.msra.mxu0 0
  %7309 = vmatpush.bf16.msra.mxu0 %v7273
  %7310 = vmatpush.bf16.msra.mxu0 %v7271
  %7311 = vmatmul.bf16.gmra.mxu0 %v7280
  %v7312 = vpop.f32.mrf.mxu0
  %v7313 = vadd.f32 0.0, %v7312
  %v7314 = vpop.f32.mrf.mxu0
  %v7315 = vadd.f32 0.0, %v7314
  %7316 = vmatmul.bf16.gmra.mxu0 %v7283
  %v7317 = vpop.f32.mrf.mxu0
  %v7318 = vadd.f32 0.0, %v7317
  %v7319 = vpop.f32.mrf.mxu0
  %v7320 = vadd.f32 0.0, %v7319
  %7321 = vmatmul.bf16.gmra.mxu0 %v7286
  %v7322 = vpop.f32.mrf.mxu0
  %v7323 = vadd.f32 0.0, %v7322
  %v7324 = vpop.f32.mrf.mxu0
  %v7325 = vadd.f32 0.0, %v7324
  %7326 = vmatmul.bf16.gmra.mxu0 %v7289
  %v7327 = vpop.f32.mrf.mxu0
  %v7328 = vadd.f32 0.0, %v7327
  %v7329 = vpop.f32.mrf.mxu0
  %v7330 = vadd.f32 0.0, %v7329
  %7331 = vmatmul.bf16.gmra.mxu0 %v7292
  %v7332 = vpop.f32.mrf.mxu0
  %v7333 = vadd.f32 0.0, %v7332
  %v7334 = vpop.f32.mrf.mxu0
  %v7335 = vadd.f32 0.0, %v7334
  %7336 = vmatmul.bf16.gmra.mxu0 %v7295
  %v7337 = vpop.f32.mrf.mxu0
  %v7338 = vadd.f32 0.0, %v7337
  %v7339 = vpop.f32.mrf.mxu0
  %v7340 = vadd.f32 0.0, %v7339
  %7341 = vmatmul.bf16.gmra.mxu0 %v7298
  %v7342 = vpop.f32.mrf.mxu0
  %v7343 = vadd.f32 0.0, %v7342
  %v7344 = vpop.f32.mrf.mxu0
  %v7345 = vadd.f32 0.0, %v7344
  %7346 = vmatmul.bf16.gmra.mxu0 %v7301
  %v7347 = vpop.f32.mrf.mxu0
  %v7348 = vadd.f32 0.0, %v7347
  %v7349 = vpop.f32.mrf.mxu0
  %v7350 = vadd.f32 0.0, %v7349
  %7351 = vdwg.mxu0
  %7352 = vmatpush.bf16.msra.mxu0 0
  %7353 = vmatpush.bf16.msra.mxu0 0
  %7354 = vmatpush.bf16.msra.mxu0 0
  %7355 = vmatpush.bf16.msra.mxu0 0
  %7356 = vmatpush.bf16.msra.mxu0 0
  %7357 = vmatpush.bf16.msra.mxu0 0
  %7358 = vmatpush.bf16.msra.mxu0 %v7274
  %7359 = vmatpush.bf16.msra.mxu0 %v7272
  %7360 = vmatmul.bf16.gmra.mxu0 %v7280
  %v7361 = vpop.f32.mrf.mxu0
  %v7362 = vadd.f32 0.0, %v7361
  %v7363 = vpop.f32.mrf.mxu0
  %v7364 = vadd.f32 0.0, %v7363
  %7365 = vmatmul.bf16.gmra.mxu0 %v7283
  %v7366 = vpop.f32.mrf.mxu0
  %v7367 = vadd.f32 0.0, %v7366
  %v7368 = vpop.f32.mrf.mxu0
  %v7369 = vadd.f32 0.0, %v7368
  %7370 = vmatmul.bf16.gmra.mxu0 %v7286
  %v7371 = vpop.f32.mrf.mxu0
  %v7372 = vadd.f32 0.0, %v7371
  %v7373 = vpop.f32.mrf.mxu0
  %v7374 = vadd.f32 0.0, %v7373
  %7375 = vmatmul.bf16.gmra.mxu0 %v7289
  %v7376 = vpop.f32.mrf.mxu0
  %v7377 = vadd.f32 0.0, %v7376
  %v7378 = vpop.f32.mrf.mxu0
  %v7379 = vadd.f32 0.0, %v7378
  %7380 = vmatmul.bf16.gmra.mxu0 %v7292
  %v7381 = vpop.f32.mrf.mxu0
  %v7382 = vadd.f32 0.0, %v7381
  %v7383 = vpop.f32.mrf.mxu0
  %v7384 = vadd.f32 0.0, %v7383
  %7385 = vmatmul.bf16.gmra.mxu0 %v7295
  %v7386 = vpop.f32.mrf.mxu0
  %v7387 = vadd.f32 0.0, %v7386
  %v7388 = vpop.f32.mrf.mxu0
  %v7389 = vadd.f32 0.0, %v7388
  %7390 = vmatmul.bf16.gmra.mxu0 %v7298
  %v7391 = vpop.f32.mrf.mxu0
  %v7392 = vadd.f32 0.0, %v7391
  %v7393 = vpop.f32.mrf.mxu0
  %v7394 = vadd.f32 0.0, %v7393
  %7395 = vmatmul.bf16.gmra.mxu0 %v7301
  %v7396 = vpop.f32.mrf.mxu0
  %v7397 = vadd.f32 0.0, %v7396
  %v7398 = vpop.f32.mrf.mxu0
  %v7399 = vadd.f32 0.0, %v7398
  %7400 = vdwg.mxu0
  %v7401 = vadd.f32 %v7110, %v7313
  %v7402 = vadd.f32 %v7159, %v7362
  %v7403 = vadd.f32 %v7112, %v7315
  %v7404 = vadd.f32 %v7161, %v7364
  %v7405 = vadd.f32 %v7115, %v7318
  %v7406 = vadd.f32 %v7164, %v7367
  %v7407 = vadd.f32 %v7117, %v7320
  %v7408 = vadd.f32 %v7166, %v7369
  %v7409 = vadd.f32 %v7120, %v7323
  %v7410 = vadd.f32 %v7169, %v7372
  %v7411 = vadd.f32 %v7122, %v7325
  %v7412 = vadd.f32 %v7171, %v7374
  %v7413 = vadd.f32 %v7125, %v7328
  %v7414 = vadd.f32 %v7174, %v7377
  %v7415 = vadd.f32 %v7127, %v7330
  %v7416 = vadd.f32 %v7176, %v7379
  %v7417 = vadd.f32 %v7130, %v7333
  %v7418 = vadd.f32 %v7179, %v7382
  %v7419 = vadd.f32 %v7132, %v7335
  %v7420 = vadd.f32 %v7181, %v7384
  %v7421 = vadd.f32 %v7135, %v7338
  %v7422 = vadd.f32 %v7184, %v7387
  %v7423 = vadd.f32 %v7137, %v7340
  %v7424 = vadd.f32 %v7186, %v7389
  %v7425 = vadd.f32 %v7140, %v7343
  %v7426 = vadd.f32 %v7189, %v7392
  %v7427 = vadd.f32 %v7142, %v7345
  %v7428 = vadd.f32 %v7191, %v7394
  %v7429 = vadd.f32 %v7145, %v7348
  %v7430 = vadd.f32 %v7194, %v7397
  %v7431 = vadd.f32 %v7147, %v7350
  %v7432 = vadd.f32 %v7196, %v7399
  %v7433 = vmul.f32 %v6856, %v5578
  %v7434 = vmul.f32 %v6855, %v5583
  %v7435 = vmul.f32 %v6854, %v5588
  %v7436 = vmul.f32 %v6853, %v5593
  %v7437 = vmul.f32 %v6852, %v5598
  %v7438 = vmul.f32 %v6851, %v5603
  %v7439 = vmul.f32 %v6850, %v5608
  %v7440 = vmul.f32 %v6849, %v5613
  %v7441 = vmul.f32 %v6848, %v5618
  %v7442 = vmul.f32 %v6847, %v5623
  %v7443 = vmul.f32 %v6846, %v5628
  %v7444 = vmul.f32 %v6845, %v5633
  %v7445 = vmul.f32 %v6844, %v5638
  %v7446 = vmul.f32 %v6843, %v5643
  %v7447 = vmul.f32 %v6842, %v5648
  %v7448 = vmul.f32 %v6841, %v5653
  %v7449 = vpack.c.bf16 %v7434, %v7433
  %v7450 = vpack.c.bf16 %v7436, %v7435
  %v7451 = vpack.c.bf16 %v7438, %v7437
  %v7452 = vpack.c.bf16 %v7440, %v7439
  %v7453 = vpack.c.bf16 %v7442, %v7441
  %v7454 = vpack.c.bf16 %v7444, %v7443
  %v7455 = vpack.c.bf16 %v7446, %v7445
  %v7456 = vpack.c.bf16 %v7448, %v7447
  %s7457 = scalar_lea.vmem %s10, 96
  %v7458 = vld [vmem:[%s7457] sm:$0xff]
  %v7459 = vld [vmem:[%s7457 + $0x8] sm:$0xff]
  %v7460 = vld [vmem:[%s7457 + $0x10] sm:$0xff]
  %v7461 = vld [vmem:[%s7457 + $0x18] sm:$0xff]
  %v7466 = vunpack.c.l.b16 %v7458
  %v7467 = vunpack.c.h.b16 %v7458
  %v7468 = vunpack.c.l.b16 %v7459
  %v7469 = vunpack.c.h.b16 %v7459
  %v7470 = vunpack.c.l.b16 %v7460
  %v7471 = vunpack.c.h.b16 %v7460
  %v7472 = vunpack.c.l.b16 %v7461
  %v7473 = vunpack.c.h.b16 %v7461
  %v7474 = vpack.c.b16 %v7468, %v7466
  %v7475 = vpack.c.b16 %v7469, %v7467
  %v7476 = vpack.c.b16 %v7472, %v7470
  %v7477 = vpack.c.b16 %v7473, %v7471
  %v7483 = vsel %vm249, %v7449, 0
  %v7486 = vsel %vm249, %v7450, 0
  %v7489 = vsel %vm249, %v7451, 0
  %v7492 = vsel %vm249, %v7452, 0
  %v7495 = vsel %vm249, %v7453, 0
  %v7498 = vsel %vm249, %v7454, 0
  %v7501 = vsel %vm249, %v7455, 0
  %v7504 = vsel %vm249, %v7456, 0
  %7506 = vmatpush.bf16.msra.mxu0 0
  %7507 = vmatpush.bf16.msra.mxu0 0
  %7508 = vmatpush.bf16.msra.mxu0 0
  %7509 = vmatpush.bf16.msra.mxu0 0
  %7510 = vmatpush.bf16.msra.mxu0 0
  %7511 = vmatpush.bf16.msra.mxu0 0
  %7512 = vmatpush.bf16.msra.mxu0 %v7476
  %7513 = vmatpush.bf16.msra.mxu0 %v7474
  %7514 = vmatmul.bf16.gmra.mxu0 %v7483
  %v7515 = vpop.f32.mrf.mxu0
  %v7516 = vadd.f32 0.0, %v7515
  %v7517 = vpop.f32.mrf.mxu0
  %v7518 = vadd.f32 0.0, %v7517
  %7519 = vmatmul.bf16.gmra.mxu0 %v7486
  %v7520 = vpop.f32.mrf.mxu0
  %v7521 = vadd.f32 0.0, %v7520
  %v7522 = vpop.f32.mrf.mxu0
  %v7523 = vadd.f32 0.0, %v7522
  %7524 = vmatmul.bf16.gmra.mxu0 %v7489
  %v7525 = vpop.f32.mrf.mxu0
  %v7526 = vadd.f32 0.0, %v7525
  %v7527 = vpop.f32.mrf.mxu0
  %v7528 = vadd.f32 0.0, %v7527
  %7529 = vmatmul.bf16.gmra.mxu0 %v7492
  %v7530 = vpop.f32.mrf.mxu0
  %v7531 = vadd.f32 0.0, %v7530
  %v7532 = vpop.f32.mrf.mxu0
  %v7533 = vadd.f32 0.0, %v7532
  %7534 = vmatmul.bf16.gmra.mxu0 %v7495
  %v7535 = vpop.f32.mrf.mxu0
  %v7536 = vadd.f32 0.0, %v7535
  %v7537 = vpop.f32.mrf.mxu0
  %v7538 = vadd.f32 0.0, %v7537
  %7539 = vmatmul.bf16.gmra.mxu0 %v7498
  %v7540 = vpop.f32.mrf.mxu0
  %v7541 = vadd.f32 0.0, %v7540
  %v7542 = vpop.f32.mrf.mxu0
  %v7543 = vadd.f32 0.0, %v7542
  %7544 = vmatmul.bf16.gmra.mxu0 %v7501
  %v7545 = vpop.f32.mrf.mxu0
  %v7546 = vadd.f32 0.0, %v7545
  %v7547 = vpop.f32.mrf.mxu0
  %v7548 = vadd.f32 0.0, %v7547
  %7549 = vmatmul.bf16.gmra.mxu0 %v7504
  %v7550 = vpop.f32.mrf.mxu0
  %v7551 = vadd.f32 0.0, %v7550
  %v7552 = vpop.f32.mrf.mxu0
  %v7553 = vadd.f32 0.0, %v7552
  %7554 = vdwg.mxu0
  %7555 = vmatpush.bf16.msra.mxu0 0
  %7556 = vmatpush.bf16.msra.mxu0 0
  %7557 = vmatpush.bf16.msra.mxu0 0
  %7558 = vmatpush.bf16.msra.mxu0 0
  %7559 = vmatpush.bf16.msra.mxu0 0
  %7560 = vmatpush.bf16.msra.mxu0 0
  %7561 = vmatpush.bf16.msra.mxu0 %v7477
  %7562 = vmatpush.bf16.msra.mxu0 %v7475
  %7563 = vmatmul.bf16.gmra.mxu0 %v7483
  %v7564 = vpop.f32.mrf.mxu0
  %v7565 = vadd.f32 0.0, %v7564
  %v7566 = vpop.f32.mrf.mxu0
  %v7567 = vadd.f32 0.0, %v7566
  %7568 = vmatmul.bf16.gmra.mxu0 %v7486
  %v7569 = vpop.f32.mrf.mxu0
  %v7570 = vadd.f32 0.0, %v7569
  %v7571 = vpop.f32.mrf.mxu0
  %v7572 = vadd.f32 0.0, %v7571
  %7573 = vmatmul.bf16.gmra.mxu0 %v7489
  %v7574 = vpop.f32.mrf.mxu0
  %v7575 = vadd.f32 0.0, %v7574
  %v7576 = vpop.f32.mrf.mxu0
  %v7577 = vadd.f32 0.0, %v7576
  %7578 = vmatmul.bf16.gmra.mxu0 %v7492
  %v7579 = vpop.f32.mrf.mxu0
  %v7580 = vadd.f32 0.0, %v7579
  %v7581 = vpop.f32.mrf.mxu0
  %v7582 = vadd.f32 0.0, %v7581
  %7583 = vmatmul.bf16.gmra.mxu0 %v7495
  %v7584 = vpop.f32.mrf.mxu0
  %v7585 = vadd.f32 0.0, %v7584
  %v7586 = vpop.f32.mrf.mxu0
  %v7587 = vadd.f32 0.0, %v7586
  %7588 = vmatmul.bf16.gmra.mxu0 %v7498
  %v7589 = vpop.f32.mrf.mxu0
  %v7590 = vadd.f32 0.0, %v7589
  %v7591 = vpop.f32.mrf.mxu0
  %v7592 = vadd.f32 0.0, %v7591
  %7593 = vmatmul.bf16.gmra.mxu0 %v7501
  %v7594 = vpop.f32.mrf.mxu0
  %v7595 = vadd.f32 0.0, %v7594
  %v7596 = vpop.f32.mrf.mxu0
  %v7597 = vadd.f32 0.0, %v7596
  %7598 = vmatmul.bf16.gmra.mxu0 %v7504
  %v7599 = vpop.f32.mrf.mxu0
  %v7600 = vadd.f32 0.0, %v7599
  %v7601 = vpop.f32.mrf.mxu0
  %v7602 = vadd.f32 0.0, %v7601
  %7603 = vdwg.mxu0
  %v7604 = vadd.f32 %v7401, %v7516
  %v7605 = vadd.f32 %v7402, %v7565
  %v7606 = vadd.f32 %v7403, %v7518
  %v7607 = vadd.f32 %v7404, %v7567
  %v7608 = vadd.f32 %v7405, %v7521
  %v7609 = vadd.f32 %v7406, %v7570
  %v7610 = vadd.f32 %v7407, %v7523
  %v7611 = vadd.f32 %v7408, %v7572
  %v7612 = vadd.f32 %v7409, %v7526
  %v7613 = vadd.f32 %v7410, %v7575
  %v7614 = vadd.f32 %v7411, %v7528
  %v7615 = vadd.f32 %v7412, %v7577
  %v7616 = vadd.f32 %v7413, %v7531
  %v7617 = vadd.f32 %v7414, %v7580
  %v7618 = vadd.f32 %v7415, %v7533
  %v7619 = vadd.f32 %v7416, %v7582
  %v7620 = vadd.f32 %v7417, %v7536
  %v7621 = vadd.f32 %v7418, %v7585
  %v7622 = vadd.f32 %v7419, %v7538
  %v7623 = vadd.f32 %v7420, %v7587
  %v7624 = vadd.f32 %v7421, %v7541
  %v7625 = vadd.f32 %v7422, %v7590
  %v7626 = vadd.f32 %v7423, %v7543
  %v7627 = vadd.f32 %v7424, %v7592
  %v7628 = vadd.f32 %v7425, %v7546
  %v7629 = vadd.f32 %v7426, %v7595
  %v7630 = vadd.f32 %v7427, %v7548
  %v7631 = vadd.f32 %v7428, %v7597
  %v7632 = vadd.f32 %v7429, %v7551
  %v7633 = vadd.f32 %v7430, %v7600
  %v7634 = vadd.f32 %v7431, %v7553
  %v7635 = vadd.f32 %v7432, %v7602
  %v7636 = vpack.c.bf16 %v6808, %v6807
  %v7637 = vpack.c.bf16 %v6810, %v6809
  %v7638 = vpack.c.bf16 %v6812, %v6811
  %v7639 = vpack.c.bf16 %v6814, %v6813
  %v7640 = vpack.c.bf16 %v6816, %v6815
  %v7641 = vpack.c.bf16 %v6818, %v6817
  %v7642 = vpack.c.bf16 %v6820, %v6819
  %v7643 = vpack.c.bf16 %v6822, %v6821
  %s7644 = scalar_lea.vmem %s10, 128
  %v7645 = vld [vmem:[%s7644] sm:$0xff]
  %v7646 = vld [vmem:[%s7644 + $0x8] sm:$0xff]
  %v7647 = vld [vmem:[%s7644 + $0x10] sm:$0xff]
  %v7648 = vld [vmem:[%s7644 + $0x18] sm:$0xff]
  %v7653 = vunpack.c.l.b16 %v7645
  %v7654 = vunpack.c.h.b16 %v7645
  %v7655 = vunpack.c.l.b16 %v7646
  %v7656 = vunpack.c.h.b16 %v7646
  %v7657 = vunpack.c.l.b16 %v7647
  %v7658 = vunpack.c.h.b16 %v7647
  %v7659 = vunpack.c.l.b16 %v7648
  %v7660 = vunpack.c.h.b16 %v7648
  %v7661 = vpack.c.b16 %v7655, %v7653
  %v7662 = vpack.c.b16 %v7656, %v7654
  %v7663 = vpack.c.b16 %v7659, %v7657
  %v7664 = vpack.c.b16 %v7660, %v7658
  %v7670 = vsel %vm249, %v7636, 0
  %v7673 = vsel %vm249, %v7637, 0
  %v7676 = vsel %vm249, %v7638, 0
  %v7679 = vsel %vm249, %v7639, 0
  %v7682 = vsel %vm249, %v7640, 0
  %v7685 = vsel %vm249, %v7641, 0
  %v7688 = vsel %vm249, %v7642, 0
  %v7691 = vsel %vm249, %v7643, 0
  %7693 = vmatpush.bf16.msra.mxu0 0
  %7694 = vmatpush.bf16.msra.mxu0 0
  %7695 = vmatpush.bf16.msra.mxu0 0
  %7696 = vmatpush.bf16.msra.mxu0 0
  %7697 = vmatpush.bf16.msra.mxu0 0
  %7698 = vmatpush.bf16.msra.mxu0 0
  %7699 = vmatpush.bf16.msra.mxu0 %v7663
  %7700 = vmatpush.bf16.msra.mxu0 %v7661
  %7701 = vmatmul.bf16.gmra.mxu0 %v7670
  %v7702 = vpop.f32.mrf.mxu0
  %v7703 = vadd.f32 0.0, %v7702
  %v7704 = vpop.f32.mrf.mxu0
  %v7705 = vadd.f32 0.0, %v7704
  %7706 = vmatmul.bf16.gmra.mxu0 %v7673
  %v7707 = vpop.f32.mrf.mxu0
  %v7708 = vadd.f32 0.0, %v7707
  %v7709 = vpop.f32.mrf.mxu0
  %v7710 = vadd.f32 0.0, %v7709
  %7711 = vmatmul.bf16.gmra.mxu0 %v7676
  %v7712 = vpop.f32.mrf.mxu0
  %v7713 = vadd.f32 0.0, %v7712
  %v7714 = vpop.f32.mrf.mxu0
  %v7715 = vadd.f32 0.0, %v7714
  %7716 = vmatmul.bf16.gmra.mxu0 %v7679
  %v7717 = vpop.f32.mrf.mxu0
  %v7718 = vadd.f32 0.0, %v7717
  %v7719 = vpop.f32.mrf.mxu0
  %v7720 = vadd.f32 0.0, %v7719
  %7721 = vmatmul.bf16.gmra.mxu0 %v7682
  %v7722 = vpop.f32.mrf.mxu0
  %v7723 = vadd.f32 0.0, %v7722
  %v7724 = vpop.f32.mrf.mxu0
  %v7725 = vadd.f32 0.0, %v7724
  %7726 = vmatmul.bf16.gmra.mxu0 %v7685
  %v7727 = vpop.f32.mrf.mxu0
  %v7728 = vadd.f32 0.0, %v7727
  %v7729 = vpop.f32.mrf.mxu0
  %v7730 = vadd.f32 0.0, %v7729
  %7731 = vmatmul.bf16.gmra.mxu0 %v7688
  %v7732 = vpop.f32.mrf.mxu0
  %v7733 = vadd.f32 0.0, %v7732
  %v7734 = vpop.f32.mrf.mxu0
  %v7735 = vadd.f32 0.0, %v7734
  %7736 = vmatmul.bf16.gmra.mxu0 %v7691
  %v7737 = vpop.f32.mrf.mxu0
  %v7738 = vadd.f32 0.0, %v7737
  %v7739 = vpop.f32.mrf.mxu0
  %v7740 = vadd.f32 0.0, %v7739
  %7741 = vdwg.mxu0
  %7742 = vmatpush.bf16.msra.mxu0 0
  %7743 = vmatpush.bf16.msra.mxu0 0
  %7744 = vmatpush.bf16.msra.mxu0 0
  %7745 = vmatpush.bf16.msra.mxu0 0
  %7746 = vmatpush.bf16.msra.mxu0 0
  %7747 = vmatpush.bf16.msra.mxu0 0
  %7748 = vmatpush.bf16.msra.mxu0 %v7664
  %7749 = vmatpush.bf16.msra.mxu0 %v7662
  %7750 = vmatmul.bf16.gmra.mxu0 %v7670
  %v7751 = vpop.f32.mrf.mxu0
  %v7752 = vadd.f32 0.0, %v7751
  %v7753 = vpop.f32.mrf.mxu0
  %v7754 = vadd.f32 0.0, %v7753
  %7755 = vmatmul.bf16.gmra.mxu0 %v7673
  %v7756 = vpop.f32.mrf.mxu0
  %v7757 = vadd.f32 0.0, %v7756
  %v7758 = vpop.f32.mrf.mxu0
  %v7759 = vadd.f32 0.0, %v7758
  %7760 = vmatmul.bf16.gmra.mxu0 %v7676
  %v7761 = vpop.f32.mrf.mxu0
  %v7762 = vadd.f32 0.0, %v7761
  %v7763 = vpop.f32.mrf.mxu0
  %v7764 = vadd.f32 0.0, %v7763
  %7765 = vmatmul.bf16.gmra.mxu0 %v7679
  %v7766 = vpop.f32.mrf.mxu0
  %v7767 = vadd.f32 0.0, %v7766
  %v7768 = vpop.f32.mrf.mxu0
  %v7769 = vadd.f32 0.0, %v7768
  %7770 = vmatmul.bf16.gmra.mxu0 %v7682
  %v7771 = vpop.f32.mrf.mxu0
  %v7772 = vadd.f32 0.0, %v7771
  %v7773 = vpop.f32.mrf.mxu0
  %v7774 = vadd.f32 0.0, %v7773
  %7775 = vmatmul.bf16.gmra.mxu0 %v7685
  %v7776 = vpop.f32.mrf.mxu0
  %v7777 = vadd.f32 0.0, %v7776
  %v7778 = vpop.f32.mrf.mxu0
  %v7779 = vadd.f32 0.0, %v7778
  %7780 = vmatmul.bf16.gmra.mxu0 %v7688
  %v7781 = vpop.f32.mrf.mxu0
  %v7782 = vadd.f32 0.0, %v7781
  %v7783 = vpop.f32.mrf.mxu0
  %v7784 = vadd.f32 0.0, %v7783
  %7785 = vmatmul.bf16.gmra.mxu0 %v7691
  %v7786 = vpop.f32.mrf.mxu0
  %v7787 = vadd.f32 0.0, %v7786
  %v7788 = vpop.f32.mrf.mxu0
  %v7789 = vadd.f32 0.0, %v7788
  %7790 = vdwg.mxu0
  %v7791 = vadd.f32 %v7604, %v7703
  %v7792 = vadd.f32 %v7605, %v7752
  %v7793 = vadd.f32 %v7606, %v7705
  %v7794 = vadd.f32 %v7607, %v7754
  %v7795 = vadd.f32 %v7608, %v7708
  %v7796 = vadd.f32 %v7609, %v7757
  %v7797 = vadd.f32 %v7610, %v7710
  %v7798 = vadd.f32 %v7611, %v7759
  %v7799 = vadd.f32 %v7612, %v7713
  %v7800 = vadd.f32 %v7613, %v7762
  %v7801 = vadd.f32 %v7614, %v7715
  %v7802 = vadd.f32 %v7615, %v7764
  %v7803 = vadd.f32 %v7616, %v7718
  %v7804 = vadd.f32 %v7617, %v7767
  %v7805 = vadd.f32 %v7618, %v7720
  %v7806 = vadd.f32 %v7619, %v7769
  %v7807 = vadd.f32 %v7620, %v7723
  %v7808 = vadd.f32 %v7621, %v7772
  %v7809 = vadd.f32 %v7622, %v7725
  %v7810 = vadd.f32 %v7623, %v7774
  %v7811 = vadd.f32 %v7624, %v7728
  %v7812 = vadd.f32 %v7625, %v7777
  %v7813 = vadd.f32 %v7626, %v7730
  %v7814 = vadd.f32 %v7627, %v7779
  %v7815 = vadd.f32 %v7628, %v7733
  %v7816 = vadd.f32 %v7629, %v7782
  %v7817 = vadd.f32 %v7630, %v7735
  %v7818 = vadd.f32 %v7631, %v7784
  %v7819 = vadd.f32 %v7632, %v7738
  %v7820 = vadd.f32 %v7633, %v7787
  %v7821 = vadd.f32 %v7634, %v7740
  %v7822 = vadd.f32 %v7635, %v7789
  %v7823 = vmul.f32 %v7228, %v5919
  %v7824 = vmul.f32 %v7227, %v5924
  %v7825 = vmul.f32 %v7226, %v5929
  %v7826 = vmul.f32 %v7225, %v5934
  %v7827 = vmul.f32 %v7224, %v5939
  %v7828 = vmul.f32 %v7223, %v5944
  %v7829 = vmul.f32 %v7222, %v5949
  %v7830 = vmul.f32 %v7221, %v5954
  %v7831 = vmul.f32 %v7220, %v5959
  %v7832 = vmul.f32 %v7219, %v5964
  %v7833 = vmul.f32 %v7218, %v5969
  %v7834 = vmul.f32 %v7217, %v5974
  %v7835 = vmul.f32 %v7216, %v5979
  %v7836 = vmul.f32 %v7215, %v5984
  %v7837 = vmul.f32 %v7214, %v5989
  %v7838 = vmul.f32 %v7229, %v5994
  %v7839 = vpack.c.bf16 %v7824, %v7823
  %v7840 = vpack.c.bf16 %v7826, %v7825
  %v7841 = vpack.c.bf16 %v7828, %v7827
  %v7842 = vpack.c.bf16 %v7830, %v7829
  %v7843 = vpack.c.bf16 %v7832, %v7831
  %v7844 = vpack.c.bf16 %v7834, %v7833
  %v7845 = vpack.c.bf16 %v7836, %v7835
  %v7846 = vpack.c.bf16 %v7838, %v7837
  %s7847 = scalar_lea.vmem %s10, 160
  %v7848 = vld [vmem:[%s7847] sm:$0xff]
  %v7849 = vld [vmem:[%s7847 + $0x8] sm:$0xff]
  %v7850 = vld [vmem:[%s7847 + $0x10] sm:$0xff]
  %v7851 = vld [vmem:[%s7847 + $0x18] sm:$0xff]
  %v7856 = vunpack.c.l.b16 %v7848
  %v7857 = vunpack.c.h.b16 %v7848
  %v7858 = vunpack.c.l.b16 %v7849
  %v7859 = vunpack.c.h.b16 %v7849
  %v7860 = vunpack.c.l.b16 %v7850
  %v7861 = vunpack.c.h.b16 %v7850
  %v7862 = vunpack.c.l.b16 %v7851
  %v7863 = vunpack.c.h.b16 %v7851
  %v7864 = vpack.c.b16 %v7858, %v7856
  %v7865 = vpack.c.b16 %v7859, %v7857
  %v7866 = vpack.c.b16 %v7862, %v7860
  %v7867 = vpack.c.b16 %v7863, %v7861
  %v7873 = vsel %vm249, %v7839, 0
  %v7876 = vsel %vm249, %v7840, 0
  %v7879 = vsel %vm249, %v7841, 0
  %v7882 = vsel %vm249, %v7842, 0
  %v7885 = vsel %vm249, %v7843, 0
  %v7888 = vsel %vm249, %v7844, 0
  %v7891 = vsel %vm249, %v7845, 0
  %v7894 = vsel %vm249, %v7846, 0
  %7896 = vmatpush.bf16.msra.mxu0 0
  %7897 = vmatpush.bf16.msra.mxu0 0
  %7898 = vmatpush.bf16.msra.mxu0 0
  %7899 = vmatpush.bf16.msra.mxu0 0
  %7900 = vmatpush.bf16.msra.mxu0 0
  %7901 = vmatpush.bf16.msra.mxu0 0
  %7902 = vmatpush.bf16.msra.mxu0 %v7866
  %7903 = vmatpush.bf16.msra.mxu0 %v7864
  %7904 = vmatmul.bf16.gmra.mxu0 %v7873
  %v7905 = vpop.f32.mrf.mxu0
  %v7906 = vadd.f32 0.0, %v7905
  %v7907 = vpop.f32.mrf.mxu0
  %v7908 = vadd.f32 0.0, %v7907
  %7909 = vmatmul.bf16.gmra.mxu0 %v7876
  %v7910 = vpop.f32.mrf.mxu0
  %v7911 = vadd.f32 0.0, %v7910
  %v7912 = vpop.f32.mrf.mxu0
  %v7913 = vadd.f32 0.0, %v7912
  %7914 = vmatmul.bf16.gmra.mxu0 %v7879
  %v7915 = vpop.f32.mrf.mxu0
  %v7916 = vadd.f32 0.0, %v7915
  %v7917 = vpop.f32.mrf.mxu0
  %v7918 = vadd.f32 0.0, %v7917
  %7919 = vmatmul.bf16.gmra.mxu0 %v7882
  %v7920 = vpop.f32.mrf.mxu0
  %v7921 = vadd.f32 0.0, %v7920
  %v7922 = vpop.f32.mrf.mxu0
  %v7923 = vadd.f32 0.0, %v7922
  %7924 = vmatmul.bf16.gmra.mxu0 %v7885
  %v7925 = vpop.f32.mrf.mxu0
  %v7926 = vadd.f32 0.0, %v7925
  %v7927 = vpop.f32.mrf.mxu0
  %v7928 = vadd.f32 0.0, %v7927
  %7929 = vmatmul.bf16.gmra.mxu0 %v7888
  %v7930 = vpop.f32.mrf.mxu0
  %v7931 = vadd.f32 0.0, %v7930
  %v7932 = vpop.f32.mrf.mxu0
  %v7933 = vadd.f32 0.0, %v7932
  %7934 = vmatmul.bf16.gmra.mxu0 %v7891
  %v7935 = vpop.f32.mrf.mxu0
  %v7936 = vadd.f32 0.0, %v7935
  %v7937 = vpop.f32.mrf.mxu0
  %v7938 = vadd.f32 0.0, %v7937
  %7939 = vmatmul.bf16.gmra.mxu0 %v7894
  %v7940 = vpop.f32.mrf.mxu0
  %v7941 = vadd.f32 0.0, %v7940
  %v7942 = vpop.f32.mrf.mxu0
  %v7943 = vadd.f32 0.0, %v7942
  %7944 = vdwg.mxu0
  %7945 = vmatpush.bf16.msra.mxu0 0
  %7946 = vmatpush.bf16.msra.mxu0 0
  %7947 = vmatpush.bf16.msra.mxu0 0
  %7948 = vmatpush.bf16.msra.mxu0 0
  %7949 = vmatpush.bf16.msra.mxu0 0
  %7950 = vmatpush.bf16.msra.mxu0 0
  %7951 = vmatpush.bf16.msra.mxu0 %v7867
  %7952 = vmatpush.bf16.msra.mxu0 %v7865
  %7953 = vmatmul.bf16.gmra.mxu0 %v7873
  %v7954 = vpop.f32.mrf.mxu0
  %v7955 = vadd.f32 0.0, %v7954
  %v7956 = vpop.f32.mrf.mxu0
  %v7957 = vadd.f32 0.0, %v7956
  %7958 = vmatmul.bf16.gmra.mxu0 %v7876
  %v7959 = vpop.f32.mrf.mxu0
  %v7960 = vadd.f32 0.0, %v7959
  %v7961 = vpop.f32.mrf.mxu0
  %v7962 = vadd.f32 0.0, %v7961
  %7963 = vmatmul.bf16.gmra.mxu0 %v7879
  %v7964 = vpop.f32.mrf.mxu0
  %v7965 = vadd.f32 0.0, %v7964
  %v7966 = vpop.f32.mrf.mxu0
  %v7967 = vadd.f32 0.0, %v7966
  %7968 = vmatmul.bf16.gmra.mxu0 %v7882
  %v7969 = vpop.f32.mrf.mxu0
  %v7970 = vadd.f32 0.0, %v7969
  %v7971 = vpop.f32.mrf.mxu0
  %v7972 = vadd.f32 0.0, %v7971
  %7973 = vmatmul.bf16.gmra.mxu0 %v7885
  %v7974 = vpop.f32.mrf.mxu0
  %v7975 = vadd.f32 0.0, %v7974
  %v7976 = vpop.f32.mrf.mxu0
  %v7977 = vadd.f32 0.0, %v7976
  %7978 = vmatmul.bf16.gmra.mxu0 %v7888
  %v7979 = vpop.f32.mrf.mxu0
  %v7980 = vadd.f32 0.0, %v7979
  %v7981 = vpop.f32.mrf.mxu0
  %v7982 = vadd.f32 0.0, %v7981
  %7983 = vmatmul.bf16.gmra.mxu0 %v7891
  %v7984 = vpop.f32.mrf.mxu0
  %v7985 = vadd.f32 0.0, %v7984
  %v7986 = vpop.f32.mrf.mxu0
  %v7987 = vadd.f32 0.0, %v7986
  %7988 = vmatmul.bf16.gmra.mxu0 %v7894
  %v7989 = vpop.f32.mrf.mxu0
  %v7990 = vadd.f32 0.0, %v7989
  %v7991 = vpop.f32.mrf.mxu0
  %v7992 = vadd.f32 0.0, %v7991
  %7993 = vdwg.mxu0
  %v7994 = vadd.f32 %v7791, %v7906
  %v7995 = vadd.f32 %v7792, %v7955
  %v7996 = vadd.f32 %v7793, %v7908
  %v7997 = vadd.f32 %v7794, %v7957
  %v7998 = vadd.f32 %v7795, %v7911
  %v7999 = vadd.f32 %v7796, %v7960
  %v8000 = vadd.f32 %v7797, %v7913
  %v8001 = vadd.f32 %v7798, %v7962
  %v8002 = vadd.f32 %v7799, %v7916
  %v8003 = vadd.f32 %v7800, %v7965
  %v8004 = vadd.f32 %v7801, %v7918
  %v8005 = vadd.f32 %v7802, %v7967
  %v8006 = vadd.f32 %v7803, %v7921
  %v8007 = vadd.f32 %v7804, %v7970
  %v8008 = vadd.f32 %v7805, %v7923
  %v8009 = vadd.f32 %v7806, %v7972
  %v8010 = vadd.f32 %v7807, %v7926
  %v8011 = vadd.f32 %v7808, %v7975
  %v8012 = vadd.f32 %v7809, %v7928
  %v8013 = vadd.f32 %v7810, %v7977
  %v8014 = vadd.f32 %v7811, %v7931
  %v8015 = vadd.f32 %v7812, %v7980
  %v8016 = vadd.f32 %v7813, %v7933
  %v8017 = vadd.f32 %v7814, %v7982
  %v8018 = vadd.f32 %v7815, %v7936
  %v8019 = vadd.f32 %v7816, %v7985
  %v8020 = vadd.f32 %v7817, %v7938
  %v8021 = vadd.f32 %v7818, %v7987
  %v8022 = vadd.f32 %v7819, %v7941
  %v8023 = vadd.f32 %v7820, %v7990
  %v8024 = vadd.f32 %v7821, %v7943
  %v8025 = vadd.f32 %v7822, %v7992
  %v8026 = vmul.f32 %v6855, %v6146
  %v8027 = vmul.f32 %v6854, %v6151
  %v8028 = vmul.f32 %v6853, %v6156
  %v8029 = vmul.f32 %v6852, %v6161
  %v8030 = vmul.f32 %v6851, %v6166
  %v8031 = vmul.f32 %v6850, %v6171
  %v8032 = vmul.f32 %v6849, %v6176
  %v8033 = vmul.f32 %v6848, %v6181
  %v8034 = vmul.f32 %v6847, %v6186
  %v8035 = vmul.f32 %v6846, %v6191
  %v8036 = vmul.f32 %v6845, %v6196
  %v8037 = vmul.f32 %v6844, %v6201
  %v8038 = vmul.f32 %v6843, %v6206
  %v8039 = vmul.f32 %v6842, %v6211
  %v8040 = vmul.f32 %v6841, %v6216
  %v8041 = vmul.f32 %v6856, %v6221
  %v8042 = vpack.c.bf16 %v8027, %v8026
  %v8043 = vpack.c.bf16 %v8029, %v8028
  %v8044 = vpack.c.bf16 %v8031, %v8030
  %v8045 = vpack.c.bf16 %v8033, %v8032
  %v8046 = vpack.c.bf16 %v8035, %v8034
  %v8047 = vpack.c.bf16 %v8037, %v8036
  %v8048 = vpack.c.bf16 %v8039, %v8038
  %v8049 = vpack.c.bf16 %v8041, %v8040
  %s8050 = scalar_lea.vmem %s10, 192
  %v8051 = vld [vmem:[%s8050] sm:$0xff]
  %v8052 = vld [vmem:[%s8050 + $0x8] sm:$0xff]
  %v8053 = vld [vmem:[%s8050 + $0x10] sm:$0xff]
  %v8054 = vld [vmem:[%s8050 + $0x18] sm:$0xff]
  %v8059 = vunpack.c.l.b16 %v8051
  %v8060 = vunpack.c.h.b16 %v8051
  %v8061 = vunpack.c.l.b16 %v8052
  %v8062 = vunpack.c.h.b16 %v8052
  %v8063 = vunpack.c.l.b16 %v8053
  %v8064 = vunpack.c.h.b16 %v8053
  %v8065 = vunpack.c.l.b16 %v8054
  %v8066 = vunpack.c.h.b16 %v8054
  %v8067 = vpack.c.b16 %v8061, %v8059
  %v8068 = vpack.c.b16 %v8062, %v8060
  %v8069 = vpack.c.b16 %v8065, %v8063
  %v8070 = vpack.c.b16 %v8066, %v8064
  %v8076 = vsel %vm249, %v8042, 0
  %v8079 = vsel %vm249, %v8043, 0
  %v8082 = vsel %vm249, %v8044, 0
  %v8085 = vsel %vm249, %v8045, 0
  %v8088 = vsel %vm249, %v8046, 0
  %v8091 = vsel %vm249, %v8047, 0
  %v8094 = vsel %vm249, %v8048, 0
  %v8097 = vsel %vm249, %v8049, 0
  %8099 = vmatpush.bf16.msra.mxu0 0
  %8100 = vmatpush.bf16.msra.mxu0 0
  %8101 = vmatpush.bf16.msra.mxu0 0
  %8102 = vmatpush.bf16.msra.mxu0 0
  %8103 = vmatpush.bf16.msra.mxu0 0
  %8104 = vmatpush.bf16.msra.mxu0 0
  %8105 = vmatpush.bf16.msra.mxu0 %v8069
  %8106 = vmatpush.bf16.msra.mxu0 %v8067
  %8107 = vmatmul.bf16.gmra.mxu0 %v8076
  %v8108 = vpop.f32.mrf.mxu0
  %v8109 = vadd.f32 0.0, %v8108
  %v8110 = vpop.f32.mrf.mxu0
  %v8111 = vadd.f32 0.0, %v8110
  %8112 = vmatmul.bf16.gmra.mxu0 %v8079
  %v8113 = vpop.f32.mrf.mxu0
  %v8114 = vadd.f32 0.0, %v8113
  %v8115 = vpop.f32.mrf.mxu0
  %v8116 = vadd.f32 0.0, %v8115
  %8117 = vmatmul.bf16.gmra.mxu0 %v8082
  %v8118 = vpop.f32.mrf.mxu0
  %v8119 = vadd.f32 0.0, %v8118
  %v8120 = vpop.f32.mrf.mxu0
  %v8121 = vadd.f32 0.0, %v8120
  %8122 = vmatmul.bf16.gmra.mxu0 %v8085
  %v8123 = vpop.f32.mrf.mxu0
  %v8124 = vadd.f32 0.0, %v8123
  %v8125 = vpop.f32.mrf.mxu0
  %v8126 = vadd.f32 0.0, %v8125
  %8127 = vmatmul.bf16.gmra.mxu0 %v8088
  %v8128 = vpop.f32.mrf.mxu0
  %v8129 = vadd.f32 0.0, %v8128
  %v8130 = vpop.f32.mrf.mxu0
  %v8131 = vadd.f32 0.0, %v8130
  %8132 = vmatmul.bf16.gmra.mxu0 %v8091
  %v8133 = vpop.f32.mrf.mxu0
  %v8134 = vadd.f32 0.0, %v8133
  %v8135 = vpop.f32.mrf.mxu0
  %v8136 = vadd.f32 0.0, %v8135
  %8137 = vmatmul.bf16.gmra.mxu0 %v8094
  %v8138 = vpop.f32.mrf.mxu0
  %v8139 = vadd.f32 0.0, %v8138
  %v8140 = vpop.f32.mrf.mxu0
  %v8141 = vadd.f32 0.0, %v8140
  %8142 = vmatmul.bf16.gmra.mxu0 %v8097
  %v8143 = vpop.f32.mrf.mxu0
  %v8144 = vadd.f32 0.0, %v8143
  %v8145 = vpop.f32.mrf.mxu0
  %v8146 = vadd.f32 0.0, %v8145
  %8147 = vdwg.mxu0
  %8148 = vmatpush.bf16.msra.mxu0 0
  %8149 = vmatpush.bf16.msra.mxu0 0
  %8150 = vmatpush.bf16.msra.mxu0 0
  %8151 = vmatpush.bf16.msra.mxu0 0
  %8152 = vmatpush.bf16.msra.mxu0 0
  %8153 = vmatpush.bf16.msra.mxu0 0
  %8154 = vmatpush.bf16.msra.mxu0 %v8070
  %8155 = vmatpush.bf16.msra.mxu0 %v8068
  %8156 = vmatmul.bf16.gmra.mxu0 %v8076
  %v8157 = vpop.f32.mrf.mxu0
  %v8158 = vadd.f32 0.0, %v8157
  %v8159 = vpop.f32.mrf.mxu0
  %v8160 = vadd.f32 0.0, %v8159
  %8161 = vmatmul.bf16.gmra.mxu0 %v8079
  %v8162 = vpop.f32.mrf.mxu0
  %v8163 = vadd.f32 0.0, %v8162
  %v8164 = vpop.f32.mrf.mxu0
  %v8165 = vadd.f32 0.0, %v8164
  %8166 = vmatmul.bf16.gmra.mxu0 %v8082
  %v8167 = vpop.f32.mrf.mxu0
  %v8168 = vadd.f32 0.0, %v8167
  %v8169 = vpop.f32.mrf.mxu0
  %v8170 = vadd.f32 0.0, %v8169
  %8171 = vmatmul.bf16.gmra.mxu0 %v8085
  %v8172 = vpop.f32.mrf.mxu0
  %v8173 = vadd.f32 0.0, %v8172
  %v8174 = vpop.f32.mrf.mxu0
  %v8175 = vadd.f32 0.0, %v8174
  %8176 = vmatmul.bf16.gmra.mxu0 %v8088
  %v8177 = vpop.f32.mrf.mxu0
  %v8178 = vadd.f32 0.0, %v8177
  %v8179 = vpop.f32.mrf.mxu0
  %v8180 = vadd.f32 0.0, %v8179
  %8181 = vmatmul.bf16.gmra.mxu0 %v8091
  %v8182 = vpop.f32.mrf.mxu0
  %v8183 = vadd.f32 0.0, %v8182
  %v8184 = vpop.f32.mrf.mxu0
  %v8185 = vadd.f32 0.0, %v8184
  %8186 = vmatmul.bf16.gmra.mxu0 %v8094
  %v8187 = vpop.f32.mrf.mxu0
  %v8188 = vadd.f32 0.0, %v8187
  %v8189 = vpop.f32.mrf.mxu0
  %v8190 = vadd.f32 0.0, %v8189
  %8191 = vmatmul.bf16.gmra.mxu0 %v8097
  %v8192 = vpop.f32.mrf.mxu0
  %v8193 = vadd.f32 0.0, %v8192
  %v8194 = vpop.f32.mrf.mxu0
  %v8195 = vadd.f32 0.0, %v8194
  %8196 = vdwg.mxu0
  %v8197 = vadd.f32 %v7994, %v8109
  %v8198 = vadd.f32 %v7995, %v8158
  %v8199 = vadd.f32 %v7996, %v8111
  %v8200 = vadd.f32 %v7997, %v8160
  %v8201 = vadd.f32 %v7998, %v8114
  %v8202 = vadd.f32 %v7999, %v8163
  %v8203 = vadd.f32 %v8000, %v8116
  %v8204 = vadd.f32 %v8001, %v8165
  %v8205 = vadd.f32 %v8002, %v8119
  %v8206 = vadd.f32 %v8003, %v8168
  %v8207 = vadd.f32 %v8004, %v8121
  %v8208 = vadd.f32 %v8005, %v8170
  %v8209 = vadd.f32 %v8006, %v8124
  %v8210 = vadd.f32 %v8007, %v8173
  %v8211 = vadd.f32 %v8008, %v8126
  %v8212 = vadd.f32 %v8009, %v8175
  %v8213 = vadd.f32 %v8010, %v8129
  %v8214 = vadd.f32 %v8011, %v8178
  %v8215 = vadd.f32 %v8012, %v8131
  %v8216 = vadd.f32 %v8013, %v8180
  %v8217 = vadd.f32 %v8014, %v8134
  %v8218 = vadd.f32 %v8015, %v8183
  %v8219 = vadd.f32 %v8016, %v8136
  %v8220 = vadd.f32 %v8017, %v8185
  %v8221 = vadd.f32 %v8018, %v8139
  %v8222 = vadd.f32 %v8019, %v8188
  %v8223 = vadd.f32 %v8020, %v8141
  %v8224 = vadd.f32 %v8021, %v8190
  %v8225 = vadd.f32 %v8022, %v8144
  %v8226 = vadd.f32 %v8023, %v8193
  %v8227 = vadd.f32 %v8024, %v8146
  %v8228 = vadd.f32 %v8025, %v8195
  %v8229 = vmul.f32 %v6808, %v6373
  %v8230 = vmul.f32 %v6809, %v6378
  %v8231 = vmul.f32 %v6810, %v6383
  %v8232 = vmul.f32 %v6811, %v6388
  %v8233 = vmul.f32 %v6812, %v6393
  %v8234 = vmul.f32 %v6813, %v6398
  %v8235 = vmul.f32 %v6814, %v6403
  %v8236 = vmul.f32 %v6815, %v6408
  %v8237 = vmul.f32 %v6816, %v6413
  %v8238 = vmul.f32 %v6817, %v6418
  %v8239 = vmul.f32 %v6818, %v6423
  %v8240 = vmul.f32 %v6819, %v6428
  %v8241 = vmul.f32 %v6820, %v6433
  %v8242 = vmul.f32 %v6821, %v6438
  %v8243 = vmul.f32 %v6822, %v6443
  %v8244 = vmul.f32 %v6807, %v6448
  %v8245 = vpack.c.bf16 %v8230, %v8229
  %v8246 = vpack.c.bf16 %v8232, %v8231
  %v8247 = vpack.c.bf16 %v8234, %v8233
  %v8248 = vpack.c.bf16 %v8236, %v8235
  %v8249 = vpack.c.bf16 %v8238, %v8237
  %v8250 = vpack.c.bf16 %v8240, %v8239
  %v8251 = vpack.c.bf16 %v8242, %v8241
  %v8252 = vpack.c.bf16 %v8244, %v8243
  %s8253 = scalar_lea.vmem %s10, 224
  %v8254 = vld [vmem:[%s8253] sm:$0xff]
  %v8255 = vld [vmem:[%s8253 + $0x8] sm:$0xff]
  %v8256 = vld [vmem:[%s8253 + $0x10] sm:$0xff]
  %v8257 = vld [vmem:[%s8253 + $0x18] sm:$0xff]
  %v8262 = vunpack.c.l.b16 %v8254
  %v8263 = vunpack.c.h.b16 %v8254
  %v8264 = vunpack.c.l.b16 %v8255
  %v8265 = vunpack.c.h.b16 %v8255
  %v8266 = vunpack.c.l.b16 %v8256
  %v8267 = vunpack.c.h.b16 %v8256
  %v8268 = vunpack.c.l.b16 %v8257
  %v8269 = vunpack.c.h.b16 %v8257
  %v8270 = vpack.c.b16 %v8264, %v8262
  %v8271 = vpack.c.b16 %v8265, %v8263
  %v8272 = vpack.c.b16 %v8268, %v8266
  %v8273 = vpack.c.b16 %v8269, %v8267
  %v8279 = vsel %vm249, %v8245, 0
  %v8282 = vsel %vm249, %v8246, 0
  %v8285 = vsel %vm249, %v8247, 0
  %v8288 = vsel %vm249, %v8248, 0
  %v8291 = vsel %vm249, %v8249, 0
  %v8294 = vsel %vm249, %v8250, 0
  %v8297 = vsel %vm249, %v8251, 0
  %v8300 = vsel %vm249, %v8252, 0
  %8302 = vmatpush.bf16.msra.mxu0 0
  %8303 = vmatpush.bf16.msra.mxu0 0
  %8304 = vmatpush.bf16.msra.mxu0 0
  %8305 = vmatpush.bf16.msra.mxu0 0
  %8306 = vmatpush.bf16.msra.mxu0 0
  %8307 = vmatpush.bf16.msra.mxu0 0
  %8308 = vmatpush.bf16.msra.mxu0 %v8272
  %8309 = vmatpush.bf16.msra.mxu0 %v8270
  %8310 = vmatmul.bf16.gmra.mxu0 %v8279
  %v8311 = vpop.f32.mrf.mxu0
  %v8312 = vadd.f32 0.0, %v8311
  %v8313 = vpop.f32.mrf.mxu0
  %v8314 = vadd.f32 0.0, %v8313
  %8315 = vmatmul.bf16.gmra.mxu0 %v8282
  %v8316 = vpop.f32.mrf.mxu0
  %v8317 = vadd.f32 0.0, %v8316
  %v8318 = vpop.f32.mrf.mxu0
  %v8319 = vadd.f32 0.0, %v8318
  %8320 = vmatmul.bf16.gmra.mxu0 %v8285
  %v8321 = vpop.f32.mrf.mxu0
  %v8322 = vadd.f32 0.0, %v8321
  %v8323 = vpop.f32.mrf.mxu0
  %v8324 = vadd.f32 0.0, %v8323
  %8325 = vmatmul.bf16.gmra.mxu0 %v8288
  %v8326 = vpop.f32.mrf.mxu0
  %v8327 = vadd.f32 0.0, %v8326
  %v8328 = vpop.f32.mrf.mxu0
  %v8329 = vadd.f32 0.0, %v8328
  %8330 = vmatmul.bf16.gmra.mxu0 %v8291
  %v8331 = vpop.f32.mrf.mxu0
  %v8332 = vadd.f32 0.0, %v8331
  %v8333 = vpop.f32.mrf.mxu0
  %v8334 = vadd.f32 0.0, %v8333
  %8335 = vmatmul.bf16.gmra.mxu0 %v8294
  %v8336 = vpop.f32.mrf.mxu0
  %v8337 = vadd.f32 0.0, %v8336
  %v8338 = vpop.f32.mrf.mxu0
  %v8339 = vadd.f32 0.0, %v8338
  %8340 = vmatmul.bf16.gmra.mxu0 %v8297
  %v8341 = vpop.f32.mrf.mxu0
  %v8342 = vadd.f32 0.0, %v8341
  %v8343 = vpop.f32.mrf.mxu0
  %v8344 = vadd.f32 0.0, %v8343
  %8345 = vmatmul.bf16.gmra.mxu0 %v8300
  %v8346 = vpop.f32.mrf.mxu0
  %v8347 = vadd.f32 0.0, %v8346
  %v8348 = vpop.f32.mrf.mxu0
  %v8349 = vadd.f32 0.0, %v8348
  %8350 = vdwg.mxu0
  %8351 = vmatpush.bf16.msra.mxu0 0
  %8352 = vmatpush.bf16.msra.mxu0 0
  %8353 = vmatpush.bf16.msra.mxu0 0
  %8354 = vmatpush.bf16.msra.mxu0 0
  %8355 = vmatpush.bf16.msra.mxu0 0
  %8356 = vmatpush.bf16.msra.mxu0 0
  %8357 = vmatpush.bf16.msra.mxu0 %v8273
  %8358 = vmatpush.bf16.msra.mxu0 %v8271
  %8359 = vmatmul.bf16.gmra.mxu0 %v8279
  %v8360 = vpop.f32.mrf.mxu0
  %v8361 = vadd.f32 0.0, %v8360
  %v8362 = vpop.f32.mrf.mxu0
  %v8363 = vadd.f32 0.0, %v8362
  %8364 = vmatmul.bf16.gmra.mxu0 %v8282
  %v8365 = vpop.f32.mrf.mxu0
  %v8366 = vadd.f32 0.0, %v8365
  %v8367 = vpop.f32.mrf.mxu0
  %v8368 = vadd.f32 0.0, %v8367
  %8369 = vmatmul.bf16.gmra.mxu0 %v8285
  %v8370 = vpop.f32.mrf.mxu0
  %v8371 = vadd.f32 0.0, %v8370
  %v8372 = vpop.f32.mrf.mxu0
  %v8373 = vadd.f32 0.0, %v8372
  %8374 = vmatmul.bf16.gmra.mxu0 %v8288
  %v8375 = vpop.f32.mrf.mxu0
  %v8376 = vadd.f32 0.0, %v8375
  %v8377 = vpop.f32.mrf.mxu0
  %v8378 = vadd.f32 0.0, %v8377
  %8379 = vmatmul.bf16.gmra.mxu0 %v8291
  %v8380 = vpop.f32.mrf.mxu0
  %v8381 = vadd.f32 0.0, %v8380
  %v8382 = vpop.f32.mrf.mxu0
  %v8383 = vadd.f32 0.0, %v8382
  %8384 = vmatmul.bf16.gmra.mxu0 %v8294
  %v8385 = vpop.f32.mrf.mxu0
  %v8386 = vadd.f32 0.0, %v8385
  %v8387 = vpop.f32.mrf.mxu0
  %v8388 = vadd.f32 0.0, %v8387
  %8389 = vmatmul.bf16.gmra.mxu0 %v8297
  %v8390 = vpop.f32.mrf.mxu0
  %v8391 = vadd.f32 0.0, %v8390
  %v8392 = vpop.f32.mrf.mxu0
  %v8393 = vadd.f32 0.0, %v8392
  %8394 = vmatmul.bf16.gmra.mxu0 %v8300
  %v8395 = vpop.f32.mrf.mxu0
  %v8396 = vadd.f32 0.0, %v8395
  %v8397 = vpop.f32.mrf.mxu0
  %v8398 = vadd.f32 0.0, %v8397
  %8399 = vdwg.mxu0
  %v8400 = vadd.f32 %v8197, %v8312
  %v8401 = vadd.f32 %v8198, %v8361
  %v8402 = vadd.f32 %v8199, %v8314
  %v8403 = vadd.f32 %v8200, %v8363
  %v8404 = vadd.f32 %v8201, %v8317
  %v8405 = vadd.f32 %v8202, %v8366
  %v8406 = vadd.f32 %v8203, %v8319
  %v8407 = vadd.f32 %v8204, %v8368
  %v8408 = vadd.f32 %v8205, %v8322
  %v8409 = vadd.f32 %v8206, %v8371
  %v8410 = vadd.f32 %v8207, %v8324
  %v8411 = vadd.f32 %v8208, %v8373
  %v8412 = vadd.f32 %v8209, %v8327
  %v8413 = vadd.f32 %v8210, %v8376
  %v8414 = vadd.f32 %v8211, %v8329
  %v8415 = vadd.f32 %v8212, %v8378
  %v8416 = vadd.f32 %v8213, %v8332
  %v8417 = vadd.f32 %v8214, %v8381
  %v8418 = vadd.f32 %v8215, %v8334
  %v8419 = vadd.f32 %v8216, %v8383
  %v8420 = vadd.f32 %v8217, %v8337
  %v8421 = vadd.f32 %v8218, %v8386
  %v8422 = vadd.f32 %v8219, %v8339
  %v8423 = vadd.f32 %v8220, %v8388
  %v8424 = vadd.f32 %v8221, %v8342
  %v8425 = vadd.f32 %v8222, %v8391
  %v8426 = vadd.f32 %v8223, %v8344
  %v8427 = vadd.f32 %v8224, %v8393
  %v8428 = vadd.f32 %v8225, %v8347
  %v8429 = vadd.f32 %v8226, %v8396
  %v8430 = vadd.f32 %v8227, %v8349
  %v8431 = vadd.f32 %v8228, %v8398
  %v8432 = vmul.f32 %v7227, %v6600
  %v8433 = vmul.f32 %v7226, %v6605
  %v8434 = vmul.f32 %v7225, %v6610
  %v8435 = vmul.f32 %v7224, %v6615
  %v8436 = vmul.f32 %v7223, %v6620
  %v8437 = vmul.f32 %v7222, %v6625
  %v8438 = vmul.f32 %v7221, %v6630
  %v8439 = vmul.f32 %v7220, %v6635
  %v8440 = vmul.f32 %v7219, %v6640
  %v8441 = vmul.f32 %v7218, %v6645
  %v8442 = vmul.f32 %v7217, %v6650
  %v8443 = vmul.f32 %v7216, %v6655
  %v8444 = vmul.f32 %v7215, %v6660
  %v8445 = vmul.f32 %v7214, %v6665
  %v8446 = vmul.f32 %v7229, %v6670
  %v8447 = vmul.f32 %v7228, %v6675
  %v8448 = vpack.c.bf16 %v8433, %v8432
  %v8449 = vpack.c.bf16 %v8435, %v8434
  %v8450 = vpack.c.bf16 %v8437, %v8436
  %v8451 = vpack.c.bf16 %v8439, %v8438
  %v8452 = vpack.c.bf16 %v8441, %v8440
  %v8453 = vpack.c.bf16 %v8443, %v8442
  %v8454 = vpack.c.bf16 %v8445, %v8444
  %v8455 = vpack.c.bf16 %v8447, %v8446
  %s8456 = scalar_lea.vmem %s10, 256
  %v8457 = vld [vmem:[%s8456] sm:$0xff]
  %v8458 = vld [vmem:[%s8456 + $0x8] sm:$0xff]
  %v8459 = vld [vmem:[%s8456 + $0x10] sm:$0xff]
  %v8460 = vld [vmem:[%s8456 + $0x18] sm:$0xff]
  %v8465 = vunpack.c.l.b16 %v8457
  %v8466 = vunpack.c.h.b16 %v8457
  %v8467 = vunpack.c.l.b16 %v8458
  %v8468 = vunpack.c.h.b16 %v8458
  %v8469 = vunpack.c.l.b16 %v8459
  %v8470 = vunpack.c.h.b16 %v8459
  %v8471 = vunpack.c.l.b16 %v8460
  %v8472 = vunpack.c.h.b16 %v8460
  %v8473 = vpack.c.b16 %v8467, %v8465
  %v8474 = vpack.c.b16 %v8468, %v8466
  %v8475 = vpack.c.b16 %v8471, %v8469
  %v8476 = vpack.c.b16 %v8472, %v8470
  %v8482 = vsel %vm249, %v8448, 0
  %v8485 = vsel %vm249, %v8449, 0
  %v8488 = vsel %vm249, %v8450, 0
  %v8491 = vsel %vm249, %v8451, 0
  %v8494 = vsel %vm249, %v8452, 0
  %v8497 = vsel %vm249, %v8453, 0
  %v8500 = vsel %vm249, %v8454, 0
  %v8503 = vsel %vm249, %v8455, 0
  %8505 = vmatpush.bf16.msra.mxu0 0
  %8506 = vmatpush.bf16.msra.mxu0 0
  %8507 = vmatpush.bf16.msra.mxu0 0
  %8508 = vmatpush.bf16.msra.mxu0 0
  %8509 = vmatpush.bf16.msra.mxu0 0
  %8510 = vmatpush.bf16.msra.mxu0 0
  %8511 = vmatpush.bf16.msra.mxu0 %v8475
  %8512 = vmatpush.bf16.msra.mxu0 %v8473
  %8513 = vmatmul.bf16.gmra.mxu0 %v8482
  %v8514 = vpop.f32.mrf.mxu0
  %v8515 = vadd.f32 0.0, %v8514
  %v8516 = vpop.f32.mrf.mxu0
  %v8517 = vadd.f32 0.0, %v8516
  %8518 = vmatmul.bf16.gmra.mxu0 %v8485
  %v8519 = vpop.f32.mrf.mxu0
  %v8520 = vadd.f32 0.0, %v8519
  %v8521 = vpop.f32.mrf.mxu0
  %v8522 = vadd.f32 0.0, %v8521
  %8523 = vmatmul.bf16.gmra.mxu0 %v8488
  %v8524 = vpop.f32.mrf.mxu0
  %v8525 = vadd.f32 0.0, %v8524
  %v8526 = vpop.f32.mrf.mxu0
  %v8527 = vadd.f32 0.0, %v8526
  %8528 = vmatmul.bf16.gmra.mxu0 %v8491
  %v8529 = vpop.f32.mrf.mxu0
  %v8530 = vadd.f32 0.0, %v8529
  %v8531 = vpop.f32.mrf.mxu0
  %v8532 = vadd.f32 0.0, %v8531
  %8533 = vmatmul.bf16.gmra.mxu0 %v8494
  %v8534 = vpop.f32.mrf.mxu0
  %v8535 = vadd.f32 0.0, %v8534
  %v8536 = vpop.f32.mrf.mxu0
  %v8537 = vadd.f32 0.0, %v8536
  %8538 = vmatmul.bf16.gmra.mxu0 %v8497
  %v8539 = vpop.f32.mrf.mxu0
  %v8540 = vadd.f32 0.0, %v8539
  %v8541 = vpop.f32.mrf.mxu0
  %v8542 = vadd.f32 0.0, %v8541
  %8543 = vmatmul.bf16.gmra.mxu0 %v8500
  %v8544 = vpop.f32.mrf.mxu0
  %v8545 = vadd.f32 0.0, %v8544
  %v8546 = vpop.f32.mrf.mxu0
  %v8547 = vadd.f32 0.0, %v8546
  %8548 = vmatmul.bf16.gmra.mxu0 %v8503
  %v8549 = vpop.f32.mrf.mxu0
  %v8550 = vadd.f32 0.0, %v8549
  %v8551 = vpop.f32.mrf.mxu0
  %v8552 = vadd.f32 0.0, %v8551
  %8553 = vdwg.mxu0
  %8554 = vmatpush.bf16.msra.mxu0 0
  %8555 = vmatpush.bf16.msra.mxu0 0
  %8556 = vmatpush.bf16.msra.mxu0 0
  %8557 = vmatpush.bf16.msra.mxu0 0
  %8558 = vmatpush.bf16.msra.mxu0 0
  %8559 = vmatpush.bf16.msra.mxu0 0
  %8560 = vmatpush.bf16.msra.mxu0 %v8476
  %8561 = vmatpush.bf16.msra.mxu0 %v8474
  %8562 = vmatmul.bf16.gmra.mxu0 %v8482
  %v8563 = vpop.f32.mrf.mxu0
  %v8564 = vadd.f32 0.0, %v8563
  %v8565 = vpop.f32.mrf.mxu0
  %v8566 = vadd.f32 0.0, %v8565
  %8567 = vmatmul.bf16.gmra.mxu0 %v8485
  %v8568 = vpop.f32.mrf.mxu0
  %v8569 = vadd.f32 0.0, %v8568
  %v8570 = vpop.f32.mrf.mxu0
  %v8571 = vadd.f32 0.0, %v8570
  %8572 = vmatmul.bf16.gmra.mxu0 %v8488
  %v8573 = vpop.f32.mrf.mxu0
  %v8574 = vadd.f32 0.0, %v8573
  %v8575 = vpop.f32.mrf.mxu0
  %v8576 = vadd.f32 0.0, %v8575
  %8577 = vmatmul.bf16.gmra.mxu0 %v8491
  %v8578 = vpop.f32.mrf.mxu0
  %v8579 = vadd.f32 0.0, %v8578
  %v8580 = vpop.f32.mrf.mxu0
  %v8581 = vadd.f32 0.0, %v8580
  %8582 = vmatmul.bf16.gmra.mxu0 %v8494
  %v8583 = vpop.f32.mrf.mxu0
  %v8584 = vadd.f32 0.0, %v8583
  %v8585 = vpop.f32.mrf.mxu0
  %v8586 = vadd.f32 0.0, %v8585
  %8587 = vmatmul.bf16.gmra.mxu0 %v8497
  %v8588 = vpop.f32.mrf.mxu0
  %v8589 = vadd.f32 0.0, %v8588
  %v8590 = vpop.f32.mrf.mxu0
  %v8591 = vadd.f32 0.0, %v8590
  %8592 = vmatmul.bf16.gmra.mxu0 %v8500
  %v8593 = vpop.f32.mrf.mxu0
  %v8594 = vadd.f32 0.0, %v8593
  %v8595 = vpop.f32.mrf.mxu0
  %v8596 = vadd.f32 0.0, %v8595
  %8597 = vmatmul.bf16.gmra.mxu0 %v8503
  %v8598 = vpop.f32.mrf.mxu0
  %v8599 = vadd.f32 0.0, %v8598
  %v8600 = vpop.f32.mrf.mxu0
  %v8601 = vadd.f32 0.0, %v8600
  %8602 = vdwg.mxu0
  %v8603 = vadd.f32 %v8400, %v8515
  %v8604 = vadd.f32 %v8401, %v8564
  %v8605 = vadd.f32 %v8402, %v8517
  %v8606 = vadd.f32 %v8403, %v8566
  %v8607 = vadd.f32 %v8404, %v8520
  %v8608 = vadd.f32 %v8405, %v8569
  %v8609 = vadd.f32 %v8406, %v8522
  %v8610 = vadd.f32 %v8407, %v8571
  %v8611 = vadd.f32 %v8408, %v8525
  %v8612 = vadd.f32 %v8409, %v8574
  %v8613 = vadd.f32 %v8410, %v8527
  %v8614 = vadd.f32 %v8411, %v8576
  %v8615 = vadd.f32 %v8412, %v8530
  %v8616 = vadd.f32 %v8413, %v8579
  %v8617 = vadd.f32 %v8414, %v8532
  %v8618 = vadd.f32 %v8415, %v8581
  %v8619 = vadd.f32 %v8416, %v8535
  %v8620 = vadd.f32 %v8417, %v8584
  %v8621 = vadd.f32 %v8418, %v8537
  %v8622 = vadd.f32 %v8419, %v8586
  %v8623 = vadd.f32 %v8420, %v8540
  %v8624 = vadd.f32 %v8421, %v8589
  %v8625 = vadd.f32 %v8422, %v8542
  %v8626 = vadd.f32 %v8423, %v8591
  %v8627 = vadd.f32 %v8424, %v8545
  %v8628 = vadd.f32 %v8425, %v8594
  %v8629 = vadd.f32 %v8426, %v8547
  %v8630 = vadd.f32 %v8427, %v8596
  %v8631 = vadd.f32 %v8428, %v8550
  %v8632 = vadd.f32 %v8429, %v8599
  %v8633 = vadd.f32 %v8430, %v8552
  %v8634 = vadd.f32 %v8431, %v8601
  %v8636 = vperm.slane %v6824, 0
  %v8637 = vperm.slane %v6824, 1
  %v8640 = vadd.f32 %v8603, %v8636
  %v8641 = vadd.f32 %v8604, %v8637
  %v8642 = vadd.f32 %v8605, %v8636
  %v8643 = vadd.f32 %v8606, %v8637
  %v8644 = vadd.f32 %v8607, %v8636
  %v8645 = vadd.f32 %v8608, %v8637
  %v8646 = vadd.f32 %v8609, %v8636
  %v8647 = vadd.f32 %v8610, %v8637
  %v8648 = vadd.f32 %v8611, %v8636
  %v8649 = vadd.f32 %v8612, %v8637
  %v8650 = vadd.f32 %v8613, %v8636
  %v8651 = vadd.f32 %v8614, %v8637
  %v8652 = vadd.f32 %v8615, %v8636
  %v8653 = vadd.f32 %v8616, %v8637
  %v8654 = vadd.f32 %v8617, %v8636
  %v8655 = vadd.f32 %v8618, %v8637
  %v8656 = vadd.f32 %v8619, %v8636
  %v8657 = vadd.f32 %v8620, %v8637
  %v8658 = vadd.f32 %v8621, %v8636
  %v8659 = vadd.f32 %v8622, %v8637
  %v8660 = vadd.f32 %v8623, %v8636
  %v8661 = vadd.f32 %v8624, %v8637
  %v8662 = vadd.f32 %v8625, %v8636
  %v8663 = vadd.f32 %v8626, %v8637
  %v8664 = vadd.f32 %v8627, %v8636
  %v8665 = vadd.f32 %v8628, %v8637
  %v8666 = vadd.f32 %v8629, %v8636
  %v8667 = vadd.f32 %v8630, %v8637
  %v8668 = vadd.f32 %v8631, %v8636
  %v8669 = vadd.f32 %v8632, %v8637
  %v8670 = vadd.f32 %v8633, %v8636
  %v8671 = vadd.f32 %v8634, %v8637
  %v8672 = vmax.f32 %v8640, 0.0
  %v8673 = vmax.f32 %v8641, 0.0
  %v8674 = vmax.f32 %v8642, 0.0
  %v8675 = vmax.f32 %v8643, 0.0
  %v8676 = vmax.f32 %v8644, 0.0
  %v8677 = vmax.f32 %v8645, 0.0
  %v8678 = vmax.f32 %v8646, 0.0
  %v8679 = vmax.f32 %v8647, 0.0
  %v8680 = vmax.f32 %v8648, 0.0
  %v8681 = vmax.f32 %v8649, 0.0
  %v8682 = vmax.f32 %v8650, 0.0
  %v8683 = vmax.f32 %v8651, 0.0
  %v8684 = vmax.f32 %v8652, 0.0
  %v8685 = vmax.f32 %v8653, 0.0
  %v8686 = vmax.f32 %v8654, 0.0
  %v8687 = vmax.f32 %v8655, 0.0
  %v8688 = vmax.f32 %v8656, 0.0
  %v8689 = vmax.f32 %v8657, 0.0
  %v8690 = vmax.f32 %v8658, 0.0
  %v8691 = vmax.f32 %v8659, 0.0
  %v8692 = vmax.f32 %v8660, 0.0
  %v8693 = vmax.f32 %v8661, 0.0
  %v8694 = vmax.f32 %v8662, 0.0
  %v8695 = vmax.f32 %v8663, 0.0
  %v8696 = vmax.f32 %v8664, 0.0
  %v8697 = vmax.f32 %v8665, 0.0
  %v8698 = vmax.f32 %v8666, 0.0
  %v8699 = vmax.f32 %v8667, 0.0
  %v8700 = vmax.f32 %v8668, 0.0
  %v8701 = vmax.f32 %v8669, 0.0
  %v8702 = vmax.f32 %v8670, 0.0
  %v8703 = vmax.f32 %v8671, 0.0
  %v8704 = vpack.c.bf16 %v8674, %v8672
  %v8705 = vpack.c.bf16 %v8675, %v8673
  %v8706 = vpack.c.bf16 %v8678, %v8676
  %v8707 = vpack.c.bf16 %v8679, %v8677
  %v8708 = vpack.c.bf16 %v8682, %v8680
  %v8709 = vpack.c.bf16 %v8683, %v8681
  %v8710 = vpack.c.bf16 %v8686, %v8684
  %v8711 = vpack.c.bf16 %v8687, %v8685
  %v8712 = vpack.c.bf16 %v8690, %v8688
  %v8713 = vpack.c.bf16 %v8691, %v8689
  %v8714 = vpack.c.bf16 %v8694, %v8692
  %v8715 = vpack.c.bf16 %v8695, %v8693
  %v8716 = vpack.c.bf16 %v8698, %v8696
  %v8717 = vpack.c.bf16 %v8699, %v8697
  %v8718 = vpack.c.bf16 %v8702, %v8700
  %v8719 = vpack.c.bf16 %v8703, %v8701
  %v8720 = vld [vmem:[%s11] sm:$0xf]
  %v8721 = vld [vmem:[%s11 + $0x4] sm:$0xf]
  %v8722 = vld [vmem:[%s11 + $0x8] sm:$0xf]
  %v8723 = vld [vmem:[%s11 + $0xc] sm:$0xf]
  %v8724 = vld [vmem:[%s11 + $0x10] sm:$0xf]
  %v8725 = vld [vmem:[%s11 + $0x14] sm:$0xf]
  %v8726 = vld [vmem:[%s11 + $0x18] sm:$0xf]
  %v8727 = vld [vmem:[%s11 + $0x1c] sm:$0xf]
  %v8728 = vld [vmem:[%s11 + $0x20] sm:$0xf]
  %v8729 = vld [vmem:[%s11 + $0x24] sm:$0xf]
  %v8730 = vld [vmem:[%s11 + $0x28] sm:$0xf]
  %v8731 = vld [vmem:[%s11 + $0x2c] sm:$0xf]
  %v8732 = vld [vmem:[%s11 + $0x30] sm:$0xf]
  %v8733 = vld [vmem:[%s11 + $0x34] sm:$0xf]
  %v8734 = vld [vmem:[%s11 + $0x38] sm:$0xf]
  %v8735 = vld [vmem:[%s11 + $0x3c] sm:$0xf]
  %v8736 = vld [vmem:[%s11 + $0x40] sm:$0xf]
  %v8737 = vld [vmem:[%s11 + $0x44] sm:$0xf]
  %v8738 = vld [vmem:[%s11 + $0x48] sm:$0xf]
  %v8739 = vld [vmem:[%s11 + $0x4c] sm:$0xf]
  %v8740 = vld [vmem:[%s11 + $0x50] sm:$0xf]
  %v8741 = vld [vmem:[%s11 + $0x54] sm:$0xf]
  %v8742 = vld [vmem:[%s11 + $0x58] sm:$0xf]
  %v8743 = vld [vmem:[%s11 + $0x5c] sm:$0xf]
  %v8744 = vld [vmem:[%s11 + $0x60] sm:$0xf]
  %v8745 = vld [vmem:[%s11 + $0x64] sm:$0xf]
  %v8746 = vld [vmem:[%s11 + $0x68] sm:$0xf]
  %v8747 = vld [vmem:[%s11 + $0x6c] sm:$0xf]
  %v8748 = vld [vmem:[%s12 + $0x12] ss:$0 sm:$0xff]
  %v8777 = vunpack.c.l.b16 %v8720
  %v8778 = vunpack.c.l.b16 %v8721
  %v8779 = vunpack.c.l.b16 %v8722
  %v8780 = vunpack.c.l.b16 %v8723
  %v8781 = vunpack.c.l.b16 %v8724
  %v8782 = vunpack.c.l.b16 %v8725
  %v8783 = vunpack.c.l.b16 %v8726
  %v8784 = vunpack.c.l.b16 %v8727
  %v8785 = vunpack.c.l.b16 %v8728
  %v8786 = vunpack.c.l.b16 %v8729
  %v8787 = vunpack.c.l.b16 %v8730
  %v8788 = vunpack.c.l.b16 %v8731
  %v8789 = vunpack.c.l.b16 %v8732
  %v8790 = vunpack.c.l.b16 %v8733
  %v8791 = vunpack.c.l.b16 %v8734
  %v8792 = vunpack.c.l.b16 %v8735
  %v8793 = vunpack.c.l.b16 %v8736
  %v8794 = vunpack.c.l.b16 %v8737
  %v8795 = vunpack.c.l.b16 %v8738
  %v8796 = vunpack.c.l.b16 %v8739
  %v8797 = vunpack.c.l.b16 %v8740
  %v8798 = vunpack.c.l.b16 %v8741
  %v8799 = vunpack.c.l.b16 %v8742
  %v8800 = vunpack.c.l.b16 %v8743
  %v8801 = vunpack.c.l.b16 %v8744
  %v8802 = vunpack.c.l.b16 %v8745
  %v8803 = vunpack.c.l.b16 %v8746
  %v8804 = vunpack.c.l.b16 %v8747
  %v8805 = vpack.c.b16 %v8778, %v8777
  %v8806 = vpack.c.b16 %v8780, %v8779
  %v8807 = vpack.c.b16 %v8782, %v8781
  %v8808 = vpack.c.b16 %v8784, %v8783
  %v8809 = vpack.c.b16 %v8786, %v8785
  %v8810 = vpack.c.b16 %v8788, %v8787
  %v8811 = vpack.c.b16 %v8790, %v8789
  %v8812 = vpack.c.b16 %v8792, %v8791
  %v8813 = vpack.c.b16 %v8794, %v8793
  %v8814 = vpack.c.b16 %v8796, %v8795
  %v8815 = vpack.c.b16 %v8798, %v8797
  %v8816 = vpack.c.b16 %v8800, %v8799
  %v8817 = vpack.c.b16 %v8802, %v8801
  %v8818 = vpack.c.b16 %v8804, %v8803
  %vm8833 = vcmask 785408
  %v8835 = vsel %vm8833, %v8705, 0
  %v8838 = vsel %vm8833, %v8707, 0
  %v8841 = vsel %vm8833, %v8709, 0
  %v8844 = vsel %vm8833, %v8711, 0
  %v8847 = vsel %vm8833, %v8713, 0
  %v8850 = vsel %vm8833, %v8715, 0
  %v8853 = vsel %vm8833, %v8717, 0
  %v8856 = vsel %vm8833, %v8719, 0
  %8858 = vmatpush.bf16.msra.mxu0 %v8812
  %8859 = vmatpush.bf16.msra.mxu0 %v8811
  %8860 = vmatpush.bf16.msra.mxu0 %v8810
  %8861 = vmatpush.bf16.msra.mxu0 %v8809
  %8862 = vmatpush.bf16.msra.mxu0 %v8808
  %8863 = vmatpush.bf16.msra.mxu0 %v8807
  %8864 = vmatpush.bf16.msra.mxu0 %v8806
  %8865 = vmatpush.bf16.msra.mxu0 %v8805
  %8866 = vmatmul.bf16.gmra.mxu0 %v8704
  %v8867 = vpop.f32.mrf.mxu0
  %v8868 = vadd.f32 %v8748, %v8867
  %v8869 = vpop.f32.mrf.mxu0
  %v8870 = vadd.f32 %v8748, %v8869
  %8871 = vmatmul.bf16.gmra.mxu0 %v8706
  %v8872 = vpop.f32.mrf.mxu0
  %v8873 = vadd.f32 %v8748, %v8872
  %v8874 = vpop.f32.mrf.mxu0
  %v8875 = vadd.f32 %v8748, %v8874
  %8876 = vmatmul.bf16.gmra.mxu0 %v8708
  %v8877 = vpop.f32.mrf.mxu0
  %v8878 = vadd.f32 %v8748, %v8877
  %v8879 = vpop.f32.mrf.mxu0
  %v8880 = vadd.f32 %v8748, %v8879
  %8881 = vmatmul.bf16.gmra.mxu0 %v8710
  %v8882 = vpop.f32.mrf.mxu0
  %v8883 = vadd.f32 %v8748, %v8882
  %v8884 = vpop.f32.mrf.mxu0
  %v8885 = vadd.f32 %v8748, %v8884
  %8886 = vmatmul.bf16.gmra.mxu0 %v8712
  %v8887 = vpop.f32.mrf.mxu0
  %v8888 = vadd.f32 %v8748, %v8887
  %v8889 = vpop.f32.mrf.mxu0
  %v8890 = vadd.f32 %v8748, %v8889
  %8891 = vmatmul.bf16.gmra.mxu0 %v8714
  %v8892 = vpop.f32.mrf.mxu0
  %v8893 = vadd.f32 %v8748, %v8892
  %v8894 = vpop.f32.mrf.mxu0
  %v8895 = vadd.f32 %v8748, %v8894
  %8896 = vmatmul.bf16.gmra.mxu0 %v8716
  %v8897 = vpop.f32.mrf.mxu0
  %v8898 = vadd.f32 %v8748, %v8897
  %v8899 = vpop.f32.mrf.mxu0
  %v8900 = vadd.f32 %v8748, %v8899
  %8901 = vmatmul.bf16.gmra.mxu0 %v8718
  %v8902 = vpop.f32.mrf.mxu0
  %v8903 = vadd.f32 %v8748, %v8902
  %v8904 = vpop.f32.mrf.mxu0
  %v8905 = vadd.f32 %v8748, %v8904
  %8906 = vdwg.mxu0
  %8907 = vmatpush.bf16.msra.mxu0 0
  %8908 = vmatpush.bf16.msra.mxu0 0
  %8909 = vmatpush.bf16.msra.mxu0 %v8818
  %8910 = vmatpush.bf16.msra.mxu0 %v8817
  %8911 = vmatpush.bf16.msra.mxu0 %v8816
  %8912 = vmatpush.bf16.msra.mxu0 %v8815
  %8913 = vmatpush.bf16.msra.mxu0 %v8814
  %8914 = vmatpush.bf16.msra.mxu0 %v8813
  %8915 = vmatmul.bf16.gmra.mxu0 %v8835
  %v8916 = vpop.f32.mrf.mxu0
  %v8917 = vadd.f32 %v8868, %v8916
  %v8918 = vpop.f32.mrf.mxu0
  %v8919 = vadd.f32 %v8870, %v8918
  %8920 = vmatmul.bf16.gmra.mxu0 %v8838
  %v8921 = vpop.f32.mrf.mxu0
  %v8922 = vadd.f32 %v8873, %v8921
  %v8923 = vpop.f32.mrf.mxu0
  %v8924 = vadd.f32 %v8875, %v8923
  %8925 = vmatmul.bf16.gmra.mxu0 %v8841
  %v8926 = vpop.f32.mrf.mxu0
  %v8927 = vadd.f32 %v8878, %v8926
  %v8928 = vpop.f32.mrf.mxu0
  %v8929 = vadd.f32 %v8880, %v8928
  %8930 = vmatmul.bf16.gmra.mxu0 %v8844
  %v8931 = vpop.f32.mrf.mxu0
  %v8932 = vadd.f32 %v8883, %v8931
  %v8933 = vpop.f32.mrf.mxu0
  %v8934 = vadd.f32 %v8885, %v8933
  %8935 = vmatmul.bf16.gmra.mxu0 %v8847
  %v8936 = vpop.f32.mrf.mxu0
  %v8937 = vadd.f32 %v8888, %v8936
  %v8938 = vpop.f32.mrf.mxu0
  %v8939 = vadd.f32 %v8890, %v8938
  %8940 = vmatmul.bf16.gmra.mxu0 %v8850
  %v8941 = vpop.f32.mrf.mxu0
  %v8942 = vadd.f32 %v8893, %v8941
  %v8943 = vpop.f32.mrf.mxu0
  %v8944 = vadd.f32 %v8895, %v8943
  %8945 = vmatmul.bf16.gmra.mxu0 %v8853
  %v8946 = vpop.f32.mrf.mxu0
  %v8947 = vadd.f32 %v8898, %v8946
  %v8948 = vpop.f32.mrf.mxu0
  %v8949 = vadd.f32 %v8900, %v8948
  %8950 = vmatmul.bf16.gmra.mxu0 %v8856
  %v8951 = vpop.f32.mrf.mxu0
  %v8952 = vadd.f32 %v8903, %v8951
  %v8953 = vpop.f32.mrf.mxu0
  %v8954 = vadd.f32 %v8905, %v8953
  %8955 = vdwg.mxu0
  %8956 = vst [vmem:[%s13] sm:$0xff] %v8917
  %8957 = vst [vmem:[%s13 + $0x8] sm:$0xff] %v8919
  %8958 = vst [vmem:[%s13 + $0x10] sm:$0xff] %v8922
  %8959 = vst [vmem:[%s13 + $0x18] sm:$0xff] %v8924
  %8960 = vst [vmem:[%s13 + $0x20] sm:$0xff] %v8927
  %8961 = vst [vmem:[%s13 + $0x28] sm:$0xff] %v8929
  %8962 = vst [vmem:[%s13 + $0x30] sm:$0xff] %v8932
  %8963 = vst [vmem:[%s13 + $0x38] sm:$0xff] %v8934
  %8964 = vst [vmem:[%s13 + $0x40] sm:$0xff] %v8937
  %8965 = vst [vmem:[%s13 + $0x48] sm:$0xff] %v8939
  %8966 = vst [vmem:[%s13 + $0x50] sm:$0xff] %v8942
  %8967 = vst [vmem:[%s13 + $0x58] sm:$0xff] %v8944
  %8968 = vst [vmem:[%s13 + $0x60] sm:$0xff] %v8947
  %8969 = vst [vmem:[%s13 + $0x68] sm:$0xff] %v8949
  %8970 = vst [vmem:[%s13 + $0x70] sm:$0xff] %v8952
  %8971 = vst [vmem:[%s13 + $0x78] sm:$0xff] %v8954
  // Predicated region
  $region54: #{vector_bev_forward.1} parent=0 // pred_check
    _
  $region55: #{vector_bev_forward.1} parent=0 // pred_check_branch
    %8973 = sbr.rel (0) target = $region57
  $region56: #{vector_bev_forward.1} parent=0 // pred_region
    _
  $region57: #{vector_bev_forward.1} parent=0 // pred_fallthru
    _
  // Predicated region
  $region58: #{vector_bev_forward.1} parent=0 // pred_check
    _
  $region59: #{vector_bev_forward.1} parent=0 // pred_check_branch
    %8975 = sbr.rel (0) target = $region61
  $region60: #{vector_bev_forward.1} parent=0 // pred_region
    _
  $region61: #{vector_bev_forward.1} parent=0 // pred_fallthru
    _

</llo_original>
